<compile_context>
chip_gen: v7x
topology: tpu7x:2x2x1
jax: 0.10.0
libtpu: 0.0.40
codegen_flags: <defaults>
</compile_context>

<pallas_src>
import jax
import jax.numpy as jnp
from jax.experimental import pallas as pl
from jax.experimental.pallas import tpu as pltpu

# ---- module hyper-parameters (defaults of Transformer.__init__) ----
D_MODEL = 64
D_INNER = 16
N_HEAD = 8
D_K = 16
D_V = 16
N_LAYERS = 4
OUTPUT_SIZE = 12
VOCAB = 1000              # small synthetic vocab (module default is 50000)
EPS = 1e-5                # PyTorch LayerNorm default eps
NEG = -1e12               # masked_fill value used by ScaledDotProductAttention
INV_TEMP = 1.0 / (D_K ** 0.5)
HK = N_HEAD * D_K         # 128
HV = N_HEAD * D_V         # 128


def _layer_norm(x, g, b):
    mu = jnp.mean(x, axis=-1, keepdims=True)
    var = jnp.mean((x - mu) ** 2, axis=-1, keepdims=True)
    return (x - mu) * jax.lax.rsqrt(var + EPS) * g + b


# --------------------------------------------------------------------------
# Single fused kernel: 4 encoder layers + output head, one batch element per
# grid step (grid axis is "parallel" -> maps onto both TCs on v7x).
# --------------------------------------------------------------------------
def fused_transformer_kernel(npad_ref, kbias_ref, x_ref,
                             wqkv_ref, bqkv_ref, wo_ref, bo_ref,
                             g1_ref, be1_ref,
                             w1_ref, b1_ref, w2_ref, b2_ref,
                             g2_ref, be2_ref,
                             wlast_ref, blast_ref,
                             out_ref):
    npad = npad_ref[0]              # (S, 1) f32, 1.0 where token != 0
    kbias = kbias_ref[0]            # (1, S) f32, NEG where key token == 0
    x = x_ref[0]                    # (S, D) f32

    for l in range(N_LAYERS):       # static unroll over the 4 encoder layers
        # ---- per-layer weights (bf16 matmul weights, f32 bias/LN params) ----
        wqkv_l = wqkv_ref[l]        # (D, 3*HK) bf16
        bqkv_l = bqkv_ref[l]        # (1, 3*HK) f32
        wo_l = wo_ref[l]            # (HV, D)   bf16
        bo_l = bo_ref[l]            # (1, D)    f32
        w1_l = w1_ref[l]            # (D, D_INNER) bf16
        b1_l = b1_ref[l]            # (1, D_INNER) f32
        w2_l = w2_ref[l]            # (D_INNER, D) bf16
        b2_l = b2_ref[l]            # (1, D) f32

        # ---- multi-head self-attention ----
        residual = x
        x_bf = x.astype(jnp.bfloat16)
        qkv = jnp.dot(x_bf, wqkv_l, preferred_element_type=jnp.float32) + bqkv_l
        qkv_bf = qkv.astype(jnp.bfloat16)                 # (S, 3*HK)

        o = jnp.zeros((x.shape[0], D_MODEL), jnp.float32)
        for h in range(N_HEAD):                           # static unroll over heads
            qh = qkv_bf[:, h * D_K:(h + 1) * D_K]                       # (S, d_k)
            kh = qkv_bf[:, HK + h * D_K: HK + (h + 1) * D_K]            # (S, d_k)
            vh = qkv_bf[:, 2 * HK + h * D_V: 2 * HK + (h + 1) * D_V]    # (S, d_v)

            s = jax.lax.dot_general(
                qh, kh, (((1,), (1,)), ((), ())),
                preferred_element_type=jnp.float32)                     # (S, S)
            s = s * INV_TEMP + kbias                       # additive key-pad bias
            s = s - jnp.max(s, axis=-1, keepdims=True)
            p = jnp.exp(s)
            attn = p * pl.reciprocal(jnp.sum(p, axis=-1, keepdims=True),
                                     approx=True)          # softmax(dim=2)
            ctx = jnp.dot(attn.astype(jnp.bfloat16), vh,
                          preferred_element_type=jnp.float32)           # (S, d_v)
            # fold the fc output projection per head; accumulate in f32
            # (equivalent to concat(heads) @ W_fc, without the lane concat)
            o = o + jnp.dot(ctx.astype(jnp.bfloat16),
                            wo_l[h * D_V:(h + 1) * D_V, :],
                            preferred_element_type=jnp.float32)

        o = _layer_norm(o + bo_l + residual, g1_ref[l], be1_ref[l])
        o = o * npad                                       # enc_output *= non_pad_mask

        # ---- position-wise FFN (Conv1d k=1 == pointwise linear) ----
        res2 = o
        h1 = jnp.maximum(
            jnp.dot(o.astype(jnp.bfloat16), w1_l,
                    preferred_element_type=jnp.float32) + b1_l, 0.0)
        h2 = jnp.dot(h1.astype(jnp.bfloat16), w2_l,
                     preferred_element_type=jnp.float32) + b2_l
        x = _layer_norm(h2 + res2, g2_ref[l], be2_ref[l])
        x = x * npad                                       # enc_output *= non_pad_mask

    # ---- output head: last_linear then max over the sequence dimension ----
    logits = jnp.dot(x.astype(jnp.bfloat16), wlast_ref[...],
                     preferred_element_type=jnp.float32) + blast_ref[...]
    out_ref[0] = jnp.max(logits, axis=0, keepdims=True)    # (1, OUTPUT_SIZE)


# --------------------------------------------------------------------------
# Wrapper: embedding + masks in JAX (glue), one fused pallas_call.
# --------------------------------------------------------------------------
def transformer_pallas(tokens, params):
    (emb, wqkv, bqkv, wo, bo, g1, be1,
     w1, b1, w2, b2, g2, be2, wlast, blast) = params
    B, S = tokens.shape

    # glue: get_non_pad_mask / get_attn_key_pad_mask (as additive bias) / embedding
    npad = (tokens != 0).astype(jnp.float32)[:, :, None]                     # (B,S,1)
    kbias = jnp.where(tokens == 0, jnp.float32(NEG),
                      jnp.float32(0.0))[:, None, :]                          # (B,1,S)
    x = jnp.take(emb, tokens, axis=0)                                        # (B,S,D)

    weights = (wqkv, bqkv, wo, bo, g1, be1, w1, b1, w2, b2, g2, be2, wlast, blast)

    def full_spec(p):
        return pl.BlockSpec(p.shape, lambda b, n=p.ndim: (0,) * n)

    in_specs = [
        pl.BlockSpec((1, S, 1), lambda b: (b, 0, 0)),        # npad
        pl.BlockSpec((1, 1, S), lambda b: (b, 0, 0)),        # kbias
        pl.BlockSpec((1, S, D_MODEL), lambda b: (b, 0, 0)),  # embedded input
    ] + [full_spec(w) for w in weights]

    out = pl.pallas_call(
        fused_transformer_kernel,
        out_shape=jax.ShapeDtypeStruct((B, 1, OUTPUT_SIZE), jnp.float32),
        grid=(B,),
        in_specs=in_specs,
        out_specs=pl.BlockSpec((1, 1, OUTPUT_SIZE), lambda b: (b, 0, 0)),
        compiler_params=pltpu.CompilerParams(dimension_semantics=("parallel",)),
    )(npad, kbias, x, *weights)
    return out[:, 0, :]                                      # (B, OUTPUT_SIZE)


transformer_forward = jax.jit(transformer_pallas)


# --------------------------------------------------------------------------
# Parameter init (deterministic; shapes match the PyTorch module, weights
# stacked over a leading layer axis; matmul weights pre-cast to bf16).
# --------------------------------------------------------------------------
def init_params(key):
    def nrm(k, shape, std):
        return (std * jax.random.normal(k, shape)).astype(jnp.float32)

    keys = iter(jax.random.split(key, 1 + 8 * N_LAYERS + 2))

    # Embedding(vocab, d_model, padding_idx=0): row 0 is zeros.
    emb = nrm(next(keys), (VOCAB, D_MODEL), 1.0)
    emb = emb.at[0].set(0.0)

    std_qk = (2.0 / (D_MODEL + D_K)) ** 0.5
    std_v = (2.0 / (D_MODEL + D_V)) ** 0.5
    std_fc = (2.0 / (N_HEAD * D_V + D_MODEL)) ** 0.5

    wqkv_l, wo_l, w1_l, w2_l, b1_l, b2_l = [], [], [], [], [], []
    for _ in range(N_LAYERS):
        wq = nrm(next(keys), (D_MODEL, N_HEAD * D_K), std_qk)
        wk = nrm(next(keys), (D_MODEL, N_HEAD * D_K), std_qk)
        wv = nrm(next(keys), (D_MODEL, N_HEAD * D_V), std_v)
        wqkv_l.append(jnp.concatenate([wq, wk, wv], axis=1))        # (D, 3*HK)
        wo_l.append(nrm(next(keys), (N_HEAD * D_V, D_MODEL), std_fc))
        w1_l.append(nrm(next(keys), (D_MODEL, D_INNER), (1.0 / D_MODEL) ** 0.5))
        w2_l.append(nrm(next(keys), (D_INNER, D_MODEL), (1.0 / D_INNER) ** 0.5))
        b1_l.append(nrm(next(keys), (1, D_INNER), 0.01))
        b2_l.append(nrm(next(keys), (1, D_MODEL), 0.01))

    wqkv = jnp.stack(wqkv_l).astype(jnp.bfloat16)                   # (L, D, 3*HK)
    bqkv = jnp.zeros((N_LAYERS, 1, 3 * HK), jnp.float32)
    wo = jnp.stack(wo_l).astype(jnp.bfloat16)                       # (L, HV, D)
    bo = jnp.zeros((N_LAYERS, 1, D_MODEL), jnp.float32)
    g1 = jnp.ones((N_LAYERS, 1, D_MODEL), jnp.float32)
    be1 = jnp.zeros((N_LAYERS, 1, D_MODEL), jnp.float32)
    w1 = jnp.stack(w1_l).astype(jnp.bfloat16)                       # (L, D, D_INNER)
    b1 = jnp.stack(b1_l)
    w2 = jnp.stack(w2_l).astype(jnp.bfloat16)                       # (L, D_INNER, D)
    b2 = jnp.stack(b2_l)
    g2 = jnp.ones((N_LAYERS, 1, D_MODEL), jnp.float32)
    be2 = jnp.zeros((N_LAYERS, 1, D_MODEL), jnp.float32)

    wlast = nrm(next(keys), (D_MODEL, OUTPUT_SIZE),
                (1.0 / D_MODEL) ** 0.5).astype(jnp.bfloat16)
    blast = nrm(next(keys), (1, OUTPUT_SIZE), 0.01)

    return (emb, wqkv, bqkv, wo, bo, g1, be1,
            w1, b1, w2, b2, g2, be2, wlast, blast)


if __name__ == "__main__":
    key = jax.random.PRNGKey(0)
    k_tok, k_par = jax.random.split(key)

    B, S = 2, 8
    tokens = jax.random.randint(k_tok, (B, S), 1, VOCAB)
    tokens = tokens.at[1, -2:].set(0)   # introduce padding tokens to exercise masks

    params = init_params(k_par)
    out = transformer_forward(tokens, params)
    out = jax.block_until_ready(out)
    assert out.shape == (B, OUTPUT_SIZE)
    print("KERNEL_OK")
</pallas_src>

<mosaic_0001>
module attributes {stable_mosaic.version = 11 : i64} {
  func.func @fused_transformer_kernel(%arg0: i32, %arg1: memref<1x8x1xf32, #tpu.memory_space<vmem>>, %arg2: memref<1x1x8xf32, #tpu.memory_space<vmem>>, %arg3: memref<1x8x64xf32, #tpu.memory_space<vmem>>, %arg4: memref<4x64x384xbf16, #tpu.memory_space<vmem>>, %arg5: memref<4x1x384xf32, #tpu.memory_space<vmem>>, %arg6: memref<4x128x64xbf16, #tpu.memory_space<vmem>>, %arg7: memref<4x1x64xf32, #tpu.memory_space<vmem>>, %arg8: memref<4x1x64xf32, #tpu.memory_space<vmem>>, %arg9: memref<4x1x64xf32, #tpu.memory_space<vmem>>, %arg10: memref<4x64x16xbf16, #tpu.memory_space<vmem>>, %arg11: memref<4x1x16xf32, #tpu.memory_space<vmem>>, %arg12: memref<4x16x64xbf16, #tpu.memory_space<vmem>>, %arg13: memref<4x1x64xf32, #tpu.memory_space<vmem>>, %arg14: memref<4x1x64xf32, #tpu.memory_space<vmem>>, %arg15: memref<4x1x64xf32, #tpu.memory_space<vmem>>, %arg16: memref<64x12xbf16, #tpu.memory_space<vmem>>, %arg17: memref<1x12xf32, #tpu.memory_space<vmem>>, %arg18: memref<1x1x12xf32, #tpu.memory_space<vmem>>) attributes {dimension_semantics = [#tpu.dimension_semantics<parallel>], iteration_bounds = array<i64: 2>, scalar_prefetch = 0 : i64, scratch_operands = 0 : i64, tpu.core_type = #tpu.core_type<tc>, window_params = [{transform_indices = @transform_0, window_bounds = array<i64: 1, 8, 1>}, {transform_indices = @transform_1, window_bounds = array<i64: 1, 1, 8>}, {transform_indices = @transform_2, window_bounds = array<i64: 1, 8, 64>}, {pipeline_mode = #tpu.pipeline_mode<synchronous>, transform_indices = @transform_3, window_bounds = array<i64: 4, 64, 384>}, {pipeline_mode = #tpu.pipeline_mode<synchronous>, transform_indices = @transform_4, window_bounds = array<i64: 4, 1, 384>}, {pipeline_mode = #tpu.pipeline_mode<synchronous>, transform_indices = @transform_5, window_bounds = array<i64: 4, 128, 64>}, {pipeline_mode = #tpu.pipeline_mode<synchronous>, transform_indices = @transform_6, window_bounds = array<i64: 4, 1, 64>}, {pipeline_mode = #tpu.pipeline_mode<synchronous>, transform_indices = @transform_7, window_bounds = array<i64: 4, 1, 64>}, {pipeline_mode = #tpu.pipeline_mode<synchronous>, transform_indices = @transform_8, window_bounds = array<i64: 4, 1, 64>}, {pipeline_mode = #tpu.pipeline_mode<synchronous>, transform_indices = @transform_9, window_bounds = array<i64: 4, 64, 16>}, {pipeline_mode = #tpu.pipeline_mode<synchronous>, transform_indices = @transform_10, window_bounds = array<i64: 4, 1, 16>}, {pipeline_mode = #tpu.pipeline_mode<synchronous>, transform_indices = @transform_11, window_bounds = array<i64: 4, 16, 64>}, {pipeline_mode = #tpu.pipeline_mode<synchronous>, transform_indices = @transform_12, window_bounds = array<i64: 4, 1, 64>}, {pipeline_mode = #tpu.pipeline_mode<synchronous>, transform_indices = @transform_13, window_bounds = array<i64: 4, 1, 64>}, {pipeline_mode = #tpu.pipeline_mode<synchronous>, transform_indices = @transform_14, window_bounds = array<i64: 4, 1, 64>}, {pipeline_mode = #tpu.pipeline_mode<synchronous>, transform_indices = @transform_15, window_bounds = array<i64: 64, 12>}, {pipeline_mode = #tpu.pipeline_mode<synchronous>, transform_indices = @transform_16, window_bounds = array<i64: 1, 12>}, {transform_indices = @transform_17, window_bounds = array<i64: 1, 1, 12>}]} {
    %c0 = arith.constant 0 : index
    %c0_0 = arith.constant 0 : index
    %c0_1 = arith.constant 0 : index
    %0 = vector.load %arg1[%c0, %c0_0, %c0_1] : memref<1x8x1xf32, #tpu.memory_space<vmem>>, vector<1x8x1xf32>
    %1 = vector.shape_cast %0 : vector<1x8x1xf32> to vector<8x1xf32>
    %c0_2 = arith.constant 0 : index
    %c0_3 = arith.constant 0 : index
    %c0_4 = arith.constant 0 : index
    %2 = vector.load %arg2[%c0_2, %c0_3, %c0_4] : memref<1x1x8xf32, #tpu.memory_space<vmem>>, vector<1x1x8xf32>
    %3 = vector.shape_cast %2 : vector<1x1x8xf32> to vector<1x8xf32>
    %c0_5 = arith.constant 0 : index
    %c0_6 = arith.constant 0 : index
    %c0_7 = arith.constant 0 : index
    %4 = vector.load %arg3[%c0_5, %c0_6, %c0_7] : memref<1x8x64xf32, #tpu.memory_space<vmem>>, vector<1x8x64xf32>
    %5 = vector.shape_cast %4 : vector<1x8x64xf32> to vector<8x64xf32>
    %c0_8 = arith.constant 0 : index
    %c0_9 = arith.constant 0 : index
    %c0_10 = arith.constant 0 : index
    %6 = vector.load %arg4[%c0_8, %c0_9, %c0_10] : memref<4x64x384xbf16, #tpu.memory_space<vmem>>, vector<1x64x384xbf16>
    %7 = vector.shape_cast %6 : vector<1x64x384xbf16> to vector<64x384xbf16>
    %c0_11 = arith.constant 0 : index
    %c0_12 = arith.constant 0 : index
    %c0_13 = arith.constant 0 : index
    %8 = vector.load %arg5[%c0_11, %c0_12, %c0_13] : memref<4x1x384xf32, #tpu.memory_space<vmem>>, vector<1x1x384xf32>
    %9 = vector.shape_cast %8 : vector<1x1x384xf32> to vector<1x384xf32>
    %c0_14 = arith.constant 0 : index
    %c0_15 = arith.constant 0 : index
    %c0_16 = arith.constant 0 : index
    %10 = vector.load %arg6[%c0_14, %c0_15, %c0_16] : memref<4x128x64xbf16, #tpu.memory_space<vmem>>, vector<1x128x64xbf16>
    %11 = vector.shape_cast %10 : vector<1x128x64xbf16> to vector<128x64xbf16>
    %c0_17 = arith.constant 0 : index
    %c0_18 = arith.constant 0 : index
    %c0_19 = arith.constant 0 : index
    %12 = vector.load %arg7[%c0_17, %c0_18, %c0_19] : memref<4x1x64xf32, #tpu.memory_space<vmem>>, vector<1x1x64xf32>
    %13 = vector.shape_cast %12 : vector<1x1x64xf32> to vector<1x64xf32>
    %c0_20 = arith.constant 0 : index
    %c0_21 = arith.constant 0 : index
    %c0_22 = arith.constant 0 : index
    %14 = vector.load %arg10[%c0_20, %c0_21, %c0_22] : memref<4x64x16xbf16, #tpu.memory_space<vmem>>, vector<1x64x16xbf16>
    %15 = vector.shape_cast %14 : vector<1x64x16xbf16> to vector<64x16xbf16>
    %c0_23 = arith.constant 0 : index
    %c0_24 = arith.constant 0 : index
    %c0_25 = arith.constant 0 : index
    %16 = vector.load %arg11[%c0_23, %c0_24, %c0_25] : memref<4x1x16xf32, #tpu.memory_space<vmem>>, vector<1x1x16xf32>
    %17 = vector.shape_cast %16 : vector<1x1x16xf32> to vector<1x16xf32>
    %c0_26 = arith.constant 0 : index
    %c0_27 = arith.constant 0 : index
    %c0_28 = arith.constant 0 : index
    %18 = vector.load %arg12[%c0_26, %c0_27, %c0_28] : memref<4x16x64xbf16, #tpu.memory_space<vmem>>, vector<1x16x64xbf16>
    %19 = vector.shape_cast %18 : vector<1x16x64xbf16> to vector<16x64xbf16>
    %c0_29 = arith.constant 0 : index
    %c0_30 = arith.constant 0 : index
    %c0_31 = arith.constant 0 : index
    %20 = vector.load %arg13[%c0_29, %c0_30, %c0_31] : memref<4x1x64xf32, #tpu.memory_space<vmem>>, vector<1x1x64xf32>
    %21 = vector.shape_cast %20 : vector<1x1x64xf32> to vector<1x64xf32>
    %22 = arith.truncf %5 : vector<8x64xf32> to vector<8x64xbf16>
    %cst = arith.constant dense<0.000000e+00> : vector<8x384xf32>
    %23 = tpu.matmul %22, %7, %cst {dimension_numbers = #tpu.dot_dimension_numbers<[1], [0], [0], [1], [0, 0, 1, 1], [], []>} : vector<8x64xbf16>, vector<64x384xbf16>, vector<8x384xf32> -> vector<8x384xf32>
    %24 = vector.broadcast %9 : vector<1x384xf32> to vector<8x384xf32>
    %25 = arith.addf %23, %24 : vector<8x384xf32>
    %26 = arith.truncf %25 : vector<8x384xf32> to vector<8x384xbf16>
    %cst_32 = arith.constant 0.000000e+00 : f32
    %27 = vector.broadcast %cst_32 : f32 to vector<8x64xf32>
    %28 = vector.extract_strided_slice %26 {offsets = [0, 0], sizes = [8, 16], strides = [1, 1]} : vector<8x384xbf16> to vector<8x16xbf16>
    %29 = vector.extract_strided_slice %26 {offsets = [0, 128], sizes = [8, 16], strides = [1, 1]} : vector<8x384xbf16> to vector<8x16xbf16>
    %30 = vector.extract_strided_slice %26 {offsets = [0, 256], sizes = [8, 16], strides = [1, 1]} : vector<8x384xbf16> to vector<8x16xbf16>
    %cst_33 = arith.constant dense<0.000000e+00> : vector<8x8xf32>
    %31 = tpu.matmul %28, %29, %cst_33 {dimension_numbers = #tpu.dot_dimension_numbers<[1], [1], [0], [0], [0, 0, 1, 0], [], []>} : vector<8x16xbf16>, vector<8x16xbf16>, vector<8x8xf32> -> vector<8x8xf32>
    %cst_34 = arith.constant 2.500000e-01 : f32
    %32 = vector.broadcast %cst_34 : f32 to vector<8x8xf32>
    %33 = arith.mulf %31, %32 : vector<8x8xf32>
    %34 = vector.broadcast %3 : vector<1x8xf32> to vector<8x8xf32>
    %35 = arith.addf %33, %34 : vector<8x8xf32>
    %cst_35 = arith.constant dense<0xFF800000> : vector<8xf32>
    %36 = vector.multi_reduction <maximumf>, %35, %cst_35 [1] : vector<8x8xf32> to vector<8xf32>
    %37 = vector.shape_cast %36 : vector<8xf32> to vector<8x1xf32>
    %38 = vector.broadcast %37 : vector<8x1xf32> to vector<8x8xf32>
    %39 = arith.subf %35, %38 : vector<8x8xf32>
    %40 = math.exp %39 : vector<8x8xf32>
    %cst_36 = arith.constant dense<0.000000e+00> : vector<8xf32>
    %41 = vector.multi_reduction <add>, %40, %cst_36 [1] : vector<8x8xf32> to vector<8xf32>
    %42 = vector.shape_cast %41 : vector<8xf32> to vector<8x1xf32>
    %43 = tpu.reciprocal %42 {approx = true} : vector<8x1xf32> -> vector<8x1xf32>
    %44 = vector.broadcast %43 : vector<8x1xf32> to vector<8x8xf32>
    %45 = arith.mulf %40, %44 : vector<8x8xf32>
    %46 = arith.truncf %45 : vector<8x8xf32> to vector<8x8xbf16>
    %cst_37 = arith.constant dense<0.000000e+00> : vector<8x16xf32>
    %47 = tpu.matmul %46, %30, %cst_37 {dimension_numbers = #tpu.dot_dimension_numbers<[1], [0], [0], [1], [0, 0, 1, 1], [], []>} : vector<8x8xbf16>, vector<8x16xbf16>, vector<8x16xf32> -> vector<8x16xf32>
    %48 = arith.truncf %47 : vector<8x16xf32> to vector<8x16xbf16>
    %49 = vector.extract_strided_slice %11 {offsets = [0, 0], sizes = [16, 64], strides = [1, 1]} : vector<128x64xbf16> to vector<16x64xbf16>
    %cst_38 = arith.constant dense<0.000000e+00> : vector<8x64xf32>
    %50 = tpu.matmul %48, %49, %cst_38 {dimension_numbers = #tpu.dot_dimension_numbers<[1], [0], [0], [1], [0, 0, 1, 1], [], []>} : vector<8x16xbf16>, vector<16x64xbf16>, vector<8x64xf32> -> vector<8x64xf32>
    %51 = arith.addf %27, %50 : vector<8x64xf32>
    %52 = vector.extract_strided_slice %26 {offsets = [0, 16], sizes = [8, 16], strides = [1, 1]} : vector<8x384xbf16> to vector<8x16xbf16>
    %53 = vector.extract_strided_slice %26 {offsets = [0, 144], sizes = [8, 16], strides = [1, 1]} : vector<8x384xbf16> to vector<8x16xbf16>
    %54 = vector.extract_strided_slice %26 {offsets = [0, 272], sizes = [8, 16], strides = [1, 1]} : vector<8x384xbf16> to vector<8x16xbf16>
    %cst_39 = arith.constant dense<0.000000e+00> : vector<8x8xf32>
    %55 = tpu.matmul %52, %53, %cst_39 {dimension_numbers = #tpu.dot_dimension_numbers<[1], [1], [0], [0], [0, 0, 1, 0], [], []>} : vector<8x16xbf16>, vector<8x16xbf16>, vector<8x8xf32> -> vector<8x8xf32>
    %cst_40 = arith.constant 2.500000e-01 : f32
    %56 = vector.broadcast %cst_40 : f32 to vector<8x8xf32>
    %57 = arith.mulf %55, %56 : vector<8x8xf32>
    %58 = vector.broadcast %3 : vector<1x8xf32> to vector<8x8xf32>
    %59 = arith.addf %57, %58 : vector<8x8xf32>
    %cst_41 = arith.constant dense<0xFF800000> : vector<8xf32>
    %60 = vector.multi_reduction <maximumf>, %59, %cst_41 [1] : vector<8x8xf32> to vector<8xf32>
    %61 = vector.shape_cast %60 : vector<8xf32> to vector<8x1xf32>
    %62 = vector.broadcast %61 : vector<8x1xf32> to vector<8x8xf32>
    %63 = arith.subf %59, %62 : vector<8x8xf32>
    %64 = math.exp %63 : vector<8x8xf32>
    %cst_42 = arith.constant dense<0.000000e+00> : vector<8xf32>
    %65 = vector.multi_reduction <add>, %64, %cst_42 [1] : vector<8x8xf32> to vector<8xf32>
    %66 = vector.shape_cast %65 : vector<8xf32> to vector<8x1xf32>
    %67 = tpu.reciprocal %66 {approx = true} : vector<8x1xf32> -> vector<8x1xf32>
    %68 = vector.broadcast %67 : vector<8x1xf32> to vector<8x8xf32>
    %69 = arith.mulf %64, %68 : vector<8x8xf32>
    %70 = arith.truncf %69 : vector<8x8xf32> to vector<8x8xbf16>
    %cst_43 = arith.constant dense<0.000000e+00> : vector<8x16xf32>
    %71 = tpu.matmul %70, %54, %cst_43 {dimension_numbers = #tpu.dot_dimension_numbers<[1], [0], [0], [1], [0, 0, 1, 1], [], []>} : vector<8x8xbf16>, vector<8x16xbf16>, vector<8x16xf32> -> vector<8x16xf32>
    %72 = arith.truncf %71 : vector<8x16xf32> to vector<8x16xbf16>
    %73 = vector.extract_strided_slice %11 {offsets = [16, 0], sizes = [16, 64], strides = [1, 1]} : vector<128x64xbf16> to vector<16x64xbf16>
    %cst_44 = arith.constant dense<0.000000e+00> : vector<8x64xf32>
    %74 = tpu.matmul %72, %73, %cst_44 {dimension_numbers = #tpu.dot_dimension_numbers<[1], [0], [0], [1], [0, 0, 1, 1], [], []>} : vector<8x16xbf16>, vector<16x64xbf16>, vector<8x64xf32> -> vector<8x64xf32>
    %75 = arith.addf %51, %74 : vector<8x64xf32>
    %76 = vector.extract_strided_slice %26 {offsets = [0, 32], sizes = [8, 16], strides = [1, 1]} : vector<8x384xbf16> to vector<8x16xbf16>
    %77 = vector.extract_strided_slice %26 {offsets = [0, 160], sizes = [8, 16], strides = [1, 1]} : vector<8x384xbf16> to vector<8x16xbf16>
    %78 = vector.extract_strided_slice %26 {offsets = [0, 288], sizes = [8, 16], strides = [1, 1]} : vector<8x384xbf16> to vector<8x16xbf16>
    %cst_45 = arith.constant dense<0.000000e+00> : vector<8x8xf32>
    %79 = tpu.matmul %76, %77, %cst_45 {dimension_numbers = #tpu.dot_dimension_numbers<[1], [1], [0], [0], [0, 0, 1, 0], [], []>} : vector<8x16xbf16>, vector<8x16xbf16>, vector<8x8xf32> -> vector<8x8xf32>
    %cst_46 = arith.constant 2.500000e-01 : f32
    %80 = vector.broadcast %cst_46 : f32 to vector<8x8xf32>
    %81 = arith.mulf %79, %80 : vector<8x8xf32>
    %82 = vector.broadcast %3 : vector<1x8xf32> to vector<8x8xf32>
    %83 = arith.addf %81, %82 : vector<8x8xf32>
    %cst_47 = arith.constant dense<0xFF800000> : vector<8xf32>
    %84 = vector.multi_reduction <maximumf>, %83, %cst_47 [1] : vector<8x8xf32> to vector<8xf32>
    %85 = vector.shape_cast %84 : vector<8xf32> to vector<8x1xf32>
    %86 = vector.broadcast %85 : vector<8x1xf32> to vector<8x8xf32>
    %87 = arith.subf %83, %86 : vector<8x8xf32>
    %88 = math.exp %87 : vector<8x8xf32>
    %cst_48 = arith.constant dense<0.000000e+00> : vector<8xf32>
    %89 = vector.multi_reduction <add>, %88, %cst_48 [1] : vector<8x8xf32> to vector<8xf32>
    %90 = vector.shape_cast %89 : vector<8xf32> to vector<8x1xf32>
    %91 = tpu.reciprocal %90 {approx = true} : vector<8x1xf32> -> vector<8x1xf32>
    %92 = vector.broadcast %91 : vector<8x1xf32> to vector<8x8xf32>
    %93 = arith.mulf %88, %92 : vector<8x8xf32>
    %94 = arith.truncf %93 : vector<8x8xf32> to vector<8x8xbf16>
    %cst_49 = arith.constant dense<0.000000e+00> : vector<8x16xf32>
    %95 = tpu.matmul %94, %78, %cst_49 {dimension_numbers = #tpu.dot_dimension_numbers<[1], [0], [0], [1], [0, 0, 1, 1], [], []>} : vector<8x8xbf16>, vector<8x16xbf16>, vector<8x16xf32> -> vector<8x16xf32>
    %96 = arith.truncf %95 : vector<8x16xf32> to vector<8x16xbf16>
    %97 = vector.extract_strided_slice %11 {offsets = [32, 0], sizes = [16, 64], strides = [1, 1]} : vector<128x64xbf16> to vector<16x64xbf16>
    %cst_50 = arith.constant dense<0.000000e+00> : vector<8x64xf32>
    %98 = tpu.matmul %96, %97, %cst_50 {dimension_numbers = #tpu.dot_dimension_numbers<[1], [0], [0], [1], [0, 0, 1, 1], [], []>} : vector<8x16xbf16>, vector<16x64xbf16>, vector<8x64xf32> -> vector<8x64xf32>
    %99 = arith.addf %75, %98 : vector<8x64xf32>
    %100 = vector.extract_strided_slice %26 {offsets = [0, 48], sizes = [8, 16], strides = [1, 1]} : vector<8x384xbf16> to vector<8x16xbf16>
    %101 = vector.extract_strided_slice %26 {offsets = [0, 176], sizes = [8, 16], strides = [1, 1]} : vector<8x384xbf16> to vector<8x16xbf16>
    %102 = vector.extract_strided_slice %26 {offsets = [0, 304], sizes = [8, 16], strides = [1, 1]} : vector<8x384xbf16> to vector<8x16xbf16>
    %cst_51 = arith.constant dense<0.000000e+00> : vector<8x8xf32>
    %103 = tpu.matmul %100, %101, %cst_51 {dimension_numbers = #tpu.dot_dimension_numbers<[1], [1], [0], [0], [0, 0, 1, 0], [], []>} : vector<8x16xbf16>, vector<8x16xbf16>, vector<8x8xf32> -> vector<8x8xf32>
    %cst_52 = arith.constant 2.500000e-01 : f32
    %104 = vector.broadcast %cst_52 : f32 to vector<8x8xf32>
    %105 = arith.mulf %103, %104 : vector<8x8xf32>
    %106 = vector.broadcast %3 : vector<1x8xf32> to vector<8x8xf32>
    %107 = arith.addf %105, %106 : vector<8x8xf32>
    %cst_53 = arith.constant dense<0xFF800000> : vector<8xf32>
    %108 = vector.multi_reduction <maximumf>, %107, %cst_53 [1] : vector<8x8xf32> to vector<8xf32>
    %109 = vector.shape_cast %108 : vector<8xf32> to vector<8x1xf32>
    %110 = vector.broadcast %109 : vector<8x1xf32> to vector<8x8xf32>
    %111 = arith.subf %107, %110 : vector<8x8xf32>
    %112 = math.exp %111 : vector<8x8xf32>
    %cst_54 = arith.constant dense<0.000000e+00> : vector<8xf32>
    %113 = vector.multi_reduction <add>, %112, %cst_54 [1] : vector<8x8xf32> to vector<8xf32>
    %114 = vector.shape_cast %113 : vector<8xf32> to vector<8x1xf32>
    %115 = tpu.reciprocal %114 {approx = true} : vector<8x1xf32> -> vector<8x1xf32>
    %116 = vector.broadcast %115 : vector<8x1xf32> to vector<8x8xf32>
    %117 = arith.mulf %112, %116 : vector<8x8xf32>
    %118 = arith.truncf %117 : vector<8x8xf32> to vector<8x8xbf16>
    %cst_55 = arith.constant dense<0.000000e+00> : vector<8x16xf32>
    %119 = tpu.matmul %118, %102, %cst_55 {dimension_numbers = #tpu.dot_dimension_numbers<[1], [0], [0], [1], [0, 0, 1, 1], [], []>} : vector<8x8xbf16>, vector<8x16xbf16>, vector<8x16xf32> -> vector<8x16xf32>
    %120 = arith.truncf %119 : vector<8x16xf32> to vector<8x16xbf16>
    %121 = vector.extract_strided_slice %11 {offsets = [48, 0], sizes = [16, 64], strides = [1, 1]} : vector<128x64xbf16> to vector<16x64xbf16>
    %cst_56 = arith.constant dense<0.000000e+00> : vector<8x64xf32>
    %122 = tpu.matmul %120, %121, %cst_56 {dimension_numbers = #tpu.dot_dimension_numbers<[1], [0], [0], [1], [0, 0, 1, 1], [], []>} : vector<8x16xbf16>, vector<16x64xbf16>, vector<8x64xf32> -> vector<8x64xf32>
    %123 = arith.addf %99, %122 : vector<8x64xf32>
    %124 = vector.extract_strided_slice %26 {offsets = [0, 64], sizes = [8, 16], strides = [1, 1]} : vector<8x384xbf16> to vector<8x16xbf16>
    %125 = vector.extract_strided_slice %26 {offsets = [0, 192], sizes = [8, 16], strides = [1, 1]} : vector<8x384xbf16> to vector<8x16xbf16>
    %126 = vector.extract_strided_slice %26 {offsets = [0, 320], sizes = [8, 16], strides = [1, 1]} : vector<8x384xbf16> to vector<8x16xbf16>
    %cst_57 = arith.constant dense<0.000000e+00> : vector<8x8xf32>
    %127 = tpu.matmul %124, %125, %cst_57 {dimension_numbers = #tpu.dot_dimension_numbers<[1], [1], [0], [0], [0, 0, 1, 0], [], []>} : vector<8x16xbf16>, vector<8x16xbf16>, vector<8x8xf32> -> vector<8x8xf32>
    %cst_58 = arith.constant 2.500000e-01 : f32
    %128 = vector.broadcast %cst_58 : f32 to vector<8x8xf32>
    %129 = arith.mulf %127, %128 : vector<8x8xf32>
    %130 = vector.broadcast %3 : vector<1x8xf32> to vector<8x8xf32>
    %131 = arith.addf %129, %130 : vector<8x8xf32>
    %cst_59 = arith.constant dense<0xFF800000> : vector<8xf32>
    %132 = vector.multi_reduction <maximumf>, %131, %cst_59 [1] : vector<8x8xf32> to vector<8xf32>
    %133 = vector.shape_cast %132 : vector<8xf32> to vector<8x1xf32>
    %134 = vector.broadcast %133 : vector<8x1xf32> to vector<8x8xf32>
    %135 = arith.subf %131, %134 : vector<8x8xf32>
    %136 = math.exp %135 : vector<8x8xf32>
    %cst_60 = arith.constant dense<0.000000e+00> : vector<8xf32>
    %137 = vector.multi_reduction <add>, %136, %cst_60 [1] : vector<8x8xf32> to vector<8xf32>
    %138 = vector.shape_cast %137 : vector<8xf32> to vector<8x1xf32>
    %139 = tpu.reciprocal %138 {approx = true} : vector<8x1xf32> -> vector<8x1xf32>
    %140 = vector.broadcast %139 : vector<8x1xf32> to vector<8x8xf32>
    %141 = arith.mulf %136, %140 : vector<8x8xf32>
    %142 = arith.truncf %141 : vector<8x8xf32> to vector<8x8xbf16>
    %cst_61 = arith.constant dense<0.000000e+00> : vector<8x16xf32>
    %143 = tpu.matmul %142, %126, %cst_61 {dimension_numbers = #tpu.dot_dimension_numbers<[1], [0], [0], [1], [0, 0, 1, 1], [], []>} : vector<8x8xbf16>, vector<8x16xbf16>, vector<8x16xf32> -> vector<8x16xf32>
    %144 = arith.truncf %143 : vector<8x16xf32> to vector<8x16xbf16>
    %145 = vector.extract_strided_slice %11 {offsets = [64, 0], sizes = [16, 64], strides = [1, 1]} : vector<128x64xbf16> to vector<16x64xbf16>
    %cst_62 = arith.constant dense<0.000000e+00> : vector<8x64xf32>
    %146 = tpu.matmul %144, %145, %cst_62 {dimension_numbers = #tpu.dot_dimension_numbers<[1], [0], [0], [1], [0, 0, 1, 1], [], []>} : vector<8x16xbf16>, vector<16x64xbf16>, vector<8x64xf32> -> vector<8x64xf32>
    %147 = arith.addf %123, %146 : vector<8x64xf32>
    %148 = vector.extract_strided_slice %26 {offsets = [0, 80], sizes = [8, 16], strides = [1, 1]} : vector<8x384xbf16> to vector<8x16xbf16>
    %149 = vector.extract_strided_slice %26 {offsets = [0, 208], sizes = [8, 16], strides = [1, 1]} : vector<8x384xbf16> to vector<8x16xbf16>
    %150 = vector.extract_strided_slice %26 {offsets = [0, 336], sizes = [8, 16], strides = [1, 1]} : vector<8x384xbf16> to vector<8x16xbf16>
    %cst_63 = arith.constant dense<0.000000e+00> : vector<8x8xf32>
    %151 = tpu.matmul %148, %149, %cst_63 {dimension_numbers = #tpu.dot_dimension_numbers<[1], [1], [0], [0], [0, 0, 1, 0], [], []>} : vector<8x16xbf16>, vector<8x16xbf16>, vector<8x8xf32> -> vector<8x8xf32>
    %cst_64 = arith.constant 2.500000e-01 : f32
    %152 = vector.broadcast %cst_64 : f32 to vector<8x8xf32>
    %153 = arith.mulf %151, %152 : vector<8x8xf32>
    %154 = vector.broadcast %3 : vector<1x8xf32> to vector<8x8xf32>
    %155 = arith.addf %153, %154 : vector<8x8xf32>
    %cst_65 = arith.constant dense<0xFF800000> : vector<8xf32>
    %156 = vector.multi_reduction <maximumf>, %155, %cst_65 [1] : vector<8x8xf32> to vector<8xf32>
    %157 = vector.shape_cast %156 : vector<8xf32> to vector<8x1xf32>
    %158 = vector.broadcast %157 : vector<8x1xf32> to vector<8x8xf32>
    %159 = arith.subf %155, %158 : vector<8x8xf32>
    %160 = math.exp %159 : vector<8x8xf32>
    %cst_66 = arith.constant dense<0.000000e+00> : vector<8xf32>
    %161 = vector.multi_reduction <add>, %160, %cst_66 [1] : vector<8x8xf32> to vector<8xf32>
    %162 = vector.shape_cast %161 : vector<8xf32> to vector<8x1xf32>
    %163 = tpu.reciprocal %162 {approx = true} : vector<8x1xf32> -> vector<8x1xf32>
    %164 = vector.broadcast %163 : vector<8x1xf32> to vector<8x8xf32>
    %165 = arith.mulf %160, %164 : vector<8x8xf32>
    %166 = arith.truncf %165 : vector<8x8xf32> to vector<8x8xbf16>
    %cst_67 = arith.constant dense<0.000000e+00> : vector<8x16xf32>
    %167 = tpu.matmul %166, %150, %cst_67 {dimension_numbers = #tpu.dot_dimension_numbers<[1], [0], [0], [1], [0, 0, 1, 1], [], []>} : vector<8x8xbf16>, vector<8x16xbf16>, vector<8x16xf32> -> vector<8x16xf32>
    %168 = arith.truncf %167 : vector<8x16xf32> to vector<8x16xbf16>
    %169 = vector.extract_strided_slice %11 {offsets = [80, 0], sizes = [16, 64], strides = [1, 1]} : vector<128x64xbf16> to vector<16x64xbf16>
    %cst_68 = arith.constant dense<0.000000e+00> : vector<8x64xf32>
    %170 = tpu.matmul %168, %169, %cst_68 {dimension_numbers = #tpu.dot_dimension_numbers<[1], [0], [0], [1], [0, 0, 1, 1], [], []>} : vector<8x16xbf16>, vector<16x64xbf16>, vector<8x64xf32> -> vector<8x64xf32>
    %171 = arith.addf %147, %170 : vector<8x64xf32>
    %172 = vector.extract_strided_slice %26 {offsets = [0, 96], sizes = [8, 16], strides = [1, 1]} : vector<8x384xbf16> to vector<8x16xbf16>
    %173 = vector.extract_strided_slice %26 {offsets = [0, 224], sizes = [8, 16], strides = [1, 1]} : vector<8x384xbf16> to vector<8x16xbf16>
    %174 = vector.extract_strided_slice %26 {offsets = [0, 352], sizes = [8, 16], strides = [1, 1]} : vector<8x384xbf16> to vector<8x16xbf16>
    %cst_69 = arith.constant dense<0.000000e+00> : vector<8x8xf32>
    %175 = tpu.matmul %172, %173, %cst_69 {dimension_numbers = #tpu.dot_dimension_numbers<[1], [1], [0], [0], [0, 0, 1, 0], [], []>} : vector<8x16xbf16>, vector<8x16xbf16>, vector<8x8xf32> -> vector<8x8xf32>
    %cst_70 = arith.constant 2.500000e-01 : f32
    %176 = vector.broadcast %cst_70 : f32 to vector<8x8xf32>
    %177 = arith.mulf %175, %176 : vector<8x8xf32>
    %178 = vector.broadcast %3 : vector<1x8xf32> to vector<8x8xf32>
    %179 = arith.addf %177, %178 : vector<8x8xf32>
    %cst_71 = arith.constant dense<0xFF800000> : vector<8xf32>
    %180 = vector.multi_reduction <maximumf>, %179, %cst_71 [1] : vector<8x8xf32> to vector<8xf32>
    %181 = vector.shape_cast %180 : vector<8xf32> to vector<8x1xf32>
    %182 = vector.broadcast %181 : vector<8x1xf32> to vector<8x8xf32>
    %183 = arith.subf %179, %182 : vector<8x8xf32>
    %184 = math.exp %183 : vector<8x8xf32>
    %cst_72 = arith.constant dense<0.000000e+00> : vector<8xf32>
    %185 = vector.multi_reduction <add>, %184, %cst_72 [1] : vector<8x8xf32> to vector<8xf32>
    %186 = vector.shape_cast %185 : vector<8xf32> to vector<8x1xf32>
    %187 = tpu.reciprocal %186 {approx = true} : vector<8x1xf32> -> vector<8x1xf32>
    %188 = vector.broadcast %187 : vector<8x1xf32> to vector<8x8xf32>
    %189 = arith.mulf %184, %188 : vector<8x8xf32>
    %190 = arith.truncf %189 : vector<8x8xf32> to vector<8x8xbf16>
    %cst_73 = arith.constant dense<0.000000e+00> : vector<8x16xf32>
    %191 = tpu.matmul %190, %174, %cst_73 {dimension_numbers = #tpu.dot_dimension_numbers<[1], [0], [0], [1], [0, 0, 1, 1], [], []>} : vector<8x8xbf16>, vector<8x16xbf16>, vector<8x16xf32> -> vector<8x16xf32>
    %192 = arith.truncf %191 : vector<8x16xf32> to vector<8x16xbf16>
    %193 = vector.extract_strided_slice %11 {offsets = [96, 0], sizes = [16, 64], strides = [1, 1]} : vector<128x64xbf16> to vector<16x64xbf16>
    %cst_74 = arith.constant dense<0.000000e+00> : vector<8x64xf32>
    %194 = tpu.matmul %192, %193, %cst_74 {dimension_numbers = #tpu.dot_dimension_numbers<[1], [0], [0], [1], [0, 0, 1, 1], [], []>} : vector<8x16xbf16>, vector<16x64xbf16>, vector<8x64xf32> -> vector<8x64xf32>
    %195 = arith.addf %171, %194 : vector<8x64xf32>
    %196 = vector.extract_strided_slice %26 {offsets = [0, 112], sizes = [8, 16], strides = [1, 1]} : vector<8x384xbf16> to vector<8x16xbf16>
    %197 = vector.extract_strided_slice %26 {offsets = [0, 240], sizes = [8, 16], strides = [1, 1]} : vector<8x384xbf16> to vector<8x16xbf16>
    %198 = vector.extract_strided_slice %26 {offsets = [0, 368], sizes = [8, 16], strides = [1, 1]} : vector<8x384xbf16> to vector<8x16xbf16>
    %cst_75 = arith.constant dense<0.000000e+00> : vector<8x8xf32>
    %199 = tpu.matmul %196, %197, %cst_75 {dimension_numbers = #tpu.dot_dimension_numbers<[1], [1], [0], [0], [0, 0, 1, 0], [], []>} : vector<8x16xbf16>, vector<8x16xbf16>, vector<8x8xf32> -> vector<8x8xf32>
    %cst_76 = arith.constant 2.500000e-01 : f32
    %200 = vector.broadcast %cst_76 : f32 to vector<8x8xf32>
    %201 = arith.mulf %199, %200 : vector<8x8xf32>
    %202 = vector.broadcast %3 : vector<1x8xf32> to vector<8x8xf32>
    %203 = arith.addf %201, %202 : vector<8x8xf32>
    %cst_77 = arith.constant dense<0xFF800000> : vector<8xf32>
    %204 = vector.multi_reduction <maximumf>, %203, %cst_77 [1] : vector<8x8xf32> to vector<8xf32>
    %205 = vector.shape_cast %204 : vector<8xf32> to vector<8x1xf32>
    %206 = vector.broadcast %205 : vector<8x1xf32> to vector<8x8xf32>
    %207 = arith.subf %203, %206 : vector<8x8xf32>
    %208 = math.exp %207 : vector<8x8xf32>
    %cst_78 = arith.constant dense<0.000000e+00> : vector<8xf32>
    %209 = vector.multi_reduction <add>, %208, %cst_78 [1] : vector<8x8xf32> to vector<8xf32>
    %210 = vector.shape_cast %209 : vector<8xf32> to vector<8x1xf32>
    %211 = tpu.reciprocal %210 {approx = true} : vector<8x1xf32> -> vector<8x1xf32>
    %212 = vector.broadcast %211 : vector<8x1xf32> to vector<8x8xf32>
    %213 = arith.mulf %208, %212 : vector<8x8xf32>
    %214 = arith.truncf %213 : vector<8x8xf32> to vector<8x8xbf16>
    %cst_79 = arith.constant dense<0.000000e+00> : vector<8x16xf32>
    %215 = tpu.matmul %214, %198, %cst_79 {dimension_numbers = #tpu.dot_dimension_numbers<[1], [0], [0], [1], [0, 0, 1, 1], [], []>} : vector<8x8xbf16>, vector<8x16xbf16>, vector<8x16xf32> -> vector<8x16xf32>
    %216 = arith.truncf %215 : vector<8x16xf32> to vector<8x16xbf16>
    %217 = vector.extract_strided_slice %11 {offsets = [112, 0], sizes = [16, 64], strides = [1, 1]} : vector<128x64xbf16> to vector<16x64xbf16>
    %cst_80 = arith.constant dense<0.000000e+00> : vector<8x64xf32>
    %218 = tpu.matmul %216, %217, %cst_80 {dimension_numbers = #tpu.dot_dimension_numbers<[1], [0], [0], [1], [0, 0, 1, 1], [], []>} : vector<8x16xbf16>, vector<16x64xbf16>, vector<8x64xf32> -> vector<8x64xf32>
    %219 = arith.addf %195, %218 : vector<8x64xf32>
    %220 = vector.broadcast %13 : vector<1x64xf32> to vector<8x64xf32>
    %221 = arith.addf %219, %220 : vector<8x64xf32>
    %222 = arith.addf %221, %5 : vector<8x64xf32>
    %c0_81 = arith.constant 0 : index
    %c0_82 = arith.constant 0 : index
    %c0_83 = arith.constant 0 : index
    %223 = vector.load %arg8[%c0_81, %c0_82, %c0_83] : memref<4x1x64xf32, #tpu.memory_space<vmem>>, vector<1x1x64xf32>
    %224 = vector.shape_cast %223 : vector<1x1x64xf32> to vector<1x64xf32>
    %c0_84 = arith.constant 0 : index
    %c0_85 = arith.constant 0 : index
    %c0_86 = arith.constant 0 : index
    %225 = vector.load %arg9[%c0_84, %c0_85, %c0_86] : memref<4x1x64xf32, #tpu.memory_space<vmem>>, vector<1x1x64xf32>
    %226 = vector.shape_cast %225 : vector<1x1x64xf32> to vector<1x64xf32>
    %cst_87 = arith.constant dense<0.000000e+00> : vector<8xf32>
    %227 = vector.multi_reduction <add>, %222, %cst_87 [1] : vector<8x64xf32> to vector<8xf32>
    %228 = vector.shape_cast %227 : vector<8xf32> to vector<8x1xf32>
    %cst_88 = arith.constant 6.400000e+01 : f32
    %229 = vector.broadcast %cst_88 : f32 to vector<8x1xf32>
    %230 = arith.divf %228, %229 : vector<8x1xf32>
    %231 = vector.broadcast %230 : vector<8x1xf32> to vector<8x64xf32>
    %232 = arith.subf %222, %231 : vector<8x64xf32>
    %233 = arith.mulf %232, %232 : vector<8x64xf32>
    %cst_89 = arith.constant dense<0.000000e+00> : vector<8xf32>
    %234 = vector.multi_reduction <add>, %233, %cst_89 [1] : vector<8x64xf32> to vector<8xf32>
    %235 = vector.shape_cast %234 : vector<8xf32> to vector<8x1xf32>
    %cst_90 = arith.constant 6.400000e+01 : f32
    %236 = vector.broadcast %cst_90 : f32 to vector<8x1xf32>
    %237 = arith.divf %235, %236 : vector<8x1xf32>
    %238 = vector.broadcast %230 : vector<8x1xf32> to vector<8x64xf32>
    %239 = arith.subf %222, %238 : vector<8x64xf32>
    %cst_91 = arith.constant 9.99999974E-6 : f32
    %240 = vector.broadcast %cst_91 : f32 to vector<8x1xf32>
    %241 = arith.addf %237, %240 : vector<8x1xf32>
    %242 = math.rsqrt %241 : vector<8x1xf32>
    %243 = vector.broadcast %242 : vector<8x1xf32> to vector<8x64xf32>
    %244 = arith.mulf %239, %243 : vector<8x64xf32>
    %245 = vector.broadcast %224 : vector<1x64xf32> to vector<8x64xf32>
    %246 = arith.mulf %244, %245 : vector<8x64xf32>
    %247 = vector.broadcast %226 : vector<1x64xf32> to vector<8x64xf32>
    %248 = arith.addf %246, %247 : vector<8x64xf32>
    %249 = vector.broadcast %1 : vector<8x1xf32> to vector<8x64xf32>
    %250 = arith.mulf %248, %249 : vector<8x64xf32>
    %251 = arith.truncf %250 : vector<8x64xf32> to vector<8x64xbf16>
    %cst_92 = arith.constant dense<0.000000e+00> : vector<8x16xf32>
    %252 = tpu.matmul %251, %15, %cst_92 {dimension_numbers = #tpu.dot_dimension_numbers<[1], [0], [0], [1], [0, 0, 1, 1], [], []>} : vector<8x64xbf16>, vector<64x16xbf16>, vector<8x16xf32> -> vector<8x16xf32>
    %253 = vector.broadcast %17 : vector<1x16xf32> to vector<8x16xf32>
    %254 = arith.addf %252, %253 : vector<8x16xf32>
    %cst_93 = arith.constant 0.000000e+00 : f32
    %255 = vector.broadcast %cst_93 : f32 to vector<8x16xf32>
    %256 = arith.maximumf %254, %255 : vector<8x16xf32>
    %257 = arith.truncf %256 : vector<8x16xf32> to vector<8x16xbf16>
    %cst_94 = arith.constant dense<0.000000e+00> : vector<8x64xf32>
    %258 = tpu.matmul %257, %19, %cst_94 {dimension_numbers = #tpu.dot_dimension_numbers<[1], [0], [0], [1], [0, 0, 1, 1], [], []>} : vector<8x16xbf16>, vector<16x64xbf16>, vector<8x64xf32> -> vector<8x64xf32>
    %259 = vector.broadcast %21 : vector<1x64xf32> to vector<8x64xf32>
    %260 = arith.addf %258, %259 : vector<8x64xf32>
    %261 = arith.addf %260, %250 : vector<8x64xf32>
    %c0_95 = arith.constant 0 : index
    %c0_96 = arith.constant 0 : index
    %c0_97 = arith.constant 0 : index
    %262 = vector.load %arg14[%c0_95, %c0_96, %c0_97] : memref<4x1x64xf32, #tpu.memory_space<vmem>>, vector<1x1x64xf32>
    %263 = vector.shape_cast %262 : vector<1x1x64xf32> to vector<1x64xf32>
    %c0_98 = arith.constant 0 : index
    %c0_99 = arith.constant 0 : index
    %c0_100 = arith.constant 0 : index
    %264 = vector.load %arg15[%c0_98, %c0_99, %c0_100] : memref<4x1x64xf32, #tpu.memory_space<vmem>>, vector<1x1x64xf32>
    %265 = vector.shape_cast %264 : vector<1x1x64xf32> to vector<1x64xf32>
    %cst_101 = arith.constant dense<0.000000e+00> : vector<8xf32>
    %266 = vector.multi_reduction <add>, %261, %cst_101 [1] : vector<8x64xf32> to vector<8xf32>
    %267 = vector.shape_cast %266 : vector<8xf32> to vector<8x1xf32>
    %cst_102 = arith.constant 6.400000e+01 : f32
    %268 = vector.broadcast %cst_102 : f32 to vector<8x1xf32>
    %269 = arith.divf %267, %268 : vector<8x1xf32>
    %270 = vector.broadcast %269 : vector<8x1xf32> to vector<8x64xf32>
    %271 = arith.subf %261, %270 : vector<8x64xf32>
    %272 = arith.mulf %271, %271 : vector<8x64xf32>
    %cst_103 = arith.constant dense<0.000000e+00> : vector<8xf32>
    %273 = vector.multi_reduction <add>, %272, %cst_103 [1] : vector<8x64xf32> to vector<8xf32>
    %274 = vector.shape_cast %273 : vector<8xf32> to vector<8x1xf32>
    %cst_104 = arith.constant 6.400000e+01 : f32
    %275 = vector.broadcast %cst_104 : f32 to vector<8x1xf32>
    %276 = arith.divf %274, %275 : vector<8x1xf32>
    %277 = vector.broadcast %269 : vector<8x1xf32> to vector<8x64xf32>
    %278 = arith.subf %261, %277 : vector<8x64xf32>
    %cst_105 = arith.constant 9.99999974E-6 : f32
    %279 = vector.broadcast %cst_105 : f32 to vector<8x1xf32>
    %280 = arith.addf %276, %279 : vector<8x1xf32>
    %281 = math.rsqrt %280 : vector<8x1xf32>
    %282 = vector.broadcast %281 : vector<8x1xf32> to vector<8x64xf32>
    %283 = arith.mulf %278, %282 : vector<8x64xf32>
    %284 = vector.broadcast %263 : vector<1x64xf32> to vector<8x64xf32>
    %285 = arith.mulf %283, %284 : vector<8x64xf32>
    %286 = vector.broadcast %265 : vector<1x64xf32> to vector<8x64xf32>
    %287 = arith.addf %285, %286 : vector<8x64xf32>
    %288 = vector.broadcast %1 : vector<8x1xf32> to vector<8x64xf32>
    %289 = arith.mulf %287, %288 : vector<8x64xf32>
    %c1 = arith.constant 1 : index
    %c0_106 = arith.constant 0 : index
    %c0_107 = arith.constant 0 : index
    %290 = vector.load %arg4[%c1, %c0_106, %c0_107] : memref<4x64x384xbf16, #tpu.memory_space<vmem>>, vector<1x64x384xbf16>
    %291 = vector.shape_cast %290 : vector<1x64x384xbf16> to vector<64x384xbf16>
    %c1_108 = arith.constant 1 : index
    %c0_109 = arith.constant 0 : index
    %c0_110 = arith.constant 0 : index
    %292 = vector.load %arg5[%c1_108, %c0_109, %c0_110] : memref<4x1x384xf32, #tpu.memory_space<vmem>>, vector<1x1x384xf32>
    %293 = vector.shape_cast %292 : vector<1x1x384xf32> to vector<1x384xf32>
    %c1_111 = arith.constant 1 : index
    %c0_112 = arith.constant 0 : index
    %c0_113 = arith.constant 0 : index
    %294 = vector.load %arg6[%c1_111, %c0_112, %c0_113] : memref<4x128x64xbf16, #tpu.memory_space<vmem>>, vector<1x128x64xbf16>
    %295 = vector.shape_cast %294 : vector<1x128x64xbf16> to vector<128x64xbf16>
    %c1_114 = arith.constant 1 : index
    %c0_115 = arith.constant 0 : index
    %c0_116 = arith.constant 0 : index
    %296 = vector.load %arg7[%c1_114, %c0_115, %c0_116] : memref<4x1x64xf32, #tpu.memory_space<vmem>>, vector<1x1x64xf32>
    %297 = vector.shape_cast %296 : vector<1x1x64xf32> to vector<1x64xf32>
    %c1_117 = arith.constant 1 : index
    %c0_118 = arith.constant 0 : index
    %c0_119 = arith.constant 0 : index
    %298 = vector.load %arg10[%c1_117, %c0_118, %c0_119] : memref<4x64x16xbf16, #tpu.memory_space<vmem>>, vector<1x64x16xbf16>
    %299 = vector.shape_cast %298 : vector<1x64x16xbf16> to vector<64x16xbf16>
    %c1_120 = arith.constant 1 : index
    %c0_121 = arith.constant 0 : index
    %c0_122 = arith.constant 0 : index
    %300 = vector.load %arg11[%c1_120, %c0_121, %c0_122] : memref<4x1x16xf32, #tpu.memory_space<vmem>>, vector<1x1x16xf32>
    %301 = vector.shape_cast %300 : vector<1x1x16xf32> to vector<1x16xf32>
    %c1_123 = arith.constant 1 : index
    %c0_124 = arith.constant 0 : index
    %c0_125 = arith.constant 0 : index
    %302 = vector.load %arg12[%c1_123, %c0_124, %c0_125] : memref<4x16x64xbf16, #tpu.memory_space<vmem>>, vector<1x16x64xbf16>
    %303 = vector.shape_cast %302 : vector<1x16x64xbf16> to vector<16x64xbf16>
    %c1_126 = arith.constant 1 : index
    %c0_127 = arith.constant 0 : index
    %c0_128 = arith.constant 0 : index
    %304 = vector.load %arg13[%c1_126, %c0_127, %c0_128] : memref<4x1x64xf32, #tpu.memory_space<vmem>>, vector<1x1x64xf32>
    %305 = vector.shape_cast %304 : vector<1x1x64xf32> to vector<1x64xf32>
    %306 = arith.truncf %289 : vector<8x64xf32> to vector<8x64xbf16>
    %cst_129 = arith.constant dense<0.000000e+00> : vector<8x384xf32>
    %307 = tpu.matmul %306, %291, %cst_129 {dimension_numbers = #tpu.dot_dimension_numbers<[1], [0], [0], [1], [0, 0, 1, 1], [], []>} : vector<8x64xbf16>, vector<64x384xbf16>, vector<8x384xf32> -> vector<8x384xf32>
    %308 = vector.broadcast %293 : vector<1x384xf32> to vector<8x384xf32>
    %309 = arith.addf %307, %308 : vector<8x384xf32>
    %310 = arith.truncf %309 : vector<8x384xf32> to vector<8x384xbf16>
    %cst_130 = arith.constant 0.000000e+00 : f32
    %311 = vector.broadcast %cst_130 : f32 to vector<8x64xf32>
    %312 = vector.extract_strided_slice %310 {offsets = [0, 0], sizes = [8, 16], strides = [1, 1]} : vector<8x384xbf16> to vector<8x16xbf16>
    %313 = vector.extract_strided_slice %310 {offsets = [0, 128], sizes = [8, 16], strides = [1, 1]} : vector<8x384xbf16> to vector<8x16xbf16>
    %314 = vector.extract_strided_slice %310 {offsets = [0, 256], sizes = [8, 16], strides = [1, 1]} : vector<8x384xbf16> to vector<8x16xbf16>
    %cst_131 = arith.constant dense<0.000000e+00> : vector<8x8xf32>
    %315 = tpu.matmul %312, %313, %cst_131 {dimension_numbers = #tpu.dot_dimension_numbers<[1], [1], [0], [0], [0, 0, 1, 0], [], []>} : vector<8x16xbf16>, vector<8x16xbf16>, vector<8x8xf32> -> vector<8x8xf32>
    %cst_132 = arith.constant 2.500000e-01 : f32
    %316 = vector.broadcast %cst_132 : f32 to vector<8x8xf32>
    %317 = arith.mulf %315, %316 : vector<8x8xf32>
    %318 = vector.broadcast %3 : vector<1x8xf32> to vector<8x8xf32>
    %319 = arith.addf %317, %318 : vector<8x8xf32>
    %cst_133 = arith.constant dense<0xFF800000> : vector<8xf32>
    %320 = vector.multi_reduction <maximumf>, %319, %cst_133 [1] : vector<8x8xf32> to vector<8xf32>
    %321 = vector.shape_cast %320 : vector<8xf32> to vector<8x1xf32>
    %322 = vector.broadcast %321 : vector<8x1xf32> to vector<8x8xf32>
    %323 = arith.subf %319, %322 : vector<8x8xf32>
    %324 = math.exp %323 : vector<8x8xf32>
    %cst_134 = arith.constant dense<0.000000e+00> : vector<8xf32>
    %325 = vector.multi_reduction <add>, %324, %cst_134 [1] : vector<8x8xf32> to vector<8xf32>
    %326 = vector.shape_cast %325 : vector<8xf32> to vector<8x1xf32>
    %327 = tpu.reciprocal %326 {approx = true} : vector<8x1xf32> -> vector<8x1xf32>
    %328 = vector.broadcast %327 : vector<8x1xf32> to vector<8x8xf32>
    %329 = arith.mulf %324, %328 : vector<8x8xf32>
    %330 = arith.truncf %329 : vector<8x8xf32> to vector<8x8xbf16>
    %cst_135 = arith.constant dense<0.000000e+00> : vector<8x16xf32>
    %331 = tpu.matmul %330, %314, %cst_135 {dimension_numbers = #tpu.dot_dimension_numbers<[1], [0], [0], [1], [0, 0, 1, 1], [], []>} : vector<8x8xbf16>, vector<8x16xbf16>, vector<8x16xf32> -> vector<8x16xf32>
    %332 = arith.truncf %331 : vector<8x16xf32> to vector<8x16xbf16>
    %333 = vector.extract_strided_slice %295 {offsets = [0, 0], sizes = [16, 64], strides = [1, 1]} : vector<128x64xbf16> to vector<16x64xbf16>
    %cst_136 = arith.constant dense<0.000000e+00> : vector<8x64xf32>
    %334 = tpu.matmul %332, %333, %cst_136 {dimension_numbers = #tpu.dot_dimension_numbers<[1], [0], [0], [1], [0, 0, 1, 1], [], []>} : vector<8x16xbf16>, vector<16x64xbf16>, vector<8x64xf32> -> vector<8x64xf32>
    %335 = arith.addf %311, %334 : vector<8x64xf32>
    %336 = vector.extract_strided_slice %310 {offsets = [0, 16], sizes = [8, 16], strides = [1, 1]} : vector<8x384xbf16> to vector<8x16xbf16>
    %337 = vector.extract_strided_slice %310 {offsets = [0, 144], sizes = [8, 16], strides = [1, 1]} : vector<8x384xbf16> to vector<8x16xbf16>
    %338 = vector.extract_strided_slice %310 {offsets = [0, 272], sizes = [8, 16], strides = [1, 1]} : vector<8x384xbf16> to vector<8x16xbf16>
    %cst_137 = arith.constant dense<0.000000e+00> : vector<8x8xf32>
    %339 = tpu.matmul %336, %337, %cst_137 {dimension_numbers = #tpu.dot_dimension_numbers<[1], [1], [0], [0], [0, 0, 1, 0], [], []>} : vector<8x16xbf16>, vector<8x16xbf16>, vector<8x8xf32> -> vector<8x8xf32>
    %cst_138 = arith.constant 2.500000e-01 : f32
    %340 = vector.broadcast %cst_138 : f32 to vector<8x8xf32>
    %341 = arith.mulf %339, %340 : vector<8x8xf32>
    %342 = vector.broadcast %3 : vector<1x8xf32> to vector<8x8xf32>
    %343 = arith.addf %341, %342 : vector<8x8xf32>
    %cst_139 = arith.constant dense<0xFF800000> : vector<8xf32>
    %344 = vector.multi_reduction <maximumf>, %343, %cst_139 [1] : vector<8x8xf32> to vector<8xf32>
    %345 = vector.shape_cast %344 : vector<8xf32> to vector<8x1xf32>
    %346 = vector.broadcast %345 : vector<8x1xf32> to vector<8x8xf32>
    %347 = arith.subf %343, %346 : vector<8x8xf32>
    %348 = math.exp %347 : vector<8x8xf32>
    %cst_140 = arith.constant dense<0.000000e+00> : vector<8xf32>
    %349 = vector.multi_reduction <add>, %348, %cst_140 [1] : vector<8x8xf32> to vector<8xf32>
    %350 = vector.shape_cast %349 : vector<8xf32> to vector<8x1xf32>
    %351 = tpu.reciprocal %350 {approx = true} : vector<8x1xf32> -> vector<8x1xf32>
    %352 = vector.broadcast %351 : vector<8x1xf32> to vector<8x8xf32>
    %353 = arith.mulf %348, %352 : vector<8x8xf32>
    %354 = arith.truncf %353 : vector<8x8xf32> to vector<8x8xbf16>
    %cst_141 = arith.constant dense<0.000000e+00> : vector<8x16xf32>
    %355 = tpu.matmul %354, %338, %cst_141 {dimension_numbers = #tpu.dot_dimension_numbers<[1], [0], [0], [1], [0, 0, 1, 1], [], []>} : vector<8x8xbf16>, vector<8x16xbf16>, vector<8x16xf32> -> vector<8x16xf32>
    %356 = arith.truncf %355 : vector<8x16xf32> to vector<8x16xbf16>
    %357 = vector.extract_strided_slice %295 {offsets = [16, 0], sizes = [16, 64], strides = [1, 1]} : vector<128x64xbf16> to vector<16x64xbf16>
    %cst_142 = arith.constant dense<0.000000e+00> : vector<8x64xf32>
    %358 = tpu.matmul %356, %357, %cst_142 {dimension_numbers = #tpu.dot_dimension_numbers<[1], [0], [0], [1], [0, 0, 1, 1], [], []>} : vector<8x16xbf16>, vector<16x64xbf16>, vector<8x64xf32> -> vector<8x64xf32>
    %359 = arith.addf %335, %358 : vector<8x64xf32>
    %360 = vector.extract_strided_slice %310 {offsets = [0, 32], sizes = [8, 16], strides = [1, 1]} : vector<8x384xbf16> to vector<8x16xbf16>
    %361 = vector.extract_strided_slice %310 {offsets = [0, 160], sizes = [8, 16], strides = [1, 1]} : vector<8x384xbf16> to vector<8x16xbf16>
    %362 = vector.extract_strided_slice %310 {offsets = [0, 288], sizes = [8, 16], strides = [1, 1]} : vector<8x384xbf16> to vector<8x16xbf16>
    %cst_143 = arith.constant dense<0.000000e+00> : vector<8x8xf32>
    %363 = tpu.matmul %360, %361, %cst_143 {dimension_numbers = #tpu.dot_dimension_numbers<[1], [1], [0], [0], [0, 0, 1, 0], [], []>} : vector<8x16xbf16>, vector<8x16xbf16>, vector<8x8xf32> -> vector<8x8xf32>
    %cst_144 = arith.constant 2.500000e-01 : f32
    %364 = vector.broadcast %cst_144 : f32 to vector<8x8xf32>
    %365 = arith.mulf %363, %364 : vector<8x8xf32>
    %366 = vector.broadcast %3 : vector<1x8xf32> to vector<8x8xf32>
    %367 = arith.addf %365, %366 : vector<8x8xf32>
    %cst_145 = arith.constant dense<0xFF800000> : vector<8xf32>
    %368 = vector.multi_reduction <maximumf>, %367, %cst_145 [1] : vector<8x8xf32> to vector<8xf32>
    %369 = vector.shape_cast %368 : vector<8xf32> to vector<8x1xf32>
    %370 = vector.broadcast %369 : vector<8x1xf32> to vector<8x8xf32>
    %371 = arith.subf %367, %370 : vector<8x8xf32>
    %372 = math.exp %371 : vector<8x8xf32>
    %cst_146 = arith.constant dense<0.000000e+00> : vector<8xf32>
    %373 = vector.multi_reduction <add>, %372, %cst_146 [1] : vector<8x8xf32> to vector<8xf32>
    %374 = vector.shape_cast %373 : vector<8xf32> to vector<8x1xf32>
    %375 = tpu.reciprocal %374 {approx = true} : vector<8x1xf32> -> vector<8x1xf32>
    %376 = vector.broadcast %375 : vector<8x1xf32> to vector<8x8xf32>
    %377 = arith.mulf %372, %376 : vector<8x8xf32>
    %378 = arith.truncf %377 : vector<8x8xf32> to vector<8x8xbf16>
    %cst_147 = arith.constant dense<0.000000e+00> : vector<8x16xf32>
    %379 = tpu.matmul %378, %362, %cst_147 {dimension_numbers = #tpu.dot_dimension_numbers<[1], [0], [0], [1], [0, 0, 1, 1], [], []>} : vector<8x8xbf16>, vector<8x16xbf16>, vector<8x16xf32> -> vector<8x16xf32>
    %380 = arith.truncf %379 : vector<8x16xf32> to vector<8x16xbf16>
    %381 = vector.extract_strided_slice %295 {offsets = [32, 0], sizes = [16, 64], strides = [1, 1]} : vector<128x64xbf16> to vector<16x64xbf16>
    %cst_148 = arith.constant dense<0.000000e+00> : vector<8x64xf32>
    %382 = tpu.matmul %380, %381, %cst_148 {dimension_numbers = #tpu.dot_dimension_numbers<[1], [0], [0], [1], [0, 0, 1, 1], [], []>} : vector<8x16xbf16>, vector<16x64xbf16>, vector<8x64xf32> -> vector<8x64xf32>
    %383 = arith.addf %359, %382 : vector<8x64xf32>
    %384 = vector.extract_strided_slice %310 {offsets = [0, 48], sizes = [8, 16], strides = [1, 1]} : vector<8x384xbf16> to vector<8x16xbf16>
    %385 = vector.extract_strided_slice %310 {offsets = [0, 176], sizes = [8, 16], strides = [1, 1]} : vector<8x384xbf16> to vector<8x16xbf16>
    %386 = vector.extract_strided_slice %310 {offsets = [0, 304], sizes = [8, 16], strides = [1, 1]} : vector<8x384xbf16> to vector<8x16xbf16>
    %cst_149 = arith.constant dense<0.000000e+00> : vector<8x8xf32>
    %387 = tpu.matmul %384, %385, %cst_149 {dimension_numbers = #tpu.dot_dimension_numbers<[1], [1], [0], [0], [0, 0, 1, 0], [], []>} : vector<8x16xbf16>, vector<8x16xbf16>, vector<8x8xf32> -> vector<8x8xf32>
    %cst_150 = arith.constant 2.500000e-01 : f32
    %388 = vector.broadcast %cst_150 : f32 to vector<8x8xf32>
    %389 = arith.mulf %387, %388 : vector<8x8xf32>
    %390 = vector.broadcast %3 : vector<1x8xf32> to vector<8x8xf32>
    %391 = arith.addf %389, %390 : vector<8x8xf32>
    %cst_151 = arith.constant dense<0xFF800000> : vector<8xf32>
    %392 = vector.multi_reduction <maximumf>, %391, %cst_151 [1] : vector<8x8xf32> to vector<8xf32>
    %393 = vector.shape_cast %392 : vector<8xf32> to vector<8x1xf32>
    %394 = vector.broadcast %393 : vector<8x1xf32> to vector<8x8xf32>
    %395 = arith.subf %391, %394 : vector<8x8xf32>
    %396 = math.exp %395 : vector<8x8xf32>
    %cst_152 = arith.constant dense<0.000000e+00> : vector<8xf32>
    %397 = vector.multi_reduction <add>, %396, %cst_152 [1] : vector<8x8xf32> to vector<8xf32>
    %398 = vector.shape_cast %397 : vector<8xf32> to vector<8x1xf32>
    %399 = tpu.reciprocal %398 {approx = true} : vector<8x1xf32> -> vector<8x1xf32>
    %400 = vector.broadcast %399 : vector<8x1xf32> to vector<8x8xf32>
    %401 = arith.mulf %396, %400 : vector<8x8xf32>
    %402 = arith.truncf %401 : vector<8x8xf32> to vector<8x8xbf16>
    %cst_153 = arith.constant dense<0.000000e+00> : vector<8x16xf32>
    %403 = tpu.matmul %402, %386, %cst_153 {dimension_numbers = #tpu.dot_dimension_numbers<[1], [0], [0], [1], [0, 0, 1, 1], [], []>} : vector<8x8xbf16>, vector<8x16xbf16>, vector<8x16xf32> -> vector<8x16xf32>
    %404 = arith.truncf %403 : vector<8x16xf32> to vector<8x16xbf16>
    %405 = vector.extract_strided_slice %295 {offsets = [48, 0], sizes = [16, 64], strides = [1, 1]} : vector<128x64xbf16> to vector<16x64xbf16>
    %cst_154 = arith.constant dense<0.000000e+00> : vector<8x64xf32>
    %406 = tpu.matmul %404, %405, %cst_154 {dimension_numbers = #tpu.dot_dimension_numbers<[1], [0], [0], [1], [0, 0, 1, 1], [], []>} : vector<8x16xbf16>, vector<16x64xbf16>, vector<8x64xf32> -> vector<8x64xf32>
    %407 = arith.addf %383, %406 : vector<8x64xf32>
    %408 = vector.extract_strided_slice %310 {offsets = [0, 64], sizes = [8, 16], strides = [1, 1]} : vector<8x384xbf16> to vector<8x16xbf16>
    %409 = vector.extract_strided_slice %310 {offsets = [0, 192], sizes = [8, 16], strides = [1, 1]} : vector<8x384xbf16> to vector<8x16xbf16>
    %410 = vector.extract_strided_slice %310 {offsets = [0, 320], sizes = [8, 16], strides = [1, 1]} : vector<8x384xbf16> to vector<8x16xbf16>
    %cst_155 = arith.constant dense<0.000000e+00> : vector<8x8xf32>
    %411 = tpu.matmul %408, %409, %cst_155 {dimension_numbers = #tpu.dot_dimension_numbers<[1], [1], [0], [0], [0, 0, 1, 0], [], []>} : vector<8x16xbf16>, vector<8x16xbf16>, vector<8x8xf32> -> vector<8x8xf32>
    %cst_156 = arith.constant 2.500000e-01 : f32
    %412 = vector.broadcast %cst_156 : f32 to vector<8x8xf32>
    %413 = arith.mulf %411, %412 : vector<8x8xf32>
    %414 = vector.broadcast %3 : vector<1x8xf32> to vector<8x8xf32>
    %415 = arith.addf %413, %414 : vector<8x8xf32>
    %cst_157 = arith.constant dense<0xFF800000> : vector<8xf32>
    %416 = vector.multi_reduction <maximumf>, %415, %cst_157 [1] : vector<8x8xf32> to vector<8xf32>
    %417 = vector.shape_cast %416 : vector<8xf32> to vector<8x1xf32>
    %418 = vector.broadcast %417 : vector<8x1xf32> to vector<8x8xf32>
    %419 = arith.subf %415, %418 : vector<8x8xf32>
    %420 = math.exp %419 : vector<8x8xf32>
    %cst_158 = arith.constant dense<0.000000e+00> : vector<8xf32>
    %421 = vector.multi_reduction <add>, %420, %cst_158 [1] : vector<8x8xf32> to vector<8xf32>
    %422 = vector.shape_cast %421 : vector<8xf32> to vector<8x1xf32>
    %423 = tpu.reciprocal %422 {approx = true} : vector<8x1xf32> -> vector<8x1xf32>
    %424 = vector.broadcast %423 : vector<8x1xf32> to vector<8x8xf32>
    %425 = arith.mulf %420, %424 : vector<8x8xf32>
    %426 = arith.truncf %425 : vector<8x8xf32> to vector<8x8xbf16>
    %cst_159 = arith.constant dense<0.000000e+00> : vector<8x16xf32>
    %427 = tpu.matmul %426, %410, %cst_159 {dimension_numbers = #tpu.dot_dimension_numbers<[1], [0], [0], [1], [0, 0, 1, 1], [], []>} : vector<8x8xbf16>, vector<8x16xbf16>, vector<8x16xf32> -> vector<8x16xf32>
    %428 = arith.truncf %427 : vector<8x16xf32> to vector<8x16xbf16>
    %429 = vector.extract_strided_slice %295 {offsets = [64, 0], sizes = [16, 64], strides = [1, 1]} : vector<128x64xbf16> to vector<16x64xbf16>
    %cst_160 = arith.constant dense<0.000000e+00> : vector<8x64xf32>
    %430 = tpu.matmul %428, %429, %cst_160 {dimension_numbers = #tpu.dot_dimension_numbers<[1], [0], [0], [1], [0, 0, 1, 1], [], []>} : vector<8x16xbf16>, vector<16x64xbf16>, vector<8x64xf32> -> vector<8x64xf32>
    %431 = arith.addf %407, %430 : vector<8x64xf32>
    %432 = vector.extract_strided_slice %310 {offsets = [0, 80], sizes = [8, 16], strides = [1, 1]} : vector<8x384xbf16> to vector<8x16xbf16>
    %433 = vector.extract_strided_slice %310 {offsets = [0, 208], sizes = [8, 16], strides = [1, 1]} : vector<8x384xbf16> to vector<8x16xbf16>
    %434 = vector.extract_strided_slice %310 {offsets = [0, 336], sizes = [8, 16], strides = [1, 1]} : vector<8x384xbf16> to vector<8x16xbf16>
    %cst_161 = arith.constant dense<0.000000e+00> : vector<8x8xf32>
    %435 = tpu.matmul %432, %433, %cst_161 {dimension_numbers = #tpu.dot_dimension_numbers<[1], [1], [0], [0], [0, 0, 1, 0], [], []>} : vector<8x16xbf16>, vector<8x16xbf16>, vector<8x8xf32> -> vector<8x8xf32>
    %cst_162 = arith.constant 2.500000e-01 : f32
    %436 = vector.broadcast %cst_162 : f32 to vector<8x8xf32>
    %437 = arith.mulf %435, %436 : vector<8x8xf32>
    %438 = vector.broadcast %3 : vector<1x8xf32> to vector<8x8xf32>
    %439 = arith.addf %437, %438 : vector<8x8xf32>
    %cst_163 = arith.constant dense<0xFF800000> : vector<8xf32>
    %440 = vector.multi_reduction <maximumf>, %439, %cst_163 [1] : vector<8x8xf32> to vector<8xf32>
    %441 = vector.shape_cast %440 : vector<8xf32> to vector<8x1xf32>
    %442 = vector.broadcast %441 : vector<8x1xf32> to vector<8x8xf32>
    %443 = arith.subf %439, %442 : vector<8x8xf32>
    %444 = math.exp %443 : vector<8x8xf32>
    %cst_164 = arith.constant dense<0.000000e+00> : vector<8xf32>
    %445 = vector.multi_reduction <add>, %444, %cst_164 [1] : vector<8x8xf32> to vector<8xf32>
    %446 = vector.shape_cast %445 : vector<8xf32> to vector<8x1xf32>
    %447 = tpu.reciprocal %446 {approx = true} : vector<8x1xf32> -> vector<8x1xf32>
    %448 = vector.broadcast %447 : vector<8x1xf32> to vector<8x8xf32>
    %449 = arith.mulf %444, %448 : vector<8x8xf32>
    %450 = arith.truncf %449 : vector<8x8xf32> to vector<8x8xbf16>
    %cst_165 = arith.constant dense<0.000000e+00> : vector<8x16xf32>
    %451 = tpu.matmul %450, %434, %cst_165 {dimension_numbers = #tpu.dot_dimension_numbers<[1], [0], [0], [1], [0, 0, 1, 1], [], []>} : vector<8x8xbf16>, vector<8x16xbf16>, vector<8x16xf32> -> vector<8x16xf32>
    %452 = arith.truncf %451 : vector<8x16xf32> to vector<8x16xbf16>
    %453 = vector.extract_strided_slice %295 {offsets = [80, 0], sizes = [16, 64], strides = [1, 1]} : vector<128x64xbf16> to vector<16x64xbf16>
    %cst_166 = arith.constant dense<0.000000e+00> : vector<8x64xf32>
    %454 = tpu.matmul %452, %453, %cst_166 {dimension_numbers = #tpu.dot_dimension_numbers<[1], [0], [0], [1], [0, 0, 1, 1], [], []>} : vector<8x16xbf16>, vector<16x64xbf16>, vector<8x64xf32> -> vector<8x64xf32>
    %455 = arith.addf %431, %454 : vector<8x64xf32>
    %456 = vector.extract_strided_slice %310 {offsets = [0, 96], sizes = [8, 16], strides = [1, 1]} : vector<8x384xbf16> to vector<8x16xbf16>
    %457 = vector.extract_strided_slice %310 {offsets = [0, 224], sizes = [8, 16], strides = [1, 1]} : vector<8x384xbf16> to vector<8x16xbf16>
    %458 = vector.extract_strided_slice %310 {offsets = [0, 352], sizes = [8, 16], strides = [1, 1]} : vector<8x384xbf16> to vector<8x16xbf16>
    %cst_167 = arith.constant dense<0.000000e+00> : vector<8x8xf32>
    %459 = tpu.matmul %456, %457, %cst_167 {dimension_numbers = #tpu.dot_dimension_numbers<[1], [1], [0], [0], [0, 0, 1, 0], [], []>} : vector<8x16xbf16>, vector<8x16xbf16>, vector<8x8xf32> -> vector<8x8xf32>
    %cst_168 = arith.constant 2.500000e-01 : f32
    %460 = vector.broadcast %cst_168 : f32 to vector<8x8xf32>
    %461 = arith.mulf %459, %460 : vector<8x8xf32>
    %462 = vector.broadcast %3 : vector<1x8xf32> to vector<8x8xf32>
    %463 = arith.addf %461, %462 : vector<8x8xf32>
    %cst_169 = arith.constant dense<0xFF800000> : vector<8xf32>
    %464 = vector.multi_reduction <maximumf>, %463, %cst_169 [1] : vector<8x8xf32> to vector<8xf32>
    %465 = vector.shape_cast %464 : vector<8xf32> to vector<8x1xf32>
    %466 = vector.broadcast %465 : vector<8x1xf32> to vector<8x8xf32>
    %467 = arith.subf %463, %466 : vector<8x8xf32>
    %468 = math.exp %467 : vector<8x8xf32>
    %cst_170 = arith.constant dense<0.000000e+00> : vector<8xf32>
    %469 = vector.multi_reduction <add>, %468, %cst_170 [1] : vector<8x8xf32> to vector<8xf32>
    %470 = vector.shape_cast %469 : vector<8xf32> to vector<8x1xf32>
    %471 = tpu.reciprocal %470 {approx = true} : vector<8x1xf32> -> vector<8x1xf32>
    %472 = vector.broadcast %471 : vector<8x1xf32> to vector<8x8xf32>
    %473 = arith.mulf %468, %472 : vector<8x8xf32>
    %474 = arith.truncf %473 : vector<8x8xf32> to vector<8x8xbf16>
    %cst_171 = arith.constant dense<0.000000e+00> : vector<8x16xf32>
    %475 = tpu.matmul %474, %458, %cst_171 {dimension_numbers = #tpu.dot_dimension_numbers<[1], [0], [0], [1], [0, 0, 1, 1], [], []>} : vector<8x8xbf16>, vector<8x16xbf16>, vector<8x16xf32> -> vector<8x16xf32>
    %476 = arith.truncf %475 : vector<8x16xf32> to vector<8x16xbf16>
    %477 = vector.extract_strided_slice %295 {offsets = [96, 0], sizes = [16, 64], strides = [1, 1]} : vector<128x64xbf16> to vector<16x64xbf16>
    %cst_172 = arith.constant dense<0.000000e+00> : vector<8x64xf32>
    %478 = tpu.matmul %476, %477, %cst_172 {dimension_numbers = #tpu.dot_dimension_numbers<[1], [0], [0], [1], [0, 0, 1, 1], [], []>} : vector<8x16xbf16>, vector<16x64xbf16>, vector<8x64xf32> -> vector<8x64xf32>
    %479 = arith.addf %455, %478 : vector<8x64xf32>
    %480 = vector.extract_strided_slice %310 {offsets = [0, 112], sizes = [8, 16], strides = [1, 1]} : vector<8x384xbf16> to vector<8x16xbf16>
    %481 = vector.extract_strided_slice %310 {offsets = [0, 240], sizes = [8, 16], strides = [1, 1]} : vector<8x384xbf16> to vector<8x16xbf16>
    %482 = vector.extract_strided_slice %310 {offsets = [0, 368], sizes = [8, 16], strides = [1, 1]} : vector<8x384xbf16> to vector<8x16xbf16>
    %cst_173 = arith.constant dense<0.000000e+00> : vector<8x8xf32>
    %483 = tpu.matmul %480, %481, %cst_173 {dimension_numbers = #tpu.dot_dimension_numbers<[1], [1], [0], [0], [0, 0, 1, 0], [], []>} : vector<8x16xbf16>, vector<8x16xbf16>, vector<8x8xf32> -> vector<8x8xf32>
    %cst_174 = arith.constant 2.500000e-01 : f32
    %484 = vector.broadcast %cst_174 : f32 to vector<8x8xf32>
    %485 = arith.mulf %483, %484 : vector<8x8xf32>
    %486 = vector.broadcast %3 : vector<1x8xf32> to vector<8x8xf32>
    %487 = arith.addf %485, %486 : vector<8x8xf32>
    %cst_175 = arith.constant dense<0xFF800000> : vector<8xf32>
    %488 = vector.multi_reduction <maximumf>, %487, %cst_175 [1] : vector<8x8xf32> to vector<8xf32>
    %489 = vector.shape_cast %488 : vector<8xf32> to vector<8x1xf32>
    %490 = vector.broadcast %489 : vector<8x1xf32> to vector<8x8xf32>
    %491 = arith.subf %487, %490 : vector<8x8xf32>
    %492 = math.exp %491 : vector<8x8xf32>
    %cst_176 = arith.constant dense<0.000000e+00> : vector<8xf32>
    %493 = vector.multi_reduction <add>, %492, %cst_176 [1] : vector<8x8xf32> to vector<8xf32>
    %494 = vector.shape_cast %493 : vector<8xf32> to vector<8x1xf32>
    %495 = tpu.reciprocal %494 {approx = true} : vector<8x1xf32> -> vector<8x1xf32>
    %496 = vector.broadcast %495 : vector<8x1xf32> to vector<8x8xf32>
    %497 = arith.mulf %492, %496 : vector<8x8xf32>
    %498 = arith.truncf %497 : vector<8x8xf32> to vector<8x8xbf16>
    %cst_177 = arith.constant dense<0.000000e+00> : vector<8x16xf32>
    %499 = tpu.matmul %498, %482, %cst_177 {dimension_numbers = #tpu.dot_dimension_numbers<[1], [0], [0], [1], [0, 0, 1, 1], [], []>} : vector<8x8xbf16>, vector<8x16xbf16>, vector<8x16xf32> -> vector<8x16xf32>
    %500 = arith.truncf %499 : vector<8x16xf32> to vector<8x16xbf16>
    %501 = vector.extract_strided_slice %295 {offsets = [112, 0], sizes = [16, 64], strides = [1, 1]} : vector<128x64xbf16> to vector<16x64xbf16>
    %cst_178 = arith.constant dense<0.000000e+00> : vector<8x64xf32>
    %502 = tpu.matmul %500, %501, %cst_178 {dimension_numbers = #tpu.dot_dimension_numbers<[1], [0], [0], [1], [0, 0, 1, 1], [], []>} : vector<8x16xbf16>, vector<16x64xbf16>, vector<8x64xf32> -> vector<8x64xf32>
    %503 = arith.addf %479, %502 : vector<8x64xf32>
    %504 = vector.broadcast %297 : vector<1x64xf32> to vector<8x64xf32>
    %505 = arith.addf %503, %504 : vector<8x64xf32>
    %506 = arith.addf %505, %289 : vector<8x64xf32>
    %c1_179 = arith.constant 1 : index
    %c0_180 = arith.constant 0 : index
    %c0_181 = arith.constant 0 : index
    %507 = vector.load %arg8[%c1_179, %c0_180, %c0_181] : memref<4x1x64xf32, #tpu.memory_space<vmem>>, vector<1x1x64xf32>
    %508 = vector.shape_cast %507 : vector<1x1x64xf32> to vector<1x64xf32>
    %c1_182 = arith.constant 1 : index
    %c0_183 = arith.constant 0 : index
    %c0_184 = arith.constant 0 : index
    %509 = vector.load %arg9[%c1_182, %c0_183, %c0_184] : memref<4x1x64xf32, #tpu.memory_space<vmem>>, vector<1x1x64xf32>
    %510 = vector.shape_cast %509 : vector<1x1x64xf32> to vector<1x64xf32>
    %cst_185 = arith.constant dense<0.000000e+00> : vector<8xf32>
    %511 = vector.multi_reduction <add>, %506, %cst_185 [1] : vector<8x64xf32> to vector<8xf32>
    %512 = vector.shape_cast %511 : vector<8xf32> to vector<8x1xf32>
    %cst_186 = arith.constant 6.400000e+01 : f32
    %513 = vector.broadcast %cst_186 : f32 to vector<8x1xf32>
    %514 = arith.divf %512, %513 : vector<8x1xf32>
    %515 = vector.broadcast %514 : vector<8x1xf32> to vector<8x64xf32>
    %516 = arith.subf %506, %515 : vector<8x64xf32>
    %517 = arith.mulf %516, %516 : vector<8x64xf32>
    %cst_187 = arith.constant dense<0.000000e+00> : vector<8xf32>
    %518 = vector.multi_reduction <add>, %517, %cst_187 [1] : vector<8x64xf32> to vector<8xf32>
    %519 = vector.shape_cast %518 : vector<8xf32> to vector<8x1xf32>
    %cst_188 = arith.constant 6.400000e+01 : f32
    %520 = vector.broadcast %cst_188 : f32 to vector<8x1xf32>
    %521 = arith.divf %519, %520 : vector<8x1xf32>
    %522 = vector.broadcast %514 : vector<8x1xf32> to vector<8x64xf32>
    %523 = arith.subf %506, %522 : vector<8x64xf32>
    %cst_189 = arith.constant 9.99999974E-6 : f32
    %524 = vector.broadcast %cst_189 : f32 to vector<8x1xf32>
    %525 = arith.addf %521, %524 : vector<8x1xf32>
    %526 = math.rsqrt %525 : vector<8x1xf32>
    %527 = vector.broadcast %526 : vector<8x1xf32> to vector<8x64xf32>
    %528 = arith.mulf %523, %527 : vector<8x64xf32>
    %529 = vector.broadcast %508 : vector<1x64xf32> to vector<8x64xf32>
    %530 = arith.mulf %528, %529 : vector<8x64xf32>
    %531 = vector.broadcast %510 : vector<1x64xf32> to vector<8x64xf32>
    %532 = arith.addf %530, %531 : vector<8x64xf32>
    %533 = vector.broadcast %1 : vector<8x1xf32> to vector<8x64xf32>
    %534 = arith.mulf %532, %533 : vector<8x64xf32>
    %535 = arith.truncf %534 : vector<8x64xf32> to vector<8x64xbf16>
    %cst_190 = arith.constant dense<0.000000e+00> : vector<8x16xf32>
    %536 = tpu.matmul %535, %299, %cst_190 {dimension_numbers = #tpu.dot_dimension_numbers<[1], [0], [0], [1], [0, 0, 1, 1], [], []>} : vector<8x64xbf16>, vector<64x16xbf16>, vector<8x16xf32> -> vector<8x16xf32>
    %537 = vector.broadcast %301 : vector<1x16xf32> to vector<8x16xf32>
    %538 = arith.addf %536, %537 : vector<8x16xf32>
    %cst_191 = arith.constant 0.000000e+00 : f32
    %539 = vector.broadcast %cst_191 : f32 to vector<8x16xf32>
    %540 = arith.maximumf %538, %539 : vector<8x16xf32>
    %541 = arith.truncf %540 : vector<8x16xf32> to vector<8x16xbf16>
    %cst_192 = arith.constant dense<0.000000e+00> : vector<8x64xf32>
    %542 = tpu.matmul %541, %303, %cst_192 {dimension_numbers = #tpu.dot_dimension_numbers<[1], [0], [0], [1], [0, 0, 1, 1], [], []>} : vector<8x16xbf16>, vector<16x64xbf16>, vector<8x64xf32> -> vector<8x64xf32>
    %543 = vector.broadcast %305 : vector<1x64xf32> to vector<8x64xf32>
    %544 = arith.addf %542, %543 : vector<8x64xf32>
    %545 = arith.addf %544, %534 : vector<8x64xf32>
    %c1_193 = arith.constant 1 : index
    %c0_194 = arith.constant 0 : index
    %c0_195 = arith.constant 0 : index
    %546 = vector.load %arg14[%c1_193, %c0_194, %c0_195] : memref<4x1x64xf32, #tpu.memory_space<vmem>>, vector<1x1x64xf32>
    %547 = vector.shape_cast %546 : vector<1x1x64xf32> to vector<1x64xf32>
    %c1_196 = arith.constant 1 : index
    %c0_197 = arith.constant 0 : index
    %c0_198 = arith.constant 0 : index
    %548 = vector.load %arg15[%c1_196, %c0_197, %c0_198] : memref<4x1x64xf32, #tpu.memory_space<vmem>>, vector<1x1x64xf32>
    %549 = vector.shape_cast %548 : vector<1x1x64xf32> to vector<1x64xf32>
    %cst_199 = arith.constant dense<0.000000e+00> : vector<8xf32>
    %550 = vector.multi_reduction <add>, %545, %cst_199 [1] : vector<8x64xf32> to vector<8xf32>
    %551 = vector.shape_cast %550 : vector<8xf32> to vector<8x1xf32>
    %cst_200 = arith.constant 6.400000e+01 : f32
    %552 = vector.broadcast %cst_200 : f32 to vector<8x1xf32>
    %553 = arith.divf %551, %552 : vector<8x1xf32>
    %554 = vector.broadcast %553 : vector<8x1xf32> to vector<8x64xf32>
    %555 = arith.subf %545, %554 : vector<8x64xf32>
    %556 = arith.mulf %555, %555 : vector<8x64xf32>
    %cst_201 = arith.constant dense<0.000000e+00> : vector<8xf32>
    %557 = vector.multi_reduction <add>, %556, %cst_201 [1] : vector<8x64xf32> to vector<8xf32>
    %558 = vector.shape_cast %557 : vector<8xf32> to vector<8x1xf32>
    %cst_202 = arith.constant 6.400000e+01 : f32
    %559 = vector.broadcast %cst_202 : f32 to vector<8x1xf32>
    %560 = arith.divf %558, %559 : vector<8x1xf32>
    %561 = vector.broadcast %553 : vector<8x1xf32> to vector<8x64xf32>
    %562 = arith.subf %545, %561 : vector<8x64xf32>
    %cst_203 = arith.constant 9.99999974E-6 : f32
    %563 = vector.broadcast %cst_203 : f32 to vector<8x1xf32>
    %564 = arith.addf %560, %563 : vector<8x1xf32>
    %565 = math.rsqrt %564 : vector<8x1xf32>
    %566 = vector.broadcast %565 : vector<8x1xf32> to vector<8x64xf32>
    %567 = arith.mulf %562, %566 : vector<8x64xf32>
    %568 = vector.broadcast %547 : vector<1x64xf32> to vector<8x64xf32>
    %569 = arith.mulf %567, %568 : vector<8x64xf32>
    %570 = vector.broadcast %549 : vector<1x64xf32> to vector<8x64xf32>
    %571 = arith.addf %569, %570 : vector<8x64xf32>
    %572 = vector.broadcast %1 : vector<8x1xf32> to vector<8x64xf32>
    %573 = arith.mulf %571, %572 : vector<8x64xf32>
    %c2 = arith.constant 2 : index
    %c0_204 = arith.constant 0 : index
    %c0_205 = arith.constant 0 : index
    %574 = vector.load %arg4[%c2, %c0_204, %c0_205] : memref<4x64x384xbf16, #tpu.memory_space<vmem>>, vector<1x64x384xbf16>
    %575 = vector.shape_cast %574 : vector<1x64x384xbf16> to vector<64x384xbf16>
    %c2_206 = arith.constant 2 : index
    %c0_207 = arith.constant 0 : index
    %c0_208 = arith.constant 0 : index
    %576 = vector.load %arg5[%c2_206, %c0_207, %c0_208] : memref<4x1x384xf32, #tpu.memory_space<vmem>>, vector<1x1x384xf32>
    %577 = vector.shape_cast %576 : vector<1x1x384xf32> to vector<1x384xf32>
    %c2_209 = arith.constant 2 : index
    %c0_210 = arith.constant 0 : index
    %c0_211 = arith.constant 0 : index
    %578 = vector.load %arg6[%c2_209, %c0_210, %c0_211] : memref<4x128x64xbf16, #tpu.memory_space<vmem>>, vector<1x128x64xbf16>
    %579 = vector.shape_cast %578 : vector<1x128x64xbf16> to vector<128x64xbf16>
    %c2_212 = arith.constant 2 : index
    %c0_213 = arith.constant 0 : index
    %c0_214 = arith.constant 0 : index
    %580 = vector.load %arg7[%c2_212, %c0_213, %c0_214] : memref<4x1x64xf32, #tpu.memory_space<vmem>>, vector<1x1x64xf32>
    %581 = vector.shape_cast %580 : vector<1x1x64xf32> to vector<1x64xf32>
    %c2_215 = arith.constant 2 : index
    %c0_216 = arith.constant 0 : index
    %c0_217 = arith.constant 0 : index
    %582 = vector.load %arg10[%c2_215, %c0_216, %c0_217] : memref<4x64x16xbf16, #tpu.memory_space<vmem>>, vector<1x64x16xbf16>
    %583 = vector.shape_cast %582 : vector<1x64x16xbf16> to vector<64x16xbf16>
    %c2_218 = arith.constant 2 : index
    %c0_219 = arith.constant 0 : index
    %c0_220 = arith.constant 0 : index
    %584 = vector.load %arg11[%c2_218, %c0_219, %c0_220] : memref<4x1x16xf32, #tpu.memory_space<vmem>>, vector<1x1x16xf32>
    %585 = vector.shape_cast %584 : vector<1x1x16xf32> to vector<1x16xf32>
    %c2_221 = arith.constant 2 : index
    %c0_222 = arith.constant 0 : index
    %c0_223 = arith.constant 0 : index
    %586 = vector.load %arg12[%c2_221, %c0_222, %c0_223] : memref<4x16x64xbf16, #tpu.memory_space<vmem>>, vector<1x16x64xbf16>
    %587 = vector.shape_cast %586 : vector<1x16x64xbf16> to vector<16x64xbf16>
    %c2_224 = arith.constant 2 : index
    %c0_225 = arith.constant 0 : index
    %c0_226 = arith.constant 0 : index
    %588 = vector.load %arg13[%c2_224, %c0_225, %c0_226] : memref<4x1x64xf32, #tpu.memory_space<vmem>>, vector<1x1x64xf32>
    %589 = vector.shape_cast %588 : vector<1x1x64xf32> to vector<1x64xf32>
    %590 = arith.truncf %573 : vector<8x64xf32> to vector<8x64xbf16>
    %cst_227 = arith.constant dense<0.000000e+00> : vector<8x384xf32>
    %591 = tpu.matmul %590, %575, %cst_227 {dimension_numbers = #tpu.dot_dimension_numbers<[1], [0], [0], [1], [0, 0, 1, 1], [], []>} : vector<8x64xbf16>, vector<64x384xbf16>, vector<8x384xf32> -> vector<8x384xf32>
    %592 = vector.broadcast %577 : vector<1x384xf32> to vector<8x384xf32>
    %593 = arith.addf %591, %592 : vector<8x384xf32>
    %594 = arith.truncf %593 : vector<8x384xf32> to vector<8x384xbf16>
    %cst_228 = arith.constant 0.000000e+00 : f32
    %595 = vector.broadcast %cst_228 : f32 to vector<8x64xf32>
    %596 = vector.extract_strided_slice %594 {offsets = [0, 0], sizes = [8, 16], strides = [1, 1]} : vector<8x384xbf16> to vector<8x16xbf16>
    %597 = vector.extract_strided_slice %594 {offsets = [0, 128], sizes = [8, 16], strides = [1, 1]} : vector<8x384xbf16> to vector<8x16xbf16>
    %598 = vector.extract_strided_slice %594 {offsets = [0, 256], sizes = [8, 16], strides = [1, 1]} : vector<8x384xbf16> to vector<8x16xbf16>
    %cst_229 = arith.constant dense<0.000000e+00> : vector<8x8xf32>
    %599 = tpu.matmul %596, %597, %cst_229 {dimension_numbers = #tpu.dot_dimension_numbers<[1], [1], [0], [0], [0, 0, 1, 0], [], []>} : vector<8x16xbf16>, vector<8x16xbf16>, vector<8x8xf32> -> vector<8x8xf32>
    %cst_230 = arith.constant 2.500000e-01 : f32
    %600 = vector.broadcast %cst_230 : f32 to vector<8x8xf32>
    %601 = arith.mulf %599, %600 : vector<8x8xf32>
    %602 = vector.broadcast %3 : vector<1x8xf32> to vector<8x8xf32>
    %603 = arith.addf %601, %602 : vector<8x8xf32>
    %cst_231 = arith.constant dense<0xFF800000> : vector<8xf32>
    %604 = vector.multi_reduction <maximumf>, %603, %cst_231 [1] : vector<8x8xf32> to vector<8xf32>
    %605 = vector.shape_cast %604 : vector<8xf32> to vector<8x1xf32>
    %606 = vector.broadcast %605 : vector<8x1xf32> to vector<8x8xf32>
    %607 = arith.subf %603, %606 : vector<8x8xf32>
    %608 = math.exp %607 : vector<8x8xf32>
    %cst_232 = arith.constant dense<0.000000e+00> : vector<8xf32>
    %609 = vector.multi_reduction <add>, %608, %cst_232 [1] : vector<8x8xf32> to vector<8xf32>
    %610 = vector.shape_cast %609 : vector<8xf32> to vector<8x1xf32>
    %611 = tpu.reciprocal %610 {approx = true} : vector<8x1xf32> -> vector<8x1xf32>
    %612 = vector.broadcast %611 : vector<8x1xf32> to vector<8x8xf32>
    %613 = arith.mulf %608, %612 : vector<8x8xf32>
    %614 = arith.truncf %613 : vector<8x8xf32> to vector<8x8xbf16>
    %cst_233 = arith.constant dense<0.000000e+00> : vector<8x16xf32>
    %615 = tpu.matmul %614, %598, %cst_233 {dimension_numbers = #tpu.dot_dimension_numbers<[1], [0], [0], [1], [0, 0, 1, 1], [], []>} : vector<8x8xbf16>, vector<8x16xbf16>, vector<8x16xf32> -> vector<8x16xf32>
    %616 = arith.truncf %615 : vector<8x16xf32> to vector<8x16xbf16>
    %617 = vector.extract_strided_slice %579 {offsets = [0, 0], sizes = [16, 64], strides = [1, 1]} : vector<128x64xbf16> to vector<16x64xbf16>
    %cst_234 = arith.constant dense<0.000000e+00> : vector<8x64xf32>
    %618 = tpu.matmul %616, %617, %cst_234 {dimension_numbers = #tpu.dot_dimension_numbers<[1], [0], [0], [1], [0, 0, 1, 1], [], []>} : vector<8x16xbf16>, vector<16x64xbf16>, vector<8x64xf32> -> vector<8x64xf32>
    %619 = arith.addf %595, %618 : vector<8x64xf32>
    %620 = vector.extract_strided_slice %594 {offsets = [0, 16], sizes = [8, 16], strides = [1, 1]} : vector<8x384xbf16> to vector<8x16xbf16>
    %621 = vector.extract_strided_slice %594 {offsets = [0, 144], sizes = [8, 16], strides = [1, 1]} : vector<8x384xbf16> to vector<8x16xbf16>
    %622 = vector.extract_strided_slice %594 {offsets = [0, 272], sizes = [8, 16], strides = [1, 1]} : vector<8x384xbf16> to vector<8x16xbf16>
    %cst_235 = arith.constant dense<0.000000e+00> : vector<8x8xf32>
    %623 = tpu.matmul %620, %621, %cst_235 {dimension_numbers = #tpu.dot_dimension_numbers<[1], [1], [0], [0], [0, 0, 1, 0], [], []>} : vector<8x16xbf16>, vector<8x16xbf16>, vector<8x8xf32> -> vector<8x8xf32>
    %cst_236 = arith.constant 2.500000e-01 : f32
    %624 = vector.broadcast %cst_236 : f32 to vector<8x8xf32>
    %625 = arith.mulf %623, %624 : vector<8x8xf32>
    %626 = vector.broadcast %3 : vector<1x8xf32> to vector<8x8xf32>
    %627 = arith.addf %625, %626 : vector<8x8xf32>
    %cst_237 = arith.constant dense<0xFF800000> : vector<8xf32>
    %628 = vector.multi_reduction <maximumf>, %627, %cst_237 [1] : vector<8x8xf32> to vector<8xf32>
    %629 = vector.shape_cast %628 : vector<8xf32> to vector<8x1xf32>
    %630 = vector.broadcast %629 : vector<8x1xf32> to vector<8x8xf32>
    %631 = arith.subf %627, %630 : vector<8x8xf32>
    %632 = math.exp %631 : vector<8x8xf32>
    %cst_238 = arith.constant dense<0.000000e+00> : vector<8xf32>
    %633 = vector.multi_reduction <add>, %632, %cst_238 [1] : vector<8x8xf32> to vector<8xf32>
    %634 = vector.shape_cast %633 : vector<8xf32> to vector<8x1xf32>
    %635 = tpu.reciprocal %634 {approx = true} : vector<8x1xf32> -> vector<8x1xf32>
    %636 = vector.broadcast %635 : vector<8x1xf32> to vector<8x8xf32>
    %637 = arith.mulf %632, %636 : vector<8x8xf32>
    %638 = arith.truncf %637 : vector<8x8xf32> to vector<8x8xbf16>
    %cst_239 = arith.constant dense<0.000000e+00> : vector<8x16xf32>
    %639 = tpu.matmul %638, %622, %cst_239 {dimension_numbers = #tpu.dot_dimension_numbers<[1], [0], [0], [1], [0, 0, 1, 1], [], []>} : vector<8x8xbf16>, vector<8x16xbf16>, vector<8x16xf32> -> vector<8x16xf32>
    %640 = arith.truncf %639 : vector<8x16xf32> to vector<8x16xbf16>
    %641 = vector.extract_strided_slice %579 {offsets = [16, 0], sizes = [16, 64], strides = [1, 1]} : vector<128x64xbf16> to vector<16x64xbf16>
    %cst_240 = arith.constant dense<0.000000e+00> : vector<8x64xf32>
    %642 = tpu.matmul %640, %641, %cst_240 {dimension_numbers = #tpu.dot_dimension_numbers<[1], [0], [0], [1], [0, 0, 1, 1], [], []>} : vector<8x16xbf16>, vector<16x64xbf16>, vector<8x64xf32> -> vector<8x64xf32>
    %643 = arith.addf %619, %642 : vector<8x64xf32>
    %644 = vector.extract_strided_slice %594 {offsets = [0, 32], sizes = [8, 16], strides = [1, 1]} : vector<8x384xbf16> to vector<8x16xbf16>
    %645 = vector.extract_strided_slice %594 {offsets = [0, 160], sizes = [8, 16], strides = [1, 1]} : vector<8x384xbf16> to vector<8x16xbf16>
    %646 = vector.extract_strided_slice %594 {offsets = [0, 288], sizes = [8, 16], strides = [1, 1]} : vector<8x384xbf16> to vector<8x16xbf16>
    %cst_241 = arith.constant dense<0.000000e+00> : vector<8x8xf32>
    %647 = tpu.matmul %644, %645, %cst_241 {dimension_numbers = #tpu.dot_dimension_numbers<[1], [1], [0], [0], [0, 0, 1, 0], [], []>} : vector<8x16xbf16>, vector<8x16xbf16>, vector<8x8xf32> -> vector<8x8xf32>
    %cst_242 = arith.constant 2.500000e-01 : f32
    %648 = vector.broadcast %cst_242 : f32 to vector<8x8xf32>
    %649 = arith.mulf %647, %648 : vector<8x8xf32>
    %650 = vector.broadcast %3 : vector<1x8xf32> to vector<8x8xf32>
    %651 = arith.addf %649, %650 : vector<8x8xf32>
    %cst_243 = arith.constant dense<0xFF800000> : vector<8xf32>
    %652 = vector.multi_reduction <maximumf>, %651, %cst_243 [1] : vector<8x8xf32> to vector<8xf32>
    %653 = vector.shape_cast %652 : vector<8xf32> to vector<8x1xf32>
    %654 = vector.broadcast %653 : vector<8x1xf32> to vector<8x8xf32>
    %655 = arith.subf %651, %654 : vector<8x8xf32>
    %656 = math.exp %655 : vector<8x8xf32>
    %cst_244 = arith.constant dense<0.000000e+00> : vector<8xf32>
    %657 = vector.multi_reduction <add>, %656, %cst_244 [1] : vector<8x8xf32> to vector<8xf32>
    %658 = vector.shape_cast %657 : vector<8xf32> to vector<8x1xf32>
    %659 = tpu.reciprocal %658 {approx = true} : vector<8x1xf32> -> vector<8x1xf32>
    %660 = vector.broadcast %659 : vector<8x1xf32> to vector<8x8xf32>
    %661 = arith.mulf %656, %660 : vector<8x8xf32>
    %662 = arith.truncf %661 : vector<8x8xf32> to vector<8x8xbf16>
    %cst_245 = arith.constant dense<0.000000e+00> : vector<8x16xf32>
    %663 = tpu.matmul %662, %646, %cst_245 {dimension_numbers = #tpu.dot_dimension_numbers<[1], [0], [0], [1], [0, 0, 1, 1], [], []>} : vector<8x8xbf16>, vector<8x16xbf16>, vector<8x16xf32> -> vector<8x16xf32>
    %664 = arith.truncf %663 : vector<8x16xf32> to vector<8x16xbf16>
    %665 = vector.extract_strided_slice %579 {offsets = [32, 0], sizes = [16, 64], strides = [1, 1]} : vector<128x64xbf16> to vector<16x64xbf16>
    %cst_246 = arith.constant dense<0.000000e+00> : vector<8x64xf32>
    %666 = tpu.matmul %664, %665, %cst_246 {dimension_numbers = #tpu.dot_dimension_numbers<[1], [0], [0], [1], [0, 0, 1, 1], [], []>} : vector<8x16xbf16>, vector<16x64xbf16>, vector<8x64xf32> -> vector<8x64xf32>
    %667 = arith.addf %643, %666 : vector<8x64xf32>
    %668 = vector.extract_strided_slice %594 {offsets = [0, 48], sizes = [8, 16], strides = [1, 1]} : vector<8x384xbf16> to vector<8x16xbf16>
    %669 = vector.extract_strided_slice %594 {offsets = [0, 176], sizes = [8, 16], strides = [1, 1]} : vector<8x384xbf16> to vector<8x16xbf16>
    %670 = vector.extract_strided_slice %594 {offsets = [0, 304], sizes = [8, 16], strides = [1, 1]} : vector<8x384xbf16> to vector<8x16xbf16>
    %cst_247 = arith.constant dense<0.000000e+00> : vector<8x8xf32>
    %671 = tpu.matmul %668, %669, %cst_247 {dimension_numbers = #tpu.dot_dimension_numbers<[1], [1], [0], [0], [0, 0, 1, 0], [], []>} : vector<8x16xbf16>, vector<8x16xbf16>, vector<8x8xf32> -> vector<8x8xf32>
    %cst_248 = arith.constant 2.500000e-01 : f32
    %672 = vector.broadcast %cst_248 : f32 to vector<8x8xf32>
    %673 = arith.mulf %671, %672 : vector<8x8xf32>
    %674 = vector.broadcast %3 : vector<1x8xf32> to vector<8x8xf32>
    %675 = arith.addf %673, %674 : vector<8x8xf32>
    %cst_249 = arith.constant dense<0xFF800000> : vector<8xf32>
    %676 = vector.multi_reduction <maximumf>, %675, %cst_249 [1] : vector<8x8xf32> to vector<8xf32>
    %677 = vector.shape_cast %676 : vector<8xf32> to vector<8x1xf32>
    %678 = vector.broadcast %677 : vector<8x1xf32> to vector<8x8xf32>
    %679 = arith.subf %675, %678 : vector<8x8xf32>
    %680 = math.exp %679 : vector<8x8xf32>
    %cst_250 = arith.constant dense<0.000000e+00> : vector<8xf32>
    %681 = vector.multi_reduction <add>, %680, %cst_250 [1] : vector<8x8xf32> to vector<8xf32>
    %682 = vector.shape_cast %681 : vector<8xf32> to vector<8x1xf32>
    %683 = tpu.reciprocal %682 {approx = true} : vector<8x1xf32> -> vector<8x1xf32>
    %684 = vector.broadcast %683 : vector<8x1xf32> to vector<8x8xf32>
    %685 = arith.mulf %680, %684 : vector<8x8xf32>
    %686 = arith.truncf %685 : vector<8x8xf32> to vector<8x8xbf16>
    %cst_251 = arith.constant dense<0.000000e+00> : vector<8x16xf32>
    %687 = tpu.matmul %686, %670, %cst_251 {dimension_numbers = #tpu.dot_dimension_numbers<[1], [0], [0], [1], [0, 0, 1, 1], [], []>} : vector<8x8xbf16>, vector<8x16xbf16>, vector<8x16xf32> -> vector<8x16xf32>
    %688 = arith.truncf %687 : vector<8x16xf32> to vector<8x16xbf16>
    %689 = vector.extract_strided_slice %579 {offsets = [48, 0], sizes = [16, 64], strides = [1, 1]} : vector<128x64xbf16> to vector<16x64xbf16>
    %cst_252 = arith.constant dense<0.000000e+00> : vector<8x64xf32>
    %690 = tpu.matmul %688, %689, %cst_252 {dimension_numbers = #tpu.dot_dimension_numbers<[1], [0], [0], [1], [0, 0, 1, 1], [], []>} : vector<8x16xbf16>, vector<16x64xbf16>, vector<8x64xf32> -> vector<8x64xf32>
    %691 = arith.addf %667, %690 : vector<8x64xf32>
    %692 = vector.extract_strided_slice %594 {offsets = [0, 64], sizes = [8, 16], strides = [1, 1]} : vector<8x384xbf16> to vector<8x16xbf16>
    %693 = vector.extract_strided_slice %594 {offsets = [0, 192], sizes = [8, 16], strides = [1, 1]} : vector<8x384xbf16> to vector<8x16xbf16>
    %694 = vector.extract_strided_slice %594 {offsets = [0, 320], sizes = [8, 16], strides = [1, 1]} : vector<8x384xbf16> to vector<8x16xbf16>
    %cst_253 = arith.constant dense<0.000000e+00> : vector<8x8xf32>
    %695 = tpu.matmul %692, %693, %cst_253 {dimension_numbers = #tpu.dot_dimension_numbers<[1], [1], [0], [0], [0, 0, 1, 0], [], []>} : vector<8x16xbf16>, vector<8x16xbf16>, vector<8x8xf32> -> vector<8x8xf32>
    %cst_254 = arith.constant 2.500000e-01 : f32
    %696 = vector.broadcast %cst_254 : f32 to vector<8x8xf32>
    %697 = arith.mulf %695, %696 : vector<8x8xf32>
    %698 = vector.broadcast %3 : vector<1x8xf32> to vector<8x8xf32>
    %699 = arith.addf %697, %698 : vector<8x8xf32>
    %cst_255 = arith.constant dense<0xFF800000> : vector<8xf32>
    %700 = vector.multi_reduction <maximumf>, %699, %cst_255 [1] : vector<8x8xf32> to vector<8xf32>
    %701 = vector.shape_cast %700 : vector<8xf32> to vector<8x1xf32>
    %702 = vector.broadcast %701 : vector<8x1xf32> to vector<8x8xf32>
    %703 = arith.subf %699, %702 : vector<8x8xf32>
    %704 = math.exp %703 : vector<8x8xf32>
    %cst_256 = arith.constant dense<0.000000e+00> : vector<8xf32>
    %705 = vector.multi_reduction <add>, %704, %cst_256 [1] : vector<8x8xf32> to vector<8xf32>
    %706 = vector.shape_cast %705 : vector<8xf32> to vector<8x1xf32>
    %707 = tpu.reciprocal %706 {approx = true} : vector<8x1xf32> -> vector<8x1xf32>
    %708 = vector.broadcast %707 : vector<8x1xf32> to vector<8x8xf32>
    %709 = arith.mulf %704, %708 : vector<8x8xf32>
    %710 = arith.truncf %709 : vector<8x8xf32> to vector<8x8xbf16>
    %cst_257 = arith.constant dense<0.000000e+00> : vector<8x16xf32>
    %711 = tpu.matmul %710, %694, %cst_257 {dimension_numbers = #tpu.dot_dimension_numbers<[1], [0], [0], [1], [0, 0, 1, 1], [], []>} : vector<8x8xbf16>, vector<8x16xbf16>, vector<8x16xf32> -> vector<8x16xf32>
    %712 = arith.truncf %711 : vector<8x16xf32> to vector<8x16xbf16>
    %713 = vector.extract_strided_slice %579 {offsets = [64, 0], sizes = [16, 64], strides = [1, 1]} : vector<128x64xbf16> to vector<16x64xbf16>
    %cst_258 = arith.constant dense<0.000000e+00> : vector<8x64xf32>
    %714 = tpu.matmul %712, %713, %cst_258 {dimension_numbers = #tpu.dot_dimension_numbers<[1], [0], [0], [1], [0, 0, 1, 1], [], []>} : vector<8x16xbf16>, vector<16x64xbf16>, vector<8x64xf32> -> vector<8x64xf32>
    %715 = arith.addf %691, %714 : vector<8x64xf32>
    %716 = vector.extract_strided_slice %594 {offsets = [0, 80], sizes = [8, 16], strides = [1, 1]} : vector<8x384xbf16> to vector<8x16xbf16>
    %717 = vector.extract_strided_slice %594 {offsets = [0, 208], sizes = [8, 16], strides = [1, 1]} : vector<8x384xbf16> to vector<8x16xbf16>
    %718 = vector.extract_strided_slice %594 {offsets = [0, 336], sizes = [8, 16], strides = [1, 1]} : vector<8x384xbf16> to vector<8x16xbf16>
    %cst_259 = arith.constant dense<0.000000e+00> : vector<8x8xf32>
    %719 = tpu.matmul %716, %717, %cst_259 {dimension_numbers = #tpu.dot_dimension_numbers<[1], [1], [0], [0], [0, 0, 1, 0], [], []>} : vector<8x16xbf16>, vector<8x16xbf16>, vector<8x8xf32> -> vector<8x8xf32>
    %cst_260 = arith.constant 2.500000e-01 : f32
    %720 = vector.broadcast %cst_260 : f32 to vector<8x8xf32>
    %721 = arith.mulf %719, %720 : vector<8x8xf32>
    %722 = vector.broadcast %3 : vector<1x8xf32> to vector<8x8xf32>
    %723 = arith.addf %721, %722 : vector<8x8xf32>
    %cst_261 = arith.constant dense<0xFF800000> : vector<8xf32>
    %724 = vector.multi_reduction <maximumf>, %723, %cst_261 [1] : vector<8x8xf32> to vector<8xf32>
    %725 = vector.shape_cast %724 : vector<8xf32> to vector<8x1xf32>
    %726 = vector.broadcast %725 : vector<8x1xf32> to vector<8x8xf32>
    %727 = arith.subf %723, %726 : vector<8x8xf32>
    %728 = math.exp %727 : vector<8x8xf32>
    %cst_262 = arith.constant dense<0.000000e+00> : vector<8xf32>
    %729 = vector.multi_reduction <add>, %728, %cst_262 [1] : vector<8x8xf32> to vector<8xf32>
    %730 = vector.shape_cast %729 : vector<8xf32> to vector<8x1xf32>
    %731 = tpu.reciprocal %730 {approx = true} : vector<8x1xf32> -> vector<8x1xf32>
    %732 = vector.broadcast %731 : vector<8x1xf32> to vector<8x8xf32>
    %733 = arith.mulf %728, %732 : vector<8x8xf32>
    %734 = arith.truncf %733 : vector<8x8xf32> to vector<8x8xbf16>
    %cst_263 = arith.constant dense<0.000000e+00> : vector<8x16xf32>
    %735 = tpu.matmul %734, %718, %cst_263 {dimension_numbers = #tpu.dot_dimension_numbers<[1], [0], [0], [1], [0, 0, 1, 1], [], []>} : vector<8x8xbf16>, vector<8x16xbf16>, vector<8x16xf32> -> vector<8x16xf32>
    %736 = arith.truncf %735 : vector<8x16xf32> to vector<8x16xbf16>
    %737 = vector.extract_strided_slice %579 {offsets = [80, 0], sizes = [16, 64], strides = [1, 1]} : vector<128x64xbf16> to vector<16x64xbf16>
    %cst_264 = arith.constant dense<0.000000e+00> : vector<8x64xf32>
    %738 = tpu.matmul %736, %737, %cst_264 {dimension_numbers = #tpu.dot_dimension_numbers<[1], [0], [0], [1], [0, 0, 1, 1], [], []>} : vector<8x16xbf16>, vector<16x64xbf16>, vector<8x64xf32> -> vector<8x64xf32>
    %739 = arith.addf %715, %738 : vector<8x64xf32>
    %740 = vector.extract_strided_slice %594 {offsets = [0, 96], sizes = [8, 16], strides = [1, 1]} : vector<8x384xbf16> to vector<8x16xbf16>
    %741 = vector.extract_strided_slice %594 {offsets = [0, 224], sizes = [8, 16], strides = [1, 1]} : vector<8x384xbf16> to vector<8x16xbf16>
    %742 = vector.extract_strided_slice %594 {offsets = [0, 352], sizes = [8, 16], strides = [1, 1]} : vector<8x384xbf16> to vector<8x16xbf16>
    %cst_265 = arith.constant dense<0.000000e+00> : vector<8x8xf32>
    %743 = tpu.matmul %740, %741, %cst_265 {dimension_numbers = #tpu.dot_dimension_numbers<[1], [1], [0], [0], [0, 0, 1, 0], [], []>} : vector<8x16xbf16>, vector<8x16xbf16>, vector<8x8xf32> -> vector<8x8xf32>
    %cst_266 = arith.constant 2.500000e-01 : f32
    %744 = vector.broadcast %cst_266 : f32 to vector<8x8xf32>
    %745 = arith.mulf %743, %744 : vector<8x8xf32>
    %746 = vector.broadcast %3 : vector<1x8xf32> to vector<8x8xf32>
    %747 = arith.addf %745, %746 : vector<8x8xf32>
    %cst_267 = arith.constant dense<0xFF800000> : vector<8xf32>
    %748 = vector.multi_reduction <maximumf>, %747, %cst_267 [1] : vector<8x8xf32> to vector<8xf32>
    %749 = vector.shape_cast %748 : vector<8xf32> to vector<8x1xf32>
    %750 = vector.broadcast %749 : vector<8x1xf32> to vector<8x8xf32>
    %751 = arith.subf %747, %750 : vector<8x8xf32>
    %752 = math.exp %751 : vector<8x8xf32>
    %cst_268 = arith.constant dense<0.000000e+00> : vector<8xf32>
    %753 = vector.multi_reduction <add>, %752, %cst_268 [1] : vector<8x8xf32> to vector<8xf32>
    %754 = vector.shape_cast %753 : vector<8xf32> to vector<8x1xf32>
    %755 = tpu.reciprocal %754 {approx = true} : vector<8x1xf32> -> vector<8x1xf32>
    %756 = vector.broadcast %755 : vector<8x1xf32> to vector<8x8xf32>
    %757 = arith.mulf %752, %756 : vector<8x8xf32>
    %758 = arith.truncf %757 : vector<8x8xf32> to vector<8x8xbf16>
    %cst_269 = arith.constant dense<0.000000e+00> : vector<8x16xf32>
    %759 = tpu.matmul %758, %742, %cst_269 {dimension_numbers = #tpu.dot_dimension_numbers<[1], [0], [0], [1], [0, 0, 1, 1], [], []>} : vector<8x8xbf16>, vector<8x16xbf16>, vector<8x16xf32> -> vector<8x16xf32>
    %760 = arith.truncf %759 : vector<8x16xf32> to vector<8x16xbf16>
    %761 = vector.extract_strided_slice %579 {offsets = [96, 0], sizes = [16, 64], strides = [1, 1]} : vector<128x64xbf16> to vector<16x64xbf16>
    %cst_270 = arith.constant dense<0.000000e+00> : vector<8x64xf32>
    %762 = tpu.matmul %760, %761, %cst_270 {dimension_numbers = #tpu.dot_dimension_numbers<[1], [0], [0], [1], [0, 0, 1, 1], [], []>} : vector<8x16xbf16>, vector<16x64xbf16>, vector<8x64xf32> -> vector<8x64xf32>
    %763 = arith.addf %739, %762 : vector<8x64xf32>
    %764 = vector.extract_strided_slice %594 {offsets = [0, 112], sizes = [8, 16], strides = [1, 1]} : vector<8x384xbf16> to vector<8x16xbf16>
    %765 = vector.extract_strided_slice %594 {offsets = [0, 240], sizes = [8, 16], strides = [1, 1]} : vector<8x384xbf16> to vector<8x16xbf16>
    %766 = vector.extract_strided_slice %594 {offsets = [0, 368], sizes = [8, 16], strides = [1, 1]} : vector<8x384xbf16> to vector<8x16xbf16>
    %cst_271 = arith.constant dense<0.000000e+00> : vector<8x8xf32>
    %767 = tpu.matmul %764, %765, %cst_271 {dimension_numbers = #tpu.dot_dimension_numbers<[1], [1], [0], [0], [0, 0, 1, 0], [], []>} : vector<8x16xbf16>, vector<8x16xbf16>, vector<8x8xf32> -> vector<8x8xf32>
    %cst_272 = arith.constant 2.500000e-01 : f32
    %768 = vector.broadcast %cst_272 : f32 to vector<8x8xf32>
    %769 = arith.mulf %767, %768 : vector<8x8xf32>
    %770 = vector.broadcast %3 : vector<1x8xf32> to vector<8x8xf32>
    %771 = arith.addf %769, %770 : vector<8x8xf32>
    %cst_273 = arith.constant dense<0xFF800000> : vector<8xf32>
    %772 = vector.multi_reduction <maximumf>, %771, %cst_273 [1] : vector<8x8xf32> to vector<8xf32>
    %773 = vector.shape_cast %772 : vector<8xf32> to vector<8x1xf32>
    %774 = vector.broadcast %773 : vector<8x1xf32> to vector<8x8xf32>
    %775 = arith.subf %771, %774 : vector<8x8xf32>
    %776 = math.exp %775 : vector<8x8xf32>
    %cst_274 = arith.constant dense<0.000000e+00> : vector<8xf32>
    %777 = vector.multi_reduction <add>, %776, %cst_274 [1] : vector<8x8xf32> to vector<8xf32>
    %778 = vector.shape_cast %777 : vector<8xf32> to vector<8x1xf32>
    %779 = tpu.reciprocal %778 {approx = true} : vector<8x1xf32> -> vector<8x1xf32>
    %780 = vector.broadcast %779 : vector<8x1xf32> to vector<8x8xf32>
    %781 = arith.mulf %776, %780 : vector<8x8xf32>
    %782 = arith.truncf %781 : vector<8x8xf32> to vector<8x8xbf16>
    %cst_275 = arith.constant dense<0.000000e+00> : vector<8x16xf32>
    %783 = tpu.matmul %782, %766, %cst_275 {dimension_numbers = #tpu.dot_dimension_numbers<[1], [0], [0], [1], [0, 0, 1, 1], [], []>} : vector<8x8xbf16>, vector<8x16xbf16>, vector<8x16xf32> -> vector<8x16xf32>
    %784 = arith.truncf %783 : vector<8x16xf32> to vector<8x16xbf16>
    %785 = vector.extract_strided_slice %579 {offsets = [112, 0], sizes = [16, 64], strides = [1, 1]} : vector<128x64xbf16> to vector<16x64xbf16>
    %cst_276 = arith.constant dense<0.000000e+00> : vector<8x64xf32>
    %786 = tpu.matmul %784, %785, %cst_276 {dimension_numbers = #tpu.dot_dimension_numbers<[1], [0], [0], [1], [0, 0, 1, 1], [], []>} : vector<8x16xbf16>, vector<16x64xbf16>, vector<8x64xf32> -> vector<8x64xf32>
    %787 = arith.addf %763, %786 : vector<8x64xf32>
    %788 = vector.broadcast %581 : vector<1x64xf32> to vector<8x64xf32>
    %789 = arith.addf %787, %788 : vector<8x64xf32>
    %790 = arith.addf %789, %573 : vector<8x64xf32>
    %c2_277 = arith.constant 2 : index
    %c0_278 = arith.constant 0 : index
    %c0_279 = arith.constant 0 : index
    %791 = vector.load %arg8[%c2_277, %c0_278, %c0_279] : memref<4x1x64xf32, #tpu.memory_space<vmem>>, vector<1x1x64xf32>
    %792 = vector.shape_cast %791 : vector<1x1x64xf32> to vector<1x64xf32>
    %c2_280 = arith.constant 2 : index
    %c0_281 = arith.constant 0 : index
    %c0_282 = arith.constant 0 : index
    %793 = vector.load %arg9[%c2_280, %c0_281, %c0_282] : memref<4x1x64xf32, #tpu.memory_space<vmem>>, vector<1x1x64xf32>
    %794 = vector.shape_cast %793 : vector<1x1x64xf32> to vector<1x64xf32>
    %cst_283 = arith.constant dense<0.000000e+00> : vector<8xf32>
    %795 = vector.multi_reduction <add>, %790, %cst_283 [1] : vector<8x64xf32> to vector<8xf32>
    %796 = vector.shape_cast %795 : vector<8xf32> to vector<8x1xf32>
    %cst_284 = arith.constant 6.400000e+01 : f32
    %797 = vector.broadcast %cst_284 : f32 to vector<8x1xf32>
    %798 = arith.divf %796, %797 : vector<8x1xf32>
    %799 = vector.broadcast %798 : vector<8x1xf32> to vector<8x64xf32>
    %800 = arith.subf %790, %799 : vector<8x64xf32>
    %801 = arith.mulf %800, %800 : vector<8x64xf32>
    %cst_285 = arith.constant dense<0.000000e+00> : vector<8xf32>
    %802 = vector.multi_reduction <add>, %801, %cst_285 [1] : vector<8x64xf32> to vector<8xf32>
    %803 = vector.shape_cast %802 : vector<8xf32> to vector<8x1xf32>
    %cst_286 = arith.constant 6.400000e+01 : f32
    %804 = vector.broadcast %cst_286 : f32 to vector<8x1xf32>
    %805 = arith.divf %803, %804 : vector<8x1xf32>
    %806 = vector.broadcast %798 : vector<8x1xf32> to vector<8x64xf32>
    %807 = arith.subf %790, %806 : vector<8x64xf32>
    %cst_287 = arith.constant 9.99999974E-6 : f32
    %808 = vector.broadcast %cst_287 : f32 to vector<8x1xf32>
    %809 = arith.addf %805, %808 : vector<8x1xf32>
    %810 = math.rsqrt %809 : vector<8x1xf32>
    %811 = vector.broadcast %810 : vector<8x1xf32> to vector<8x64xf32>
    %812 = arith.mulf %807, %811 : vector<8x64xf32>
    %813 = vector.broadcast %792 : vector<1x64xf32> to vector<8x64xf32>
    %814 = arith.mulf %812, %813 : vector<8x64xf32>
    %815 = vector.broadcast %794 : vector<1x64xf32> to vector<8x64xf32>
    %816 = arith.addf %814, %815 : vector<8x64xf32>
    %817 = vector.broadcast %1 : vector<8x1xf32> to vector<8x64xf32>
    %818 = arith.mulf %816, %817 : vector<8x64xf32>
    %819 = arith.truncf %818 : vector<8x64xf32> to vector<8x64xbf16>
    %cst_288 = arith.constant dense<0.000000e+00> : vector<8x16xf32>
    %820 = tpu.matmul %819, %583, %cst_288 {dimension_numbers = #tpu.dot_dimension_numbers<[1], [0], [0], [1], [0, 0, 1, 1], [], []>} : vector<8x64xbf16>, vector<64x16xbf16>, vector<8x16xf32> -> vector<8x16xf32>
    %821 = vector.broadcast %585 : vector<1x16xf32> to vector<8x16xf32>
    %822 = arith.addf %820, %821 : vector<8x16xf32>
    %cst_289 = arith.constant 0.000000e+00 : f32
    %823 = vector.broadcast %cst_289 : f32 to vector<8x16xf32>
    %824 = arith.maximumf %822, %823 : vector<8x16xf32>
    %825 = arith.truncf %824 : vector<8x16xf32> to vector<8x16xbf16>
    %cst_290 = arith.constant dense<0.000000e+00> : vector<8x64xf32>
    %826 = tpu.matmul %825, %587, %cst_290 {dimension_numbers = #tpu.dot_dimension_numbers<[1], [0], [0], [1], [0, 0, 1, 1], [], []>} : vector<8x16xbf16>, vector<16x64xbf16>, vector<8x64xf32> -> vector<8x64xf32>
    %827 = vector.broadcast %589 : vector<1x64xf32> to vector<8x64xf32>
    %828 = arith.addf %826, %827 : vector<8x64xf32>
    %829 = arith.addf %828, %818 : vector<8x64xf32>
    %c2_291 = arith.constant 2 : index
    %c0_292 = arith.constant 0 : index
    %c0_293 = arith.constant 0 : index
    %830 = vector.load %arg14[%c2_291, %c0_292, %c0_293] : memref<4x1x64xf32, #tpu.memory_space<vmem>>, vector<1x1x64xf32>
    %831 = vector.shape_cast %830 : vector<1x1x64xf32> to vector<1x64xf32>
    %c2_294 = arith.constant 2 : index
    %c0_295 = arith.constant 0 : index
    %c0_296 = arith.constant 0 : index
    %832 = vector.load %arg15[%c2_294, %c0_295, %c0_296] : memref<4x1x64xf32, #tpu.memory_space<vmem>>, vector<1x1x64xf32>
    %833 = vector.shape_cast %832 : vector<1x1x64xf32> to vector<1x64xf32>
    %cst_297 = arith.constant dense<0.000000e+00> : vector<8xf32>
    %834 = vector.multi_reduction <add>, %829, %cst_297 [1] : vector<8x64xf32> to vector<8xf32>
    %835 = vector.shape_cast %834 : vector<8xf32> to vector<8x1xf32>
    %cst_298 = arith.constant 6.400000e+01 : f32
    %836 = vector.broadcast %cst_298 : f32 to vector<8x1xf32>
    %837 = arith.divf %835, %836 : vector<8x1xf32>
    %838 = vector.broadcast %837 : vector<8x1xf32> to vector<8x64xf32>
    %839 = arith.subf %829, %838 : vector<8x64xf32>
    %840 = arith.mulf %839, %839 : vector<8x64xf32>
    %cst_299 = arith.constant dense<0.000000e+00> : vector<8xf32>
    %841 = vector.multi_reduction <add>, %840, %cst_299 [1] : vector<8x64xf32> to vector<8xf32>
    %842 = vector.shape_cast %841 : vector<8xf32> to vector<8x1xf32>
    %cst_300 = arith.constant 6.400000e+01 : f32
    %843 = vector.broadcast %cst_300 : f32 to vector<8x1xf32>
    %844 = arith.divf %842, %843 : vector<8x1xf32>
    %845 = vector.broadcast %837 : vector<8x1xf32> to vector<8x64xf32>
    %846 = arith.subf %829, %845 : vector<8x64xf32>
    %cst_301 = arith.constant 9.99999974E-6 : f32
    %847 = vector.broadcast %cst_301 : f32 to vector<8x1xf32>
    %848 = arith.addf %844, %847 : vector<8x1xf32>
    %849 = math.rsqrt %848 : vector<8x1xf32>
    %850 = vector.broadcast %849 : vector<8x1xf32> to vector<8x64xf32>
    %851 = arith.mulf %846, %850 : vector<8x64xf32>
    %852 = vector.broadcast %831 : vector<1x64xf32> to vector<8x64xf32>
    %853 = arith.mulf %851, %852 : vector<8x64xf32>
    %854 = vector.broadcast %833 : vector<1x64xf32> to vector<8x64xf32>
    %855 = arith.addf %853, %854 : vector<8x64xf32>
    %856 = vector.broadcast %1 : vector<8x1xf32> to vector<8x64xf32>
    %857 = arith.mulf %855, %856 : vector<8x64xf32>
    %c3 = arith.constant 3 : index
    %c0_302 = arith.constant 0 : index
    %c0_303 = arith.constant 0 : index
    %858 = vector.load %arg4[%c3, %c0_302, %c0_303] : memref<4x64x384xbf16, #tpu.memory_space<vmem>>, vector<1x64x384xbf16>
    %859 = vector.shape_cast %858 : vector<1x64x384xbf16> to vector<64x384xbf16>
    %c3_304 = arith.constant 3 : index
    %c0_305 = arith.constant 0 : index
    %c0_306 = arith.constant 0 : index
    %860 = vector.load %arg5[%c3_304, %c0_305, %c0_306] : memref<4x1x384xf32, #tpu.memory_space<vmem>>, vector<1x1x384xf32>
    %861 = vector.shape_cast %860 : vector<1x1x384xf32> to vector<1x384xf32>
    %c3_307 = arith.constant 3 : index
    %c0_308 = arith.constant 0 : index
    %c0_309 = arith.constant 0 : index
    %862 = vector.load %arg6[%c3_307, %c0_308, %c0_309] : memref<4x128x64xbf16, #tpu.memory_space<vmem>>, vector<1x128x64xbf16>
    %863 = vector.shape_cast %862 : vector<1x128x64xbf16> to vector<128x64xbf16>
    %c3_310 = arith.constant 3 : index
    %c0_311 = arith.constant 0 : index
    %c0_312 = arith.constant 0 : index
    %864 = vector.load %arg7[%c3_310, %c0_311, %c0_312] : memref<4x1x64xf32, #tpu.memory_space<vmem>>, vector<1x1x64xf32>
    %865 = vector.shape_cast %864 : vector<1x1x64xf32> to vector<1x64xf32>
    %c3_313 = arith.constant 3 : index
    %c0_314 = arith.constant 0 : index
    %c0_315 = arith.constant 0 : index
    %866 = vector.load %arg10[%c3_313, %c0_314, %c0_315] : memref<4x64x16xbf16, #tpu.memory_space<vmem>>, vector<1x64x16xbf16>
    %867 = vector.shape_cast %866 : vector<1x64x16xbf16> to vector<64x16xbf16>
    %c3_316 = arith.constant 3 : index
    %c0_317 = arith.constant 0 : index
    %c0_318 = arith.constant 0 : index
    %868 = vector.load %arg11[%c3_316, %c0_317, %c0_318] : memref<4x1x16xf32, #tpu.memory_space<vmem>>, vector<1x1x16xf32>
    %869 = vector.shape_cast %868 : vector<1x1x16xf32> to vector<1x16xf32>
    %c3_319 = arith.constant 3 : index
    %c0_320 = arith.constant 0 : index
    %c0_321 = arith.constant 0 : index
    %870 = vector.load %arg12[%c3_319, %c0_320, %c0_321] : memref<4x16x64xbf16, #tpu.memory_space<vmem>>, vector<1x16x64xbf16>
    %871 = vector.shape_cast %870 : vector<1x16x64xbf16> to vector<16x64xbf16>
    %c3_322 = arith.constant 3 : index
    %c0_323 = arith.constant 0 : index
    %c0_324 = arith.constant 0 : index
    %872 = vector.load %arg13[%c3_322, %c0_323, %c0_324] : memref<4x1x64xf32, #tpu.memory_space<vmem>>, vector<1x1x64xf32>
    %873 = vector.shape_cast %872 : vector<1x1x64xf32> to vector<1x64xf32>
    %874 = arith.truncf %857 : vector<8x64xf32> to vector<8x64xbf16>
    %cst_325 = arith.constant dense<0.000000e+00> : vector<8x384xf32>
    %875 = tpu.matmul %874, %859, %cst_325 {dimension_numbers = #tpu.dot_dimension_numbers<[1], [0], [0], [1], [0, 0, 1, 1], [], []>} : vector<8x64xbf16>, vector<64x384xbf16>, vector<8x384xf32> -> vector<8x384xf32>
    %876 = vector.broadcast %861 : vector<1x384xf32> to vector<8x384xf32>
    %877 = arith.addf %875, %876 : vector<8x384xf32>
    %878 = arith.truncf %877 : vector<8x384xf32> to vector<8x384xbf16>
    %cst_326 = arith.constant 0.000000e+00 : f32
    %879 = vector.broadcast %cst_326 : f32 to vector<8x64xf32>
    %880 = vector.extract_strided_slice %878 {offsets = [0, 0], sizes = [8, 16], strides = [1, 1]} : vector<8x384xbf16> to vector<8x16xbf16>
    %881 = vector.extract_strided_slice %878 {offsets = [0, 128], sizes = [8, 16], strides = [1, 1]} : vector<8x384xbf16> to vector<8x16xbf16>
    %882 = vector.extract_strided_slice %878 {offsets = [0, 256], sizes = [8, 16], strides = [1, 1]} : vector<8x384xbf16> to vector<8x16xbf16>
    %cst_327 = arith.constant dense<0.000000e+00> : vector<8x8xf32>
    %883 = tpu.matmul %880, %881, %cst_327 {dimension_numbers = #tpu.dot_dimension_numbers<[1], [1], [0], [0], [0, 0, 1, 0], [], []>} : vector<8x16xbf16>, vector<8x16xbf16>, vector<8x8xf32> -> vector<8x8xf32>
    %cst_328 = arith.constant 2.500000e-01 : f32
    %884 = vector.broadcast %cst_328 : f32 to vector<8x8xf32>
    %885 = arith.mulf %883, %884 : vector<8x8xf32>
    %886 = vector.broadcast %3 : vector<1x8xf32> to vector<8x8xf32>
    %887 = arith.addf %885, %886 : vector<8x8xf32>
    %cst_329 = arith.constant dense<0xFF800000> : vector<8xf32>
    %888 = vector.multi_reduction <maximumf>, %887, %cst_329 [1] : vector<8x8xf32> to vector<8xf32>
    %889 = vector.shape_cast %888 : vector<8xf32> to vector<8x1xf32>
    %890 = vector.broadcast %889 : vector<8x1xf32> to vector<8x8xf32>
    %891 = arith.subf %887, %890 : vector<8x8xf32>
    %892 = math.exp %891 : vector<8x8xf32>
    %cst_330 = arith.constant dense<0.000000e+00> : vector<8xf32>
    %893 = vector.multi_reduction <add>, %892, %cst_330 [1] : vector<8x8xf32> to vector<8xf32>
    %894 = vector.shape_cast %893 : vector<8xf32> to vector<8x1xf32>
    %895 = tpu.reciprocal %894 {approx = true} : vector<8x1xf32> -> vector<8x1xf32>
    %896 = vector.broadcast %895 : vector<8x1xf32> to vector<8x8xf32>
    %897 = arith.mulf %892, %896 : vector<8x8xf32>
    %898 = arith.truncf %897 : vector<8x8xf32> to vector<8x8xbf16>
    %cst_331 = arith.constant dense<0.000000e+00> : vector<8x16xf32>
    %899 = tpu.matmul %898, %882, %cst_331 {dimension_numbers = #tpu.dot_dimension_numbers<[1], [0], [0], [1], [0, 0, 1, 1], [], []>} : vector<8x8xbf16>, vector<8x16xbf16>, vector<8x16xf32> -> vector<8x16xf32>
    %900 = arith.truncf %899 : vector<8x16xf32> to vector<8x16xbf16>
    %901 = vector.extract_strided_slice %863 {offsets = [0, 0], sizes = [16, 64], strides = [1, 1]} : vector<128x64xbf16> to vector<16x64xbf16>
    %cst_332 = arith.constant dense<0.000000e+00> : vector<8x64xf32>
    %902 = tpu.matmul %900, %901, %cst_332 {dimension_numbers = #tpu.dot_dimension_numbers<[1], [0], [0], [1], [0, 0, 1, 1], [], []>} : vector<8x16xbf16>, vector<16x64xbf16>, vector<8x64xf32> -> vector<8x64xf32>
    %903 = arith.addf %879, %902 : vector<8x64xf32>
    %904 = vector.extract_strided_slice %878 {offsets = [0, 16], sizes = [8, 16], strides = [1, 1]} : vector<8x384xbf16> to vector<8x16xbf16>
    %905 = vector.extract_strided_slice %878 {offsets = [0, 144], sizes = [8, 16], strides = [1, 1]} : vector<8x384xbf16> to vector<8x16xbf16>
    %906 = vector.extract_strided_slice %878 {offsets = [0, 272], sizes = [8, 16], strides = [1, 1]} : vector<8x384xbf16> to vector<8x16xbf16>
    %cst_333 = arith.constant dense<0.000000e+00> : vector<8x8xf32>
    %907 = tpu.matmul %904, %905, %cst_333 {dimension_numbers = #tpu.dot_dimension_numbers<[1], [1], [0], [0], [0, 0, 1, 0], [], []>} : vector<8x16xbf16>, vector<8x16xbf16>, vector<8x8xf32> -> vector<8x8xf32>
    %cst_334 = arith.constant 2.500000e-01 : f32
    %908 = vector.broadcast %cst_334 : f32 to vector<8x8xf32>
    %909 = arith.mulf %907, %908 : vector<8x8xf32>
    %910 = vector.broadcast %3 : vector<1x8xf32> to vector<8x8xf32>
    %911 = arith.addf %909, %910 : vector<8x8xf32>
    %cst_335 = arith.constant dense<0xFF800000> : vector<8xf32>
    %912 = vector.multi_reduction <maximumf>, %911, %cst_335 [1] : vector<8x8xf32> to vector<8xf32>
    %913 = vector.shape_cast %912 : vector<8xf32> to vector<8x1xf32>
    %914 = vector.broadcast %913 : vector<8x1xf32> to vector<8x8xf32>
    %915 = arith.subf %911, %914 : vector<8x8xf32>
    %916 = math.exp %915 : vector<8x8xf32>
    %cst_336 = arith.constant dense<0.000000e+00> : vector<8xf32>
    %917 = vector.multi_reduction <add>, %916, %cst_336 [1] : vector<8x8xf32> to vector<8xf32>
    %918 = vector.shape_cast %917 : vector<8xf32> to vector<8x1xf32>
    %919 = tpu.reciprocal %918 {approx = true} : vector<8x1xf32> -> vector<8x1xf32>
    %920 = vector.broadcast %919 : vector<8x1xf32> to vector<8x8xf32>
    %921 = arith.mulf %916, %920 : vector<8x8xf32>
    %922 = arith.truncf %921 : vector<8x8xf32> to vector<8x8xbf16>
    %cst_337 = arith.constant dense<0.000000e+00> : vector<8x16xf32>
    %923 = tpu.matmul %922, %906, %cst_337 {dimension_numbers = #tpu.dot_dimension_numbers<[1], [0], [0], [1], [0, 0, 1, 1], [], []>} : vector<8x8xbf16>, vector<8x16xbf16>, vector<8x16xf32> -> vector<8x16xf32>
    %924 = arith.truncf %923 : vector<8x16xf32> to vector<8x16xbf16>
    %925 = vector.extract_strided_slice %863 {offsets = [16, 0], sizes = [16, 64], strides = [1, 1]} : vector<128x64xbf16> to vector<16x64xbf16>
    %cst_338 = arith.constant dense<0.000000e+00> : vector<8x64xf32>
    %926 = tpu.matmul %924, %925, %cst_338 {dimension_numbers = #tpu.dot_dimension_numbers<[1], [0], [0], [1], [0, 0, 1, 1], [], []>} : vector<8x16xbf16>, vector<16x64xbf16>, vector<8x64xf32> -> vector<8x64xf32>
    %927 = arith.addf %903, %926 : vector<8x64xf32>
    %928 = vector.extract_strided_slice %878 {offsets = [0, 32], sizes = [8, 16], strides = [1, 1]} : vector<8x384xbf16> to vector<8x16xbf16>
    %929 = vector.extract_strided_slice %878 {offsets = [0, 160], sizes = [8, 16], strides = [1, 1]} : vector<8x384xbf16> to vector<8x16xbf16>
    %930 = vector.extract_strided_slice %878 {offsets = [0, 288], sizes = [8, 16], strides = [1, 1]} : vector<8x384xbf16> to vector<8x16xbf16>
    %cst_339 = arith.constant dense<0.000000e+00> : vector<8x8xf32>
    %931 = tpu.matmul %928, %929, %cst_339 {dimension_numbers = #tpu.dot_dimension_numbers<[1], [1], [0], [0], [0, 0, 1, 0], [], []>} : vector<8x16xbf16>, vector<8x16xbf16>, vector<8x8xf32> -> vector<8x8xf32>
    %cst_340 = arith.constant 2.500000e-01 : f32
    %932 = vector.broadcast %cst_340 : f32 to vector<8x8xf32>
    %933 = arith.mulf %931, %932 : vector<8x8xf32>
    %934 = vector.broadcast %3 : vector<1x8xf32> to vector<8x8xf32>
    %935 = arith.addf %933, %934 : vector<8x8xf32>
    %cst_341 = arith.constant dense<0xFF800000> : vector<8xf32>
    %936 = vector.multi_reduction <maximumf>, %935, %cst_341 [1] : vector<8x8xf32> to vector<8xf32>
    %937 = vector.shape_cast %936 : vector<8xf32> to vector<8x1xf32>
    %938 = vector.broadcast %937 : vector<8x1xf32> to vector<8x8xf32>
    %939 = arith.subf %935, %938 : vector<8x8xf32>
    %940 = math.exp %939 : vector<8x8xf32>
    %cst_342 = arith.constant dense<0.000000e+00> : vector<8xf32>
    %941 = vector.multi_reduction <add>, %940, %cst_342 [1] : vector<8x8xf32> to vector<8xf32>
    %942 = vector.shape_cast %941 : vector<8xf32> to vector<8x1xf32>
    %943 = tpu.reciprocal %942 {approx = true} : vector<8x1xf32> -> vector<8x1xf32>
    %944 = vector.broadcast %943 : vector<8x1xf32> to vector<8x8xf32>
    %945 = arith.mulf %940, %944 : vector<8x8xf32>
    %946 = arith.truncf %945 : vector<8x8xf32> to vector<8x8xbf16>
    %cst_343 = arith.constant dense<0.000000e+00> : vector<8x16xf32>
    %947 = tpu.matmul %946, %930, %cst_343 {dimension_numbers = #tpu.dot_dimension_numbers<[1], [0], [0], [1], [0, 0, 1, 1], [], []>} : vector<8x8xbf16>, vector<8x16xbf16>, vector<8x16xf32> -> vector<8x16xf32>
    %948 = arith.truncf %947 : vector<8x16xf32> to vector<8x16xbf16>
    %949 = vector.extract_strided_slice %863 {offsets = [32, 0], sizes = [16, 64], strides = [1, 1]} : vector<128x64xbf16> to vector<16x64xbf16>
    %cst_344 = arith.constant dense<0.000000e+00> : vector<8x64xf32>
    %950 = tpu.matmul %948, %949, %cst_344 {dimension_numbers = #tpu.dot_dimension_numbers<[1], [0], [0], [1], [0, 0, 1, 1], [], []>} : vector<8x16xbf16>, vector<16x64xbf16>, vector<8x64xf32> -> vector<8x64xf32>
    %951 = arith.addf %927, %950 : vector<8x64xf32>
    %952 = vector.extract_strided_slice %878 {offsets = [0, 48], sizes = [8, 16], strides = [1, 1]} : vector<8x384xbf16> to vector<8x16xbf16>
    %953 = vector.extract_strided_slice %878 {offsets = [0, 176], sizes = [8, 16], strides = [1, 1]} : vector<8x384xbf16> to vector<8x16xbf16>
    %954 = vector.extract_strided_slice %878 {offsets = [0, 304], sizes = [8, 16], strides = [1, 1]} : vector<8x384xbf16> to vector<8x16xbf16>
    %cst_345 = arith.constant dense<0.000000e+00> : vector<8x8xf32>
    %955 = tpu.matmul %952, %953, %cst_345 {dimension_numbers = #tpu.dot_dimension_numbers<[1], [1], [0], [0], [0, 0, 1, 0], [], []>} : vector<8x16xbf16>, vector<8x16xbf16>, vector<8x8xf32> -> vector<8x8xf32>
    %cst_346 = arith.constant 2.500000e-01 : f32
    %956 = vector.broadcast %cst_346 : f32 to vector<8x8xf32>
    %957 = arith.mulf %955, %956 : vector<8x8xf32>
    %958 = vector.broadcast %3 : vector<1x8xf32> to vector<8x8xf32>
    %959 = arith.addf %957, %958 : vector<8x8xf32>
    %cst_347 = arith.constant dense<0xFF800000> : vector<8xf32>
    %960 = vector.multi_reduction <maximumf>, %959, %cst_347 [1] : vector<8x8xf32> to vector<8xf32>
    %961 = vector.shape_cast %960 : vector<8xf32> to vector<8x1xf32>
    %962 = vector.broadcast %961 : vector<8x1xf32> to vector<8x8xf32>
    %963 = arith.subf %959, %962 : vector<8x8xf32>
    %964 = math.exp %963 : vector<8x8xf32>
    %cst_348 = arith.constant dense<0.000000e+00> : vector<8xf32>
    %965 = vector.multi_reduction <add>, %964, %cst_348 [1] : vector<8x8xf32> to vector<8xf32>
    %966 = vector.shape_cast %965 : vector<8xf32> to vector<8x1xf32>
    %967 = tpu.reciprocal %966 {approx = true} : vector<8x1xf32> -> vector<8x1xf32>
    %968 = vector.broadcast %967 : vector<8x1xf32> to vector<8x8xf32>
    %969 = arith.mulf %964, %968 : vector<8x8xf32>
    %970 = arith.truncf %969 : vector<8x8xf32> to vector<8x8xbf16>
    %cst_349 = arith.constant dense<0.000000e+00> : vector<8x16xf32>
    %971 = tpu.matmul %970, %954, %cst_349 {dimension_numbers = #tpu.dot_dimension_numbers<[1], [0], [0], [1], [0, 0, 1, 1], [], []>} : vector<8x8xbf16>, vector<8x16xbf16>, vector<8x16xf32> -> vector<8x16xf32>
    %972 = arith.truncf %971 : vector<8x16xf32> to vector<8x16xbf16>
    %973 = vector.extract_strided_slice %863 {offsets = [48, 0], sizes = [16, 64], strides = [1, 1]} : vector<128x64xbf16> to vector<16x64xbf16>
    %cst_350 = arith.constant dense<0.000000e+00> : vector<8x64xf32>
    %974 = tpu.matmul %972, %973, %cst_350 {dimension_numbers = #tpu.dot_dimension_numbers<[1], [0], [0], [1], [0, 0, 1, 1], [], []>} : vector<8x16xbf16>, vector<16x64xbf16>, vector<8x64xf32> -> vector<8x64xf32>
    %975 = arith.addf %951, %974 : vector<8x64xf32>
    %976 = vector.extract_strided_slice %878 {offsets = [0, 64], sizes = [8, 16], strides = [1, 1]} : vector<8x384xbf16> to vector<8x16xbf16>
    %977 = vector.extract_strided_slice %878 {offsets = [0, 192], sizes = [8, 16], strides = [1, 1]} : vector<8x384xbf16> to vector<8x16xbf16>
    %978 = vector.extract_strided_slice %878 {offsets = [0, 320], sizes = [8, 16], strides = [1, 1]} : vector<8x384xbf16> to vector<8x16xbf16>
    %cst_351 = arith.constant dense<0.000000e+00> : vector<8x8xf32>
    %979 = tpu.matmul %976, %977, %cst_351 {dimension_numbers = #tpu.dot_dimension_numbers<[1], [1], [0], [0], [0, 0, 1, 0], [], []>} : vector<8x16xbf16>, vector<8x16xbf16>, vector<8x8xf32> -> vector<8x8xf32>
    %cst_352 = arith.constant 2.500000e-01 : f32
    %980 = vector.broadcast %cst_352 : f32 to vector<8x8xf32>
    %981 = arith.mulf %979, %980 : vector<8x8xf32>
    %982 = vector.broadcast %3 : vector<1x8xf32> to vector<8x8xf32>
    %983 = arith.addf %981, %982 : vector<8x8xf32>
    %cst_353 = arith.constant dense<0xFF800000> : vector<8xf32>
    %984 = vector.multi_reduction <maximumf>, %983, %cst_353 [1] : vector<8x8xf32> to vector<8xf32>
    %985 = vector.shape_cast %984 : vector<8xf32> to vector<8x1xf32>
    %986 = vector.broadcast %985 : vector<8x1xf32> to vector<8x8xf32>
    %987 = arith.subf %983, %986 : vector<8x8xf32>
    %988 = math.exp %987 : vector<8x8xf32>
    %cst_354 = arith.constant dense<0.000000e+00> : vector<8xf32>
    %989 = vector.multi_reduction <add>, %988, %cst_354 [1] : vector<8x8xf32> to vector<8xf32>
    %990 = vector.shape_cast %989 : vector<8xf32> to vector<8x1xf32>
    %991 = tpu.reciprocal %990 {approx = true} : vector<8x1xf32> -> vector<8x1xf32>
    %992 = vector.broadcast %991 : vector<8x1xf32> to vector<8x8xf32>
    %993 = arith.mulf %988, %992 : vector<8x8xf32>
    %994 = arith.truncf %993 : vector<8x8xf32> to vector<8x8xbf16>
    %cst_355 = arith.constant dense<0.000000e+00> : vector<8x16xf32>
    %995 = tpu.matmul %994, %978, %cst_355 {dimension_numbers = #tpu.dot_dimension_numbers<[1], [0], [0], [1], [0, 0, 1, 1], [], []>} : vector<8x8xbf16>, vector<8x16xbf16>, vector<8x16xf32> -> vector<8x16xf32>
    %996 = arith.truncf %995 : vector<8x16xf32> to vector<8x16xbf16>
    %997 = vector.extract_strided_slice %863 {offsets = [64, 0], sizes = [16, 64], strides = [1, 1]} : vector<128x64xbf16> to vector<16x64xbf16>
    %cst_356 = arith.constant dense<0.000000e+00> : vector<8x64xf32>
    %998 = tpu.matmul %996, %997, %cst_356 {dimension_numbers = #tpu.dot_dimension_numbers<[1], [0], [0], [1], [0, 0, 1, 1], [], []>} : vector<8x16xbf16>, vector<16x64xbf16>, vector<8x64xf32> -> vector<8x64xf32>
    %999 = arith.addf %975, %998 : vector<8x64xf32>
    %1000 = vector.extract_strided_slice %878 {offsets = [0, 80], sizes = [8, 16], strides = [1, 1]} : vector<8x384xbf16> to vector<8x16xbf16>
    %1001 = vector.extract_strided_slice %878 {offsets = [0, 208], sizes = [8, 16], strides = [1, 1]} : vector<8x384xbf16> to vector<8x16xbf16>
    %1002 = vector.extract_strided_slice %878 {offsets = [0, 336], sizes = [8, 16], strides = [1, 1]} : vector<8x384xbf16> to vector<8x16xbf16>
    %cst_357 = arith.constant dense<0.000000e+00> : vector<8x8xf32>
    %1003 = tpu.matmul %1000, %1001, %cst_357 {dimension_numbers = #tpu.dot_dimension_numbers<[1], [1], [0], [0], [0, 0, 1, 0], [], []>} : vector<8x16xbf16>, vector<8x16xbf16>, vector<8x8xf32> -> vector<8x8xf32>
    %cst_358 = arith.constant 2.500000e-01 : f32
    %1004 = vector.broadcast %cst_358 : f32 to vector<8x8xf32>
    %1005 = arith.mulf %1003, %1004 : vector<8x8xf32>
    %1006 = vector.broadcast %3 : vector<1x8xf32> to vector<8x8xf32>
    %1007 = arith.addf %1005, %1006 : vector<8x8xf32>
    %cst_359 = arith.constant dense<0xFF800000> : vector<8xf32>
    %1008 = vector.multi_reduction <maximumf>, %1007, %cst_359 [1] : vector<8x8xf32> to vector<8xf32>
    %1009 = vector.shape_cast %1008 : vector<8xf32> to vector<8x1xf32>
    %1010 = vector.broadcast %1009 : vector<8x1xf32> to vector<8x8xf32>
    %1011 = arith.subf %1007, %1010 : vector<8x8xf32>
    %1012 = math.exp %1011 : vector<8x8xf32>
    %cst_360 = arith.constant dense<0.000000e+00> : vector<8xf32>
    %1013 = vector.multi_reduction <add>, %1012, %cst_360 [1] : vector<8x8xf32> to vector<8xf32>
    %1014 = vector.shape_cast %1013 : vector<8xf32> to vector<8x1xf32>
    %1015 = tpu.reciprocal %1014 {approx = true} : vector<8x1xf32> -> vector<8x1xf32>
    %1016 = vector.broadcast %1015 : vector<8x1xf32> to vector<8x8xf32>
    %1017 = arith.mulf %1012, %1016 : vector<8x8xf32>
    %1018 = arith.truncf %1017 : vector<8x8xf32> to vector<8x8xbf16>
    %cst_361 = arith.constant dense<0.000000e+00> : vector<8x16xf32>
    %1019 = tpu.matmul %1018, %1002, %cst_361 {dimension_numbers = #tpu.dot_dimension_numbers<[1], [0], [0], [1], [0, 0, 1, 1], [], []>} : vector<8x8xbf16>, vector<8x16xbf16>, vector<8x16xf32> -> vector<8x16xf32>
    %1020 = arith.truncf %1019 : vector<8x16xf32> to vector<8x16xbf16>
    %1021 = vector.extract_strided_slice %863 {offsets = [80, 0], sizes = [16, 64], strides = [1, 1]} : vector<128x64xbf16> to vector<16x64xbf16>
    %cst_362 = arith.constant dense<0.000000e+00> : vector<8x64xf32>
    %1022 = tpu.matmul %1020, %1021, %cst_362 {dimension_numbers = #tpu.dot_dimension_numbers<[1], [0], [0], [1], [0, 0, 1, 1], [], []>} : vector<8x16xbf16>, vector<16x64xbf16>, vector<8x64xf32> -> vector<8x64xf32>
    %1023 = arith.addf %999, %1022 : vector<8x64xf32>
    %1024 = vector.extract_strided_slice %878 {offsets = [0, 96], sizes = [8, 16], strides = [1, 1]} : vector<8x384xbf16> to vector<8x16xbf16>
    %1025 = vector.extract_strided_slice %878 {offsets = [0, 224], sizes = [8, 16], strides = [1, 1]} : vector<8x384xbf16> to vector<8x16xbf16>
    %1026 = vector.extract_strided_slice %878 {offsets = [0, 352], sizes = [8, 16], strides = [1, 1]} : vector<8x384xbf16> to vector<8x16xbf16>
    %cst_363 = arith.constant dense<0.000000e+00> : vector<8x8xf32>
    %1027 = tpu.matmul %1024, %1025, %cst_363 {dimension_numbers = #tpu.dot_dimension_numbers<[1], [1], [0], [0], [0, 0, 1, 0], [], []>} : vector<8x16xbf16>, vector<8x16xbf16>, vector<8x8xf32> -> vector<8x8xf32>
    %cst_364 = arith.constant 2.500000e-01 : f32
    %1028 = vector.broadcast %cst_364 : f32 to vector<8x8xf32>
    %1029 = arith.mulf %1027, %1028 : vector<8x8xf32>
    %1030 = vector.broadcast %3 : vector<1x8xf32> to vector<8x8xf32>
    %1031 = arith.addf %1029, %1030 : vector<8x8xf32>
    %cst_365 = arith.constant dense<0xFF800000> : vector<8xf32>
    %1032 = vector.multi_reduction <maximumf>, %1031, %cst_365 [1] : vector<8x8xf32> to vector<8xf32>
    %1033 = vector.shape_cast %1032 : vector<8xf32> to vector<8x1xf32>
    %1034 = vector.broadcast %1033 : vector<8x1xf32> to vector<8x8xf32>
    %1035 = arith.subf %1031, %1034 : vector<8x8xf32>
    %1036 = math.exp %1035 : vector<8x8xf32>
    %cst_366 = arith.constant dense<0.000000e+00> : vector<8xf32>
    %1037 = vector.multi_reduction <add>, %1036, %cst_366 [1] : vector<8x8xf32> to vector<8xf32>
    %1038 = vector.shape_cast %1037 : vector<8xf32> to vector<8x1xf32>
    %1039 = tpu.reciprocal %1038 {approx = true} : vector<8x1xf32> -> vector<8x1xf32>
    %1040 = vector.broadcast %1039 : vector<8x1xf32> to vector<8x8xf32>
    %1041 = arith.mulf %1036, %1040 : vector<8x8xf32>
    %1042 = arith.truncf %1041 : vector<8x8xf32> to vector<8x8xbf16>
    %cst_367 = arith.constant dense<0.000000e+00> : vector<8x16xf32>
    %1043 = tpu.matmul %1042, %1026, %cst_367 {dimension_numbers = #tpu.dot_dimension_numbers<[1], [0], [0], [1], [0, 0, 1, 1], [], []>} : vector<8x8xbf16>, vector<8x16xbf16>, vector<8x16xf32> -> vector<8x16xf32>
    %1044 = arith.truncf %1043 : vector<8x16xf32> to vector<8x16xbf16>
    %1045 = vector.extract_strided_slice %863 {offsets = [96, 0], sizes = [16, 64], strides = [1, 1]} : vector<128x64xbf16> to vector<16x64xbf16>
    %cst_368 = arith.constant dense<0.000000e+00> : vector<8x64xf32>
    %1046 = tpu.matmul %1044, %1045, %cst_368 {dimension_numbers = #tpu.dot_dimension_numbers<[1], [0], [0], [1], [0, 0, 1, 1], [], []>} : vector<8x16xbf16>, vector<16x64xbf16>, vector<8x64xf32> -> vector<8x64xf32>
    %1047 = arith.addf %1023, %1046 : vector<8x64xf32>
    %1048 = vector.extract_strided_slice %878 {offsets = [0, 112], sizes = [8, 16], strides = [1, 1]} : vector<8x384xbf16> to vector<8x16xbf16>
    %1049 = vector.extract_strided_slice %878 {offsets = [0, 240], sizes = [8, 16], strides = [1, 1]} : vector<8x384xbf16> to vector<8x16xbf16>
    %1050 = vector.extract_strided_slice %878 {offsets = [0, 368], sizes = [8, 16], strides = [1, 1]} : vector<8x384xbf16> to vector<8x16xbf16>
    %cst_369 = arith.constant dense<0.000000e+00> : vector<8x8xf32>
    %1051 = tpu.matmul %1048, %1049, %cst_369 {dimension_numbers = #tpu.dot_dimension_numbers<[1], [1], [0], [0], [0, 0, 1, 0], [], []>} : vector<8x16xbf16>, vector<8x16xbf16>, vector<8x8xf32> -> vector<8x8xf32>
    %cst_370 = arith.constant 2.500000e-01 : f32
    %1052 = vector.broadcast %cst_370 : f32 to vector<8x8xf32>
    %1053 = arith.mulf %1051, %1052 : vector<8x8xf32>
    %1054 = vector.broadcast %3 : vector<1x8xf32> to vector<8x8xf32>
    %1055 = arith.addf %1053, %1054 : vector<8x8xf32>
    %cst_371 = arith.constant dense<0xFF800000> : vector<8xf32>
    %1056 = vector.multi_reduction <maximumf>, %1055, %cst_371 [1] : vector<8x8xf32> to vector<8xf32>
    %1057 = vector.shape_cast %1056 : vector<8xf32> to vector<8x1xf32>
    %1058 = vector.broadcast %1057 : vector<8x1xf32> to vector<8x8xf32>
    %1059 = arith.subf %1055, %1058 : vector<8x8xf32>
    %1060 = math.exp %1059 : vector<8x8xf32>
    %cst_372 = arith.constant dense<0.000000e+00> : vector<8xf32>
    %1061 = vector.multi_reduction <add>, %1060, %cst_372 [1] : vector<8x8xf32> to vector<8xf32>
    %1062 = vector.shape_cast %1061 : vector<8xf32> to vector<8x1xf32>
    %1063 = tpu.reciprocal %1062 {approx = true} : vector<8x1xf32> -> vector<8x1xf32>
    %1064 = vector.broadcast %1063 : vector<8x1xf32> to vector<8x8xf32>
    %1065 = arith.mulf %1060, %1064 : vector<8x8xf32>
    %1066 = arith.truncf %1065 : vector<8x8xf32> to vector<8x8xbf16>
    %cst_373 = arith.constant dense<0.000000e+00> : vector<8x16xf32>
    %1067 = tpu.matmul %1066, %1050, %cst_373 {dimension_numbers = #tpu.dot_dimension_numbers<[1], [0], [0], [1], [0, 0, 1, 1], [], []>} : vector<8x8xbf16>, vector<8x16xbf16>, vector<8x16xf32> -> vector<8x16xf32>
    %1068 = arith.truncf %1067 : vector<8x16xf32> to vector<8x16xbf16>
    %1069 = vector.extract_strided_slice %863 {offsets = [112, 0], sizes = [16, 64], strides = [1, 1]} : vector<128x64xbf16> to vector<16x64xbf16>
    %cst_374 = arith.constant dense<0.000000e+00> : vector<8x64xf32>
    %1070 = tpu.matmul %1068, %1069, %cst_374 {dimension_numbers = #tpu.dot_dimension_numbers<[1], [0], [0], [1], [0, 0, 1, 1], [], []>} : vector<8x16xbf16>, vector<16x64xbf16>, vector<8x64xf32> -> vector<8x64xf32>
    %1071 = arith.addf %1047, %1070 : vector<8x64xf32>
    %1072 = vector.broadcast %865 : vector<1x64xf32> to vector<8x64xf32>
    %1073 = arith.addf %1071, %1072 : vector<8x64xf32>
    %1074 = arith.addf %1073, %857 : vector<8x64xf32>
    %c3_375 = arith.constant 3 : index
    %c0_376 = arith.constant 0 : index
    %c0_377 = arith.constant 0 : index
    %1075 = vector.load %arg8[%c3_375, %c0_376, %c0_377] : memref<4x1x64xf32, #tpu.memory_space<vmem>>, vector<1x1x64xf32>
    %1076 = vector.shape_cast %1075 : vector<1x1x64xf32> to vector<1x64xf32>
    %c3_378 = arith.constant 3 : index
    %c0_379 = arith.constant 0 : index
    %c0_380 = arith.constant 0 : index
    %1077 = vector.load %arg9[%c3_378, %c0_379, %c0_380] : memref<4x1x64xf32, #tpu.memory_space<vmem>>, vector<1x1x64xf32>
    %1078 = vector.shape_cast %1077 : vector<1x1x64xf32> to vector<1x64xf32>
    %cst_381 = arith.constant dense<0.000000e+00> : vector<8xf32>
    %1079 = vector.multi_reduction <add>, %1074, %cst_381 [1] : vector<8x64xf32> to vector<8xf32>
    %1080 = vector.shape_cast %1079 : vector<8xf32> to vector<8x1xf32>
    %cst_382 = arith.constant 6.400000e+01 : f32
    %1081 = vector.broadcast %cst_382 : f32 to vector<8x1xf32>
    %1082 = arith.divf %1080, %1081 : vector<8x1xf32>
    %1083 = vector.broadcast %1082 : vector<8x1xf32> to vector<8x64xf32>
    %1084 = arith.subf %1074, %1083 : vector<8x64xf32>
    %1085 = arith.mulf %1084, %1084 : vector<8x64xf32>
    %cst_383 = arith.constant dense<0.000000e+00> : vector<8xf32>
    %1086 = vector.multi_reduction <add>, %1085, %cst_383 [1] : vector<8x64xf32> to vector<8xf32>
    %1087 = vector.shape_cast %1086 : vector<8xf32> to vector<8x1xf32>
    %cst_384 = arith.constant 6.400000e+01 : f32
    %1088 = vector.broadcast %cst_384 : f32 to vector<8x1xf32>
    %1089 = arith.divf %1087, %1088 : vector<8x1xf32>
    %1090 = vector.broadcast %1082 : vector<8x1xf32> to vector<8x64xf32>
    %1091 = arith.subf %1074, %1090 : vector<8x64xf32>
    %cst_385 = arith.constant 9.99999974E-6 : f32
    %1092 = vector.broadcast %cst_385 : f32 to vector<8x1xf32>
    %1093 = arith.addf %1089, %1092 : vector<8x1xf32>
    %1094 = math.rsqrt %1093 : vector<8x1xf32>
    %1095 = vector.broadcast %1094 : vector<8x1xf32> to vector<8x64xf32>
    %1096 = arith.mulf %1091, %1095 : vector<8x64xf32>
    %1097 = vector.broadcast %1076 : vector<1x64xf32> to vector<8x64xf32>
    %1098 = arith.mulf %1096, %1097 : vector<8x64xf32>
    %1099 = vector.broadcast %1078 : vector<1x64xf32> to vector<8x64xf32>
    %1100 = arith.addf %1098, %1099 : vector<8x64xf32>
    %1101 = vector.broadcast %1 : vector<8x1xf32> to vector<8x64xf32>
    %1102 = arith.mulf %1100, %1101 : vector<8x64xf32>
    %1103 = arith.truncf %1102 : vector<8x64xf32> to vector<8x64xbf16>
    %cst_386 = arith.constant dense<0.000000e+00> : vector<8x16xf32>
    %1104 = tpu.matmul %1103, %867, %cst_386 {dimension_numbers = #tpu.dot_dimension_numbers<[1], [0], [0], [1], [0, 0, 1, 1], [], []>} : vector<8x64xbf16>, vector<64x16xbf16>, vector<8x16xf32> -> vector<8x16xf32>
    %1105 = vector.broadcast %869 : vector<1x16xf32> to vector<8x16xf32>
    %1106 = arith.addf %1104, %1105 : vector<8x16xf32>
    %cst_387 = arith.constant 0.000000e+00 : f32
    %1107 = vector.broadcast %cst_387 : f32 to vector<8x16xf32>
    %1108 = arith.maximumf %1106, %1107 : vector<8x16xf32>
    %1109 = arith.truncf %1108 : vector<8x16xf32> to vector<8x16xbf16>
    %cst_388 = arith.constant dense<0.000000e+00> : vector<8x64xf32>
    %1110 = tpu.matmul %1109, %871, %cst_388 {dimension_numbers = #tpu.dot_dimension_numbers<[1], [0], [0], [1], [0, 0, 1, 1], [], []>} : vector<8x16xbf16>, vector<16x64xbf16>, vector<8x64xf32> -> vector<8x64xf32>
    %1111 = vector.broadcast %873 : vector<1x64xf32> to vector<8x64xf32>
    %1112 = arith.addf %1110, %1111 : vector<8x64xf32>
    %1113 = arith.addf %1112, %1102 : vector<8x64xf32>
    %c3_389 = arith.constant 3 : index
    %c0_390 = arith.constant 0 : index
    %c0_391 = arith.constant 0 : index
    %1114 = vector.load %arg14[%c3_389, %c0_390, %c0_391] : memref<4x1x64xf32, #tpu.memory_space<vmem>>, vector<1x1x64xf32>
    %1115 = vector.shape_cast %1114 : vector<1x1x64xf32> to vector<1x64xf32>
    %c3_392 = arith.constant 3 : index
    %c0_393 = arith.constant 0 : index
    %c0_394 = arith.constant 0 : index
    %1116 = vector.load %arg15[%c3_392, %c0_393, %c0_394] : memref<4x1x64xf32, #tpu.memory_space<vmem>>, vector<1x1x64xf32>
    %1117 = vector.shape_cast %1116 : vector<1x1x64xf32> to vector<1x64xf32>
    %cst_395 = arith.constant dense<0.000000e+00> : vector<8xf32>
    %1118 = vector.multi_reduction <add>, %1113, %cst_395 [1] : vector<8x64xf32> to vector<8xf32>
    %1119 = vector.shape_cast %1118 : vector<8xf32> to vector<8x1xf32>
    %cst_396 = arith.constant 6.400000e+01 : f32
    %1120 = vector.broadcast %cst_396 : f32 to vector<8x1xf32>
    %1121 = arith.divf %1119, %1120 : vector<8x1xf32>
    %1122 = vector.broadcast %1121 : vector<8x1xf32> to vector<8x64xf32>
    %1123 = arith.subf %1113, %1122 : vector<8x64xf32>
    %1124 = arith.mulf %1123, %1123 : vector<8x64xf32>
    %cst_397 = arith.constant dense<0.000000e+00> : vector<8xf32>
    %1125 = vector.multi_reduction <add>, %1124, %cst_397 [1] : vector<8x64xf32> to vector<8xf32>
    %1126 = vector.shape_cast %1125 : vector<8xf32> to vector<8x1xf32>
    %cst_398 = arith.constant 6.400000e+01 : f32
    %1127 = vector.broadcast %cst_398 : f32 to vector<8x1xf32>
    %1128 = arith.divf %1126, %1127 : vector<8x1xf32>
    %1129 = vector.broadcast %1121 : vector<8x1xf32> to vector<8x64xf32>
    %1130 = arith.subf %1113, %1129 : vector<8x64xf32>
    %cst_399 = arith.constant 9.99999974E-6 : f32
    %1131 = vector.broadcast %cst_399 : f32 to vector<8x1xf32>
    %1132 = arith.addf %1128, %1131 : vector<8x1xf32>
    %1133 = math.rsqrt %1132 : vector<8x1xf32>
    %1134 = vector.broadcast %1133 : vector<8x1xf32> to vector<8x64xf32>
    %1135 = arith.mulf %1130, %1134 : vector<8x64xf32>
    %1136 = vector.broadcast %1115 : vector<1x64xf32> to vector<8x64xf32>
    %1137 = arith.mulf %1135, %1136 : vector<8x64xf32>
    %1138 = vector.broadcast %1117 : vector<1x64xf32> to vector<8x64xf32>
    %1139 = arith.addf %1137, %1138 : vector<8x64xf32>
    %1140 = vector.broadcast %1 : vector<8x1xf32> to vector<8x64xf32>
    %1141 = arith.mulf %1139, %1140 : vector<8x64xf32>
    %1142 = arith.truncf %1141 : vector<8x64xf32> to vector<8x64xbf16>
    %c0_400 = arith.constant 0 : index
    %c0_401 = arith.constant 0 : index
    %1143 = vector.load %arg16[%c0_400, %c0_401] : memref<64x12xbf16, #tpu.memory_space<vmem>>, vector<64x12xbf16>
    %cst_402 = arith.constant dense<0.000000e+00> : vector<8x12xf32>
    %1144 = tpu.matmul %1142, %1143, %cst_402 {dimension_numbers = #tpu.dot_dimension_numbers<[1], [0], [0], [1], [0, 0, 1, 1], [], []>} : vector<8x64xbf16>, vector<64x12xbf16>, vector<8x12xf32> -> vector<8x12xf32>
    %c0_403 = arith.constant 0 : index
    %c0_404 = arith.constant 0 : index
    %1145 = vector.load %arg17[%c0_403, %c0_404] : memref<1x12xf32, #tpu.memory_space<vmem>>, vector<1x12xf32>
    %1146 = vector.broadcast %1145 : vector<1x12xf32> to vector<8x12xf32>
    %1147 = arith.addf %1144, %1146 : vector<8x12xf32>
    %cst_405 = arith.constant dense<0xFF800000> : vector<12xf32>
    %1148 = vector.multi_reduction <maximumf>, %1147, %cst_405 [0] : vector<8x12xf32> to vector<12xf32>
    %1149 = vector.shape_cast %1148 : vector<12xf32> to vector<1x12xf32>
    %c0_406 = arith.constant 0 : index
    %c0_407 = arith.constant 0 : index
    %c0_408 = arith.constant 0 : index
    %1150 = vector.load %arg18[%c0_406, %c0_407, %c0_408] : memref<1x1x12xf32, #tpu.memory_space<vmem>>, vector<1x1x12xf32>
    %1151 = vector.shape_cast %1150 : vector<1x1x12xf32> to vector<1x12xf32>
    %1152 = vector.shape_cast %1149 : vector<1x12xf32> to vector<1x1x12xf32>
    tpu.vector_store %arg18[%c0_406, %c0_407, %c0_408], %1152 {strides = array<i32>} : memref<1x1x12xf32, #tpu.memory_space<vmem>>, vector<1x1x12xf32>,
    return
  }
  func.func @transform_0(%arg0: i32) -> (i32, i32, i32) {
    %c0_i32 = arith.constant 0 : i32
    %c0_i32_0 = arith.constant 0 : i32
    %c0_i32_1 = arith.constant 0 : i32
    return %arg0, %c0_i32, %c0_i32_0 : i32, i32, i32
  }
  func.func @transform_1(%arg0: i32) -> (i32, i32, i32) {
    %c0_i32 = arith.constant 0 : i32
    %c0_i32_0 = arith.constant 0 : i32
    %c0_i32_1 = arith.constant 0 : i32
    return %arg0, %c0_i32, %c0_i32_0 : i32, i32, i32
  }
  func.func @transform_2(%arg0: i32) -> (i32, i32, i32) {
    %c0_i32 = arith.constant 0 : i32
    %c0_i32_0 = arith.constant 0 : i32
    %c0_i32_1 = arith.constant 0 : i32
    return %arg0, %c0_i32, %c0_i32_0 : i32, i32, i32
  }
  func.func @transform_3(%arg0: i32) -> (i32, i32, i32) {
    %c0_i32 = arith.constant 0 : i32
    %c0_i32_0 = arith.constant 0 : i32
    %c0_i32_1 = arith.constant 0 : i32
    %c0_i32_2 = arith.constant 0 : i32
    return %c0_i32, %c0_i32_0, %c0_i32_1 : i32, i32, i32
  }
  func.func @transform_4(%arg0: i32) -> (i32, i32, i32) {
    %c0_i32 = arith.constant 0 : i32
    %c0_i32_0 = arith.constant 0 : i32
    %c0_i32_1 = arith.constant 0 : i32
    %c0_i32_2 = arith.constant 0 : i32
    return %c0_i32, %c0_i32_0, %c0_i32_1 : i32, i32, i32
  }
  func.func @transform_5(%arg0: i32) -> (i32, i32, i32) {
    %c0_i32 = arith.constant 0 : i32
    %c0_i32_0 = arith.constant 0 : i32
    %c0_i32_1 = arith.constant 0 : i32
    %c0_i32_2 = arith.constant 0 : i32
    return %c0_i32, %c0_i32_0, %c0_i32_1 : i32, i32, i32
  }
  func.func @transform_6(%arg0: i32) -> (i32, i32, i32) {
    %c0_i32 = arith.constant 0 : i32
    %c0_i32_0 = arith.constant 0 : i32
    %c0_i32_1 = arith.constant 0 : i32
    %c0_i32_2 = arith.constant 0 : i32
    return %c0_i32, %c0_i32_0, %c0_i32_1 : i32, i32, i32
  }
  func.func @transform_7(%arg0: i32) -> (i32, i32, i32) {
    %c0_i32 = arith.constant 0 : i32
    %c0_i32_0 = arith.constant 0 : i32
    %c0_i32_1 = arith.constant 0 : i32
    %c0_i32_2 = arith.constant 0 : i32
    return %c0_i32, %c0_i32_0, %c0_i32_1 : i32, i32, i32
  }
  func.func @transform_8(%arg0: i32) -> (i32, i32, i32) {
    %c0_i32 = arith.constant 0 : i32
    %c0_i32_0 = arith.constant 0 : i32
    %c0_i32_1 = arith.constant 0 : i32
    %c0_i32_2 = arith.constant 0 : i32
    return %c0_i32, %c0_i32_0, %c0_i32_1 : i32, i32, i32
  }
  func.func @transform_9(%arg0: i32) -> (i32, i32, i32) {
    %c0_i32 = arith.constant 0 : i32
    %c0_i32_0 = arith.constant 0 : i32
    %c0_i32_1 = arith.constant 0 : i32
    %c0_i32_2 = arith.constant 0 : i32
    return %c0_i32, %c0_i32_0, %c0_i32_1 : i32, i32, i32
  }
  func.func @transform_10(%arg0: i32) -> (i32, i32, i32) {
    %c0_i32 = arith.constant 0 : i32
    %c0_i32_0 = arith.constant 0 : i32
    %c0_i32_1 = arith.constant 0 : i32
    %c0_i32_2 = arith.constant 0 : i32
    return %c0_i32, %c0_i32_0, %c0_i32_1 : i32, i32, i32
  }
  func.func @transform_11(%arg0: i32) -> (i32, i32, i32) {
    %c0_i32 = arith.constant 0 : i32
    %c0_i32_0 = arith.constant 0 : i32
    %c0_i32_1 = arith.constant 0 : i32
    %c0_i32_2 = arith.constant 0 : i32
    return %c0_i32, %c0_i32_0, %c0_i32_1 : i32, i32, i32
  }
  func.func @transform_12(%arg0: i32) -> (i32, i32, i32) {
    %c0_i32 = arith.constant 0 : i32
    %c0_i32_0 = arith.constant 0 : i32
    %c0_i32_1 = arith.constant 0 : i32
    %c0_i32_2 = arith.constant 0 : i32
    return %c0_i32, %c0_i32_0, %c0_i32_1 : i32, i32, i32
  }
  func.func @transform_13(%arg0: i32) -> (i32, i32, i32) {
    %c0_i32 = arith.constant 0 : i32
    %c0_i32_0 = arith.constant 0 : i32
    %c0_i32_1 = arith.constant 0 : i32
    %c0_i32_2 = arith.constant 0 : i32
    return %c0_i32, %c0_i32_0, %c0_i32_1 : i32, i32, i32
  }
  func.func @transform_14(%arg0: i32) -> (i32, i32, i32) {
    %c0_i32 = arith.constant 0 : i32
    %c0_i32_0 = arith.constant 0 : i32
    %c0_i32_1 = arith.constant 0 : i32
    %c0_i32_2 = arith.constant 0 : i32
    return %c0_i32, %c0_i32_0, %c0_i32_1 : i32, i32, i32
  }
  func.func @transform_15(%arg0: i32) -> (i32, i32) {
    %c0_i32 = arith.constant 0 : i32
    %c0_i32_0 = arith.constant 0 : i32
    %c0_i32_1 = arith.constant 0 : i32
    return %c0_i32, %c0_i32_0 : i32, i32
  }
  func.func @transform_16(%arg0: i32) -> (i32, i32) {
    %c0_i32 = arith.constant 0 : i32
    %c0_i32_0 = arith.constant 0 : i32
    %c0_i32_1 = arith.constant 0 : i32
    return %c0_i32, %c0_i32_0 : i32, i32
  }
  func.func @transform_17(%arg0: i32) -> (i32, i32, i32) {
    %c0_i32 = arith.constant 0 : i32
    %c0_i32_0 = arith.constant 0 : i32
    %c0_i32_1 = arith.constant 0 : i32
    return %arg0, %c0_i32, %c0_i32_0 : i32, i32, i32
  }
}

</mosaic_0001>

<llo_original>
// kernel: transformer_pallas.1
$region0: #{transformer_pallas.1}
  #allocation0 [shape = 'u32[]', space=smem, size = 0x4, offset = 0x4, fixed_abs, tag = 'smem constant byte address 0x4 - core index']
  #allocation1 [shape = 'u32[144,128]{1,0:T(1,128)}', space=vmem, size = 0x12000, scoped, tag = 'internal scratch']
  %s0 = inlined_call_operand.vmem [shape: f32[2,8,1], index: 0, kind: input, shape index: {}]
  %s1 = inlined_call_operand.vmem [shape: f32[2,1,8], index: 1, kind: input, shape index: {}]
  %s2 = inlined_call_operand.vmem [shape: f32[2,8,64], index: 2, kind: input, shape index: {}]
  %s3 = inlined_call_operand.vmem [shape: bf16[4,64,384], index: 3, kind: input, shape index: {}]
  %s4 = inlined_call_operand.vmem [shape: f32[4,1,384], index: 4, kind: input, shape index: {}]
  %s5 = inlined_call_operand.vmem [shape: bf16[4,128,64], index: 5, kind: input, shape index: {}]
  %s6 = inlined_call_operand.vmem [shape: f32[4,1,64], index: 6, kind: input, shape index: {}]
  %s7 = inlined_call_operand.vmem [shape: f32[4,1,64], index: 7, kind: input, shape index: {}]
  %s8 = inlined_call_operand.vmem [shape: f32[4,1,64], index: 8, kind: input, shape index: {}]
  %s9 = inlined_call_operand.vmem [shape: bf16[4,64,16], index: 9, kind: input, shape index: {}]
  %s10 = inlined_call_operand.vmem [shape: f32[4,1,16], index: 10, kind: input, shape index: {}]
  %s11 = inlined_call_operand.vmem [shape: bf16[4,16,64], index: 11, kind: input, shape index: {}]
  %s12 = inlined_call_operand.vmem [shape: f32[4,1,64], index: 12, kind: input, shape index: {}]
  %s13 = inlined_call_operand.vmem [shape: f32[4,1,64], index: 13, kind: input, shape index: {}]
  %s14 = inlined_call_operand.vmem [shape: f32[4,1,64], index: 14, kind: input, shape index: {}]
  %s15 = inlined_call_operand.vmem [shape: bf16[64,12], index: 15, kind: input, shape index: {}]
  %s16 = inlined_call_operand.vmem [shape: f32[1,12], index: 16, kind: input, shape index: {}]
  %s17 = inlined_call_operand.hbm [shape: f32[2,1,12], index: 17, kind: output, shape index: {}]
  %s18 = sld [smem:[#allocation0]]
  $region101: #{transformer_pallas.1} parent=0
    _
  %s20 = ssub.s32 1, %s18
  %s21 = scalar_select 0, %s20, %s18
  $region1: #{transformer_pallas.1} parent=0
    #allocation2 [shape = 'u8[1024]{0}', space=vmem, size = 0x400, scoped, tag = 'output window, operand 0']
    #allocation3 [shape = 's32[2]{0}', space=sflag, size = 0x8, scoped, tag = 'scoped memory for transformer_pallas.1']
    %22 = vsyncpa [#allocation3], 0
    %s23 = scalar_lea.sflag [#allocation3], 1
    %24 = vsyncpa %s23, 0
    loop: start=0, step=1, limit=4
    $region2: #{transformer_pallas.1} parent=1 // loop_pre_header
      _
    $region3: #{transformer_pallas.1} parent=1 // loop_header
      %s26 = sphi 0, %s30
      %p27 = scmp.ge.s32.totalorder %s26, 4
      %s36 = sphi 0, %s38
      %s39 = sphi 0, %s36
      %s40 = sphi 0, %s39
      %s56 = sphi 0, %s40
      %s62 = sphi 0, %s64
      %s65 = sphi 0, %s62
      %s66 = sphi 0, %s65
      %s82 = sphi 0, %s66
      %s88 = sphi 0, %s90
      %s91 = sphi 0, %s88
      %s92 = sphi 0, %s91
      %s108 = sphi 0, %s92
      %s112 = sphi 0, %s112
      %s114 = sphi 0, %s112
      %s115 = sphi 0, %s114
      %s129 = sphi 0, %s115
      %s133 = sphi 0, %s133
      %s135 = sphi 0, %s133
      %s136 = sphi 0, %s135
      %s150 = sphi 0, %s136
      %s154 = sphi 0, %s154
      %s156 = sphi 0, %s154
      %s157 = sphi 0, %s156
      %s171 = sphi 0, %s157
      %s175 = sphi 0, %s175
      %s177 = sphi 0, %s175
      %s178 = sphi 0, %s177
      %s192 = sphi 0, %s178
      %s196 = sphi 0, %s196
      %s198 = sphi 0, %s196
      %s199 = sphi 0, %s198
      %s213 = sphi 0, %s199
      %s217 = sphi 0, %s217
      %s219 = sphi 0, %s217
      %s220 = sphi 0, %s219
      %s234 = sphi 0, %s220
      %s238 = sphi 0, %s238
      %s240 = sphi 0, %s238
      %s241 = sphi 0, %s240
      %s255 = sphi 0, %s241
      %s259 = sphi 0, %s259
      %s261 = sphi 0, %s259
      %s262 = sphi 0, %s261
      %s276 = sphi 0, %s262
      %s280 = sphi 0, %s280
      %s282 = sphi 0, %s280
      %s283 = sphi 0, %s282
      %s297 = sphi 0, %s283
      %s301 = sphi 0, %s301
      %s303 = sphi 0, %s301
      %s304 = sphi 0, %s303
      %s318 = sphi 0, %s304
      %s322 = sphi 0, %s322
      %s324 = sphi 0, %s322
      %s325 = sphi 0, %s324
      %s339 = sphi 0, %s325
      %s343 = sphi 0, %s343
      %s345 = sphi 0, %s343
      %s346 = sphi 0, %s345
      %s360 = sphi 0, %s346
      %s364 = sphi 0, %s364
      %s366 = sphi 0, %s364
      %s367 = sphi 0, %s366
      %s381 = sphi 0, %s367
      %s385 = sphi 0, %s385
      %s387 = sphi 0, %s385
      %s388 = sphi 0, %s387
      %s402 = sphi 0, %s388
      %s408 = sphi 0, %s410
      %s411 = sphi 0, %s408
      %s412 = sphi 0, %s411
      %s428 = sphi 0, %s412
    $region4: #{transformer_pallas.1} parent=1 // loop_header_branch
      %29 = sbr.rel (%p27) target = $region8
    $region5: #{transformer_pallas.1} parent=1 // loop_body
      %s31 = ssub.s32 %s26, 1
      %s32 = ssub.s32 %s26, 2
      %s33 = sadd.s32 %s26, 1
      %s34 = ssub.s32 %s26, %s33
      %p35 = scmp.eq.s32.totalorder %s34, 0
      %s37 = sadd.s32 %s36, 1
      %s38 = scalar_select %p35, %s36, %s37
      %p41 = pneg %p35
      %p42 = scmp.eq.s32.totalorder %s26, 1
      %p43 = por %p41, %p42
      %p44 = scmp.ne.s32.totalorder %s36, %s39
      %p45 = scmp.eq.s32.totalorder %s26, 0
      %p46 = por %p44, %p45
      %p47 = scmp.ne.s32.totalorder %s36, %s39
      %p48 = scmp.eq.s32.totalorder %s31, 1
      %p49 = por %p47, %p48
      %p50 = scmp.ne.s32.totalorder %s39, %s40
      %p51 = scmp.eq.s32.totalorder %s31, 0
      %p52 = por %p50, %p51
      %p53 = scmp.ne.s32.totalorder %s39, %s40
      %p54 = scmp.eq.s32.totalorder %s32, 1
      %p55 = por %p53, %p54
      %p57 = scmp.ne.s32.totalorder %s40, %s56
      %p58 = scmp.eq.s32.totalorder %s32, 0
      %p59 = por %p57, %p58
      %s60 = ssub.s32 %s26, %s33
      %p61 = scmp.eq.s32.totalorder %s60, 0
      %s63 = sadd.s32 %s62, 1
      %s64 = scalar_select %p61, %s62, %s63
      %p67 = pneg %p61
      %p68 = scmp.eq.s32.totalorder %s26, 1
      %p69 = por %p67, %p68
      %p70 = scmp.ne.s32.totalorder %s62, %s65
      %p71 = scmp.eq.s32.totalorder %s26, 0
      %p72 = por %p70, %p71
      %p73 = scmp.ne.s32.totalorder %s62, %s65
      %p74 = scmp.eq.s32.totalorder %s31, 1
      %p75 = por %p73, %p74
      %p76 = scmp.ne.s32.totalorder %s65, %s66
      %p77 = scmp.eq.s32.totalorder %s31, 0
      %p78 = por %p76, %p77
      %p79 = scmp.ne.s32.totalorder %s65, %s66
      %p80 = scmp.eq.s32.totalorder %s32, 1
      %p81 = por %p79, %p80
      %p83 = scmp.ne.s32.totalorder %s66, %s82
      %p84 = scmp.eq.s32.totalorder %s32, 0
      %p85 = por %p83, %p84
      %s86 = ssub.s32 %s26, %s33
      %p87 = scmp.eq.s32.totalorder %s86, 0
      %s89 = sadd.s32 %s88, 1
      %s90 = scalar_select %p87, %s88, %s89
      %p93 = pneg %p87
      %p94 = scmp.eq.s32.totalorder %s26, 1
      %p95 = por %p93, %p94
      %p96 = scmp.ne.s32.totalorder %s88, %s91
      %p97 = scmp.eq.s32.totalorder %s26, 0
      %p98 = por %p96, %p97
      %p99 = scmp.ne.s32.totalorder %s88, %s91
      %p100 = scmp.eq.s32.totalorder %s31, 1
      %p101 = por %p99, %p100
      %p102 = scmp.ne.s32.totalorder %s91, %s92
      %p103 = scmp.eq.s32.totalorder %s31, 0
      %p104 = por %p102, %p103
      %p105 = scmp.ne.s32.totalorder %s91, %s92
      %p106 = scmp.eq.s32.totalorder %s32, 1
      %p107 = por %p105, %p106
      %p109 = scmp.ne.s32.totalorder %s92, %s108
      %p110 = scmp.eq.s32.totalorder %s32, 0
      %p111 = por %p109, %p110
      %s113 = sadd.s32 %s112, 1
      %p116 = scmp.eq.s32.totalorder %s26, 1
      %p117 = scmp.ne.s32.totalorder %s112, %s114
      %p118 = scmp.eq.s32.totalorder %s26, 0
      %p119 = por %p117, %p118
      %p120 = scmp.ne.s32.totalorder %s112, %s114
      %p121 = scmp.eq.s32.totalorder %s31, 1
      %p122 = por %p120, %p121
      %p123 = scmp.ne.s32.totalorder %s114, %s115
      %p124 = scmp.eq.s32.totalorder %s31, 0
      %p125 = por %p123, %p124
      %p126 = scmp.ne.s32.totalorder %s114, %s115
      %p127 = scmp.eq.s32.totalorder %s32, 1
      %p128 = por %p126, %p127
      %p130 = scmp.ne.s32.totalorder %s115, %s129
      %p131 = scmp.eq.s32.totalorder %s32, 0
      %p132 = por %p130, %p131
      %s134 = sadd.s32 %s133, 1
      %p137 = scmp.eq.s32.totalorder %s26, 1
      %p138 = scmp.ne.s32.totalorder %s133, %s135
      %p139 = scmp.eq.s32.totalorder %s26, 0
      %p140 = por %p138, %p139
      %p141 = scmp.ne.s32.totalorder %s133, %s135
      %p142 = scmp.eq.s32.totalorder %s31, 1
      %p143 = por %p141, %p142
      %p144 = scmp.ne.s32.totalorder %s135, %s136
      %p145 = scmp.eq.s32.totalorder %s31, 0
      %p146 = por %p144, %p145
      %p147 = scmp.ne.s32.totalorder %s135, %s136
      %p148 = scmp.eq.s32.totalorder %s32, 1
      %p149 = por %p147, %p148
      %p151 = scmp.ne.s32.totalorder %s136, %s150
      %p152 = scmp.eq.s32.totalorder %s32, 0
      %p153 = por %p151, %p152
      %s155 = sadd.s32 %s154, 1
      %p158 = scmp.eq.s32.totalorder %s26, 1
      %p159 = scmp.ne.s32.totalorder %s154, %s156
      %p160 = scmp.eq.s32.totalorder %s26, 0
      %p161 = por %p159, %p160
      %p162 = scmp.ne.s32.totalorder %s154, %s156
      %p163 = scmp.eq.s32.totalorder %s31, 1
      %p164 = por %p162, %p163
      %p165 = scmp.ne.s32.totalorder %s156, %s157
      %p166 = scmp.eq.s32.totalorder %s31, 0
      %p167 = por %p165, %p166
      %p168 = scmp.ne.s32.totalorder %s156, %s157
      %p169 = scmp.eq.s32.totalorder %s32, 1
      %p170 = por %p168, %p169
      %p172 = scmp.ne.s32.totalorder %s157, %s171
      %p173 = scmp.eq.s32.totalorder %s32, 0
      %p174 = por %p172, %p173
      %s176 = sadd.s32 %s175, 1
      %p179 = scmp.eq.s32.totalorder %s26, 1
      %p180 = scmp.ne.s32.totalorder %s175, %s177
      %p181 = scmp.eq.s32.totalorder %s26, 0
      %p182 = por %p180, %p181
      %p183 = scmp.ne.s32.totalorder %s175, %s177
      %p184 = scmp.eq.s32.totalorder %s31, 1
      %p185 = por %p183, %p184
      %p186 = scmp.ne.s32.totalorder %s177, %s178
      %p187 = scmp.eq.s32.totalorder %s31, 0
      %p188 = por %p186, %p187
      %p189 = scmp.ne.s32.totalorder %s177, %s178
      %p190 = scmp.eq.s32.totalorder %s32, 1
      %p191 = por %p189, %p190
      %p193 = scmp.ne.s32.totalorder %s178, %s192
      %p194 = scmp.eq.s32.totalorder %s32, 0
      %p195 = por %p193, %p194
      %s197 = sadd.s32 %s196, 1
      %p200 = scmp.eq.s32.totalorder %s26, 1
      %p201 = scmp.ne.s32.totalorder %s196, %s198
      %p202 = scmp.eq.s32.totalorder %s26, 0
      %p203 = por %p201, %p202
      %p204 = scmp.ne.s32.totalorder %s196, %s198
      %p205 = scmp.eq.s32.totalorder %s31, 1
      %p206 = por %p204, %p205
      %p207 = scmp.ne.s32.totalorder %s198, %s199
      %p208 = scmp.eq.s32.totalorder %s31, 0
      %p209 = por %p207, %p208
      %p210 = scmp.ne.s32.totalorder %s198, %s199
      %p211 = scmp.eq.s32.totalorder %s32, 1
      %p212 = por %p210, %p211
      %p214 = scmp.ne.s32.totalorder %s199, %s213
      %p215 = scmp.eq.s32.totalorder %s32, 0
      %p216 = por %p214, %p215
      %s218 = sadd.s32 %s217, 1
      %p221 = scmp.eq.s32.totalorder %s26, 1
      %p222 = scmp.ne.s32.totalorder %s217, %s219
      %p223 = scmp.eq.s32.totalorder %s26, 0
      %p224 = por %p222, %p223
      %p225 = scmp.ne.s32.totalorder %s217, %s219
      %p226 = scmp.eq.s32.totalorder %s31, 1
      %p227 = por %p225, %p226
      %p228 = scmp.ne.s32.totalorder %s219, %s220
      %p229 = scmp.eq.s32.totalorder %s31, 0
      %p230 = por %p228, %p229
      %p231 = scmp.ne.s32.totalorder %s219, %s220
      %p232 = scmp.eq.s32.totalorder %s32, 1
      %p233 = por %p231, %p232
      %p235 = scmp.ne.s32.totalorder %s220, %s234
      %p236 = scmp.eq.s32.totalorder %s32, 0
      %p237 = por %p235, %p236
      %s239 = sadd.s32 %s238, 1
      %p242 = scmp.eq.s32.totalorder %s26, 1
      %p243 = scmp.ne.s32.totalorder %s238, %s240
      %p244 = scmp.eq.s32.totalorder %s26, 0
      %p245 = por %p243, %p244
      %p246 = scmp.ne.s32.totalorder %s238, %s240
      %p247 = scmp.eq.s32.totalorder %s31, 1
      %p248 = por %p246, %p247
      %p249 = scmp.ne.s32.totalorder %s240, %s241
      %p250 = scmp.eq.s32.totalorder %s31, 0
      %p251 = por %p249, %p250
      %p252 = scmp.ne.s32.totalorder %s240, %s241
      %p253 = scmp.eq.s32.totalorder %s32, 1
      %p254 = por %p252, %p253
      %p256 = scmp.ne.s32.totalorder %s241, %s255
      %p257 = scmp.eq.s32.totalorder %s32, 0
      %p258 = por %p256, %p257
      %s260 = sadd.s32 %s259, 1
      %p263 = scmp.eq.s32.totalorder %s26, 1
      %p264 = scmp.ne.s32.totalorder %s259, %s261
      %p265 = scmp.eq.s32.totalorder %s26, 0
      %p266 = por %p264, %p265
      %p267 = scmp.ne.s32.totalorder %s259, %s261
      %p268 = scmp.eq.s32.totalorder %s31, 1
      %p269 = por %p267, %p268
      %p270 = scmp.ne.s32.totalorder %s261, %s262
      %p271 = scmp.eq.s32.totalorder %s31, 0
      %p272 = por %p270, %p271
      %p273 = scmp.ne.s32.totalorder %s261, %s262
      %p274 = scmp.eq.s32.totalorder %s32, 1
      %p275 = por %p273, %p274
      %p277 = scmp.ne.s32.totalorder %s262, %s276
      %p278 = scmp.eq.s32.totalorder %s32, 0
      %p279 = por %p277, %p278
      %s281 = sadd.s32 %s280, 1
      %p284 = scmp.eq.s32.totalorder %s26, 1
      %p285 = scmp.ne.s32.totalorder %s280, %s282
      %p286 = scmp.eq.s32.totalorder %s26, 0
      %p287 = por %p285, %p286
      %p288 = scmp.ne.s32.totalorder %s280, %s282
      %p289 = scmp.eq.s32.totalorder %s31, 1
      %p290 = por %p288, %p289
      %p291 = scmp.ne.s32.totalorder %s282, %s283
      %p292 = scmp.eq.s32.totalorder %s31, 0
      %p293 = por %p291, %p292
      %p294 = scmp.ne.s32.totalorder %s282, %s283
      %p295 = scmp.eq.s32.totalorder %s32, 1
      %p296 = por %p294, %p295
      %p298 = scmp.ne.s32.totalorder %s283, %s297
      %p299 = scmp.eq.s32.totalorder %s32, 0
      %p300 = por %p298, %p299
      %s302 = sadd.s32 %s301, 1
      %p305 = scmp.eq.s32.totalorder %s26, 1
      %p306 = scmp.ne.s32.totalorder %s301, %s303
      %p307 = scmp.eq.s32.totalorder %s26, 0
      %p308 = por %p306, %p307
      %p309 = scmp.ne.s32.totalorder %s301, %s303
      %p310 = scmp.eq.s32.totalorder %s31, 1
      %p311 = por %p309, %p310
      %p312 = scmp.ne.s32.totalorder %s303, %s304
      %p313 = scmp.eq.s32.totalorder %s31, 0
      %p314 = por %p312, %p313
      %p315 = scmp.ne.s32.totalorder %s303, %s304
      %p316 = scmp.eq.s32.totalorder %s32, 1
      %p317 = por %p315, %p316
      %p319 = scmp.ne.s32.totalorder %s304, %s318
      %p320 = scmp.eq.s32.totalorder %s32, 0
      %p321 = por %p319, %p320
      %s323 = sadd.s32 %s322, 1
      %p326 = scmp.eq.s32.totalorder %s26, 1
      %p327 = scmp.ne.s32.totalorder %s322, %s324
      %p328 = scmp.eq.s32.totalorder %s26, 0
      %p329 = por %p327, %p328
      %p330 = scmp.ne.s32.totalorder %s322, %s324
      %p331 = scmp.eq.s32.totalorder %s31, 1
      %p332 = por %p330, %p331
      %p333 = scmp.ne.s32.totalorder %s324, %s325
      %p334 = scmp.eq.s32.totalorder %s31, 0
      %p335 = por %p333, %p334
      %p336 = scmp.ne.s32.totalorder %s324, %s325
      %p337 = scmp.eq.s32.totalorder %s32, 1
      %p338 = por %p336, %p337
      %p340 = scmp.ne.s32.totalorder %s325, %s339
      %p341 = scmp.eq.s32.totalorder %s32, 0
      %p342 = por %p340, %p341
      %s344 = sadd.s32 %s343, 1
      %p347 = scmp.eq.s32.totalorder %s26, 1
      %p348 = scmp.ne.s32.totalorder %s343, %s345
      %p349 = scmp.eq.s32.totalorder %s26, 0
      %p350 = por %p348, %p349
      %p351 = scmp.ne.s32.totalorder %s343, %s345
      %p352 = scmp.eq.s32.totalorder %s31, 1
      %p353 = por %p351, %p352
      %p354 = scmp.ne.s32.totalorder %s345, %s346
      %p355 = scmp.eq.s32.totalorder %s31, 0
      %p356 = por %p354, %p355
      %p357 = scmp.ne.s32.totalorder %s345, %s346
      %p358 = scmp.eq.s32.totalorder %s32, 1
      %p359 = por %p357, %p358
      %p361 = scmp.ne.s32.totalorder %s346, %s360
      %p362 = scmp.eq.s32.totalorder %s32, 0
      %p363 = por %p361, %p362
      %s365 = sadd.s32 %s364, 1
      %p368 = scmp.eq.s32.totalorder %s26, 1
      %p369 = scmp.ne.s32.totalorder %s364, %s366
      %p370 = scmp.eq.s32.totalorder %s26, 0
      %p371 = por %p369, %p370
      %p372 = scmp.ne.s32.totalorder %s364, %s366
      %p373 = scmp.eq.s32.totalorder %s31, 1
      %p374 = por %p372, %p373
      %p375 = scmp.ne.s32.totalorder %s366, %s367
      %p376 = scmp.eq.s32.totalorder %s31, 0
      %p377 = por %p375, %p376
      %p378 = scmp.ne.s32.totalorder %s366, %s367
      %p379 = scmp.eq.s32.totalorder %s32, 1
      %p380 = por %p378, %p379
      %p382 = scmp.ne.s32.totalorder %s367, %s381
      %p383 = scmp.eq.s32.totalorder %s32, 0
      %p384 = por %p382, %p383
      %s386 = sadd.s32 %s385, 1
      %p389 = scmp.eq.s32.totalorder %s26, 1
      %p390 = scmp.ne.s32.totalorder %s385, %s387
      %p391 = scmp.eq.s32.totalorder %s26, 0
      %p392 = por %p390, %p391
      %p393 = scmp.ne.s32.totalorder %s385, %s387
      %p394 = scmp.eq.s32.totalorder %s31, 1
      %p395 = por %p393, %p394
      %p396 = scmp.ne.s32.totalorder %s387, %s388
      %p397 = scmp.eq.s32.totalorder %s31, 0
      %p398 = por %p396, %p397
      %p399 = scmp.ne.s32.totalorder %s387, %s388
      %p400 = scmp.eq.s32.totalorder %s32, 1
      %p401 = por %p399, %p400
      %p403 = scmp.ne.s32.totalorder %s388, %s402
      %p404 = scmp.eq.s32.totalorder %s32, 0
      %p405 = por %p403, %p404
      %s406 = ssub.s32 %s26, %s33
      %p407 = scmp.eq.s32.totalorder %s406, 0
      %s409 = sadd.s32 %s408, 1
      %s410 = scalar_select %p407, %s408, %s409
      %p413 = pneg %p407
      %p414 = scmp.eq.s32.totalorder %s26, 1
      %p415 = por %p413, %p414
      %p416 = scmp.ne.s32.totalorder %s408, %s411
      %p417 = scmp.eq.s32.totalorder %s26, 0
      %p418 = por %p416, %p417
      %p419 = scmp.ne.s32.totalorder %s408, %s411
      %p420 = scmp.eq.s32.totalorder %s31, 1
      %p421 = por %p419, %p420
      %p422 = scmp.ne.s32.totalorder %s411, %s412
      %p423 = scmp.eq.s32.totalorder %s31, 0
      %p424 = por %p422, %p423
      %p425 = scmp.ne.s32.totalorder %s411, %s412
      %p426 = scmp.eq.s32.totalorder %s32, 1
      %p427 = por %p425, %p426
      %p429 = scmp.ne.s32.totalorder %s412, %s428
      %p430 = scmp.eq.s32.totalorder %s32, 0
      %p431 = por %p429, %p430
      %p432 = scmp.le.s32.totalorder 1, %s26
      %p433 = scmp.lt.s32.totalorder %s26, 3
      %p434 = pnand %p432, %p433
      %p435 = pneg %p434
      // Predicated region
      $region9: #{transformer_pallas.1} parent=5 // pred_check
        _
      $region10: #{transformer_pallas.1} parent=5 // pred_check_branch
        %437 = sbr.rel (%p434) target = $region12
      $region11: #{transformer_pallas.1} parent=5 // pred_region
        %s438 = ssub.s32 %s26, 1
        // Predicated region
        $region13: #{transformer_pallas.1} parent=11 // pred_check
          %p439 = pneg %p125
        $region14: #{transformer_pallas.1} parent=11 // pred_check_branch
          %441 = sbr.rel (%p439) target = $region16
        $region15: #{transformer_pallas.1} parent=11 // pred_region
          _
        $region16: #{transformer_pallas.1} parent=11 // pred_fallthru
          _
        // Predicated region
        $region17: #{transformer_pallas.1} parent=11 // pred_check
          %p442 = pneg %p146
        $region18: #{transformer_pallas.1} parent=11 // pred_check_branch
          %444 = sbr.rel (%p442) target = $region20
        $region19: #{transformer_pallas.1} parent=11 // pred_region
          _
        $region20: #{transformer_pallas.1} parent=11 // pred_fallthru
          _
        // Predicated region
        $region21: #{transformer_pallas.1} parent=11 // pred_check
          %p445 = pneg %p167
        $region22: #{transformer_pallas.1} parent=11 // pred_check_branch
          %447 = sbr.rel (%p445) target = $region24
        $region23: #{transformer_pallas.1} parent=11 // pred_region
          _
        $region24: #{transformer_pallas.1} parent=11 // pred_fallthru
          _
        // Predicated region
        $region25: #{transformer_pallas.1} parent=11 // pred_check
          %p448 = pneg %p188
        $region26: #{transformer_pallas.1} parent=11 // pred_check_branch
          %450 = sbr.rel (%p448) target = $region28
        $region27: #{transformer_pallas.1} parent=11 // pred_region
          _
        $region28: #{transformer_pallas.1} parent=11 // pred_fallthru
          _
        // Predicated region
        $region29: #{transformer_pallas.1} parent=11 // pred_check
          %p451 = pneg %p209
        $region30: #{transformer_pallas.1} parent=11 // pred_check_branch
          %453 = sbr.rel (%p451) target = $region32
        $region31: #{transformer_pallas.1} parent=11 // pred_region
          _
        $region32: #{transformer_pallas.1} parent=11 // pred_fallthru
          _
        // Predicated region
        $region33: #{transformer_pallas.1} parent=11 // pred_check
          %p454 = pneg %p230
        $region34: #{transformer_pallas.1} parent=11 // pred_check_branch
          %456 = sbr.rel (%p454) target = $region36
        $region35: #{transformer_pallas.1} parent=11 // pred_region
          _
        $region36: #{transformer_pallas.1} parent=11 // pred_fallthru
          _
        // Predicated region
        $region37: #{transformer_pallas.1} parent=11 // pred_check
          %p457 = pneg %p251
        $region38: #{transformer_pallas.1} parent=11 // pred_check_branch
          %459 = sbr.rel (%p457) target = $region40
        $region39: #{transformer_pallas.1} parent=11 // pred_region
          _
        $region40: #{transformer_pallas.1} parent=11 // pred_fallthru
          _
        // Predicated region
        $region41: #{transformer_pallas.1} parent=11 // pred_check
          %p460 = pneg %p272
        $region42: #{transformer_pallas.1} parent=11 // pred_check_branch
          %462 = sbr.rel (%p460) target = $region44
        $region43: #{transformer_pallas.1} parent=11 // pred_region
          _
        $region44: #{transformer_pallas.1} parent=11 // pred_fallthru
          _
        // Predicated region
        $region45: #{transformer_pallas.1} parent=11 // pred_check
          %p463 = pneg %p293
        $region46: #{transformer_pallas.1} parent=11 // pred_check_branch
          %465 = sbr.rel (%p463) target = $region48
        $region47: #{transformer_pallas.1} parent=11 // pred_region
          _
        $region48: #{transformer_pallas.1} parent=11 // pred_fallthru
          _
        // Predicated region
        $region49: #{transformer_pallas.1} parent=11 // pred_check
          %p466 = pneg %p314
        $region50: #{transformer_pallas.1} parent=11 // pred_check_branch
          %468 = sbr.rel (%p466) target = $region52
        $region51: #{transformer_pallas.1} parent=11 // pred_region
          _
        $region52: #{transformer_pallas.1} parent=11 // pred_fallthru
          _
        // Predicated region
        $region53: #{transformer_pallas.1} parent=11 // pred_check
          %p469 = pneg %p335
        $region54: #{transformer_pallas.1} parent=11 // pred_check_branch
          %471 = sbr.rel (%p469) target = $region56
        $region55: #{transformer_pallas.1} parent=11 // pred_region
          _
        $region56: #{transformer_pallas.1} parent=11 // pred_fallthru
          _
        // Predicated region
        $region57: #{transformer_pallas.1} parent=11 // pred_check
          %p472 = pneg %p356
        $region58: #{transformer_pallas.1} parent=11 // pred_check_branch
          %474 = sbr.rel (%p472) target = $region60
        $region59: #{transformer_pallas.1} parent=11 // pred_region
          _
        $region60: #{transformer_pallas.1} parent=11 // pred_fallthru
          _
        // Predicated region
        $region61: #{transformer_pallas.1} parent=11 // pred_check
          %p475 = pneg %p377
        $region62: #{transformer_pallas.1} parent=11 // pred_check_branch
          %477 = sbr.rel (%p475) target = $region64
        $region63: #{transformer_pallas.1} parent=11 // pred_region
          _
        $region64: #{transformer_pallas.1} parent=11 // pred_fallthru
          _
        // Predicated region
        $region65: #{transformer_pallas.1} parent=11 // pred_check
          %p478 = pneg %p398
        $region66: #{transformer_pallas.1} parent=11 // pred_check_branch
          %480 = sbr.rel (%p478) target = $region68
        $region67: #{transformer_pallas.1} parent=11 // pred_region
          _
        $region68: #{transformer_pallas.1} parent=11 // pred_fallthru
          _
      $region12: #{transformer_pallas.1} parent=5 // pred_fallthru
        _
      %p481 = scmp.lt.s32.totalorder %s26, 2
      // Predicated region
      $region69: #{transformer_pallas.1} parent=5 // pred_check
        %p482 = pneg %p481
      $region70: #{transformer_pallas.1} parent=5 // pred_check_branch
        %484 = sbr.rel (%p482) target = $region72
      $region71: #{transformer_pallas.1} parent=5 // pred_region
        // Predicated region
        $region73: #{transformer_pallas.1} parent=71 // pred_check
          %p485 = pneg %p46
        $region74: #{transformer_pallas.1} parent=71 // pred_check_branch
          %487 = sbr.rel (%p485) target = $region76
        $region75: #{transformer_pallas.1} parent=71 // pred_region
          %p488 = scmp.lt.s32.totalorder %s26, 1
          %s489 = scalar_select %p488, %s26, 1
          %s490 = smul.addr %s489, 8
          %s491 = scalar_lea.vmem %s0, %s490
        $region76: #{transformer_pallas.1} parent=71 // pred_fallthru
          _
        // Predicated region
        $region77: #{transformer_pallas.1} parent=71 // pred_check
          %p492 = pneg %p72
        $region78: #{transformer_pallas.1} parent=71 // pred_check_branch
          %494 = sbr.rel (%p492) target = $region80
        $region79: #{transformer_pallas.1} parent=71 // pred_region
          %p495 = scmp.lt.s32.totalorder %s26, 1
          %s496 = scalar_select %p495, %s26, 1
          %s497 = scalar_lea.vmem %s1, %s496
        $region80: #{transformer_pallas.1} parent=71 // pred_fallthru
          _
        // Predicated region
        $region81: #{transformer_pallas.1} parent=71 // pred_check
          %p498 = pneg %p98
        $region82: #{transformer_pallas.1} parent=71 // pred_check_branch
          %500 = sbr.rel (%p498) target = $region84
        $region83: #{transformer_pallas.1} parent=71 // pred_region
          %p501 = scmp.lt.s32.totalorder %s26, 1
          %s502 = scalar_select %p501, %s26, 1
          %s503 = smul.addr %s502, 8
          %s504 = scalar_lea.vmem %s2, %s503
        $region84: #{transformer_pallas.1} parent=71 // pred_fallthru
          _
      $region72: #{transformer_pallas.1} parent=5 // pred_fallthru
        _
      %p505 = scmp.le.s32.totalorder 1, %s26
      %p506 = scmp.lt.s32.totalorder %s26, 3
      %p507 = pnand %p505, %p506
      %p508 = pneg %p507
      // Predicated region
      $region85: #{transformer_pallas.1} parent=5 // pred_check
        _
      $region86: #{transformer_pallas.1} parent=5 // pred_check_branch
        %510 = sbr.rel (%p507) target = $region88
      $region87: #{transformer_pallas.1} parent=5 // pred_region
        %s511 = ssub.s32 %s26, 1
        %p512 = scmp.lt.s32.totalorder %s31, 1
        %s513 = scalar_select %p512, %s31, 1
        %s514 = smul.addr %s513, 8
        %s515 = scalar_lea.vmem %s0, %s514
        %p516 = pneg %p52
        %p517 = pneg %p49
        %p518 = scmp.lt.s32.totalorder %s31, 1
        %s519 = scalar_select %p518, %s31, 1
        %s520 = scalar_lea.vmem %s1, %s519
        %p521 = pneg %p78
        %p522 = pneg %p75
        %p523 = scmp.lt.s32.totalorder %s31, 1
        %s524 = scalar_select %p523, %s31, 1
        %s525 = smul.addr %s524, 8
        %s526 = scalar_lea.vmem %s2, %s525
        %p527 = pneg %p104
        %p528 = pneg %p101
        %p529 = pneg %p125
        %p530 = pneg %p122
        %p531 = pneg %p146
        %p532 = pneg %p143
        %p533 = pneg %p167
        %p534 = pneg %p164
        %p535 = pneg %p188
        %p536 = pneg %p185
        %p537 = pneg %p209
        %p538 = pneg %p206
        %p539 = pneg %p230
        %p540 = pneg %p227
        %p541 = pneg %p251
        %p542 = pneg %p248
        %p543 = pneg %p272
        %p544 = pneg %p269
        %p545 = pneg %p293
        %p546 = pneg %p290
        %p547 = pneg %p314
        %p548 = pneg %p311
        %p549 = pneg %p335
        %p550 = pneg %p332
        %p551 = pneg %p356
        %p552 = pneg %p353
        %p553 = pneg %p377
        %p554 = pneg %p374
        %p555 = pneg %p398
        %p556 = pneg %p395
        %p557 = pneg %p424
        %p558 = pneg %p421
        %s559 = sand.u32 %s411, 1
        %s560 = scalar_lea.sflag [#allocation3], %s559
        %s561 = sand.u32 %s411, 1
        %s562 = scalar_lea.vmem [#allocation2], %s561
        %p563 = scmp.lt.s32.totalorder %s31, 1
        %s564 = scalar_select %p563, %s31, 1
        %s565 = smul.addr %s564, 8
        %s566 = scalar_lea.vmem %s0, %s565
        %p567 = scmp.lt.s32.totalorder %s31, 1
        %s568 = scalar_select %p567, %s31, 1
        %s569 = scalar_lea.vmem %s1, %s568
        %p570 = scmp.lt.s32.totalorder %s31, 1
        %s571 = scalar_select %p570, %s31, 1
        %s572 = smul.addr %s571, 8
        %s573 = scalar_lea.vmem %s2, %s572
        %v575 = vld [vmem:[%s566] sm:$0xff]
        %v576 = vld [vmem:[%s569] sm:$0x1]
        %v577 = vld [vmem:[%s573] sm:$0xff]
        %v578 = vld [vmem:[%s3] sm:$0xff]
        %v579 = vld [vmem:[%s3 + $0x8] sm:$0xf]
        %v580 = vld [vmem:[%s3 + $0xc] sm:$0xff]
        %v581 = vld [vmem:[%s3 + $0x14] sm:$0xf]
        %v582 = vld [vmem:[%s3 + $0x18] sm:$0xff]
        %v583 = vld [vmem:[%s3 + $0x20] sm:$0xf]
        %v584 = vld [vmem:[%s3 + $0x24] sm:$0xff]
        %v585 = vld [vmem:[%s3 + $0x2c] sm:$0xf]
        %v586 = vld [vmem:[%s3 + $0x30] sm:$0xff]
        %v587 = vld [vmem:[%s3 + $0x38] sm:$0xf]
        %v588 = vld [vmem:[%s3 + $0x3c] sm:$0xff]
        %v589 = vld [vmem:[%s3 + $0x44] sm:$0xf]
        %v590 = vld [vmem:[%s3 + $0x48] sm:$0xff]
        %v591 = vld [vmem:[%s3 + $0x50] sm:$0xf]
        %v592 = vld [vmem:[%s3 + $0x54] sm:$0xff]
        %v593 = vld [vmem:[%s3 + $0x5c] sm:$0xf]
        %v594 = vld [vmem:[%s4] sm:$0x7]
        %v595 = vld [vmem:[%s5] sm:$0xf]
        %v596 = vld [vmem:[%s5 + $0x4] sm:$0xf]
        %v597 = vld [vmem:[%s5 + $0x8] sm:$0xf]
        %v598 = vld [vmem:[%s5 + $0xc] sm:$0xf]
        %v599 = vld [vmem:[%s5 + $0x10] sm:$0xf]
        %v600 = vld [vmem:[%s5 + $0x14] sm:$0xf]
        %v601 = vld [vmem:[%s5 + $0x18] sm:$0xf]
        %v602 = vld [vmem:[%s5 + $0x1c] sm:$0xf]
        %v603 = vld [vmem:[%s5 + $0x20] sm:$0xf]
        %v604 = vld [vmem:[%s5 + $0x24] sm:$0xf]
        %v605 = vld [vmem:[%s5 + $0x28] sm:$0xf]
        %v606 = vld [vmem:[%s5 + $0x2c] sm:$0xf]
        %v607 = vld [vmem:[%s5 + $0x30] sm:$0xf]
        %v608 = vld [vmem:[%s5 + $0x34] sm:$0xf]
        %v609 = vld [vmem:[%s5 + $0x38] sm:$0xf]
        %v610 = vld [vmem:[%s5 + $0x3c] sm:$0xf]
        %v611 = vld [vmem:[%s6] sm:$0x1]
        %v612 = vld [vmem:[%s9] sm:$0xf]
        %v613 = vld [vmem:[%s9 + $0x4] sm:$0xf]
        %v614 = vld [vmem:[%s9 + $0x8] sm:$0xf]
        %v615 = vld [vmem:[%s9 + $0xc] sm:$0xf]
        %v616 = vld [vmem:[%s9 + $0x10] sm:$0xf]
        %v617 = vld [vmem:[%s9 + $0x14] sm:$0xf]
        %v618 = vld [vmem:[%s9 + $0x18] sm:$0xf]
        %v619 = vld [vmem:[%s9 + $0x1c] sm:$0xf]
        %v620 = vld [vmem:[%s10] sm:$0x1]
        %v621 = vld [vmem:[%s11] sm:$0xf]
        %v622 = vld [vmem:[%s11 + $0x4] sm:$0xf]
        %v623 = vld [vmem:[%s12] sm:$0x1]
        %v624 = vpack.c.bf16 %v577, %v577
        %v626 = vlaneseq
        %v627 = vshrl.u32 %v626, 7
        %v628 = vsub.s32 0, %v627
        %v629 = vrot.slane %v594, %v628
        %v630 = vlaneseq
        %v631 = vshrl.u32 %v630, 7
        %v632 = vsub.s32 1, %v631
        %v633 = vrot.slane %v594, %v632
        %v634 = vlaneseq
        %v635 = vshrl.u32 %v634, 7
        %v636 = vsub.s32 2, %v635
        %v637 = vrot.slane %v594, %v636
        %v657 = vunpack.c.l.b16 %v578
        %v658 = vunpack.c.h.b16 %v578
        %v659 = vunpack.c.l.b16 %v579
        %v660 = vunpack.c.l.b16 %v580
        %v661 = vunpack.c.h.b16 %v580
        %v662 = vunpack.c.l.b16 %v581
        %v663 = vunpack.c.l.b16 %v582
        %v664 = vunpack.c.h.b16 %v582
        %v665 = vunpack.c.l.b16 %v583
        %v666 = vunpack.c.l.b16 %v584
        %v667 = vunpack.c.h.b16 %v584
        %v668 = vunpack.c.l.b16 %v585
        %v669 = vunpack.c.l.b16 %v586
        %v670 = vunpack.c.h.b16 %v586
        %v671 = vunpack.c.l.b16 %v587
        %v672 = vunpack.c.l.b16 %v588
        %v673 = vunpack.c.h.b16 %v588
        %v674 = vunpack.c.l.b16 %v589
        %v675 = vunpack.c.l.b16 %v590
        %v676 = vunpack.c.h.b16 %v590
        %v677 = vunpack.c.l.b16 %v591
        %v678 = vunpack.c.l.b16 %v592
        %v679 = vunpack.c.h.b16 %v592
        %v680 = vunpack.c.l.b16 %v593
        %v681 = vpack.c.b16 %v660, %v657
        %v682 = vpack.c.b16 %v661, %v658
        %v683 = vpack.c.b16 %v662, %v659
        %v684 = vpack.c.b16 %v666, %v663
        %v685 = vpack.c.b16 %v667, %v664
        %v686 = vpack.c.b16 %v668, %v665
        %v687 = vpack.c.b16 %v672, %v669
        %v688 = vpack.c.b16 %v673, %v670
        %v689 = vpack.c.b16 %v674, %v671
        %v690 = vpack.c.b16 %v678, %v675
        %v691 = vpack.c.b16 %v679, %v676
        %v692 = vpack.c.b16 %v680, %v677
        %vm705 = vcmask 523264
        %v707 = vsel %vm705, %v624, 0
        %709 = vmatprep.subr.bf16.mxu0 %v682
        %710 = vmatpush1.bf16.msra.mxu0 %v681
        %711 = vmatprep.subr.bf16.mxu0 %v685
        %712 = vmatpush1.bf16.msra.mxu0 %v684
        %713 = vmatprep.subr.bf16.mxu0 %v688
        %714 = vmatpush1.bf16.msra.mxu0 %v687
        %715 = vmatprep.subr.bf16.mxu0 %v691
        %716 = vmatpush1.bf16.msra.mxu0 %v690
        %717 = vmatprep.subr.bf16.mxu0 0
        %718 = vmatpush1.bf16.msra.mxu0 0
        %719 = vmatprep.subr.bf16.mxu0 0
        %720 = vmatpush1.bf16.msra.mxu0 0
        %721 = vmatprep.subr.bf16.mxu0 0
        %722 = vmatpush1.bf16.msra.mxu0 0
        %723 = vmatprep.subr.bf16.mxu0 0
        %724 = vmatpush1.bf16.msra.mxu0 0
        %725 = vmatprep.subr.bf16.mxu0 0
        %726 = vmatpush1.bf16.msra.mxu0 0
        %727 = vmatprep.subr.bf16.mxu0 0
        %728 = vmatpush1.bf16.msra.mxu0 0
        %729 = vmatprep.subr.bf16.mxu0 0
        %730 = vmatpush1.bf16.msra.mxu0 0
        %731 = vmatprep.subr.bf16.mxu0 0
        %732 = vmatpush1.bf16.msra.mxu0 0
        %733 = vmatprep.subr.bf16.mxu0 0
        %734 = vmatpush1.bf16.msra.mxu0 0
        %735 = vmatprep.subr.bf16.mxu0 0
        %736 = vmatpush1.bf16.msra.mxu0 0
        %737 = vmatprep.subr.bf16.mxu0 0
        %738 = vmatpush1.bf16.msra.mxu0 0
        %739 = vmatprep.subr.bf16.mxu0 0
        %740 = vmatpush1.bf16.msra.mxu0 0
        %741 = vmatprep.mubr.bf16.mxu0 0
        %742 = vmatmul.mubr.bf16.gmra.mrb[0].mxu0 %v707
        %v743 = vpop.f32.mrb[0].mxu0
        %v744 = vadd.f32 %v629, %v743
        %v745 = vpop.f32.mrb[0].mxu0
        %v746 = vadd.f32 %v633, %v745
        %v747 = vpop.f32.mrb[0].mxu0
        %v748 = vpop.f32.mrb[0].mxu0
        %749 = vdwg.mxu0
        %750 = vmatprep.subr.bf16.mxu0 0
        %751 = vmatpush1.bf16.msra.mxu0 %v683
        %752 = vmatprep.subr.bf16.mxu0 0
        %753 = vmatpush1.bf16.msra.mxu0 %v686
        %754 = vmatprep.subr.bf16.mxu0 0
        %755 = vmatpush1.bf16.msra.mxu0 %v689
        %756 = vmatprep.subr.bf16.mxu0 0
        %757 = vmatpush1.bf16.msra.mxu0 %v692
        %758 = vmatprep.subr.bf16.mxu0 0
        %759 = vmatpush1.bf16.msra.mxu0 0
        %760 = vmatprep.subr.bf16.mxu0 0
        %761 = vmatpush1.bf16.msra.mxu0 0
        %762 = vmatprep.subr.bf16.mxu0 0
        %763 = vmatpush1.bf16.msra.mxu0 0
        %764 = vmatprep.subr.bf16.mxu0 0
        %765 = vmatpush1.bf16.msra.mxu0 0
        %766 = vmatprep.subr.bf16.mxu0 0
        %767 = vmatpush1.bf16.msra.mxu0 0
        %768 = vmatprep.subr.bf16.mxu0 0
        %769 = vmatpush1.bf16.msra.mxu0 0
        %770 = vmatprep.subr.bf16.mxu0 0
        %771 = vmatpush1.bf16.msra.mxu0 0
        %772 = vmatprep.subr.bf16.mxu0 0
        %773 = vmatpush1.bf16.msra.mxu0 0
        %774 = vmatprep.subr.bf16.mxu0 0
        %775 = vmatpush1.bf16.msra.mxu0 0
        %776 = vmatprep.subr.bf16.mxu0 0
        %777 = vmatpush1.bf16.msra.mxu0 0
        %778 = vmatprep.subr.bf16.mxu0 0
        %779 = vmatpush1.bf16.msra.mxu0 0
        %780 = vmatprep.subr.bf16.mxu0 0
        %781 = vmatpush1.bf16.msra.mxu0 0
        %782 = vmatprep.mubr.bf16.mxu0 0
        %783 = vmatmul.mubr.bf16.gmra.mrb[0].mxu0 %v707
        %v784 = vpop.f32.mrb[0].mxu0
        %v785 = vadd.f32 %v637, %v784
        %v786 = vpop.f32.mrb[0].mxu0
        %v787 = vpop.f32.mrb[0].mxu0
        %v788 = vpop.f32.mrb[0].mxu0
        %789 = vdwg.mxu0
        %v790 = vpack.c.bf16 %v744, %v744
        %v791 = vpack.c.bf16 %v746, %v746
        %v792 = vpack.c.bf16 %v785, %v785
        %vm793 = vcmask 130048
        %v795 = vsel %vm793, %v790, 0
        %v798 = vsel %vm793, %v791, 0
        %800 = vmatprep.subr.bf16.mxu0 0
        %801 = vmatpush1.bf16.xpose.msra.mxu0 %v798
        %802 = vmatprep.subr.bf16.mxu0 0
        %803 = vmatpush1.bf16.xpose.msra.mxu0 0
        %804 = vmatprep.subr.bf16.mxu0 0
        %805 = vmatpush1.bf16.xpose.msra.mxu0 0
        %806 = vmatprep.subr.bf16.mxu0 0
        %807 = vmatpush1.bf16.xpose.msra.mxu0 0
        %808 = vmatprep.subr.bf16.mxu0 0
        %809 = vmatpush1.bf16.xpose.msra.mxu0 0
        %810 = vmatprep.subr.bf16.mxu0 0
        %811 = vmatpush1.bf16.xpose.msra.mxu0 0
        %812 = vmatprep.subr.bf16.mxu0 0
        %813 = vmatpush1.bf16.xpose.msra.mxu0 0
        %814 = vmatprep.subr.bf16.mxu0 0
        %815 = vmatpush1.bf16.xpose.msra.mxu0 0
        %816 = vmatprep.subr.bf16.mxu0 0
        %817 = vmatpush1.bf16.xpose.msra.mxu0 0
        %818 = vmatprep.subr.bf16.mxu0 0
        %819 = vmatpush1.bf16.xpose.msra.mxu0 0
        %820 = vmatprep.subr.bf16.mxu0 0
        %821 = vmatpush1.bf16.xpose.msra.mxu0 0
        %822 = vmatprep.subr.bf16.mxu0 0
        %823 = vmatpush1.bf16.xpose.msra.mxu0 0
        %824 = vmatprep.subr.bf16.mxu0 0
        %825 = vmatpush1.bf16.xpose.msra.mxu0 0
        %826 = vmatprep.subr.bf16.mxu0 0
        %827 = vmatpush1.bf16.xpose.msra.mxu0 0
        %828 = vmatprep.subr.bf16.mxu0 0
        %829 = vmatpush1.bf16.xpose.msra.mxu0 0
        %830 = vmatprep.subr.bf16.mxu0 0
        %831 = vmatpush1.bf16.xpose.msra.mxu0 0
        %832 = vmatprep.mubr.bf16.mxu0 0
        %833 = vmatmul.mubr.bf16.gmra.mrb[0].mxu0 %v795
        %v834 = vpop.f32.mrb[0].mxu0
        %v835 = vadd.f32 0.0, %v834
        %v836 = vpop.f32.mrb[0].mxu0
        %v837 = vpop.f32.mrb[0].mxu0
        %v838 = vpop.f32.mrb[0].mxu0
        %839 = vdwg.mxu0
        %v840 = vmul.f32 %v835, 0.25
        %v842 = vlaneseq
        %v843 = vshrl.u32 %v842, 7
        %v844 = vsub.s32 0, %v843
        %v845 = vrot.slane %v576, %v844
        %v847 = vadd.f32 %v840, %v845
        %vm848 = vcmask 64512
        %v849 = vsel %vm848, %v847, -inf
        %850 = vmax.xlane.f32.xlu0 %v849
        %v851 = vpop.xlane.xlu0 %850
        %v852 = vsub.f32 %v847, %v851
        %v853 = vmul.f32 %v852, 1.442695
        %v854 = vpow.pop %v853
        %v855 = vsel %vm848, %v854, 0.0
        %856 = vadd.xlane.f32.xlu0 %v855
        %v857 = vpop.xlane.xlu0 %856
        %v858 = vrcp.pop %v857
        %v859 = vmul.f32 %v854, %v858
        %v860 = vpack.c.bf16 %v859, %v859
        %v862 = vsel %vm848, %v860, 0
        %vm864 = vcmask 1043456
        %v866 = vsel %vm864, %v792, 0
        %868 = vmatprep.subr.bf16.mxu0 0
        %869 = vmatpush1.bf16.msra.mxu0 %v866
        %870 = vmatprep.subr.bf16.mxu0 0
        %871 = vmatpush1.bf16.msra.mxu0 0
        %872 = vmatprep.subr.bf16.mxu0 0
        %873 = vmatpush1.bf16.msra.mxu0 0
        %874 = vmatprep.subr.bf16.mxu0 0
        %875 = vmatpush1.bf16.msra.mxu0 0
        %876 = vmatprep.subr.bf16.mxu0 0
        %877 = vmatpush1.bf16.msra.mxu0 0
        %878 = vmatprep.subr.bf16.mxu0 0
        %879 = vmatpush1.bf16.msra.mxu0 0
        %880 = vmatprep.subr.bf16.mxu0 0
        %881 = vmatpush1.bf16.msra.mxu0 0
        %882 = vmatprep.subr.bf16.mxu0 0
        %883 = vmatpush1.bf16.msra.mxu0 0
        %884 = vmatprep.subr.bf16.mxu0 0
        %885 = vmatpush1.bf16.msra.mxu0 0
        %886 = vmatprep.subr.bf16.mxu0 0
        %887 = vmatpush1.bf16.msra.mxu0 0
        %888 = vmatprep.subr.bf16.mxu0 0
        %889 = vmatpush1.bf16.msra.mxu0 0
        %890 = vmatprep.subr.bf16.mxu0 0
        %891 = vmatpush1.bf16.msra.mxu0 0
        %892 = vmatprep.subr.bf16.mxu0 0
        %893 = vmatpush1.bf16.msra.mxu0 0
        %894 = vmatprep.subr.bf16.mxu0 0
        %895 = vmatpush1.bf16.msra.mxu0 0
        %896 = vmatprep.subr.bf16.mxu0 0
        %897 = vmatpush1.bf16.msra.mxu0 0
        %898 = vmatprep.subr.bf16.mxu0 0
        %899 = vmatpush1.bf16.msra.mxu0 0
        %900 = vmatprep.mubr.bf16.mxu0 0
        %901 = vmatmul.mubr.bf16.gmra.mrb[0].mxu0 %v862
        %v902 = vpop.f32.mrb[0].mxu0
        %v903 = vadd.f32 0.0, %v902
        %v904 = vpop.f32.mrb[0].mxu0
        %v905 = vpop.f32.mrb[0].mxu0
        %v906 = vpop.f32.mrb[0].mxu0
        %907 = vdwg.mxu0
        %v908 = vpack.c.bf16 %v903, %v903
        %910 = vrot.lane.b32.xlu0 %v790, 112
        %v911 = vpop.permute.xlu0 %910
        %913 = vrot.lane.b32.xlu0 %v791, 112
        %v914 = vpop.permute.xlu0 %913
        %v916 = vsel %vm793, %v911, 0
        %v919 = vsel %vm793, %v914, 0
        %921 = vmatprep.subr.bf16.mxu0 0
        %922 = vmatpush1.bf16.xpose.msra.mxu0 %v919
        %923 = vmatprep.subr.bf16.mxu0 0
        %924 = vmatpush1.bf16.xpose.msra.mxu0 0
        %925 = vmatprep.subr.bf16.mxu0 0
        %926 = vmatpush1.bf16.xpose.msra.mxu0 0
        %927 = vmatprep.subr.bf16.mxu0 0
        %928 = vmatpush1.bf16.xpose.msra.mxu0 0
        %929 = vmatprep.subr.bf16.mxu0 0
        %930 = vmatpush1.bf16.xpose.msra.mxu0 0
        %931 = vmatprep.subr.bf16.mxu0 0
        %932 = vmatpush1.bf16.xpose.msra.mxu0 0
        %933 = vmatprep.subr.bf16.mxu0 0
        %934 = vmatpush1.bf16.xpose.msra.mxu0 0
        %935 = vmatprep.subr.bf16.mxu0 0
        %936 = vmatpush1.bf16.xpose.msra.mxu0 0
        %937 = vmatprep.subr.bf16.mxu0 0
        %938 = vmatpush1.bf16.xpose.msra.mxu0 0
        %939 = vmatprep.subr.bf16.mxu0 0
        %940 = vmatpush1.bf16.xpose.msra.mxu0 0
        %941 = vmatprep.subr.bf16.mxu0 0
        %942 = vmatpush1.bf16.xpose.msra.mxu0 0
        %943 = vmatprep.subr.bf16.mxu0 0
        %944 = vmatpush1.bf16.xpose.msra.mxu0 0
        %945 = vmatprep.subr.bf16.mxu0 0
        %946 = vmatpush1.bf16.xpose.msra.mxu0 0
        %947 = vmatprep.subr.bf16.mxu0 0
        %948 = vmatpush1.bf16.xpose.msra.mxu0 0
        %949 = vmatprep.subr.bf16.mxu0 0
        %950 = vmatpush1.bf16.xpose.msra.mxu0 0
        %951 = vmatprep.subr.bf16.mxu0 0
        %952 = vmatpush1.bf16.xpose.msra.mxu0 0
        %953 = vmatprep.mubr.bf16.mxu0 0
        %954 = vmatmul.mubr.bf16.gmra.mrb[0].mxu0 %v916
        %v955 = vpop.f32.mrb[0].mxu0
        %v956 = vadd.f32 0.0, %v955
        %v957 = vpop.f32.mrb[0].mxu0
        %v958 = vpop.f32.mrb[0].mxu0
        %v959 = vpop.f32.mrb[0].mxu0
        %960 = vdwg.mxu0
        %v961 = vmul.f32 %v956, 0.25
        %v962 = vadd.f32 %v961, %v845
        %v963 = vsel %vm848, %v962, -inf
        %964 = vmax.xlane.f32.xlu0 %v963
        %v965 = vpop.xlane.xlu0 %964
        %v966 = vsub.f32 %v962, %v965
        %v967 = vmul.f32 %v966, 1.442695
        %v968 = vpow.pop %v967
        %v969 = vsel %vm848, %v968, 0.0
        %970 = vadd.xlane.f32.xlu0 %v969
        %v971 = vpop.xlane.xlu0 %970
        %v972 = vrcp.pop %v971
        %v973 = vmul.f32 %v968, %v972
        %v974 = vpack.c.bf16 %v973, %v973
        %976 = vrot.lane.b32.xlu0 %v792, 112
        %v977 = vpop.permute.xlu0 %976
        %v979 = vsel %vm848, %v974, 0
        %v982 = vsel %vm864, %v977, 0
        %984 = vmatprep.subr.bf16.mxu0 0
        %985 = vmatpush1.bf16.msra.mxu0 %v982
        %986 = vmatprep.subr.bf16.mxu0 0
        %987 = vmatpush1.bf16.msra.mxu0 0
        %988 = vmatprep.subr.bf16.mxu0 0
        %989 = vmatpush1.bf16.msra.mxu0 0
        %990 = vmatprep.subr.bf16.mxu0 0
        %991 = vmatpush1.bf16.msra.mxu0 0
        %992 = vmatprep.subr.bf16.mxu0 0
        %993 = vmatpush1.bf16.msra.mxu0 0
        %994 = vmatprep.subr.bf16.mxu0 0
        %995 = vmatpush1.bf16.msra.mxu0 0
        %996 = vmatprep.subr.bf16.mxu0 0
        %997 = vmatpush1.bf16.msra.mxu0 0
        %998 = vmatprep.subr.bf16.mxu0 0
        %999 = vmatpush1.bf16.msra.mxu0 0
        %1000 = vmatprep.subr.bf16.mxu0 0
        %1001 = vmatpush1.bf16.msra.mxu0 0
        %1002 = vmatprep.subr.bf16.mxu0 0
        %1003 = vmatpush1.bf16.msra.mxu0 0
        %1004 = vmatprep.subr.bf16.mxu0 0
        %1005 = vmatpush1.bf16.msra.mxu0 0
        %1006 = vmatprep.subr.bf16.mxu0 0
        %1007 = vmatpush1.bf16.msra.mxu0 0
        %1008 = vmatprep.subr.bf16.mxu0 0
        %1009 = vmatpush1.bf16.msra.mxu0 0
        %1010 = vmatprep.subr.bf16.mxu0 0
        %1011 = vmatpush1.bf16.msra.mxu0 0
        %1012 = vmatprep.subr.bf16.mxu0 0
        %1013 = vmatpush1.bf16.msra.mxu0 0
        %1014 = vmatprep.subr.bf16.mxu0 0
        %1015 = vmatpush1.bf16.msra.mxu0 0
        %1016 = vmatprep.mubr.bf16.mxu0 0
        %1017 = vmatmul.mubr.bf16.gmra.mrb[0].mxu0 %v979
        %v1018 = vpop.f32.mrb[0].mxu0
        %v1019 = vadd.f32 0.0, %v1018
        %v1020 = vpop.f32.mrb[0].mxu0
        %v1021 = vpop.f32.mrb[0].mxu0
        %v1022 = vpop.f32.mrb[0].mxu0
        %1023 = vdwg.mxu0
        %v1024 = vpack.c.bf16 %v1019, %v1019
        %v1027 = vunpack.c.l.b16 %v597
        %v1028 = vunpack.c.l.b16 %v598
        %v1029 = vpack.c.b16 %v1028, %v1027
        %v1032 = vsel %vm793, %v1024, 0
        %1034 = vmatprep.subr.bf16.mxu0 0
        %1035 = vmatpush1.bf16.msra.mxu0 %v1029
        %1036 = vmatprep.subr.bf16.mxu0 0
        %1037 = vmatpush1.bf16.msra.mxu0 0
        %1038 = vmatprep.subr.bf16.mxu0 0
        %1039 = vmatpush1.bf16.msra.mxu0 0
        %1040 = vmatprep.subr.bf16.mxu0 0
        %1041 = vmatpush1.bf16.msra.mxu0 0
        %1042 = vmatprep.subr.bf16.mxu0 0
        %1043 = vmatpush1.bf16.msra.mxu0 0
        %1044 = vmatprep.subr.bf16.mxu0 0
        %1045 = vmatpush1.bf16.msra.mxu0 0
        %1046 = vmatprep.subr.bf16.mxu0 0
        %1047 = vmatpush1.bf16.msra.mxu0 0
        %1048 = vmatprep.subr.bf16.mxu0 0
        %1049 = vmatpush1.bf16.msra.mxu0 0
        %1050 = vmatprep.subr.bf16.mxu0 0
        %1051 = vmatpush1.bf16.msra.mxu0 0
        %1052 = vmatprep.subr.bf16.mxu0 0
        %1053 = vmatpush1.bf16.msra.mxu0 0
        %1054 = vmatprep.subr.bf16.mxu0 0
        %1055 = vmatpush1.bf16.msra.mxu0 0
        %1056 = vmatprep.subr.bf16.mxu0 0
        %1057 = vmatpush1.bf16.msra.mxu0 0
        %1058 = vmatprep.subr.bf16.mxu0 0
        %1059 = vmatpush1.bf16.msra.mxu0 0
        %1060 = vmatprep.subr.bf16.mxu0 0
        %1061 = vmatpush1.bf16.msra.mxu0 0
        %1062 = vmatprep.subr.bf16.mxu0 0
        %1063 = vmatpush1.bf16.msra.mxu0 0
        %1064 = vmatprep.subr.bf16.mxu0 0
        %1065 = vmatpush1.bf16.msra.mxu0 0
        %1066 = vmatprep.mubr.bf16.mxu0 0
        %1067 = vmatmul.mubr.bf16.gmra.mrb[0].mxu0 %v1032
        %v1068 = vpop.f32.mrb[0].mxu0
        %v1069 = vadd.f32 0.0, %v1068
        %v1070 = vpop.f32.mrb[0].mxu0
        %v1071 = vpop.f32.mrb[0].mxu0
        %v1072 = vpop.f32.mrb[0].mxu0
        %1073 = vdwg.mxu0
        %v1076 = vunpack.c.l.b16 %v595
        %v1077 = vunpack.c.l.b16 %v596
        %v1078 = vpack.c.b16 %v1077, %v1076
        %v1081 = vsel %vm793, %v908, 0
        %1083 = vmatprep.subr.bf16.mxu0 0
        %1084 = vmatpush1.bf16.msra.mxu0 %v1078
        %1085 = vmatprep.subr.bf16.mxu0 0
        %1086 = vmatpush1.bf16.msra.mxu0 0
        %1087 = vmatprep.subr.bf16.mxu0 0
        %1088 = vmatpush1.bf16.msra.mxu0 0
        %1089 = vmatprep.subr.bf16.mxu0 0
        %1090 = vmatpush1.bf16.msra.mxu0 0
        %1091 = vmatprep.subr.bf16.mxu0 0
        %1092 = vmatpush1.bf16.msra.mxu0 0
        %1093 = vmatprep.subr.bf16.mxu0 0
        %1094 = vmatpush1.bf16.msra.mxu0 0
        %1095 = vmatprep.subr.bf16.mxu0 0
        %1096 = vmatpush1.bf16.msra.mxu0 0
        %1097 = vmatprep.subr.bf16.mxu0 0
        %1098 = vmatpush1.bf16.msra.mxu0 0
        %1099 = vmatprep.subr.bf16.mxu0 0
        %1100 = vmatpush1.bf16.msra.mxu0 0
        %1101 = vmatprep.subr.bf16.mxu0 0
        %1102 = vmatpush1.bf16.msra.mxu0 0
        %1103 = vmatprep.subr.bf16.mxu0 0
        %1104 = vmatpush1.bf16.msra.mxu0 0
        %1105 = vmatprep.subr.bf16.mxu0 0
        %1106 = vmatpush1.bf16.msra.mxu0 0
        %1107 = vmatprep.subr.bf16.mxu0 0
        %1108 = vmatpush1.bf16.msra.mxu0 0
        %1109 = vmatprep.subr.bf16.mxu0 0
        %1110 = vmatpush1.bf16.msra.mxu0 0
        %1111 = vmatprep.subr.bf16.mxu0 0
        %1112 = vmatpush1.bf16.msra.mxu0 0
        %1113 = vmatprep.subr.bf16.mxu0 0
        %1114 = vmatpush1.bf16.msra.mxu0 0
        %1115 = vmatprep.mubr.bf16.mxu0 0
        %1116 = vmatmul.mubr.bf16.gmra.mrb[0].mxu0 %v1081
        %v1117 = vpop.f32.mrb[0].mxu0
        %v1118 = vadd.f32 %v1069, %v1117
        %v1119 = vpop.f32.mrb[0].mxu0
        %v1120 = vpop.f32.mrb[0].mxu0
        %v1121 = vpop.f32.mrb[0].mxu0
        %1122 = vdwg.mxu0
        %1123 = vrot.lane.b32.xlu0 %v790, 96
        %v1124 = vpop.permute.xlu0 %1123
        %1125 = vrot.lane.b32.xlu0 %v791, 96
        %v1126 = vpop.permute.xlu0 %1125
        %v1128 = vsel %vm793, %v1124, 0
        %v1131 = vsel %vm793, %v1126, 0
        %1133 = vmatprep.subr.bf16.mxu0 0
        %1134 = vmatpush1.bf16.xpose.msra.mxu0 %v1131
        %1135 = vmatprep.subr.bf16.mxu0 0
        %1136 = vmatpush1.bf16.xpose.msra.mxu0 0
        %1137 = vmatprep.subr.bf16.mxu0 0
        %1138 = vmatpush1.bf16.xpose.msra.mxu0 0
        %1139 = vmatprep.subr.bf16.mxu0 0
        %1140 = vmatpush1.bf16.xpose.msra.mxu0 0
        %1141 = vmatprep.subr.bf16.mxu0 0
        %1142 = vmatpush1.bf16.xpose.msra.mxu0 0
        %1143 = vmatprep.subr.bf16.mxu0 0
        %1144 = vmatpush1.bf16.xpose.msra.mxu0 0
        %1145 = vmatprep.subr.bf16.mxu0 0
        %1146 = vmatpush1.bf16.xpose.msra.mxu0 0
        %1147 = vmatprep.subr.bf16.mxu0 0
        %1148 = vmatpush1.bf16.xpose.msra.mxu0 0
        %1149 = vmatprep.subr.bf16.mxu0 0
        %1150 = vmatpush1.bf16.xpose.msra.mxu0 0
        %1151 = vmatprep.subr.bf16.mxu0 0
        %1152 = vmatpush1.bf16.xpose.msra.mxu0 0
        %1153 = vmatprep.subr.bf16.mxu0 0
        %1154 = vmatpush1.bf16.xpose.msra.mxu0 0
        %1155 = vmatprep.subr.bf16.mxu0 0
        %1156 = vmatpush1.bf16.xpose.msra.mxu0 0
        %1157 = vmatprep.subr.bf16.mxu0 0
        %1158 = vmatpush1.bf16.xpose.msra.mxu0 0
        %1159 = vmatprep.subr.bf16.mxu0 0
        %1160 = vmatpush1.bf16.xpose.msra.mxu0 0
        %1161 = vmatprep.subr.bf16.mxu0 0
        %1162 = vmatpush1.bf16.xpose.msra.mxu0 0
        %1163 = vmatprep.subr.bf16.mxu0 0
        %1164 = vmatpush1.bf16.xpose.msra.mxu0 0
        %1165 = vmatprep.mubr.bf16.mxu0 0
        %1166 = vmatmul.mubr.bf16.gmra.mrb[0].mxu0 %v1128
        %v1167 = vpop.f32.mrb[0].mxu0
        %v1168 = vadd.f32 0.0, %v1167
        %v1169 = vpop.f32.mrb[0].mxu0
        %v1170 = vpop.f32.mrb[0].mxu0
        %v1171 = vpop.f32.mrb[0].mxu0
        %1172 = vdwg.mxu0
        %v1173 = vmul.f32 %v1168, 0.25
        %v1174 = vadd.f32 %v1173, %v845
        %v1175 = vsel %vm848, %v1174, -inf
        %1176 = vmax.xlane.f32.xlu0 %v1175
        %v1177 = vpop.xlane.xlu0 %1176
        %v1178 = vsub.f32 %v1174, %v1177
        %v1179 = vmul.f32 %v1178, 1.442695
        %v1180 = vpow.pop %v1179
        %v1181 = vsel %vm848, %v1180, 0.0
        %1182 = vadd.xlane.f32.xlu0 %v1181
        %v1183 = vpop.xlane.xlu0 %1182
        %v1184 = vrcp.pop %v1183
        %v1185 = vmul.f32 %v1180, %v1184
        %v1186 = vpack.c.bf16 %v1185, %v1185
        %1187 = vrot.lane.b32.xlu0 %v792, 96
        %v1188 = vpop.permute.xlu0 %1187
        %v1190 = vsel %vm848, %v1186, 0
        %v1193 = vsel %vm864, %v1188, 0
        %1195 = vmatprep.subr.bf16.mxu0 0
        %1196 = vmatpush1.bf16.msra.mxu0 %v1193
        %1197 = vmatprep.subr.bf16.mxu0 0
        %1198 = vmatpush1.bf16.msra.mxu0 0
        %1199 = vmatprep.subr.bf16.mxu0 0
        %1200 = vmatpush1.bf16.msra.mxu0 0
        %1201 = vmatprep.subr.bf16.mxu0 0
        %1202 = vmatpush1.bf16.msra.mxu0 0
        %1203 = vmatprep.subr.bf16.mxu0 0
        %1204 = vmatpush1.bf16.msra.mxu0 0
        %1205 = vmatprep.subr.bf16.mxu0 0
        %1206 = vmatpush1.bf16.msra.mxu0 0
        %1207 = vmatprep.subr.bf16.mxu0 0
        %1208 = vmatpush1.bf16.msra.mxu0 0
        %1209 = vmatprep.subr.bf16.mxu0 0
        %1210 = vmatpush1.bf16.msra.mxu0 0
        %1211 = vmatprep.subr.bf16.mxu0 0
        %1212 = vmatpush1.bf16.msra.mxu0 0
        %1213 = vmatprep.subr.bf16.mxu0 0
        %1214 = vmatpush1.bf16.msra.mxu0 0
        %1215 = vmatprep.subr.bf16.mxu0 0
        %1216 = vmatpush1.bf16.msra.mxu0 0
        %1217 = vmatprep.subr.bf16.mxu0 0
        %1218 = vmatpush1.bf16.msra.mxu0 0
        %1219 = vmatprep.subr.bf16.mxu0 0
        %1220 = vmatpush1.bf16.msra.mxu0 0
        %1221 = vmatprep.subr.bf16.mxu0 0
        %1222 = vmatpush1.bf16.msra.mxu0 0
        %1223 = vmatprep.subr.bf16.mxu0 0
        %1224 = vmatpush1.bf16.msra.mxu0 0
        %1225 = vmatprep.subr.bf16.mxu0 0
        %1226 = vmatpush1.bf16.msra.mxu0 0
        %1227 = vmatprep.mubr.bf16.mxu0 0
        %1228 = vmatmul.mubr.bf16.gmra.mrb[0].mxu0 %v1190
        %v1229 = vpop.f32.mrb[0].mxu0
        %v1230 = vadd.f32 0.0, %v1229
        %v1231 = vpop.f32.mrb[0].mxu0
        %v1232 = vpop.f32.mrb[0].mxu0
        %v1233 = vpop.f32.mrb[0].mxu0
        %1234 = vdwg.mxu0
        %v1235 = vpack.c.bf16 %v1230, %v1230
        %v1238 = vunpack.c.l.b16 %v599
        %v1239 = vunpack.c.l.b16 %v600
        %v1240 = vpack.c.b16 %v1239, %v1238
        %v1243 = vsel %vm793, %v1235, 0
        %1245 = vmatprep.subr.bf16.mxu0 0
        %1246 = vmatpush1.bf16.msra.mxu0 %v1240
        %1247 = vmatprep.subr.bf16.mxu0 0
        %1248 = vmatpush1.bf16.msra.mxu0 0
        %1249 = vmatprep.subr.bf16.mxu0 0
        %1250 = vmatpush1.bf16.msra.mxu0 0
        %1251 = vmatprep.subr.bf16.mxu0 0
        %1252 = vmatpush1.bf16.msra.mxu0 0
        %1253 = vmatprep.subr.bf16.mxu0 0
        %1254 = vmatpush1.bf16.msra.mxu0 0
        %1255 = vmatprep.subr.bf16.mxu0 0
        %1256 = vmatpush1.bf16.msra.mxu0 0
        %1257 = vmatprep.subr.bf16.mxu0 0
        %1258 = vmatpush1.bf16.msra.mxu0 0
        %1259 = vmatprep.subr.bf16.mxu0 0
        %1260 = vmatpush1.bf16.msra.mxu0 0
        %1261 = vmatprep.subr.bf16.mxu0 0
        %1262 = vmatpush1.bf16.msra.mxu0 0
        %1263 = vmatprep.subr.bf16.mxu0 0
        %1264 = vmatpush1.bf16.msra.mxu0 0
        %1265 = vmatprep.subr.bf16.mxu0 0
        %1266 = vmatpush1.bf16.msra.mxu0 0
        %1267 = vmatprep.subr.bf16.mxu0 0
        %1268 = vmatpush1.bf16.msra.mxu0 0
        %1269 = vmatprep.subr.bf16.mxu0 0
        %1270 = vmatpush1.bf16.msra.mxu0 0
        %1271 = vmatprep.subr.bf16.mxu0 0
        %1272 = vmatpush1.bf16.msra.mxu0 0
        %1273 = vmatprep.subr.bf16.mxu0 0
        %1274 = vmatpush1.bf16.msra.mxu0 0
        %1275 = vmatprep.subr.bf16.mxu0 0
        %1276 = vmatpush1.bf16.msra.mxu0 0
        %1277 = vmatprep.mubr.bf16.mxu0 0
        %1278 = vmatmul.mubr.bf16.gmra.mrb[0].mxu0 %v1243
        %v1279 = vpop.f32.mrb[0].mxu0
        %v1280 = vadd.f32 0.0, %v1279
        %v1281 = vpop.f32.mrb[0].mxu0
        %v1282 = vpop.f32.mrb[0].mxu0
        %v1283 = vpop.f32.mrb[0].mxu0
        %1284 = vdwg.mxu0
        %v1285 = vadd.f32 %v1118, %v1280
        %1286 = vrot.lane.b32.xlu0 %v790, 80
        %v1287 = vpop.permute.xlu0 %1286
        %1288 = vrot.lane.b32.xlu0 %v791, 80
        %v1289 = vpop.permute.xlu0 %1288
        %v1291 = vsel %vm793, %v1287, 0
        %v1294 = vsel %vm793, %v1289, 0
        %1296 = vmatprep.subr.bf16.mxu0 0
        %1297 = vmatpush1.bf16.xpose.msra.mxu0 %v1294
        %1298 = vmatprep.subr.bf16.mxu0 0
        %1299 = vmatpush1.bf16.xpose.msra.mxu0 0
        %1300 = vmatprep.subr.bf16.mxu0 0
        %1301 = vmatpush1.bf16.xpose.msra.mxu0 0
        %1302 = vmatprep.subr.bf16.mxu0 0
        %1303 = vmatpush1.bf16.xpose.msra.mxu0 0
        %1304 = vmatprep.subr.bf16.mxu0 0
        %1305 = vmatpush1.bf16.xpose.msra.mxu0 0
        %1306 = vmatprep.subr.bf16.mxu0 0
        %1307 = vmatpush1.bf16.xpose.msra.mxu0 0
        %1308 = vmatprep.subr.bf16.mxu0 0
        %1309 = vmatpush1.bf16.xpose.msra.mxu0 0
        %1310 = vmatprep.subr.bf16.mxu0 0
        %1311 = vmatpush1.bf16.xpose.msra.mxu0 0
        %1312 = vmatprep.subr.bf16.mxu0 0
        %1313 = vmatpush1.bf16.xpose.msra.mxu0 0
        %1314 = vmatprep.subr.bf16.mxu0 0
        %1315 = vmatpush1.bf16.xpose.msra.mxu0 0
        %1316 = vmatprep.subr.bf16.mxu0 0
        %1317 = vmatpush1.bf16.xpose.msra.mxu0 0
        %1318 = vmatprep.subr.bf16.mxu0 0
        %1319 = vmatpush1.bf16.xpose.msra.mxu0 0
        %1320 = vmatprep.subr.bf16.mxu0 0
        %1321 = vmatpush1.bf16.xpose.msra.mxu0 0
        %1322 = vmatprep.subr.bf16.mxu0 0
        %1323 = vmatpush1.bf16.xpose.msra.mxu0 0
        %1324 = vmatprep.subr.bf16.mxu0 0
        %1325 = vmatpush1.bf16.xpose.msra.mxu0 0
        %1326 = vmatprep.subr.bf16.mxu0 0
        %1327 = vmatpush1.bf16.xpose.msra.mxu0 0
        %1328 = vmatprep.mubr.bf16.mxu0 0
        %1329 = vmatmul.mubr.bf16.gmra.mrb[0].mxu0 %v1291
        %v1330 = vpop.f32.mrb[0].mxu0
        %v1331 = vadd.f32 0.0, %v1330
        %v1332 = vpop.f32.mrb[0].mxu0
        %v1333 = vpop.f32.mrb[0].mxu0
        %v1334 = vpop.f32.mrb[0].mxu0
        %1335 = vdwg.mxu0
        %v1336 = vmul.f32 %v1331, 0.25
        %v1337 = vadd.f32 %v1336, %v845
        %v1338 = vsel %vm848, %v1337, -inf
        %1339 = vmax.xlane.f32.xlu0 %v1338
        %v1340 = vpop.xlane.xlu0 %1339
        %v1341 = vsub.f32 %v1337, %v1340
        %v1342 = vmul.f32 %v1341, 1.442695
        %v1343 = vpow.pop %v1342
        %v1344 = vsel %vm848, %v1343, 0.0
        %1345 = vadd.xlane.f32.xlu0 %v1344
        %v1346 = vpop.xlane.xlu0 %1345
        %v1347 = vrcp.pop %v1346
        %v1348 = vmul.f32 %v1343, %v1347
        %v1349 = vpack.c.bf16 %v1348, %v1348
        %1350 = vrot.lane.b32.xlu0 %v792, 80
        %v1351 = vpop.permute.xlu0 %1350
        %v1353 = vsel %vm848, %v1349, 0
        %v1356 = vsel %vm864, %v1351, 0
        %1358 = vmatprep.subr.bf16.mxu0 0
        %1359 = vmatpush1.bf16.msra.mxu0 %v1356
        %1360 = vmatprep.subr.bf16.mxu0 0
        %1361 = vmatpush1.bf16.msra.mxu0 0
        %1362 = vmatprep.subr.bf16.mxu0 0
        %1363 = vmatpush1.bf16.msra.mxu0 0
        %1364 = vmatprep.subr.bf16.mxu0 0
        %1365 = vmatpush1.bf16.msra.mxu0 0
        %1366 = vmatprep.subr.bf16.mxu0 0
        %1367 = vmatpush1.bf16.msra.mxu0 0
        %1368 = vmatprep.subr.bf16.mxu0 0
        %1369 = vmatpush1.bf16.msra.mxu0 0
        %1370 = vmatprep.subr.bf16.mxu0 0
        %1371 = vmatpush1.bf16.msra.mxu0 0
        %1372 = vmatprep.subr.bf16.mxu0 0
        %1373 = vmatpush1.bf16.msra.mxu0 0
        %1374 = vmatprep.subr.bf16.mxu0 0
        %1375 = vmatpush1.bf16.msra.mxu0 0
        %1376 = vmatprep.subr.bf16.mxu0 0
        %1377 = vmatpush1.bf16.msra.mxu0 0
        %1378 = vmatprep.subr.bf16.mxu0 0
        %1379 = vmatpush1.bf16.msra.mxu0 0
        %1380 = vmatprep.subr.bf16.mxu0 0
        %1381 = vmatpush1.bf16.msra.mxu0 0
        %1382 = vmatprep.subr.bf16.mxu0 0
        %1383 = vmatpush1.bf16.msra.mxu0 0
        %1384 = vmatprep.subr.bf16.mxu0 0
        %1385 = vmatpush1.bf16.msra.mxu0 0
        %1386 = vmatprep.subr.bf16.mxu0 0
        %1387 = vmatpush1.bf16.msra.mxu0 0
        %1388 = vmatprep.subr.bf16.mxu0 0
        %1389 = vmatpush1.bf16.msra.mxu0 0
        %1390 = vmatprep.mubr.bf16.mxu0 0
        %1391 = vmatmul.mubr.bf16.gmra.mrb[0].mxu0 %v1353
        %v1392 = vpop.f32.mrb[0].mxu0
        %v1393 = vadd.f32 0.0, %v1392
        %v1394 = vpop.f32.mrb[0].mxu0
        %v1395 = vpop.f32.mrb[0].mxu0
        %v1396 = vpop.f32.mrb[0].mxu0
        %1397 = vdwg.mxu0
        %v1398 = vpack.c.bf16 %v1393, %v1393
        %v1401 = vunpack.c.l.b16 %v601
        %v1402 = vunpack.c.l.b16 %v602
        %v1403 = vpack.c.b16 %v1402, %v1401
        %v1406 = vsel %vm793, %v1398, 0
        %1408 = vmatprep.subr.bf16.mxu0 0
        %1409 = vmatpush1.bf16.msra.mxu0 %v1403
        %1410 = vmatprep.subr.bf16.mxu0 0
        %1411 = vmatpush1.bf16.msra.mxu0 0
        %1412 = vmatprep.subr.bf16.mxu0 0
        %1413 = vmatpush1.bf16.msra.mxu0 0
        %1414 = vmatprep.subr.bf16.mxu0 0
        %1415 = vmatpush1.bf16.msra.mxu0 0
        %1416 = vmatprep.subr.bf16.mxu0 0
        %1417 = vmatpush1.bf16.msra.mxu0 0
        %1418 = vmatprep.subr.bf16.mxu0 0
        %1419 = vmatpush1.bf16.msra.mxu0 0
        %1420 = vmatprep.subr.bf16.mxu0 0
        %1421 = vmatpush1.bf16.msra.mxu0 0
        %1422 = vmatprep.subr.bf16.mxu0 0
        %1423 = vmatpush1.bf16.msra.mxu0 0
        %1424 = vmatprep.subr.bf16.mxu0 0
        %1425 = vmatpush1.bf16.msra.mxu0 0
        %1426 = vmatprep.subr.bf16.mxu0 0
        %1427 = vmatpush1.bf16.msra.mxu0 0
        %1428 = vmatprep.subr.bf16.mxu0 0
        %1429 = vmatpush1.bf16.msra.mxu0 0
        %1430 = vmatprep.subr.bf16.mxu0 0
        %1431 = vmatpush1.bf16.msra.mxu0 0
        %1432 = vmatprep.subr.bf16.mxu0 0
        %1433 = vmatpush1.bf16.msra.mxu0 0
        %1434 = vmatprep.subr.bf16.mxu0 0
        %1435 = vmatpush1.bf16.msra.mxu0 0
        %1436 = vmatprep.subr.bf16.mxu0 0
        %1437 = vmatpush1.bf16.msra.mxu0 0
        %1438 = vmatprep.subr.bf16.mxu0 0
        %1439 = vmatpush1.bf16.msra.mxu0 0
        %1440 = vmatprep.mubr.bf16.mxu0 0
        %1441 = vmatmul.mubr.bf16.gmra.mrb[0].mxu0 %v1406
        %v1442 = vpop.f32.mrb[0].mxu0
        %v1443 = vadd.f32 0.0, %v1442
        %v1444 = vpop.f32.mrb[0].mxu0
        %v1445 = vpop.f32.mrb[0].mxu0
        %v1446 = vpop.f32.mrb[0].mxu0
        %1447 = vdwg.mxu0
        %v1448 = vadd.f32 %v1285, %v1443
        %1449 = vrot.lane.b32.xlu0 %v790, 64
        %v1450 = vpop.permute.xlu0 %1449
        %1451 = vrot.lane.b32.xlu0 %v791, 64
        %v1452 = vpop.permute.xlu0 %1451
        %v1454 = vsel %vm793, %v1450, 0
        %v1457 = vsel %vm793, %v1452, 0
        %1459 = vmatprep.subr.bf16.mxu0 0
        %1460 = vmatpush1.bf16.xpose.msra.mxu0 %v1457
        %1461 = vmatprep.subr.bf16.mxu0 0
        %1462 = vmatpush1.bf16.xpose.msra.mxu0 0
        %1463 = vmatprep.subr.bf16.mxu0 0
        %1464 = vmatpush1.bf16.xpose.msra.mxu0 0
        %1465 = vmatprep.subr.bf16.mxu0 0
        %1466 = vmatpush1.bf16.xpose.msra.mxu0 0
        %1467 = vmatprep.subr.bf16.mxu0 0
        %1468 = vmatpush1.bf16.xpose.msra.mxu0 0
        %1469 = vmatprep.subr.bf16.mxu0 0
        %1470 = vmatpush1.bf16.xpose.msra.mxu0 0
        %1471 = vmatprep.subr.bf16.mxu0 0
        %1472 = vmatpush1.bf16.xpose.msra.mxu0 0
        %1473 = vmatprep.subr.bf16.mxu0 0
        %1474 = vmatpush1.bf16.xpose.msra.mxu0 0
        %1475 = vmatprep.subr.bf16.mxu0 0
        %1476 = vmatpush1.bf16.xpose.msra.mxu0 0
        %1477 = vmatprep.subr.bf16.mxu0 0
        %1478 = vmatpush1.bf16.xpose.msra.mxu0 0
        %1479 = vmatprep.subr.bf16.mxu0 0
        %1480 = vmatpush1.bf16.xpose.msra.mxu0 0
        %1481 = vmatprep.subr.bf16.mxu0 0
        %1482 = vmatpush1.bf16.xpose.msra.mxu0 0
        %1483 = vmatprep.subr.bf16.mxu0 0
        %1484 = vmatpush1.bf16.xpose.msra.mxu0 0
        %1485 = vmatprep.subr.bf16.mxu0 0
        %1486 = vmatpush1.bf16.xpose.msra.mxu0 0
        %1487 = vmatprep.subr.bf16.mxu0 0
        %1488 = vmatpush1.bf16.xpose.msra.mxu0 0
        %1489 = vmatprep.subr.bf16.mxu0 0
        %1490 = vmatpush1.bf16.xpose.msra.mxu0 0
        %1491 = vmatprep.mubr.bf16.mxu0 0
        %1492 = vmatmul.mubr.bf16.gmra.mrb[0].mxu0 %v1454
        %v1493 = vpop.f32.mrb[0].mxu0
        %v1494 = vadd.f32 0.0, %v1493
        %v1495 = vpop.f32.mrb[0].mxu0
        %v1496 = vpop.f32.mrb[0].mxu0
        %v1497 = vpop.f32.mrb[0].mxu0
        %1498 = vdwg.mxu0
        %v1499 = vmul.f32 %v1494, 0.25
        %v1500 = vadd.f32 %v1499, %v845
        %v1501 = vsel %vm848, %v1500, -inf
        %1502 = vmax.xlane.f32.xlu0 %v1501
        %v1503 = vpop.xlane.xlu0 %1502
        %v1504 = vsub.f32 %v1500, %v1503
        %v1505 = vmul.f32 %v1504, 1.442695
        %v1506 = vpow.pop %v1505
        %v1507 = vsel %vm848, %v1506, 0.0
        %1508 = vadd.xlane.f32.xlu0 %v1507
        %v1509 = vpop.xlane.xlu0 %1508
        %v1510 = vrcp.pop %v1509
        %v1511 = vmul.f32 %v1506, %v1510
        %v1512 = vpack.c.bf16 %v1511, %v1511
        %1513 = vrot.lane.b32.xlu0 %v792, 64
        %v1514 = vpop.permute.xlu0 %1513
        %v1516 = vsel %vm848, %v1512, 0
        %v1519 = vsel %vm864, %v1514, 0
        %1521 = vmatprep.subr.bf16.mxu0 0
        %1522 = vmatpush1.bf16.msra.mxu0 %v1519
        %1523 = vmatprep.subr.bf16.mxu0 0
        %1524 = vmatpush1.bf16.msra.mxu0 0
        %1525 = vmatprep.subr.bf16.mxu0 0
        %1526 = vmatpush1.bf16.msra.mxu0 0
        %1527 = vmatprep.subr.bf16.mxu0 0
        %1528 = vmatpush1.bf16.msra.mxu0 0
        %1529 = vmatprep.subr.bf16.mxu0 0
        %1530 = vmatpush1.bf16.msra.mxu0 0
        %1531 = vmatprep.subr.bf16.mxu0 0
        %1532 = vmatpush1.bf16.msra.mxu0 0
        %1533 = vmatprep.subr.bf16.mxu0 0
        %1534 = vmatpush1.bf16.msra.mxu0 0
        %1535 = vmatprep.subr.bf16.mxu0 0
        %1536 = vmatpush1.bf16.msra.mxu0 0
        %1537 = vmatprep.subr.bf16.mxu0 0
        %1538 = vmatpush1.bf16.msra.mxu0 0
        %1539 = vmatprep.subr.bf16.mxu0 0
        %1540 = vmatpush1.bf16.msra.mxu0 0
        %1541 = vmatprep.subr.bf16.mxu0 0
        %1542 = vmatpush1.bf16.msra.mxu0 0
        %1543 = vmatprep.subr.bf16.mxu0 0
        %1544 = vmatpush1.bf16.msra.mxu0 0
        %1545 = vmatprep.subr.bf16.mxu0 0
        %1546 = vmatpush1.bf16.msra.mxu0 0
        %1547 = vmatprep.subr.bf16.mxu0 0
        %1548 = vmatpush1.bf16.msra.mxu0 0
        %1549 = vmatprep.subr.bf16.mxu0 0
        %1550 = vmatpush1.bf16.msra.mxu0 0
        %1551 = vmatprep.subr.bf16.mxu0 0
        %1552 = vmatpush1.bf16.msra.mxu0 0
        %1553 = vmatprep.mubr.bf16.mxu0 0
        %1554 = vmatmul.mubr.bf16.gmra.mrb[0].mxu0 %v1516
        %v1555 = vpop.f32.mrb[0].mxu0
        %v1556 = vadd.f32 0.0, %v1555
        %v1557 = vpop.f32.mrb[0].mxu0
        %v1558 = vpop.f32.mrb[0].mxu0
        %v1559 = vpop.f32.mrb[0].mxu0
        %1560 = vdwg.mxu0
        %v1561 = vpack.c.bf16 %v1556, %v1556
        %v1564 = vunpack.c.l.b16 %v603
        %v1565 = vunpack.c.l.b16 %v604
        %v1566 = vpack.c.b16 %v1565, %v1564
        %v1569 = vsel %vm793, %v1561, 0
        %1571 = vmatprep.subr.bf16.mxu0 0
        %1572 = vmatpush1.bf16.msra.mxu0 %v1566
        %1573 = vmatprep.subr.bf16.mxu0 0
        %1574 = vmatpush1.bf16.msra.mxu0 0
        %1575 = vmatprep.subr.bf16.mxu0 0
        %1576 = vmatpush1.bf16.msra.mxu0 0
        %1577 = vmatprep.subr.bf16.mxu0 0
        %1578 = vmatpush1.bf16.msra.mxu0 0
        %1579 = vmatprep.subr.bf16.mxu0 0
        %1580 = vmatpush1.bf16.msra.mxu0 0
        %1581 = vmatprep.subr.bf16.mxu0 0
        %1582 = vmatpush1.bf16.msra.mxu0 0
        %1583 = vmatprep.subr.bf16.mxu0 0
        %1584 = vmatpush1.bf16.msra.mxu0 0
        %1585 = vmatprep.subr.bf16.mxu0 0
        %1586 = vmatpush1.bf16.msra.mxu0 0
        %1587 = vmatprep.subr.bf16.mxu0 0
        %1588 = vmatpush1.bf16.msra.mxu0 0
        %1589 = vmatprep.subr.bf16.mxu0 0
        %1590 = vmatpush1.bf16.msra.mxu0 0
        %1591 = vmatprep.subr.bf16.mxu0 0
        %1592 = vmatpush1.bf16.msra.mxu0 0
        %1593 = vmatprep.subr.bf16.mxu0 0
        %1594 = vmatpush1.bf16.msra.mxu0 0
        %1595 = vmatprep.subr.bf16.mxu0 0
        %1596 = vmatpush1.bf16.msra.mxu0 0
        %1597 = vmatprep.subr.bf16.mxu0 0
        %1598 = vmatpush1.bf16.msra.mxu0 0
        %1599 = vmatprep.subr.bf16.mxu0 0
        %1600 = vmatpush1.bf16.msra.mxu0 0
        %1601 = vmatprep.subr.bf16.mxu0 0
        %1602 = vmatpush1.bf16.msra.mxu0 0
        %1603 = vmatprep.mubr.bf16.mxu0 0
        %1604 = vmatmul.mubr.bf16.gmra.mrb[0].mxu0 %v1569
        %v1605 = vpop.f32.mrb[0].mxu0
        %v1606 = vadd.f32 0.0, %v1605
        %v1607 = vpop.f32.mrb[0].mxu0
        %v1608 = vpop.f32.mrb[0].mxu0
        %v1609 = vpop.f32.mrb[0].mxu0
        %1610 = vdwg.mxu0
        %v1611 = vadd.f32 %v1448, %v1606
        %1612 = vrot.lane.b32.xlu0 %v790, 48
        %v1613 = vpop.permute.xlu0 %1612
        %1614 = vrot.lane.b32.xlu0 %v791, 48
        %v1615 = vpop.permute.xlu0 %1614
        %v1617 = vsel %vm793, %v1613, 0
        %v1620 = vsel %vm793, %v1615, 0
        %1622 = vmatprep.subr.bf16.mxu0 0
        %1623 = vmatpush1.bf16.xpose.msra.mxu0 %v1620
        %1624 = vmatprep.subr.bf16.mxu0 0
        %1625 = vmatpush1.bf16.xpose.msra.mxu0 0
        %1626 = vmatprep.subr.bf16.mxu0 0
        %1627 = vmatpush1.bf16.xpose.msra.mxu0 0
        %1628 = vmatprep.subr.bf16.mxu0 0
        %1629 = vmatpush1.bf16.xpose.msra.mxu0 0
        %1630 = vmatprep.subr.bf16.mxu0 0
        %1631 = vmatpush1.bf16.xpose.msra.mxu0 0
        %1632 = vmatprep.subr.bf16.mxu0 0
        %1633 = vmatpush1.bf16.xpose.msra.mxu0 0
        %1634 = vmatprep.subr.bf16.mxu0 0
        %1635 = vmatpush1.bf16.xpose.msra.mxu0 0
        %1636 = vmatprep.subr.bf16.mxu0 0
        %1637 = vmatpush1.bf16.xpose.msra.mxu0 0
        %1638 = vmatprep.subr.bf16.mxu0 0
        %1639 = vmatpush1.bf16.xpose.msra.mxu0 0
        %1640 = vmatprep.subr.bf16.mxu0 0
        %1641 = vmatpush1.bf16.xpose.msra.mxu0 0
        %1642 = vmatprep.subr.bf16.mxu0 0
        %1643 = vmatpush1.bf16.xpose.msra.mxu0 0
        %1644 = vmatprep.subr.bf16.mxu0 0
        %1645 = vmatpush1.bf16.xpose.msra.mxu0 0
        %1646 = vmatprep.subr.bf16.mxu0 0
        %1647 = vmatpush1.bf16.xpose.msra.mxu0 0
        %1648 = vmatprep.subr.bf16.mxu0 0
        %1649 = vmatpush1.bf16.xpose.msra.mxu0 0
        %1650 = vmatprep.subr.bf16.mxu0 0
        %1651 = vmatpush1.bf16.xpose.msra.mxu0 0
        %1652 = vmatprep.subr.bf16.mxu0 0
        %1653 = vmatpush1.bf16.xpose.msra.mxu0 0
        %1654 = vmatprep.mubr.bf16.mxu0 0
        %1655 = vmatmul.mubr.bf16.gmra.mrb[0].mxu0 %v1617
        %v1656 = vpop.f32.mrb[0].mxu0
        %v1657 = vadd.f32 0.0, %v1656
        %v1658 = vpop.f32.mrb[0].mxu0
        %v1659 = vpop.f32.mrb[0].mxu0
        %v1660 = vpop.f32.mrb[0].mxu0
        %1661 = vdwg.mxu0
        %v1662 = vmul.f32 %v1657, 0.25
        %v1663 = vadd.f32 %v1662, %v845
        %v1664 = vsel %vm848, %v1663, -inf
        %1665 = vmax.xlane.f32.xlu0 %v1664
        %v1666 = vpop.xlane.xlu0 %1665
        %v1667 = vsub.f32 %v1663, %v1666
        %v1668 = vmul.f32 %v1667, 1.442695
        %v1669 = vpow.pop %v1668
        %v1670 = vsel %vm848, %v1669, 0.0
        %1671 = vadd.xlane.f32.xlu0 %v1670
        %v1672 = vpop.xlane.xlu0 %1671
        %v1673 = vrcp.pop %v1672
        %v1674 = vmul.f32 %v1669, %v1673
        %v1675 = vpack.c.bf16 %v1674, %v1674
        %1676 = vrot.lane.b32.xlu0 %v792, 48
        %v1677 = vpop.permute.xlu0 %1676
        %v1679 = vsel %vm848, %v1675, 0
        %v1682 = vsel %vm864, %v1677, 0
        %1684 = vmatprep.subr.bf16.mxu0 0
        %1685 = vmatpush1.bf16.msra.mxu0 %v1682
        %1686 = vmatprep.subr.bf16.mxu0 0
        %1687 = vmatpush1.bf16.msra.mxu0 0
        %1688 = vmatprep.subr.bf16.mxu0 0
        %1689 = vmatpush1.bf16.msra.mxu0 0
        %1690 = vmatprep.subr.bf16.mxu0 0
        %1691 = vmatpush1.bf16.msra.mxu0 0
        %1692 = vmatprep.subr.bf16.mxu0 0
        %1693 = vmatpush1.bf16.msra.mxu0 0
        %1694 = vmatprep.subr.bf16.mxu0 0
        %1695 = vmatpush1.bf16.msra.mxu0 0
        %1696 = vmatprep.subr.bf16.mxu0 0
        %1697 = vmatpush1.bf16.msra.mxu0 0
        %1698 = vmatprep.subr.bf16.mxu0 0
        %1699 = vmatpush1.bf16.msra.mxu0 0
        %1700 = vmatprep.subr.bf16.mxu0 0
        %1701 = vmatpush1.bf16.msra.mxu0 0
        %1702 = vmatprep.subr.bf16.mxu0 0
        %1703 = vmatpush1.bf16.msra.mxu0 0
        %1704 = vmatprep.subr.bf16.mxu0 0
        %1705 = vmatpush1.bf16.msra.mxu0 0
        %1706 = vmatprep.subr.bf16.mxu0 0
        %1707 = vmatpush1.bf16.msra.mxu0 0
        %1708 = vmatprep.subr.bf16.mxu0 0
        %1709 = vmatpush1.bf16.msra.mxu0 0
        %1710 = vmatprep.subr.bf16.mxu0 0
        %1711 = vmatpush1.bf16.msra.mxu0 0
        %1712 = vmatprep.subr.bf16.mxu0 0
        %1713 = vmatpush1.bf16.msra.mxu0 0
        %1714 = vmatprep.subr.bf16.mxu0 0
        %1715 = vmatpush1.bf16.msra.mxu0 0
        %1716 = vmatprep.mubr.bf16.mxu0 0
        %1717 = vmatmul.mubr.bf16.gmra.mrb[0].mxu0 %v1679
        %v1718 = vpop.f32.mrb[0].mxu0
        %v1719 = vadd.f32 0.0, %v1718
        %v1720 = vpop.f32.mrb[0].mxu0
        %v1721 = vpop.f32.mrb[0].mxu0
        %v1722 = vpop.f32.mrb[0].mxu0
        %1723 = vdwg.mxu0
        %v1724 = vpack.c.bf16 %v1719, %v1719
        %v1727 = vunpack.c.l.b16 %v605
        %v1728 = vunpack.c.l.b16 %v606
        %v1729 = vpack.c.b16 %v1728, %v1727
        %v1732 = vsel %vm793, %v1724, 0
        %1734 = vmatprep.subr.bf16.mxu0 0
        %1735 = vmatpush1.bf16.msra.mxu0 %v1729
        %1736 = vmatprep.subr.bf16.mxu0 0
        %1737 = vmatpush1.bf16.msra.mxu0 0
        %1738 = vmatprep.subr.bf16.mxu0 0
        %1739 = vmatpush1.bf16.msra.mxu0 0
        %1740 = vmatprep.subr.bf16.mxu0 0
        %1741 = vmatpush1.bf16.msra.mxu0 0
        %1742 = vmatprep.subr.bf16.mxu0 0
        %1743 = vmatpush1.bf16.msra.mxu0 0
        %1744 = vmatprep.subr.bf16.mxu0 0
        %1745 = vmatpush1.bf16.msra.mxu0 0
        %1746 = vmatprep.subr.bf16.mxu0 0
        %1747 = vmatpush1.bf16.msra.mxu0 0
        %1748 = vmatprep.subr.bf16.mxu0 0
        %1749 = vmatpush1.bf16.msra.mxu0 0
        %1750 = vmatprep.subr.bf16.mxu0 0
        %1751 = vmatpush1.bf16.msra.mxu0 0
        %1752 = vmatprep.subr.bf16.mxu0 0
        %1753 = vmatpush1.bf16.msra.mxu0 0
        %1754 = vmatprep.subr.bf16.mxu0 0
        %1755 = vmatpush1.bf16.msra.mxu0 0
        %1756 = vmatprep.subr.bf16.mxu0 0
        %1757 = vmatpush1.bf16.msra.mxu0 0
        %1758 = vmatprep.subr.bf16.mxu0 0
        %1759 = vmatpush1.bf16.msra.mxu0 0
        %1760 = vmatprep.subr.bf16.mxu0 0
        %1761 = vmatpush1.bf16.msra.mxu0 0
        %1762 = vmatprep.subr.bf16.mxu0 0
        %1763 = vmatpush1.bf16.msra.mxu0 0
        %1764 = vmatprep.subr.bf16.mxu0 0
        %1765 = vmatpush1.bf16.msra.mxu0 0
        %1766 = vmatprep.mubr.bf16.mxu0 0
        %1767 = vmatmul.mubr.bf16.gmra.mrb[0].mxu0 %v1732
        %v1768 = vpop.f32.mrb[0].mxu0
        %v1769 = vadd.f32 0.0, %v1768
        %v1770 = vpop.f32.mrb[0].mxu0
        %v1771 = vpop.f32.mrb[0].mxu0
        %v1772 = vpop.f32.mrb[0].mxu0
        %1773 = vdwg.mxu0
        %v1774 = vadd.f32 %v1611, %v1769
        %1775 = vrot.lane.b32.xlu0 %v790, 32
        %v1776 = vpop.permute.xlu0 %1775
        %1777 = vrot.lane.b32.xlu0 %v791, 32
        %v1778 = vpop.permute.xlu0 %1777
        %v1780 = vsel %vm793, %v1776, 0
        %v1783 = vsel %vm793, %v1778, 0
        %1785 = vmatprep.subr.bf16.mxu0 0
        %1786 = vmatpush1.bf16.xpose.msra.mxu0 %v1783
        %1787 = vmatprep.subr.bf16.mxu0 0
        %1788 = vmatpush1.bf16.xpose.msra.mxu0 0
        %1789 = vmatprep.subr.bf16.mxu0 0
        %1790 = vmatpush1.bf16.xpose.msra.mxu0 0
        %1791 = vmatprep.subr.bf16.mxu0 0
        %1792 = vmatpush1.bf16.xpose.msra.mxu0 0
        %1793 = vmatprep.subr.bf16.mxu0 0
        %1794 = vmatpush1.bf16.xpose.msra.mxu0 0
        %1795 = vmatprep.subr.bf16.mxu0 0
        %1796 = vmatpush1.bf16.xpose.msra.mxu0 0
        %1797 = vmatprep.subr.bf16.mxu0 0
        %1798 = vmatpush1.bf16.xpose.msra.mxu0 0
        %1799 = vmatprep.subr.bf16.mxu0 0
        %1800 = vmatpush1.bf16.xpose.msra.mxu0 0
        %1801 = vmatprep.subr.bf16.mxu0 0
        %1802 = vmatpush1.bf16.xpose.msra.mxu0 0
        %1803 = vmatprep.subr.bf16.mxu0 0
        %1804 = vmatpush1.bf16.xpose.msra.mxu0 0
        %1805 = vmatprep.subr.bf16.mxu0 0
        %1806 = vmatpush1.bf16.xpose.msra.mxu0 0
        %1807 = vmatprep.subr.bf16.mxu0 0
        %1808 = vmatpush1.bf16.xpose.msra.mxu0 0
        %1809 = vmatprep.subr.bf16.mxu0 0
        %1810 = vmatpush1.bf16.xpose.msra.mxu0 0
        %1811 = vmatprep.subr.bf16.mxu0 0
        %1812 = vmatpush1.bf16.xpose.msra.mxu0 0
        %1813 = vmatprep.subr.bf16.mxu0 0
        %1814 = vmatpush1.bf16.xpose.msra.mxu0 0
        %1815 = vmatprep.subr.bf16.mxu0 0
        %1816 = vmatpush1.bf16.xpose.msra.mxu0 0
        %1817 = vmatprep.mubr.bf16.mxu0 0
        %1818 = vmatmul.mubr.bf16.gmra.mrb[0].mxu0 %v1780
        %v1819 = vpop.f32.mrb[0].mxu0
        %v1820 = vadd.f32 0.0, %v1819
        %v1821 = vpop.f32.mrb[0].mxu0
        %v1822 = vpop.f32.mrb[0].mxu0
        %v1823 = vpop.f32.mrb[0].mxu0
        %1824 = vdwg.mxu0
        %v1825 = vmul.f32 %v1820, 0.25
        %v1826 = vadd.f32 %v1825, %v845
        %v1827 = vsel %vm848, %v1826, -inf
        %1828 = vmax.xlane.f32.xlu0 %v1827
        %v1829 = vpop.xlane.xlu0 %1828
        %v1830 = vsub.f32 %v1826, %v1829
        %v1831 = vmul.f32 %v1830, 1.442695
        %v1832 = vpow.pop %v1831
        %v1833 = vsel %vm848, %v1832, 0.0
        %1834 = vadd.xlane.f32.xlu0 %v1833
        %v1835 = vpop.xlane.xlu0 %1834
        %v1836 = vrcp.pop %v1835
        %v1837 = vmul.f32 %v1832, %v1836
        %v1838 = vpack.c.bf16 %v1837, %v1837
        %1839 = vrot.lane.b32.xlu0 %v792, 32
        %v1840 = vpop.permute.xlu0 %1839
        %v1842 = vsel %vm848, %v1838, 0
        %v1845 = vsel %vm864, %v1840, 0
        %1847 = vmatprep.subr.bf16.mxu0 0
        %1848 = vmatpush1.bf16.msra.mxu0 %v1845
        %1849 = vmatprep.subr.bf16.mxu0 0
        %1850 = vmatpush1.bf16.msra.mxu0 0
        %1851 = vmatprep.subr.bf16.mxu0 0
        %1852 = vmatpush1.bf16.msra.mxu0 0
        %1853 = vmatprep.subr.bf16.mxu0 0
        %1854 = vmatpush1.bf16.msra.mxu0 0
        %1855 = vmatprep.subr.bf16.mxu0 0
        %1856 = vmatpush1.bf16.msra.mxu0 0
        %1857 = vmatprep.subr.bf16.mxu0 0
        %1858 = vmatpush1.bf16.msra.mxu0 0
        %1859 = vmatprep.subr.bf16.mxu0 0
        %1860 = vmatpush1.bf16.msra.mxu0 0
        %1861 = vmatprep.subr.bf16.mxu0 0
        %1862 = vmatpush1.bf16.msra.mxu0 0
        %1863 = vmatprep.subr.bf16.mxu0 0
        %1864 = vmatpush1.bf16.msra.mxu0 0
        %1865 = vmatprep.subr.bf16.mxu0 0
        %1866 = vmatpush1.bf16.msra.mxu0 0
        %1867 = vmatprep.subr.bf16.mxu0 0
        %1868 = vmatpush1.bf16.msra.mxu0 0
        %1869 = vmatprep.subr.bf16.mxu0 0
        %1870 = vmatpush1.bf16.msra.mxu0 0
        %1871 = vmatprep.subr.bf16.mxu0 0
        %1872 = vmatpush1.bf16.msra.mxu0 0
        %1873 = vmatprep.subr.bf16.mxu0 0
        %1874 = vmatpush1.bf16.msra.mxu0 0
        %1875 = vmatprep.subr.bf16.mxu0 0
        %1876 = vmatpush1.bf16.msra.mxu0 0
        %1877 = vmatprep.subr.bf16.mxu0 0
        %1878 = vmatpush1.bf16.msra.mxu0 0
        %1879 = vmatprep.mubr.bf16.mxu0 0
        %1880 = vmatmul.mubr.bf16.gmra.mrb[0].mxu0 %v1842
        %v1881 = vpop.f32.mrb[0].mxu0
        %v1882 = vadd.f32 0.0, %v1881
        %v1883 = vpop.f32.mrb[0].mxu0
        %v1884 = vpop.f32.mrb[0].mxu0
        %v1885 = vpop.f32.mrb[0].mxu0
        %1886 = vdwg.mxu0
        %v1887 = vpack.c.bf16 %v1882, %v1882
        %v1890 = vunpack.c.l.b16 %v607
        %v1891 = vunpack.c.l.b16 %v608
        %v1892 = vpack.c.b16 %v1891, %v1890
        %v1895 = vsel %vm793, %v1887, 0
        %1897 = vmatprep.subr.bf16.mxu0 0
        %1898 = vmatpush1.bf16.msra.mxu0 %v1892
        %1899 = vmatprep.subr.bf16.mxu0 0
        %1900 = vmatpush1.bf16.msra.mxu0 0
        %1901 = vmatprep.subr.bf16.mxu0 0
        %1902 = vmatpush1.bf16.msra.mxu0 0
        %1903 = vmatprep.subr.bf16.mxu0 0
        %1904 = vmatpush1.bf16.msra.mxu0 0
        %1905 = vmatprep.subr.bf16.mxu0 0
        %1906 = vmatpush1.bf16.msra.mxu0 0
        %1907 = vmatprep.subr.bf16.mxu0 0
        %1908 = vmatpush1.bf16.msra.mxu0 0
        %1909 = vmatprep.subr.bf16.mxu0 0
        %1910 = vmatpush1.bf16.msra.mxu0 0
        %1911 = vmatprep.subr.bf16.mxu0 0
        %1912 = vmatpush1.bf16.msra.mxu0 0
        %1913 = vmatprep.subr.bf16.mxu0 0
        %1914 = vmatpush1.bf16.msra.mxu0 0
        %1915 = vmatprep.subr.bf16.mxu0 0
        %1916 = vmatpush1.bf16.msra.mxu0 0
        %1917 = vmatprep.subr.bf16.mxu0 0
        %1918 = vmatpush1.bf16.msra.mxu0 0
        %1919 = vmatprep.subr.bf16.mxu0 0
        %1920 = vmatpush1.bf16.msra.mxu0 0
        %1921 = vmatprep.subr.bf16.mxu0 0
        %1922 = vmatpush1.bf16.msra.mxu0 0
        %1923 = vmatprep.subr.bf16.mxu0 0
        %1924 = vmatpush1.bf16.msra.mxu0 0
        %1925 = vmatprep.subr.bf16.mxu0 0
        %1926 = vmatpush1.bf16.msra.mxu0 0
        %1927 = vmatprep.subr.bf16.mxu0 0
        %1928 = vmatpush1.bf16.msra.mxu0 0
        %1929 = vmatprep.mubr.bf16.mxu0 0
        %1930 = vmatmul.mubr.bf16.gmra.mrb[0].mxu0 %v1895
        %v1931 = vpop.f32.mrb[0].mxu0
        %v1932 = vadd.f32 0.0, %v1931
        %v1933 = vpop.f32.mrb[0].mxu0
        %v1934 = vpop.f32.mrb[0].mxu0
        %v1935 = vpop.f32.mrb[0].mxu0
        %1936 = vdwg.mxu0
        %v1937 = vadd.f32 %v1774, %v1932
        %1938 = vrot.lane.b32.xlu0 %v790, 16
        %v1939 = vpop.permute.xlu0 %1938
        %1940 = vrot.lane.b32.xlu0 %v791, 16
        %v1941 = vpop.permute.xlu0 %1940
        %v1943 = vsel %vm793, %v1939, 0
        %v1946 = vsel %vm793, %v1941, 0
        %1948 = vmatprep.subr.bf16.mxu0 0
        %1949 = vmatpush1.bf16.xpose.msra.mxu0 %v1946
        %1950 = vmatprep.subr.bf16.mxu0 0
        %1951 = vmatpush1.bf16.xpose.msra.mxu0 0
        %1952 = vmatprep.subr.bf16.mxu0 0
        %1953 = vmatpush1.bf16.xpose.msra.mxu0 0
        %1954 = vmatprep.subr.bf16.mxu0 0
        %1955 = vmatpush1.bf16.xpose.msra.mxu0 0
        %1956 = vmatprep.subr.bf16.mxu0 0
        %1957 = vmatpush1.bf16.xpose.msra.mxu0 0
        %1958 = vmatprep.subr.bf16.mxu0 0
        %1959 = vmatpush1.bf16.xpose.msra.mxu0 0
        %1960 = vmatprep.subr.bf16.mxu0 0
        %1961 = vmatpush1.bf16.xpose.msra.mxu0 0
        %1962 = vmatprep.subr.bf16.mxu0 0
        %1963 = vmatpush1.bf16.xpose.msra.mxu0 0
        %1964 = vmatprep.subr.bf16.mxu0 0
        %1965 = vmatpush1.bf16.xpose.msra.mxu0 0
        %1966 = vmatprep.subr.bf16.mxu0 0
        %1967 = vmatpush1.bf16.xpose.msra.mxu0 0
        %1968 = vmatprep.subr.bf16.mxu0 0
        %1969 = vmatpush1.bf16.xpose.msra.mxu0 0
        %1970 = vmatprep.subr.bf16.mxu0 0
        %1971 = vmatpush1.bf16.xpose.msra.mxu0 0
        %1972 = vmatprep.subr.bf16.mxu0 0
        %1973 = vmatpush1.bf16.xpose.msra.mxu0 0
        %1974 = vmatprep.subr.bf16.mxu0 0
        %1975 = vmatpush1.bf16.xpose.msra.mxu0 0
        %1976 = vmatprep.subr.bf16.mxu0 0
        %1977 = vmatpush1.bf16.xpose.msra.mxu0 0
        %1978 = vmatprep.subr.bf16.mxu0 0
        %1979 = vmatpush1.bf16.xpose.msra.mxu0 0
        %1980 = vmatprep.mubr.bf16.mxu0 0
        %1981 = vmatmul.mubr.bf16.gmra.mrb[0].mxu0 %v1943
        %v1982 = vpop.f32.mrb[0].mxu0
        %v1983 = vadd.f32 0.0, %v1982
        %v1984 = vpop.f32.mrb[0].mxu0
        %v1985 = vpop.f32.mrb[0].mxu0
        %v1986 = vpop.f32.mrb[0].mxu0
        %1987 = vdwg.mxu0
        %v1988 = vmul.f32 %v1983, 0.25
        %v1989 = vadd.f32 %v1988, %v845
        %v1990 = vsel %vm848, %v1989, -inf
        %1991 = vmax.xlane.f32.xlu0 %v1990
        %v1992 = vpop.xlane.xlu0 %1991
        %v1993 = vsub.f32 %v1989, %v1992
        %v1994 = vmul.f32 %v1993, 1.442695
        %v1995 = vpow.pop %v1994
        %v1996 = vsel %vm848, %v1995, 0.0
        %1997 = vadd.xlane.f32.xlu0 %v1996
        %v1998 = vpop.xlane.xlu0 %1997
        %v1999 = vrcp.pop %v1998
        %v2000 = vmul.f32 %v1995, %v1999
        %v2001 = vpack.c.bf16 %v2000, %v2000
        %2002 = vrot.lane.b32.xlu0 %v792, 16
        %v2003 = vpop.permute.xlu0 %2002
        %v2005 = vsel %vm848, %v2001, 0
        %v2008 = vsel %vm864, %v2003, 0
        %2010 = vmatprep.subr.bf16.mxu0 0
        %2011 = vmatpush1.bf16.msra.mxu0 %v2008
        %2012 = vmatprep.subr.bf16.mxu0 0
        %2013 = vmatpush1.bf16.msra.mxu0 0
        %2014 = vmatprep.subr.bf16.mxu0 0
        %2015 = vmatpush1.bf16.msra.mxu0 0
        %2016 = vmatprep.subr.bf16.mxu0 0
        %2017 = vmatpush1.bf16.msra.mxu0 0
        %2018 = vmatprep.subr.bf16.mxu0 0
        %2019 = vmatpush1.bf16.msra.mxu0 0
        %2020 = vmatprep.subr.bf16.mxu0 0
        %2021 = vmatpush1.bf16.msra.mxu0 0
        %2022 = vmatprep.subr.bf16.mxu0 0
        %2023 = vmatpush1.bf16.msra.mxu0 0
        %2024 = vmatprep.subr.bf16.mxu0 0
        %2025 = vmatpush1.bf16.msra.mxu0 0
        %2026 = vmatprep.subr.bf16.mxu0 0
        %2027 = vmatpush1.bf16.msra.mxu0 0
        %2028 = vmatprep.subr.bf16.mxu0 0
        %2029 = vmatpush1.bf16.msra.mxu0 0
        %2030 = vmatprep.subr.bf16.mxu0 0
        %2031 = vmatpush1.bf16.msra.mxu0 0
        %2032 = vmatprep.subr.bf16.mxu0 0
        %2033 = vmatpush1.bf16.msra.mxu0 0
        %2034 = vmatprep.subr.bf16.mxu0 0
        %2035 = vmatpush1.bf16.msra.mxu0 0
        %2036 = vmatprep.subr.bf16.mxu0 0
        %2037 = vmatpush1.bf16.msra.mxu0 0
        %2038 = vmatprep.subr.bf16.mxu0 0
        %2039 = vmatpush1.bf16.msra.mxu0 0
        %2040 = vmatprep.subr.bf16.mxu0 0
        %2041 = vmatpush1.bf16.msra.mxu0 0
        %2042 = vmatprep.mubr.bf16.mxu0 0
        %2043 = vmatmul.mubr.bf16.gmra.mrb[0].mxu0 %v2005
        %v2044 = vpop.f32.mrb[0].mxu0
        %v2045 = vadd.f32 0.0, %v2044
        %v2046 = vpop.f32.mrb[0].mxu0
        %v2047 = vpop.f32.mrb[0].mxu0
        %v2048 = vpop.f32.mrb[0].mxu0
        %2049 = vdwg.mxu0
        %v2050 = vpack.c.bf16 %v2045, %v2045
        %v2053 = vunpack.c.l.b16 %v609
        %v2054 = vunpack.c.l.b16 %v610
        %v2055 = vpack.c.b16 %v2054, %v2053
        %v2058 = vsel %vm793, %v2050, 0
        %2060 = vmatprep.subr.bf16.mxu0 0
        %2061 = vmatpush1.bf16.msra.mxu0 %v2055
        %2062 = vmatprep.subr.bf16.mxu0 0
        %2063 = vmatpush1.bf16.msra.mxu0 0
        %2064 = vmatprep.subr.bf16.mxu0 0
        %2065 = vmatpush1.bf16.msra.mxu0 0
        %2066 = vmatprep.subr.bf16.mxu0 0
        %2067 = vmatpush1.bf16.msra.mxu0 0
        %2068 = vmatprep.subr.bf16.mxu0 0
        %2069 = vmatpush1.bf16.msra.mxu0 0
        %2070 = vmatprep.subr.bf16.mxu0 0
        %2071 = vmatpush1.bf16.msra.mxu0 0
        %2072 = vmatprep.subr.bf16.mxu0 0
        %2073 = vmatpush1.bf16.msra.mxu0 0
        %2074 = vmatprep.subr.bf16.mxu0 0
        %2075 = vmatpush1.bf16.msra.mxu0 0
        %2076 = vmatprep.subr.bf16.mxu0 0
        %2077 = vmatpush1.bf16.msra.mxu0 0
        %2078 = vmatprep.subr.bf16.mxu0 0
        %2079 = vmatpush1.bf16.msra.mxu0 0
        %2080 = vmatprep.subr.bf16.mxu0 0
        %2081 = vmatpush1.bf16.msra.mxu0 0
        %2082 = vmatprep.subr.bf16.mxu0 0
        %2083 = vmatpush1.bf16.msra.mxu0 0
        %2084 = vmatprep.subr.bf16.mxu0 0
        %2085 = vmatpush1.bf16.msra.mxu0 0
        %2086 = vmatprep.subr.bf16.mxu0 0
        %2087 = vmatpush1.bf16.msra.mxu0 0
        %2088 = vmatprep.subr.bf16.mxu0 0
        %2089 = vmatpush1.bf16.msra.mxu0 0
        %2090 = vmatprep.subr.bf16.mxu0 0
        %2091 = vmatpush1.bf16.msra.mxu0 0
        %2092 = vmatprep.mubr.bf16.mxu0 0
        %2093 = vmatmul.mubr.bf16.gmra.mrb[0].mxu0 %v2058
        %v2094 = vpop.f32.mrb[0].mxu0
        %v2095 = vadd.f32 0.0, %v2094
        %v2096 = vpop.f32.mrb[0].mxu0
        %v2097 = vpop.f32.mrb[0].mxu0
        %v2098 = vpop.f32.mrb[0].mxu0
        %2099 = vdwg.mxu0
        %v2100 = vadd.f32 %v1937, %v2095
        %v2102 = vlaneseq
        %v2103 = vshrl.u32 %v2102, 7
        %v2104 = vsub.s32 0, %v2103
        %v2105 = vrot.slane %v611, %v2104
        %v2107 = vadd.f32 %v2100, %v2105
        %v2108 = vadd.f32 %v2107, %v577
        %v2109 = vld [vmem:[%s7] sm:$0x1]
        %v2110 = vld [vmem:[%s8] sm:$0x1]
        %v2111 = vsel %vm705, %v2108, 0.0
        %2112 = vadd.xlane.f32.xlu0 %v2111
        %v2113 = vpop.xlane.xlu0 %2112
        %v2114 = vrcp.pop 64.0
        %v2115 = vmul.f32 %v2113, %v2114
        %v2116 = vsub.f32 %v2108, %v2115
        %v2117 = vmul.f32 %v2116, %v2116
        %v2118 = vsel %vm705, %v2117, 0.0
        %2119 = vadd.xlane.f32.xlu0 %v2118
        %v2120 = vpop.xlane.xlu0 %2119
        %v2121 = vmul.f32 %v2120, %v2114
        %v2122 = vadd.f32 %v2121, 1e-05
        %v2123 = vrsqrt.pop %v2122
        %v2124 = vmul.f32 %v2116, %v2123
        %v2126 = vlaneseq
        %v2127 = vshrl.u32 %v2126, 7
        %v2128 = vsub.s32 0, %v2127
        %v2129 = vrot.slane %v2109, %v2128
        %v2131 = vmul.f32 %v2124, %v2129
        %v2133 = vlaneseq
        %v2134 = vshrl.u32 %v2133, 7
        %v2135 = vsub.s32 0, %v2134
        %v2136 = vrot.slane %v2110, %v2135
        %v2138 = vadd.f32 %v2131, %v2136
        %2140 = vset.pattern.permute.xlu0 0
        %2141 = vperm.xlu0 %2140, %v575
        %v2142 = vpop.permute.xlu0 %2141
        %v2144 = vmul.f32 %v2138, %v2142
        %v2145 = vpack.c.bf16 %v2144, %v2144
        %v2147 = vlaneseq
        %v2148 = vshrl.u32 %v2147, 7
        %v2149 = vsub.s32 0, %v2148
        %v2150 = vrot.slane %v620, %v2149
        %v2160 = vunpack.c.l.b16 %v612
        %v2161 = vunpack.c.l.b16 %v613
        %v2162 = vunpack.c.l.b16 %v614
        %v2163 = vunpack.c.l.b16 %v615
        %v2164 = vunpack.c.l.b16 %v616
        %v2165 = vunpack.c.l.b16 %v617
        %v2166 = vunpack.c.l.b16 %v618
        %v2167 = vunpack.c.l.b16 %v619
        %v2168 = vpack.c.b16 %v2161, %v2160
        %v2169 = vpack.c.b16 %v2163, %v2162
        %v2170 = vpack.c.b16 %v2165, %v2164
        %v2171 = vpack.c.b16 %v2167, %v2166
        %v2177 = vsel %vm705, %v2145, 0
        %2179 = vmatprep.subr.bf16.mxu0 0
        %2180 = vmatpush1.bf16.msra.mxu0 %v2168
        %2181 = vmatprep.subr.bf16.mxu0 0
        %2182 = vmatpush1.bf16.msra.mxu0 %v2169
        %2183 = vmatprep.subr.bf16.mxu0 0
        %2184 = vmatpush1.bf16.msra.mxu0 %v2170
        %2185 = vmatprep.subr.bf16.mxu0 0
        %2186 = vmatpush1.bf16.msra.mxu0 %v2171
        %2187 = vmatprep.subr.bf16.mxu0 0
        %2188 = vmatpush1.bf16.msra.mxu0 0
        %2189 = vmatprep.subr.bf16.mxu0 0
        %2190 = vmatpush1.bf16.msra.mxu0 0
        %2191 = vmatprep.subr.bf16.mxu0 0
        %2192 = vmatpush1.bf16.msra.mxu0 0
        %2193 = vmatprep.subr.bf16.mxu0 0
        %2194 = vmatpush1.bf16.msra.mxu0 0
        %2195 = vmatprep.subr.bf16.mxu0 0
        %2196 = vmatpush1.bf16.msra.mxu0 0
        %2197 = vmatprep.subr.bf16.mxu0 0
        %2198 = vmatpush1.bf16.msra.mxu0 0
        %2199 = vmatprep.subr.bf16.mxu0 0
        %2200 = vmatpush1.bf16.msra.mxu0 0
        %2201 = vmatprep.subr.bf16.mxu0 0
        %2202 = vmatpush1.bf16.msra.mxu0 0
        %2203 = vmatprep.subr.bf16.mxu0 0
        %2204 = vmatpush1.bf16.msra.mxu0 0
        %2205 = vmatprep.subr.bf16.mxu0 0
        %2206 = vmatpush1.bf16.msra.mxu0 0
        %2207 = vmatprep.subr.bf16.mxu0 0
        %2208 = vmatpush1.bf16.msra.mxu0 0
        %2209 = vmatprep.subr.bf16.mxu0 0
        %2210 = vmatpush1.bf16.msra.mxu0 0
        %2211 = vmatprep.mubr.bf16.mxu0 0
        %2212 = vmatmul.mubr.bf16.gmra.mrb[0].mxu0 %v2177
        %v2213 = vpop.f32.mrb[0].mxu0
        %v2214 = vadd.f32 %v2150, %v2213
        %v2215 = vpop.f32.mrb[0].mxu0
        %v2216 = vpop.f32.mrb[0].mxu0
        %v2217 = vpop.f32.mrb[0].mxu0
        %2218 = vdwg.mxu0
        %v2219 = vmax.f32 %v2214, 0.0
        %v2220 = vpack.c.bf16 %v2219, %v2219
        %v2222 = vlaneseq
        %v2223 = vshrl.u32 %v2222, 7
        %v2224 = vsub.s32 0, %v2223
        %v2225 = vrot.slane %v623, %v2224
        %v2229 = vunpack.c.l.b16 %v621
        %v2230 = vunpack.c.l.b16 %v622
        %v2231 = vpack.c.b16 %v2230, %v2229
        %v2234 = vsel %vm793, %v2220, 0
        %2236 = vmatprep.subr.bf16.mxu0 0
        %2237 = vmatpush1.bf16.msra.mxu0 %v2231
        %2238 = vmatprep.subr.bf16.mxu0 0
        %2239 = vmatpush1.bf16.msra.mxu0 0
        %2240 = vmatprep.subr.bf16.mxu0 0
        %2241 = vmatpush1.bf16.msra.mxu0 0
        %2242 = vmatprep.subr.bf16.mxu0 0
        %2243 = vmatpush1.bf16.msra.mxu0 0
        %2244 = vmatprep.subr.bf16.mxu0 0
        %2245 = vmatpush1.bf16.msra.mxu0 0
        %2246 = vmatprep.subr.bf16.mxu0 0
        %2247 = vmatpush1.bf16.msra.mxu0 0
        %2248 = vmatprep.subr.bf16.mxu0 0
        %2249 = vmatpush1.bf16.msra.mxu0 0
        %2250 = vmatprep.subr.bf16.mxu0 0
        %2251 = vmatpush1.bf16.msra.mxu0 0
        %2252 = vmatprep.subr.bf16.mxu0 0
        %2253 = vmatpush1.bf16.msra.mxu0 0
        %2254 = vmatprep.subr.bf16.mxu0 0
        %2255 = vmatpush1.bf16.msra.mxu0 0
        %2256 = vmatprep.subr.bf16.mxu0 0
        %2257 = vmatpush1.bf16.msra.mxu0 0
        %2258 = vmatprep.subr.bf16.mxu0 0
        %2259 = vmatpush1.bf16.msra.mxu0 0
        %2260 = vmatprep.subr.bf16.mxu0 0
        %2261 = vmatpush1.bf16.msra.mxu0 0
        %2262 = vmatprep.subr.bf16.mxu0 0
        %2263 = vmatpush1.bf16.msra.mxu0 0
        %2264 = vmatprep.subr.bf16.mxu0 0
        %2265 = vmatpush1.bf16.msra.mxu0 0
        %2266 = vmatprep.subr.bf16.mxu0 0
        %2267 = vmatpush1.bf16.msra.mxu0 0
        %2268 = vmatprep.mubr.bf16.mxu0 0
        %2269 = vmatmul.mubr.bf16.gmra.mrb[0].mxu0 %v2234
        %v2270 = vpop.f32.mrb[0].mxu0
        %v2271 = vadd.f32 %v2225, %v2270
        %v2272 = vpop.f32.mrb[0].mxu0
        %v2273 = vpop.f32.mrb[0].mxu0
        %v2274 = vpop.f32.mrb[0].mxu0
        %2275 = vdwg.mxu0
        %v2276 = vadd.f32 %v2271, %v2144
        %v2277 = vld [vmem:[%s13] sm:$0x1]
        %v2278 = vld [vmem:[%s14] sm:$0x1]
        %v2279 = vsel %vm705, %v2276, 0.0
        %2280 = vadd.xlane.f32.xlu0 %v2279
        %v2281 = vpop.xlane.xlu0 %2280
        %v2282 = vmul.f32 %v2281, %v2114
        %v2283 = vsub.f32 %v2276, %v2282
        %v2284 = vmul.f32 %v2283, %v2283
        %v2285 = vsel %vm705, %v2284, 0.0
        %2286 = vadd.xlane.f32.xlu0 %v2285
        %v2287 = vpop.xlane.xlu0 %2286
        %v2288 = vmul.f32 %v2287, %v2114
        %v2289 = vadd.f32 %v2288, 1e-05
        %v2290 = vrsqrt.pop %v2289
        %v2291 = vmul.f32 %v2283, %v2290
        %v2293 = vlaneseq
        %v2294 = vshrl.u32 %v2293, 7
        %v2295 = vsub.s32 0, %v2294
        %v2296 = vrot.slane %v2277, %v2295
        %v2298 = vmul.f32 %v2291, %v2296
        %v2300 = vlaneseq
        %v2301 = vshrl.u32 %v2300, 7
        %v2302 = vsub.s32 0, %v2301
        %v2303 = vrot.slane %v2278, %v2302
        %v2305 = vadd.f32 %v2298, %v2303
        %v2306 = vmul.f32 %v2305, %v2142
        %s2307 = scalar_lea.vmem %s3, 96
        %v2308 = vld [vmem:[%s2307] sm:$0xff]
        %v2309 = vld [vmem:[%s2307 + $0x8] sm:$0xf]
        %v2310 = vld [vmem:[%s2307 + $0xc] sm:$0xff]
        %v2311 = vld [vmem:[%s2307 + $0x14] sm:$0xf]
        %v2312 = vld [vmem:[%s2307 + $0x18] sm:$0xff]
        %v2313 = vld [vmem:[%s2307 + $0x20] sm:$0xf]
        %v2314 = vld [vmem:[%s2307 + $0x24] sm:$0xff]
        %v2315 = vld [vmem:[%s2307 + $0x2c] sm:$0xf]
        %v2316 = vld [vmem:[%s2307 + $0x30] sm:$0xff]
        %v2317 = vld [vmem:[%s2307 + $0x38] sm:$0xf]
        %v2318 = vld [vmem:[%s2307 + $0x3c] sm:$0xff]
        %v2319 = vld [vmem:[%s2307 + $0x44] sm:$0xf]
        %v2320 = vld [vmem:[%s2307 + $0x48] sm:$0xff]
        %v2321 = vld [vmem:[%s2307 + $0x50] sm:$0xf]
        %v2322 = vld [vmem:[%s2307 + $0x54] sm:$0xff]
        %v2323 = vld [vmem:[%s2307 + $0x5c] sm:$0xf]
        %s2324 = scalar_lea.vmem %s4, 3
        %v2325 = vld [vmem:[%s2324] sm:$0x7]
        %s2326 = scalar_lea.vmem %s5, 64
        %v2327 = vld [vmem:[%s2326] sm:$0xf]
        %v2328 = vld [vmem:[%s2326 + $0x4] sm:$0xf]
        %v2329 = vld [vmem:[%s2326 + $0x8] sm:$0xf]
        %v2330 = vld [vmem:[%s2326 + $0xc] sm:$0xf]
        %v2331 = vld [vmem:[%s2326 + $0x10] sm:$0xf]
        %v2332 = vld [vmem:[%s2326 + $0x14] sm:$0xf]
        %v2333 = vld [vmem:[%s2326 + $0x18] sm:$0xf]
        %v2334 = vld [vmem:[%s2326 + $0x1c] sm:$0xf]
        %v2335 = vld [vmem:[%s2326 + $0x20] sm:$0xf]
        %v2336 = vld [vmem:[%s2326 + $0x24] sm:$0xf]
        %v2337 = vld [vmem:[%s2326 + $0x28] sm:$0xf]
        %v2338 = vld [vmem:[%s2326 + $0x2c] sm:$0xf]
        %v2339 = vld [vmem:[%s2326 + $0x30] sm:$0xf]
        %v2340 = vld [vmem:[%s2326 + $0x34] sm:$0xf]
        %v2341 = vld [vmem:[%s2326 + $0x38] sm:$0xf]
        %v2342 = vld [vmem:[%s2326 + $0x3c] sm:$0xf]
        %s2343 = scalar_lea.vmem %s6, 1
        %v2344 = vld [vmem:[%s2343] sm:$0x1]
        %s2345 = scalar_lea.vmem %s9, 32
        %v2346 = vld [vmem:[%s2345] sm:$0xf]
        %v2347 = vld [vmem:[%s2345 + $0x4] sm:$0xf]
        %v2348 = vld [vmem:[%s2345 + $0x8] sm:$0xf]
        %v2349 = vld [vmem:[%s2345 + $0xc] sm:$0xf]
        %v2350 = vld [vmem:[%s2345 + $0x10] sm:$0xf]
        %v2351 = vld [vmem:[%s2345 + $0x14] sm:$0xf]
        %v2352 = vld [vmem:[%s2345 + $0x18] sm:$0xf]
        %v2353 = vld [vmem:[%s2345 + $0x1c] sm:$0xf]
        %s2354 = scalar_lea.vmem %s10, 1
        %v2355 = vld [vmem:[%s2354] sm:$0x1]
        %s2356 = scalar_lea.vmem %s11, 8
        %v2357 = vld [vmem:[%s2356] sm:$0xf]
        %v2358 = vld [vmem:[%s2356 + $0x4] sm:$0xf]
        %s2359 = scalar_lea.vmem %s12, 1
        %v2360 = vld [vmem:[%s2359] sm:$0x1]
        %v2361 = vpack.c.bf16 %v2306, %v2306
        %v2363 = vlaneseq
        %v2364 = vshrl.u32 %v2363, 7
        %v2365 = vsub.s32 0, %v2364
        %v2366 = vrot.slane %v2325, %v2365
        %v2367 = vlaneseq
        %v2368 = vshrl.u32 %v2367, 7
        %v2369 = vsub.s32 1, %v2368
        %v2370 = vrot.slane %v2325, %v2369
        %v2371 = vlaneseq
        %v2372 = vshrl.u32 %v2371, 7
        %v2373 = vsub.s32 2, %v2372
        %v2374 = vrot.slane %v2325, %v2373
        %v2394 = vunpack.c.l.b16 %v2308
        %v2395 = vunpack.c.h.b16 %v2308
        %v2396 = vunpack.c.l.b16 %v2309
        %v2397 = vunpack.c.l.b16 %v2310
        %v2398 = vunpack.c.h.b16 %v2310
        %v2399 = vunpack.c.l.b16 %v2311
        %v2400 = vunpack.c.l.b16 %v2312
        %v2401 = vunpack.c.h.b16 %v2312
        %v2402 = vunpack.c.l.b16 %v2313
        %v2403 = vunpack.c.l.b16 %v2314
        %v2404 = vunpack.c.h.b16 %v2314
        %v2405 = vunpack.c.l.b16 %v2315
        %v2406 = vunpack.c.l.b16 %v2316
        %v2407 = vunpack.c.h.b16 %v2316
        %v2408 = vunpack.c.l.b16 %v2317
        %v2409 = vunpack.c.l.b16 %v2318
        %v2410 = vunpack.c.h.b16 %v2318
        %v2411 = vunpack.c.l.b16 %v2319
        %v2412 = vunpack.c.l.b16 %v2320
        %v2413 = vunpack.c.h.b16 %v2320
        %v2414 = vunpack.c.l.b16 %v2321
        %v2415 = vunpack.c.l.b16 %v2322
        %v2416 = vunpack.c.h.b16 %v2322
        %v2417 = vunpack.c.l.b16 %v2323
        %v2418 = vpack.c.b16 %v2397, %v2394
        %v2419 = vpack.c.b16 %v2398, %v2395
        %v2420 = vpack.c.b16 %v2399, %v2396
        %v2421 = vpack.c.b16 %v2403, %v2400
        %v2422 = vpack.c.b16 %v2404, %v2401
        %v2423 = vpack.c.b16 %v2405, %v2402
        %v2424 = vpack.c.b16 %v2409, %v2406
        %v2425 = vpack.c.b16 %v2410, %v2407
        %v2426 = vpack.c.b16 %v2411, %v2408
        %v2427 = vpack.c.b16 %v2415, %v2412
        %v2428 = vpack.c.b16 %v2416, %v2413
        %v2429 = vpack.c.b16 %v2417, %v2414
        %v2443 = vsel %vm705, %v2361, 0
        %2445 = vmatprep.subr.bf16.mxu0 %v2419
        %2446 = vmatpush1.bf16.msra.mxu0 %v2418
        %2447 = vmatprep.subr.bf16.mxu0 %v2422
        %2448 = vmatpush1.bf16.msra.mxu0 %v2421
        %2449 = vmatprep.subr.bf16.mxu0 %v2425
        %2450 = vmatpush1.bf16.msra.mxu0 %v2424
        %2451 = vmatprep.subr.bf16.mxu0 %v2428
        %2452 = vmatpush1.bf16.msra.mxu0 %v2427
        %2453 = vmatprep.subr.bf16.mxu0 0
        %2454 = vmatpush1.bf16.msra.mxu0 0
        %2455 = vmatprep.subr.bf16.mxu0 0
        %2456 = vmatpush1.bf16.msra.mxu0 0
        %2457 = vmatprep.subr.bf16.mxu0 0
        %2458 = vmatpush1.bf16.msra.mxu0 0
        %2459 = vmatprep.subr.bf16.mxu0 0
        %2460 = vmatpush1.bf16.msra.mxu0 0
        %2461 = vmatprep.subr.bf16.mxu0 0
        %2462 = vmatpush1.bf16.msra.mxu0 0
        %2463 = vmatprep.subr.bf16.mxu0 0
        %2464 = vmatpush1.bf16.msra.mxu0 0
        %2465 = vmatprep.subr.bf16.mxu0 0
        %2466 = vmatpush1.bf16.msra.mxu0 0
        %2467 = vmatprep.subr.bf16.mxu0 0
        %2468 = vmatpush1.bf16.msra.mxu0 0
        %2469 = vmatprep.subr.bf16.mxu0 0
        %2470 = vmatpush1.bf16.msra.mxu0 0
        %2471 = vmatprep.subr.bf16.mxu0 0
        %2472 = vmatpush1.bf16.msra.mxu0 0
        %2473 = vmatprep.subr.bf16.mxu0 0
        %2474 = vmatpush1.bf16.msra.mxu0 0
        %2475 = vmatprep.subr.bf16.mxu0 0
        %2476 = vmatpush1.bf16.msra.mxu0 0
        %2477 = vmatprep.mubr.bf16.mxu0 0
        %2478 = vmatmul.mubr.bf16.gmra.mrb[0].mxu0 %v2443
        %v2479 = vpop.f32.mrb[0].mxu0
        %v2480 = vadd.f32 %v2366, %v2479
        %v2481 = vpop.f32.mrb[0].mxu0
        %v2482 = vadd.f32 %v2370, %v2481
        %v2483 = vpop.f32.mrb[0].mxu0
        %v2484 = vpop.f32.mrb[0].mxu0
        %2485 = vdwg.mxu0
        %2486 = vmatprep.subr.bf16.mxu0 0
        %2487 = vmatpush1.bf16.msra.mxu0 %v2420
        %2488 = vmatprep.subr.bf16.mxu0 0
        %2489 = vmatpush1.bf16.msra.mxu0 %v2423
        %2490 = vmatprep.subr.bf16.mxu0 0
        %2491 = vmatpush1.bf16.msra.mxu0 %v2426
        %2492 = vmatprep.subr.bf16.mxu0 0
        %2493 = vmatpush1.bf16.msra.mxu0 %v2429
        %2494 = vmatprep.subr.bf16.mxu0 0
        %2495 = vmatpush1.bf16.msra.mxu0 0
        %2496 = vmatprep.subr.bf16.mxu0 0
        %2497 = vmatpush1.bf16.msra.mxu0 0
        %2498 = vmatprep.subr.bf16.mxu0 0
        %2499 = vmatpush1.bf16.msra.mxu0 0
        %2500 = vmatprep.subr.bf16.mxu0 0
        %2501 = vmatpush1.bf16.msra.mxu0 0
        %2502 = vmatprep.subr.bf16.mxu0 0
        %2503 = vmatpush1.bf16.msra.mxu0 0
        %2504 = vmatprep.subr.bf16.mxu0 0
        %2505 = vmatpush1.bf16.msra.mxu0 0
        %2506 = vmatprep.subr.bf16.mxu0 0
        %2507 = vmatpush1.bf16.msra.mxu0 0
        %2508 = vmatprep.subr.bf16.mxu0 0
        %2509 = vmatpush1.bf16.msra.mxu0 0
        %2510 = vmatprep.subr.bf16.mxu0 0
        %2511 = vmatpush1.bf16.msra.mxu0 0
        %2512 = vmatprep.subr.bf16.mxu0 0
        %2513 = vmatpush1.bf16.msra.mxu0 0
        %2514 = vmatprep.subr.bf16.mxu0 0
        %2515 = vmatpush1.bf16.msra.mxu0 0
        %2516 = vmatprep.subr.bf16.mxu0 0
        %2517 = vmatpush1.bf16.msra.mxu0 0
        %2518 = vmatprep.mubr.bf16.mxu0 0
        %2519 = vmatmul.mubr.bf16.gmra.mrb[0].mxu0 %v2443
        %v2520 = vpop.f32.mrb[0].mxu0
        %v2521 = vadd.f32 %v2374, %v2520
        %v2522 = vpop.f32.mrb[0].mxu0
        %v2523 = vpop.f32.mrb[0].mxu0
        %v2524 = vpop.f32.mrb[0].mxu0
        %2525 = vdwg.mxu0
        %v2526 = vpack.c.bf16 %v2480, %v2480
        %v2527 = vpack.c.bf16 %v2482, %v2482
        %v2528 = vpack.c.bf16 %v2521, %v2521
        %v2530 = vsel %vm793, %v2526, 0
        %v2533 = vsel %vm793, %v2527, 0
        %2535 = vmatprep.subr.bf16.mxu0 0
        %2536 = vmatpush1.bf16.xpose.msra.mxu0 %v2533
        %2537 = vmatprep.subr.bf16.mxu0 0
        %2538 = vmatpush1.bf16.xpose.msra.mxu0 0
        %2539 = vmatprep.subr.bf16.mxu0 0
        %2540 = vmatpush1.bf16.xpose.msra.mxu0 0
        %2541 = vmatprep.subr.bf16.mxu0 0
        %2542 = vmatpush1.bf16.xpose.msra.mxu0 0
        %2543 = vmatprep.subr.bf16.mxu0 0
        %2544 = vmatpush1.bf16.xpose.msra.mxu0 0
        %2545 = vmatprep.subr.bf16.mxu0 0
        %2546 = vmatpush1.bf16.xpose.msra.mxu0 0
        %2547 = vmatprep.subr.bf16.mxu0 0
        %2548 = vmatpush1.bf16.xpose.msra.mxu0 0
        %2549 = vmatprep.subr.bf16.mxu0 0
        %2550 = vmatpush1.bf16.xpose.msra.mxu0 0
        %2551 = vmatprep.subr.bf16.mxu0 0
        %2552 = vmatpush1.bf16.xpose.msra.mxu0 0
        %2553 = vmatprep.subr.bf16.mxu0 0
        %2554 = vmatpush1.bf16.xpose.msra.mxu0 0
        %2555 = vmatprep.subr.bf16.mxu0 0
        %2556 = vmatpush1.bf16.xpose.msra.mxu0 0
        %2557 = vmatprep.subr.bf16.mxu0 0
        %2558 = vmatpush1.bf16.xpose.msra.mxu0 0
        %2559 = vmatprep.subr.bf16.mxu0 0
        %2560 = vmatpush1.bf16.xpose.msra.mxu0 0
        %2561 = vmatprep.subr.bf16.mxu0 0
        %2562 = vmatpush1.bf16.xpose.msra.mxu0 0
        %2563 = vmatprep.subr.bf16.mxu0 0
        %2564 = vmatpush1.bf16.xpose.msra.mxu0 0
        %2565 = vmatprep.subr.bf16.mxu0 0
        %2566 = vmatpush1.bf16.xpose.msra.mxu0 0
        %2567 = vmatprep.mubr.bf16.mxu0 0
        %2568 = vmatmul.mubr.bf16.gmra.mrb[0].mxu0 %v2530
        %v2569 = vpop.f32.mrb[0].mxu0
        %v2570 = vadd.f32 0.0, %v2569
        %v2571 = vpop.f32.mrb[0].mxu0
        %v2572 = vpop.f32.mrb[0].mxu0
        %v2573 = vpop.f32.mrb[0].mxu0
        %2574 = vdwg.mxu0
        %v2575 = vmul.f32 %v2570, 0.25
        %v2576 = vadd.f32 %v2575, %v845
        %v2577 = vsel %vm848, %v2576, -inf
        %2578 = vmax.xlane.f32.xlu0 %v2577
        %v2579 = vpop.xlane.xlu0 %2578
        %v2580 = vsub.f32 %v2576, %v2579
        %v2581 = vmul.f32 %v2580, 1.442695
        %v2582 = vpow.pop %v2581
        %v2583 = vsel %vm848, %v2582, 0.0
        %2584 = vadd.xlane.f32.xlu0 %v2583
        %v2585 = vpop.xlane.xlu0 %2584
        %v2586 = vrcp.pop %v2585
        %v2587 = vmul.f32 %v2582, %v2586
        %v2588 = vpack.c.bf16 %v2587, %v2587
        %v2590 = vsel %vm848, %v2588, 0
        %v2593 = vsel %vm864, %v2528, 0
        %2595 = vmatprep.subr.bf16.mxu0 0
        %2596 = vmatpush1.bf16.msra.mxu0 %v2593
        %2597 = vmatprep.subr.bf16.mxu0 0
        %2598 = vmatpush1.bf16.msra.mxu0 0
        %2599 = vmatprep.subr.bf16.mxu0 0
        %2600 = vmatpush1.bf16.msra.mxu0 0
        %2601 = vmatprep.subr.bf16.mxu0 0
        %2602 = vmatpush1.bf16.msra.mxu0 0
        %2603 = vmatprep.subr.bf16.mxu0 0
        %2604 = vmatpush1.bf16.msra.mxu0 0
        %2605 = vmatprep.subr.bf16.mxu0 0
        %2606 = vmatpush1.bf16.msra.mxu0 0
        %2607 = vmatprep.subr.bf16.mxu0 0
        %2608 = vmatpush1.bf16.msra.mxu0 0
        %2609 = vmatprep.subr.bf16.mxu0 0
        %2610 = vmatpush1.bf16.msra.mxu0 0
        %2611 = vmatprep.subr.bf16.mxu0 0
        %2612 = vmatpush1.bf16.msra.mxu0 0
        %2613 = vmatprep.subr.bf16.mxu0 0
        %2614 = vmatpush1.bf16.msra.mxu0 0
        %2615 = vmatprep.subr.bf16.mxu0 0
        %2616 = vmatpush1.bf16.msra.mxu0 0
        %2617 = vmatprep.subr.bf16.mxu0 0
        %2618 = vmatpush1.bf16.msra.mxu0 0
        %2619 = vmatprep.subr.bf16.mxu0 0
        %2620 = vmatpush1.bf16.msra.mxu0 0
        %2621 = vmatprep.subr.bf16.mxu0 0
        %2622 = vmatpush1.bf16.msra.mxu0 0
        %2623 = vmatprep.subr.bf16.mxu0 0
        %2624 = vmatpush1.bf16.msra.mxu0 0
        %2625 = vmatprep.subr.bf16.mxu0 0
        %2626 = vmatpush1.bf16.msra.mxu0 0
        %2627 = vmatprep.mubr.bf16.mxu0 0
        %2628 = vmatmul.mubr.bf16.gmra.mrb[0].mxu0 %v2590
        %v2629 = vpop.f32.mrb[0].mxu0
        %v2630 = vadd.f32 0.0, %v2629
        %v2631 = vpop.f32.mrb[0].mxu0
        %v2632 = vpop.f32.mrb[0].mxu0
        %v2633 = vpop.f32.mrb[0].mxu0
        %2634 = vdwg.mxu0
        %v2635 = vpack.c.bf16 %v2630, %v2630
        %2637 = vrot.lane.b32.xlu0 %v2526, 112
        %v2638 = vpop.permute.xlu0 %2637
        %2640 = vrot.lane.b32.xlu0 %v2527, 112
        %v2641 = vpop.permute.xlu0 %2640
        %v2643 = vsel %vm793, %v2638, 0
        %v2646 = vsel %vm793, %v2641, 0
        %2648 = vmatprep.subr.bf16.mxu0 0
        %2649 = vmatpush1.bf16.xpose.msra.mxu0 %v2646
        %2650 = vmatprep.subr.bf16.mxu0 0
        %2651 = vmatpush1.bf16.xpose.msra.mxu0 0
        %2652 = vmatprep.subr.bf16.mxu0 0
        %2653 = vmatpush1.bf16.xpose.msra.mxu0 0
        %2654 = vmatprep.subr.bf16.mxu0 0
        %2655 = vmatpush1.bf16.xpose.msra.mxu0 0
        %2656 = vmatprep.subr.bf16.mxu0 0
        %2657 = vmatpush1.bf16.xpose.msra.mxu0 0
        %2658 = vmatprep.subr.bf16.mxu0 0
        %2659 = vmatpush1.bf16.xpose.msra.mxu0 0
        %2660 = vmatprep.subr.bf16.mxu0 0
        %2661 = vmatpush1.bf16.xpose.msra.mxu0 0
        %2662 = vmatprep.subr.bf16.mxu0 0
        %2663 = vmatpush1.bf16.xpose.msra.mxu0 0
        %2664 = vmatprep.subr.bf16.mxu0 0
        %2665 = vmatpush1.bf16.xpose.msra.mxu0 0
        %2666 = vmatprep.subr.bf16.mxu0 0
        %2667 = vmatpush1.bf16.xpose.msra.mxu0 0
        %2668 = vmatprep.subr.bf16.mxu0 0
        %2669 = vmatpush1.bf16.xpose.msra.mxu0 0
        %2670 = vmatprep.subr.bf16.mxu0 0
        %2671 = vmatpush1.bf16.xpose.msra.mxu0 0
        %2672 = vmatprep.subr.bf16.mxu0 0
        %2673 = vmatpush1.bf16.xpose.msra.mxu0 0
        %2674 = vmatprep.subr.bf16.mxu0 0
        %2675 = vmatpush1.bf16.xpose.msra.mxu0 0
        %2676 = vmatprep.subr.bf16.mxu0 0
        %2677 = vmatpush1.bf16.xpose.msra.mxu0 0
        %2678 = vmatprep.subr.bf16.mxu0 0
        %2679 = vmatpush1.bf16.xpose.msra.mxu0 0
        %2680 = vmatprep.mubr.bf16.mxu0 0
        %2681 = vmatmul.mubr.bf16.gmra.mrb[0].mxu0 %v2643
        %v2682 = vpop.f32.mrb[0].mxu0
        %v2683 = vadd.f32 0.0, %v2682
        %v2684 = vpop.f32.mrb[0].mxu0
        %v2685 = vpop.f32.mrb[0].mxu0
        %v2686 = vpop.f32.mrb[0].mxu0
        %2687 = vdwg.mxu0
        %v2688 = vmul.f32 %v2683, 0.25
        %v2689 = vadd.f32 %v2688, %v845
        %v2690 = vsel %vm848, %v2689, -inf
        %2691 = vmax.xlane.f32.xlu0 %v2690
        %v2692 = vpop.xlane.xlu0 %2691
        %v2693 = vsub.f32 %v2689, %v2692
        %v2694 = vmul.f32 %v2693, 1.442695
        %v2695 = vpow.pop %v2694
        %v2696 = vsel %vm848, %v2695, 0.0
        %2697 = vadd.xlane.f32.xlu0 %v2696
        %v2698 = vpop.xlane.xlu0 %2697
        %v2699 = vrcp.pop %v2698
        %v2700 = vmul.f32 %v2695, %v2699
        %v2701 = vpack.c.bf16 %v2700, %v2700
        %2703 = vrot.lane.b32.xlu0 %v2528, 112
        %v2704 = vpop.permute.xlu0 %2703
        %v2706 = vsel %vm848, %v2701, 0
        %v2709 = vsel %vm864, %v2704, 0
        %2711 = vmatprep.subr.bf16.mxu0 0
        %2712 = vmatpush1.bf16.msra.mxu0 %v2709
        %2713 = vmatprep.subr.bf16.mxu0 0
        %2714 = vmatpush1.bf16.msra.mxu0 0
        %2715 = vmatprep.subr.bf16.mxu0 0
        %2716 = vmatpush1.bf16.msra.mxu0 0
        %2717 = vmatprep.subr.bf16.mxu0 0
        %2718 = vmatpush1.bf16.msra.mxu0 0
        %2719 = vmatprep.subr.bf16.mxu0 0
        %2720 = vmatpush1.bf16.msra.mxu0 0
        %2721 = vmatprep.subr.bf16.mxu0 0
        %2722 = vmatpush1.bf16.msra.mxu0 0
        %2723 = vmatprep.subr.bf16.mxu0 0
        %2724 = vmatpush1.bf16.msra.mxu0 0
        %2725 = vmatprep.subr.bf16.mxu0 0
        %2726 = vmatpush1.bf16.msra.mxu0 0
        %2727 = vmatprep.subr.bf16.mxu0 0
        %2728 = vmatpush1.bf16.msra.mxu0 0
        %2729 = vmatprep.subr.bf16.mxu0 0
        %2730 = vmatpush1.bf16.msra.mxu0 0
        %2731 = vmatprep.subr.bf16.mxu0 0
        %2732 = vmatpush1.bf16.msra.mxu0 0
        %2733 = vmatprep.subr.bf16.mxu0 0
        %2734 = vmatpush1.bf16.msra.mxu0 0
        %2735 = vmatprep.subr.bf16.mxu0 0
        %2736 = vmatpush1.bf16.msra.mxu0 0
        %2737 = vmatprep.subr.bf16.mxu0 0
        %2738 = vmatpush1.bf16.msra.mxu0 0
        %2739 = vmatprep.subr.bf16.mxu0 0
        %2740 = vmatpush1.bf16.msra.mxu0 0
        %2741 = vmatprep.subr.bf16.mxu0 0
        %2742 = vmatpush1.bf16.msra.mxu0 0
        %2743 = vmatprep.mubr.bf16.mxu0 0
        %2744 = vmatmul.mubr.bf16.gmra.mrb[0].mxu0 %v2706
        %v2745 = vpop.f32.mrb[0].mxu0
        %v2746 = vadd.f32 0.0, %v2745
        %v2747 = vpop.f32.mrb[0].mxu0
        %v2748 = vpop.f32.mrb[0].mxu0
        %v2749 = vpop.f32.mrb[0].mxu0
        %2750 = vdwg.mxu0
        %v2751 = vpack.c.bf16 %v2746, %v2746
        %v2754 = vunpack.c.l.b16 %v2329
        %v2755 = vunpack.c.l.b16 %v2330
        %v2756 = vpack.c.b16 %v2755, %v2754
        %v2759 = vsel %vm793, %v2751, 0
        %2761 = vmatprep.subr.bf16.mxu0 0
        %2762 = vmatpush1.bf16.msra.mxu0 %v2756
        %2763 = vmatprep.subr.bf16.mxu0 0
        %2764 = vmatpush1.bf16.msra.mxu0 0
        %2765 = vmatprep.subr.bf16.mxu0 0
        %2766 = vmatpush1.bf16.msra.mxu0 0
        %2767 = vmatprep.subr.bf16.mxu0 0
        %2768 = vmatpush1.bf16.msra.mxu0 0
        %2769 = vmatprep.subr.bf16.mxu0 0
        %2770 = vmatpush1.bf16.msra.mxu0 0
        %2771 = vmatprep.subr.bf16.mxu0 0
        %2772 = vmatpush1.bf16.msra.mxu0 0
        %2773 = vmatprep.subr.bf16.mxu0 0
        %2774 = vmatpush1.bf16.msra.mxu0 0
        %2775 = vmatprep.subr.bf16.mxu0 0
        %2776 = vmatpush1.bf16.msra.mxu0 0
        %2777 = vmatprep.subr.bf16.mxu0 0
        %2778 = vmatpush1.bf16.msra.mxu0 0
        %2779 = vmatprep.subr.bf16.mxu0 0
        %2780 = vmatpush1.bf16.msra.mxu0 0
        %2781 = vmatprep.subr.bf16.mxu0 0
        %2782 = vmatpush1.bf16.msra.mxu0 0
        %2783 = vmatprep.subr.bf16.mxu0 0
        %2784 = vmatpush1.bf16.msra.mxu0 0
        %2785 = vmatprep.subr.bf16.mxu0 0
        %2786 = vmatpush1.bf16.msra.mxu0 0
        %2787 = vmatprep.subr.bf16.mxu0 0
        %2788 = vmatpush1.bf16.msra.mxu0 0
        %2789 = vmatprep.subr.bf16.mxu0 0
        %2790 = vmatpush1.bf16.msra.mxu0 0
        %2791 = vmatprep.subr.bf16.mxu0 0
        %2792 = vmatpush1.bf16.msra.mxu0 0
        %2793 = vmatprep.mubr.bf16.mxu0 0
        %2794 = vmatmul.mubr.bf16.gmra.mrb[0].mxu0 %v2759
        %v2795 = vpop.f32.mrb[0].mxu0
        %v2796 = vadd.f32 0.0, %v2795
        %v2797 = vpop.f32.mrb[0].mxu0
        %v2798 = vpop.f32.mrb[0].mxu0
        %v2799 = vpop.f32.mrb[0].mxu0
        %2800 = vdwg.mxu0
        %v2803 = vunpack.c.l.b16 %v2327
        %v2804 = vunpack.c.l.b16 %v2328
        %v2805 = vpack.c.b16 %v2804, %v2803
        %v2808 = vsel %vm793, %v2635, 0
        %2810 = vmatprep.subr.bf16.mxu0 0
        %2811 = vmatpush1.bf16.msra.mxu0 %v2805
        %2812 = vmatprep.subr.bf16.mxu0 0
        %2813 = vmatpush1.bf16.msra.mxu0 0
        %2814 = vmatprep.subr.bf16.mxu0 0
        %2815 = vmatpush1.bf16.msra.mxu0 0
        %2816 = vmatprep.subr.bf16.mxu0 0
        %2817 = vmatpush1.bf16.msra.mxu0 0
        %2818 = vmatprep.subr.bf16.mxu0 0
        %2819 = vmatpush1.bf16.msra.mxu0 0
        %2820 = vmatprep.subr.bf16.mxu0 0
        %2821 = vmatpush1.bf16.msra.mxu0 0
        %2822 = vmatprep.subr.bf16.mxu0 0
        %2823 = vmatpush1.bf16.msra.mxu0 0
        %2824 = vmatprep.subr.bf16.mxu0 0
        %2825 = vmatpush1.bf16.msra.mxu0 0
        %2826 = vmatprep.subr.bf16.mxu0 0
        %2827 = vmatpush1.bf16.msra.mxu0 0
        %2828 = vmatprep.subr.bf16.mxu0 0
        %2829 = vmatpush1.bf16.msra.mxu0 0
        %2830 = vmatprep.subr.bf16.mxu0 0
        %2831 = vmatpush1.bf16.msra.mxu0 0
        %2832 = vmatprep.subr.bf16.mxu0 0
        %2833 = vmatpush1.bf16.msra.mxu0 0
        %2834 = vmatprep.subr.bf16.mxu0 0
        %2835 = vmatpush1.bf16.msra.mxu0 0
        %2836 = vmatprep.subr.bf16.mxu0 0
        %2837 = vmatpush1.bf16.msra.mxu0 0
        %2838 = vmatprep.subr.bf16.mxu0 0
        %2839 = vmatpush1.bf16.msra.mxu0 0
        %2840 = vmatprep.subr.bf16.mxu0 0
        %2841 = vmatpush1.bf16.msra.mxu0 0
        %2842 = vmatprep.mubr.bf16.mxu0 0
        %2843 = vmatmul.mubr.bf16.gmra.mrb[0].mxu0 %v2808
        %v2844 = vpop.f32.mrb[0].mxu0
        %v2845 = vadd.f32 %v2796, %v2844
        %v2846 = vpop.f32.mrb[0].mxu0
        %v2847 = vpop.f32.mrb[0].mxu0
        %v2848 = vpop.f32.mrb[0].mxu0
        %2849 = vdwg.mxu0
        %2850 = vrot.lane.b32.xlu0 %v2526, 96
        %v2851 = vpop.permute.xlu0 %2850
        %2852 = vrot.lane.b32.xlu0 %v2527, 96
        %v2853 = vpop.permute.xlu0 %2852
        %v2855 = vsel %vm793, %v2851, 0
        %v2858 = vsel %vm793, %v2853, 0
        %2860 = vmatprep.subr.bf16.mxu0 0
        %2861 = vmatpush1.bf16.xpose.msra.mxu0 %v2858
        %2862 = vmatprep.subr.bf16.mxu0 0
        %2863 = vmatpush1.bf16.xpose.msra.mxu0 0
        %2864 = vmatprep.subr.bf16.mxu0 0
        %2865 = vmatpush1.bf16.xpose.msra.mxu0 0
        %2866 = vmatprep.subr.bf16.mxu0 0
        %2867 = vmatpush1.bf16.xpose.msra.mxu0 0
        %2868 = vmatprep.subr.bf16.mxu0 0
        %2869 = vmatpush1.bf16.xpose.msra.mxu0 0
        %2870 = vmatprep.subr.bf16.mxu0 0
        %2871 = vmatpush1.bf16.xpose.msra.mxu0 0
        %2872 = vmatprep.subr.bf16.mxu0 0
        %2873 = vmatpush1.bf16.xpose.msra.mxu0 0
        %2874 = vmatprep.subr.bf16.mxu0 0
        %2875 = vmatpush1.bf16.xpose.msra.mxu0 0
        %2876 = vmatprep.subr.bf16.mxu0 0
        %2877 = vmatpush1.bf16.xpose.msra.mxu0 0
        %2878 = vmatprep.subr.bf16.mxu0 0
        %2879 = vmatpush1.bf16.xpose.msra.mxu0 0
        %2880 = vmatprep.subr.bf16.mxu0 0
        %2881 = vmatpush1.bf16.xpose.msra.mxu0 0
        %2882 = vmatprep.subr.bf16.mxu0 0
        %2883 = vmatpush1.bf16.xpose.msra.mxu0 0
        %2884 = vmatprep.subr.bf16.mxu0 0
        %2885 = vmatpush1.bf16.xpose.msra.mxu0 0
        %2886 = vmatprep.subr.bf16.mxu0 0
        %2887 = vmatpush1.bf16.xpose.msra.mxu0 0
        %2888 = vmatprep.subr.bf16.mxu0 0
        %2889 = vmatpush1.bf16.xpose.msra.mxu0 0
        %2890 = vmatprep.subr.bf16.mxu0 0
        %2891 = vmatpush1.bf16.xpose.msra.mxu0 0
        %2892 = vmatprep.mubr.bf16.mxu0 0
        %2893 = vmatmul.mubr.bf16.gmra.mrb[0].mxu0 %v2855
        %v2894 = vpop.f32.mrb[0].mxu0
        %v2895 = vadd.f32 0.0, %v2894
        %v2896 = vpop.f32.mrb[0].mxu0
        %v2897 = vpop.f32.mrb[0].mxu0
        %v2898 = vpop.f32.mrb[0].mxu0
        %2899 = vdwg.mxu0
        %v2900 = vmul.f32 %v2895, 0.25
        %v2901 = vadd.f32 %v2900, %v845
        %v2902 = vsel %vm848, %v2901, -inf
        %2903 = vmax.xlane.f32.xlu0 %v2902
        %v2904 = vpop.xlane.xlu0 %2903
        %v2905 = vsub.f32 %v2901, %v2904
        %v2906 = vmul.f32 %v2905, 1.442695
        %v2907 = vpow.pop %v2906
        %v2908 = vsel %vm848, %v2907, 0.0
        %2909 = vadd.xlane.f32.xlu0 %v2908
        %v2910 = vpop.xlane.xlu0 %2909
        %v2911 = vrcp.pop %v2910
        %v2912 = vmul.f32 %v2907, %v2911
        %v2913 = vpack.c.bf16 %v2912, %v2912
        %2914 = vrot.lane.b32.xlu0 %v2528, 96
        %v2915 = vpop.permute.xlu0 %2914
        %v2917 = vsel %vm848, %v2913, 0
        %v2920 = vsel %vm864, %v2915, 0
        %2922 = vmatprep.subr.bf16.mxu0 0
        %2923 = vmatpush1.bf16.msra.mxu0 %v2920
        %2924 = vmatprep.subr.bf16.mxu0 0
        %2925 = vmatpush1.bf16.msra.mxu0 0
        %2926 = vmatprep.subr.bf16.mxu0 0
        %2927 = vmatpush1.bf16.msra.mxu0 0
        %2928 = vmatprep.subr.bf16.mxu0 0
        %2929 = vmatpush1.bf16.msra.mxu0 0
        %2930 = vmatprep.subr.bf16.mxu0 0
        %2931 = vmatpush1.bf16.msra.mxu0 0
        %2932 = vmatprep.subr.bf16.mxu0 0
        %2933 = vmatpush1.bf16.msra.mxu0 0
        %2934 = vmatprep.subr.bf16.mxu0 0
        %2935 = vmatpush1.bf16.msra.mxu0 0
        %2936 = vmatprep.subr.bf16.mxu0 0
        %2937 = vmatpush1.bf16.msra.mxu0 0
        %2938 = vmatprep.subr.bf16.mxu0 0
        %2939 = vmatpush1.bf16.msra.mxu0 0
        %2940 = vmatprep.subr.bf16.mxu0 0
        %2941 = vmatpush1.bf16.msra.mxu0 0
        %2942 = vmatprep.subr.bf16.mxu0 0
        %2943 = vmatpush1.bf16.msra.mxu0 0
        %2944 = vmatprep.subr.bf16.mxu0 0
        %2945 = vmatpush1.bf16.msra.mxu0 0
        %2946 = vmatprep.subr.bf16.mxu0 0
        %2947 = vmatpush1.bf16.msra.mxu0 0
        %2948 = vmatprep.subr.bf16.mxu0 0
        %2949 = vmatpush1.bf16.msra.mxu0 0
        %2950 = vmatprep.subr.bf16.mxu0 0
        %2951 = vmatpush1.bf16.msra.mxu0 0
        %2952 = vmatprep.subr.bf16.mxu0 0
        %2953 = vmatpush1.bf16.msra.mxu0 0
        %2954 = vmatprep.mubr.bf16.mxu0 0
        %2955 = vmatmul.mubr.bf16.gmra.mrb[0].mxu0 %v2917
        %v2956 = vpop.f32.mrb[0].mxu0
        %v2957 = vadd.f32 0.0, %v2956
        %v2958 = vpop.f32.mrb[0].mxu0
        %v2959 = vpop.f32.mrb[0].mxu0
        %v2960 = vpop.f32.mrb[0].mxu0
        %2961 = vdwg.mxu0
        %v2962 = vpack.c.bf16 %v2957, %v2957
        %v2965 = vunpack.c.l.b16 %v2331
        %v2966 = vunpack.c.l.b16 %v2332
        %v2967 = vpack.c.b16 %v2966, %v2965
        %v2970 = vsel %vm793, %v2962, 0
        %2972 = vmatprep.subr.bf16.mxu0 0
        %2973 = vmatpush1.bf16.msra.mxu0 %v2967
        %2974 = vmatprep.subr.bf16.mxu0 0
        %2975 = vmatpush1.bf16.msra.mxu0 0
        %2976 = vmatprep.subr.bf16.mxu0 0
        %2977 = vmatpush1.bf16.msra.mxu0 0
        %2978 = vmatprep.subr.bf16.mxu0 0
        %2979 = vmatpush1.bf16.msra.mxu0 0
        %2980 = vmatprep.subr.bf16.mxu0 0
        %2981 = vmatpush1.bf16.msra.mxu0 0
        %2982 = vmatprep.subr.bf16.mxu0 0
        %2983 = vmatpush1.bf16.msra.mxu0 0
        %2984 = vmatprep.subr.bf16.mxu0 0
        %2985 = vmatpush1.bf16.msra.mxu0 0
        %2986 = vmatprep.subr.bf16.mxu0 0
        %2987 = vmatpush1.bf16.msra.mxu0 0
        %2988 = vmatprep.subr.bf16.mxu0 0
        %2989 = vmatpush1.bf16.msra.mxu0 0
        %2990 = vmatprep.subr.bf16.mxu0 0
        %2991 = vmatpush1.bf16.msra.mxu0 0
        %2992 = vmatprep.subr.bf16.mxu0 0
        %2993 = vmatpush1.bf16.msra.mxu0 0
        %2994 = vmatprep.subr.bf16.mxu0 0
        %2995 = vmatpush1.bf16.msra.mxu0 0
        %2996 = vmatprep.subr.bf16.mxu0 0
        %2997 = vmatpush1.bf16.msra.mxu0 0
        %2998 = vmatprep.subr.bf16.mxu0 0
        %2999 = vmatpush1.bf16.msra.mxu0 0
        %3000 = vmatprep.subr.bf16.mxu0 0
        %3001 = vmatpush1.bf16.msra.mxu0 0
        %3002 = vmatprep.subr.bf16.mxu0 0
        %3003 = vmatpush1.bf16.msra.mxu0 0
        %3004 = vmatprep.mubr.bf16.mxu0 0
        %3005 = vmatmul.mubr.bf16.gmra.mrb[0].mxu0 %v2970
        %v3006 = vpop.f32.mrb[0].mxu0
        %v3007 = vadd.f32 0.0, %v3006
        %v3008 = vpop.f32.mrb[0].mxu0
        %v3009 = vpop.f32.mrb[0].mxu0
        %v3010 = vpop.f32.mrb[0].mxu0
        %3011 = vdwg.mxu0
        %v3012 = vadd.f32 %v2845, %v3007
        %3013 = vrot.lane.b32.xlu0 %v2526, 80
        %v3014 = vpop.permute.xlu0 %3013
        %3015 = vrot.lane.b32.xlu0 %v2527, 80
        %v3016 = vpop.permute.xlu0 %3015
        %v3018 = vsel %vm793, %v3014, 0
        %v3021 = vsel %vm793, %v3016, 0
        %3023 = vmatprep.subr.bf16.mxu0 0
        %3024 = vmatpush1.bf16.xpose.msra.mxu0 %v3021
        %3025 = vmatprep.subr.bf16.mxu0 0
        %3026 = vmatpush1.bf16.xpose.msra.mxu0 0
        %3027 = vmatprep.subr.bf16.mxu0 0
        %3028 = vmatpush1.bf16.xpose.msra.mxu0 0
        %3029 = vmatprep.subr.bf16.mxu0 0
        %3030 = vmatpush1.bf16.xpose.msra.mxu0 0
        %3031 = vmatprep.subr.bf16.mxu0 0
        %3032 = vmatpush1.bf16.xpose.msra.mxu0 0
        %3033 = vmatprep.subr.bf16.mxu0 0
        %3034 = vmatpush1.bf16.xpose.msra.mxu0 0
        %3035 = vmatprep.subr.bf16.mxu0 0
        %3036 = vmatpush1.bf16.xpose.msra.mxu0 0
        %3037 = vmatprep.subr.bf16.mxu0 0
        %3038 = vmatpush1.bf16.xpose.msra.mxu0 0
        %3039 = vmatprep.subr.bf16.mxu0 0
        %3040 = vmatpush1.bf16.xpose.msra.mxu0 0
        %3041 = vmatprep.subr.bf16.mxu0 0
        %3042 = vmatpush1.bf16.xpose.msra.mxu0 0
        %3043 = vmatprep.subr.bf16.mxu0 0
        %3044 = vmatpush1.bf16.xpose.msra.mxu0 0
        %3045 = vmatprep.subr.bf16.mxu0 0
        %3046 = vmatpush1.bf16.xpose.msra.mxu0 0
        %3047 = vmatprep.subr.bf16.mxu0 0
        %3048 = vmatpush1.bf16.xpose.msra.mxu0 0
        %3049 = vmatprep.subr.bf16.mxu0 0
        %3050 = vmatpush1.bf16.xpose.msra.mxu0 0
        %3051 = vmatprep.subr.bf16.mxu0 0
        %3052 = vmatpush1.bf16.xpose.msra.mxu0 0
        %3053 = vmatprep.subr.bf16.mxu0 0
        %3054 = vmatpush1.bf16.xpose.msra.mxu0 0
        %3055 = vmatprep.mubr.bf16.mxu0 0
        %3056 = vmatmul.mubr.bf16.gmra.mrb[0].mxu0 %v3018
        %v3057 = vpop.f32.mrb[0].mxu0
        %v3058 = vadd.f32 0.0, %v3057
        %v3059 = vpop.f32.mrb[0].mxu0
        %v3060 = vpop.f32.mrb[0].mxu0
        %v3061 = vpop.f32.mrb[0].mxu0
        %3062 = vdwg.mxu0
        %v3063 = vmul.f32 %v3058, 0.25
        %v3064 = vadd.f32 %v3063, %v845
        %v3065 = vsel %vm848, %v3064, -inf
        %3066 = vmax.xlane.f32.xlu0 %v3065
        %v3067 = vpop.xlane.xlu0 %3066
        %v3068 = vsub.f32 %v3064, %v3067
        %v3069 = vmul.f32 %v3068, 1.442695
        %v3070 = vpow.pop %v3069
        %v3071 = vsel %vm848, %v3070, 0.0
        %3072 = vadd.xlane.f32.xlu0 %v3071
        %v3073 = vpop.xlane.xlu0 %3072
        %v3074 = vrcp.pop %v3073
        %v3075 = vmul.f32 %v3070, %v3074
        %v3076 = vpack.c.bf16 %v3075, %v3075
        %3077 = vrot.lane.b32.xlu0 %v2528, 80
        %v3078 = vpop.permute.xlu0 %3077
        %v3080 = vsel %vm848, %v3076, 0
        %v3083 = vsel %vm864, %v3078, 0
        %3085 = vmatprep.subr.bf16.mxu0 0
        %3086 = vmatpush1.bf16.msra.mxu0 %v3083
        %3087 = vmatprep.subr.bf16.mxu0 0
        %3088 = vmatpush1.bf16.msra.mxu0 0
        %3089 = vmatprep.subr.bf16.mxu0 0
        %3090 = vmatpush1.bf16.msra.mxu0 0
        %3091 = vmatprep.subr.bf16.mxu0 0
        %3092 = vmatpush1.bf16.msra.mxu0 0
        %3093 = vmatprep.subr.bf16.mxu0 0
        %3094 = vmatpush1.bf16.msra.mxu0 0
        %3095 = vmatprep.subr.bf16.mxu0 0
        %3096 = vmatpush1.bf16.msra.mxu0 0
        %3097 = vmatprep.subr.bf16.mxu0 0
        %3098 = vmatpush1.bf16.msra.mxu0 0
        %3099 = vmatprep.subr.bf16.mxu0 0
        %3100 = vmatpush1.bf16.msra.mxu0 0
        %3101 = vmatprep.subr.bf16.mxu0 0
        %3102 = vmatpush1.bf16.msra.mxu0 0
        %3103 = vmatprep.subr.bf16.mxu0 0
        %3104 = vmatpush1.bf16.msra.mxu0 0
        %3105 = vmatprep.subr.bf16.mxu0 0
        %3106 = vmatpush1.bf16.msra.mxu0 0
        %3107 = vmatprep.subr.bf16.mxu0 0
        %3108 = vmatpush1.bf16.msra.mxu0 0
        %3109 = vmatprep.subr.bf16.mxu0 0
        %3110 = vmatpush1.bf16.msra.mxu0 0
        %3111 = vmatprep.subr.bf16.mxu0 0
        %3112 = vmatpush1.bf16.msra.mxu0 0
        %3113 = vmatprep.subr.bf16.mxu0 0
        %3114 = vmatpush1.bf16.msra.mxu0 0
        %3115 = vmatprep.subr.bf16.mxu0 0
        %3116 = vmatpush1.bf16.msra.mxu0 0
        %3117 = vmatprep.mubr.bf16.mxu0 0
        %3118 = vmatmul.mubr.bf16.gmra.mrb[0].mxu0 %v3080
        %v3119 = vpop.f32.mrb[0].mxu0
        %v3120 = vadd.f32 0.0, %v3119
        %v3121 = vpop.f32.mrb[0].mxu0
        %v3122 = vpop.f32.mrb[0].mxu0
        %v3123 = vpop.f32.mrb[0].mxu0
        %3124 = vdwg.mxu0
        %v3125 = vpack.c.bf16 %v3120, %v3120
        %v3128 = vunpack.c.l.b16 %v2333
        %v3129 = vunpack.c.l.b16 %v2334
        %v3130 = vpack.c.b16 %v3129, %v3128
        %v3133 = vsel %vm793, %v3125, 0
        %3135 = vmatprep.subr.bf16.mxu0 0
        %3136 = vmatpush1.bf16.msra.mxu0 %v3130
        %3137 = vmatprep.subr.bf16.mxu0 0
        %3138 = vmatpush1.bf16.msra.mxu0 0
        %3139 = vmatprep.subr.bf16.mxu0 0
        %3140 = vmatpush1.bf16.msra.mxu0 0
        %3141 = vmatprep.subr.bf16.mxu0 0
        %3142 = vmatpush1.bf16.msra.mxu0 0
        %3143 = vmatprep.subr.bf16.mxu0 0
        %3144 = vmatpush1.bf16.msra.mxu0 0
        %3145 = vmatprep.subr.bf16.mxu0 0
        %3146 = vmatpush1.bf16.msra.mxu0 0
        %3147 = vmatprep.subr.bf16.mxu0 0
        %3148 = vmatpush1.bf16.msra.mxu0 0
        %3149 = vmatprep.subr.bf16.mxu0 0
        %3150 = vmatpush1.bf16.msra.mxu0 0
        %3151 = vmatprep.subr.bf16.mxu0 0
        %3152 = vmatpush1.bf16.msra.mxu0 0
        %3153 = vmatprep.subr.bf16.mxu0 0
        %3154 = vmatpush1.bf16.msra.mxu0 0
        %3155 = vmatprep.subr.bf16.mxu0 0
        %3156 = vmatpush1.bf16.msra.mxu0 0
        %3157 = vmatprep.subr.bf16.mxu0 0
        %3158 = vmatpush1.bf16.msra.mxu0 0
        %3159 = vmatprep.subr.bf16.mxu0 0
        %3160 = vmatpush1.bf16.msra.mxu0 0
        %3161 = vmatprep.subr.bf16.mxu0 0
        %3162 = vmatpush1.bf16.msra.mxu0 0
        %3163 = vmatprep.subr.bf16.mxu0 0
        %3164 = vmatpush1.bf16.msra.mxu0 0
        %3165 = vmatprep.subr.bf16.mxu0 0
        %3166 = vmatpush1.bf16.msra.mxu0 0
        %3167 = vmatprep.mubr.bf16.mxu0 0
        %3168 = vmatmul.mubr.bf16.gmra.mrb[0].mxu0 %v3133
        %v3169 = vpop.f32.mrb[0].mxu0
        %v3170 = vadd.f32 0.0, %v3169
        %v3171 = vpop.f32.mrb[0].mxu0
        %v3172 = vpop.f32.mrb[0].mxu0
        %v3173 = vpop.f32.mrb[0].mxu0
        %3174 = vdwg.mxu0
        %v3175 = vadd.f32 %v3012, %v3170
        %3176 = vrot.lane.b32.xlu0 %v2526, 64
        %v3177 = vpop.permute.xlu0 %3176
        %3178 = vrot.lane.b32.xlu0 %v2527, 64
        %v3179 = vpop.permute.xlu0 %3178
        %v3181 = vsel %vm793, %v3177, 0
        %v3184 = vsel %vm793, %v3179, 0
        %3186 = vmatprep.subr.bf16.mxu0 0
        %3187 = vmatpush1.bf16.xpose.msra.mxu0 %v3184
        %3188 = vmatprep.subr.bf16.mxu0 0
        %3189 = vmatpush1.bf16.xpose.msra.mxu0 0
        %3190 = vmatprep.subr.bf16.mxu0 0
        %3191 = vmatpush1.bf16.xpose.msra.mxu0 0
        %3192 = vmatprep.subr.bf16.mxu0 0
        %3193 = vmatpush1.bf16.xpose.msra.mxu0 0
        %3194 = vmatprep.subr.bf16.mxu0 0
        %3195 = vmatpush1.bf16.xpose.msra.mxu0 0
        %3196 = vmatprep.subr.bf16.mxu0 0
        %3197 = vmatpush1.bf16.xpose.msra.mxu0 0
        %3198 = vmatprep.subr.bf16.mxu0 0
        %3199 = vmatpush1.bf16.xpose.msra.mxu0 0
        %3200 = vmatprep.subr.bf16.mxu0 0
        %3201 = vmatpush1.bf16.xpose.msra.mxu0 0
        %3202 = vmatprep.subr.bf16.mxu0 0
        %3203 = vmatpush1.bf16.xpose.msra.mxu0 0
        %3204 = vmatprep.subr.bf16.mxu0 0
        %3205 = vmatpush1.bf16.xpose.msra.mxu0 0
        %3206 = vmatprep.subr.bf16.mxu0 0
        %3207 = vmatpush1.bf16.xpose.msra.mxu0 0
        %3208 = vmatprep.subr.bf16.mxu0 0
        %3209 = vmatpush1.bf16.xpose.msra.mxu0 0
        %3210 = vmatprep.subr.bf16.mxu0 0
        %3211 = vmatpush1.bf16.xpose.msra.mxu0 0
        %3212 = vmatprep.subr.bf16.mxu0 0
        %3213 = vmatpush1.bf16.xpose.msra.mxu0 0
        %3214 = vmatprep.subr.bf16.mxu0 0
        %3215 = vmatpush1.bf16.xpose.msra.mxu0 0
        %3216 = vmatprep.subr.bf16.mxu0 0
        %3217 = vmatpush1.bf16.xpose.msra.mxu0 0
        %3218 = vmatprep.mubr.bf16.mxu0 0
        %3219 = vmatmul.mubr.bf16.gmra.mrb[0].mxu0 %v3181
        %v3220 = vpop.f32.mrb[0].mxu0
        %v3221 = vadd.f32 0.0, %v3220
        %v3222 = vpop.f32.mrb[0].mxu0
        %v3223 = vpop.f32.mrb[0].mxu0
        %v3224 = vpop.f32.mrb[0].mxu0
        %3225 = vdwg.mxu0
        %v3226 = vmul.f32 %v3221, 0.25
        %v3227 = vadd.f32 %v3226, %v845
        %v3228 = vsel %vm848, %v3227, -inf
        %3229 = vmax.xlane.f32.xlu0 %v3228
        %v3230 = vpop.xlane.xlu0 %3229
        %v3231 = vsub.f32 %v3227, %v3230
        %v3232 = vmul.f32 %v3231, 1.442695
        %v3233 = vpow.pop %v3232
        %v3234 = vsel %vm848, %v3233, 0.0
        %3235 = vadd.xlane.f32.xlu0 %v3234
        %v3236 = vpop.xlane.xlu0 %3235
        %v3237 = vrcp.pop %v3236
        %v3238 = vmul.f32 %v3233, %v3237
        %v3239 = vpack.c.bf16 %v3238, %v3238
        %3240 = vrot.lane.b32.xlu0 %v2528, 64
        %v3241 = vpop.permute.xlu0 %3240
        %v3243 = vsel %vm848, %v3239, 0
        %v3246 = vsel %vm864, %v3241, 0
        %3248 = vmatprep.subr.bf16.mxu0 0
        %3249 = vmatpush1.bf16.msra.mxu0 %v3246
        %3250 = vmatprep.subr.bf16.mxu0 0
        %3251 = vmatpush1.bf16.msra.mxu0 0
        %3252 = vmatprep.subr.bf16.mxu0 0
        %3253 = vmatpush1.bf16.msra.mxu0 0
        %3254 = vmatprep.subr.bf16.mxu0 0
        %3255 = vmatpush1.bf16.msra.mxu0 0
        %3256 = vmatprep.subr.bf16.mxu0 0
        %3257 = vmatpush1.bf16.msra.mxu0 0
        %3258 = vmatprep.subr.bf16.mxu0 0
        %3259 = vmatpush1.bf16.msra.mxu0 0
        %3260 = vmatprep.subr.bf16.mxu0 0
        %3261 = vmatpush1.bf16.msra.mxu0 0
        %3262 = vmatprep.subr.bf16.mxu0 0
        %3263 = vmatpush1.bf16.msra.mxu0 0
        %3264 = vmatprep.subr.bf16.mxu0 0
        %3265 = vmatpush1.bf16.msra.mxu0 0
        %3266 = vmatprep.subr.bf16.mxu0 0
        %3267 = vmatpush1.bf16.msra.mxu0 0
        %3268 = vmatprep.subr.bf16.mxu0 0
        %3269 = vmatpush1.bf16.msra.mxu0 0
        %3270 = vmatprep.subr.bf16.mxu0 0
        %3271 = vmatpush1.bf16.msra.mxu0 0
        %3272 = vmatprep.subr.bf16.mxu0 0
        %3273 = vmatpush1.bf16.msra.mxu0 0
        %3274 = vmatprep.subr.bf16.mxu0 0
        %3275 = vmatpush1.bf16.msra.mxu0 0
        %3276 = vmatprep.subr.bf16.mxu0 0
        %3277 = vmatpush1.bf16.msra.mxu0 0
        %3278 = vmatprep.subr.bf16.mxu0 0
        %3279 = vmatpush1.bf16.msra.mxu0 0
        %3280 = vmatprep.mubr.bf16.mxu0 0
        %3281 = vmatmul.mubr.bf16.gmra.mrb[0].mxu0 %v3243
        %v3282 = vpop.f32.mrb[0].mxu0
        %v3283 = vadd.f32 0.0, %v3282
        %v3284 = vpop.f32.mrb[0].mxu0
        %v3285 = vpop.f32.mrb[0].mxu0
        %v3286 = vpop.f32.mrb[0].mxu0
        %3287 = vdwg.mxu0
        %v3288 = vpack.c.bf16 %v3283, %v3283
        %v3291 = vunpack.c.l.b16 %v2335
        %v3292 = vunpack.c.l.b16 %v2336
        %v3293 = vpack.c.b16 %v3292, %v3291
        %v3296 = vsel %vm793, %v3288, 0
        %3298 = vmatprep.subr.bf16.mxu0 0
        %3299 = vmatpush1.bf16.msra.mxu0 %v3293
        %3300 = vmatprep.subr.bf16.mxu0 0
        %3301 = vmatpush1.bf16.msra.mxu0 0
        %3302 = vmatprep.subr.bf16.mxu0 0
        %3303 = vmatpush1.bf16.msra.mxu0 0
        %3304 = vmatprep.subr.bf16.mxu0 0
        %3305 = vmatpush1.bf16.msra.mxu0 0
        %3306 = vmatprep.subr.bf16.mxu0 0
        %3307 = vmatpush1.bf16.msra.mxu0 0
        %3308 = vmatprep.subr.bf16.mxu0 0
        %3309 = vmatpush1.bf16.msra.mxu0 0
        %3310 = vmatprep.subr.bf16.mxu0 0
        %3311 = vmatpush1.bf16.msra.mxu0 0
        %3312 = vmatprep.subr.bf16.mxu0 0
        %3313 = vmatpush1.bf16.msra.mxu0 0
        %3314 = vmatprep.subr.bf16.mxu0 0
        %3315 = vmatpush1.bf16.msra.mxu0 0
        %3316 = vmatprep.subr.bf16.mxu0 0
        %3317 = vmatpush1.bf16.msra.mxu0 0
        %3318 = vmatprep.subr.bf16.mxu0 0
        %3319 = vmatpush1.bf16.msra.mxu0 0
        %3320 = vmatprep.subr.bf16.mxu0 0
        %3321 = vmatpush1.bf16.msra.mxu0 0
        %3322 = vmatprep.subr.bf16.mxu0 0
        %3323 = vmatpush1.bf16.msra.mxu0 0
        %3324 = vmatprep.subr.bf16.mxu0 0
        %3325 = vmatpush1.bf16.msra.mxu0 0
        %3326 = vmatprep.subr.bf16.mxu0 0
        %3327 = vmatpush1.bf16.msra.mxu0 0
        %3328 = vmatprep.subr.bf16.mxu0 0
        %3329 = vmatpush1.bf16.msra.mxu0 0
        %3330 = vmatprep.mubr.bf16.mxu0 0
        %3331 = vmatmul.mubr.bf16.gmra.mrb[0].mxu0 %v3296
        %v3332 = vpop.f32.mrb[0].mxu0
        %v3333 = vadd.f32 0.0, %v3332
        %v3334 = vpop.f32.mrb[0].mxu0
        %v3335 = vpop.f32.mrb[0].mxu0
        %v3336 = vpop.f32.mrb[0].mxu0
        %3337 = vdwg.mxu0
        %v3338 = vadd.f32 %v3175, %v3333
        %3339 = vrot.lane.b32.xlu0 %v2526, 48
        %v3340 = vpop.permute.xlu0 %3339
        %3341 = vrot.lane.b32.xlu0 %v2527, 48
        %v3342 = vpop.permute.xlu0 %3341
        %v3344 = vsel %vm793, %v3340, 0
        %v3347 = vsel %vm793, %v3342, 0
        %3349 = vmatprep.subr.bf16.mxu0 0
        %3350 = vmatpush1.bf16.xpose.msra.mxu0 %v3347
        %3351 = vmatprep.subr.bf16.mxu0 0
        %3352 = vmatpush1.bf16.xpose.msra.mxu0 0
        %3353 = vmatprep.subr.bf16.mxu0 0
        %3354 = vmatpush1.bf16.xpose.msra.mxu0 0
        %3355 = vmatprep.subr.bf16.mxu0 0
        %3356 = vmatpush1.bf16.xpose.msra.mxu0 0
        %3357 = vmatprep.subr.bf16.mxu0 0
        %3358 = vmatpush1.bf16.xpose.msra.mxu0 0
        %3359 = vmatprep.subr.bf16.mxu0 0
        %3360 = vmatpush1.bf16.xpose.msra.mxu0 0
        %3361 = vmatprep.subr.bf16.mxu0 0
        %3362 = vmatpush1.bf16.xpose.msra.mxu0 0
        %3363 = vmatprep.subr.bf16.mxu0 0
        %3364 = vmatpush1.bf16.xpose.msra.mxu0 0
        %3365 = vmatprep.subr.bf16.mxu0 0
        %3366 = vmatpush1.bf16.xpose.msra.mxu0 0
        %3367 = vmatprep.subr.bf16.mxu0 0
        %3368 = vmatpush1.bf16.xpose.msra.mxu0 0
        %3369 = vmatprep.subr.bf16.mxu0 0
        %3370 = vmatpush1.bf16.xpose.msra.mxu0 0
        %3371 = vmatprep.subr.bf16.mxu0 0
        %3372 = vmatpush1.bf16.xpose.msra.mxu0 0
        %3373 = vmatprep.subr.bf16.mxu0 0
        %3374 = vmatpush1.bf16.xpose.msra.mxu0 0
        %3375 = vmatprep.subr.bf16.mxu0 0
        %3376 = vmatpush1.bf16.xpose.msra.mxu0 0
        %3377 = vmatprep.subr.bf16.mxu0 0
        %3378 = vmatpush1.bf16.xpose.msra.mxu0 0
        %3379 = vmatprep.subr.bf16.mxu0 0
        %3380 = vmatpush1.bf16.xpose.msra.mxu0 0
        %3381 = vmatprep.mubr.bf16.mxu0 0
        %3382 = vmatmul.mubr.bf16.gmra.mrb[0].mxu0 %v3344
        %v3383 = vpop.f32.mrb[0].mxu0
        %v3384 = vadd.f32 0.0, %v3383
        %v3385 = vpop.f32.mrb[0].mxu0
        %v3386 = vpop.f32.mrb[0].mxu0
        %v3387 = vpop.f32.mrb[0].mxu0
        %3388 = vdwg.mxu0
        %v3389 = vmul.f32 %v3384, 0.25
        %v3390 = vadd.f32 %v3389, %v845
        %v3391 = vsel %vm848, %v3390, -inf
        %3392 = vmax.xlane.f32.xlu0 %v3391
        %v3393 = vpop.xlane.xlu0 %3392
        %v3394 = vsub.f32 %v3390, %v3393
        %v3395 = vmul.f32 %v3394, 1.442695
        %v3396 = vpow.pop %v3395
        %v3397 = vsel %vm848, %v3396, 0.0
        %3398 = vadd.xlane.f32.xlu0 %v3397
        %v3399 = vpop.xlane.xlu0 %3398
        %v3400 = vrcp.pop %v3399
        %v3401 = vmul.f32 %v3396, %v3400
        %v3402 = vpack.c.bf16 %v3401, %v3401
        %3403 = vrot.lane.b32.xlu0 %v2528, 48
        %v3404 = vpop.permute.xlu0 %3403
        %v3406 = vsel %vm848, %v3402, 0
        %v3409 = vsel %vm864, %v3404, 0
        %3411 = vmatprep.subr.bf16.mxu0 0
        %3412 = vmatpush1.bf16.msra.mxu0 %v3409
        %3413 = vmatprep.subr.bf16.mxu0 0
        %3414 = vmatpush1.bf16.msra.mxu0 0
        %3415 = vmatprep.subr.bf16.mxu0 0
        %3416 = vmatpush1.bf16.msra.mxu0 0
        %3417 = vmatprep.subr.bf16.mxu0 0
        %3418 = vmatpush1.bf16.msra.mxu0 0
        %3419 = vmatprep.subr.bf16.mxu0 0
        %3420 = vmatpush1.bf16.msra.mxu0 0
        %3421 = vmatprep.subr.bf16.mxu0 0
        %3422 = vmatpush1.bf16.msra.mxu0 0
        %3423 = vmatprep.subr.bf16.mxu0 0
        %3424 = vmatpush1.bf16.msra.mxu0 0
        %3425 = vmatprep.subr.bf16.mxu0 0
        %3426 = vmatpush1.bf16.msra.mxu0 0
        %3427 = vmatprep.subr.bf16.mxu0 0
        %3428 = vmatpush1.bf16.msra.mxu0 0
        %3429 = vmatprep.subr.bf16.mxu0 0
        %3430 = vmatpush1.bf16.msra.mxu0 0
        %3431 = vmatprep.subr.bf16.mxu0 0
        %3432 = vmatpush1.bf16.msra.mxu0 0
        %3433 = vmatprep.subr.bf16.mxu0 0
        %3434 = vmatpush1.bf16.msra.mxu0 0
        %3435 = vmatprep.subr.bf16.mxu0 0
        %3436 = vmatpush1.bf16.msra.mxu0 0
        %3437 = vmatprep.subr.bf16.mxu0 0
        %3438 = vmatpush1.bf16.msra.mxu0 0
        %3439 = vmatprep.subr.bf16.mxu0 0
        %3440 = vmatpush1.bf16.msra.mxu0 0
        %3441 = vmatprep.subr.bf16.mxu0 0
        %3442 = vmatpush1.bf16.msra.mxu0 0
        %3443 = vmatprep.mubr.bf16.mxu0 0
        %3444 = vmatmul.mubr.bf16.gmra.mrb[0].mxu0 %v3406
        %v3445 = vpop.f32.mrb[0].mxu0
        %v3446 = vadd.f32 0.0, %v3445
        %v3447 = vpop.f32.mrb[0].mxu0
        %v3448 = vpop.f32.mrb[0].mxu0
        %v3449 = vpop.f32.mrb[0].mxu0
        %3450 = vdwg.mxu0
        %v3451 = vpack.c.bf16 %v3446, %v3446
        %v3454 = vunpack.c.l.b16 %v2337
        %v3455 = vunpack.c.l.b16 %v2338
        %v3456 = vpack.c.b16 %v3455, %v3454
        %v3459 = vsel %vm793, %v3451, 0
        %3461 = vmatprep.subr.bf16.mxu0 0
        %3462 = vmatpush1.bf16.msra.mxu0 %v3456
        %3463 = vmatprep.subr.bf16.mxu0 0
        %3464 = vmatpush1.bf16.msra.mxu0 0
        %3465 = vmatprep.subr.bf16.mxu0 0
        %3466 = vmatpush1.bf16.msra.mxu0 0
        %3467 = vmatprep.subr.bf16.mxu0 0
        %3468 = vmatpush1.bf16.msra.mxu0 0
        %3469 = vmatprep.subr.bf16.mxu0 0
        %3470 = vmatpush1.bf16.msra.mxu0 0
        %3471 = vmatprep.subr.bf16.mxu0 0
        %3472 = vmatpush1.bf16.msra.mxu0 0
        %3473 = vmatprep.subr.bf16.mxu0 0
        %3474 = vmatpush1.bf16.msra.mxu0 0
        %3475 = vmatprep.subr.bf16.mxu0 0
        %3476 = vmatpush1.bf16.msra.mxu0 0
        %3477 = vmatprep.subr.bf16.mxu0 0
        %3478 = vmatpush1.bf16.msra.mxu0 0
        %3479 = vmatprep.subr.bf16.mxu0 0
        %3480 = vmatpush1.bf16.msra.mxu0 0
        %3481 = vmatprep.subr.bf16.mxu0 0
        %3482 = vmatpush1.bf16.msra.mxu0 0
        %3483 = vmatprep.subr.bf16.mxu0 0
        %3484 = vmatpush1.bf16.msra.mxu0 0
        %3485 = vmatprep.subr.bf16.mxu0 0
        %3486 = vmatpush1.bf16.msra.mxu0 0
        %3487 = vmatprep.subr.bf16.mxu0 0
        %3488 = vmatpush1.bf16.msra.mxu0 0
        %3489 = vmatprep.subr.bf16.mxu0 0
        %3490 = vmatpush1.bf16.msra.mxu0 0
        %3491 = vmatprep.subr.bf16.mxu0 0
        %3492 = vmatpush1.bf16.msra.mxu0 0
        %3493 = vmatprep.mubr.bf16.mxu0 0
        %3494 = vmatmul.mubr.bf16.gmra.mrb[0].mxu0 %v3459
        %v3495 = vpop.f32.mrb[0].mxu0
        %v3496 = vadd.f32 0.0, %v3495
        %v3497 = vpop.f32.mrb[0].mxu0
        %v3498 = vpop.f32.mrb[0].mxu0
        %v3499 = vpop.f32.mrb[0].mxu0
        %3500 = vdwg.mxu0
        %v3501 = vadd.f32 %v3338, %v3496
        %3502 = vrot.lane.b32.xlu0 %v2526, 32
        %v3503 = vpop.permute.xlu0 %3502
        %3504 = vrot.lane.b32.xlu0 %v2527, 32
        %v3505 = vpop.permute.xlu0 %3504
        %v3507 = vsel %vm793, %v3503, 0
        %v3510 = vsel %vm793, %v3505, 0
        %3512 = vmatprep.subr.bf16.mxu0 0
        %3513 = vmatpush1.bf16.xpose.msra.mxu0 %v3510
        %3514 = vmatprep.subr.bf16.mxu0 0
        %3515 = vmatpush1.bf16.xpose.msra.mxu0 0
        %3516 = vmatprep.subr.bf16.mxu0 0
        %3517 = vmatpush1.bf16.xpose.msra.mxu0 0
        %3518 = vmatprep.subr.bf16.mxu0 0
        %3519 = vmatpush1.bf16.xpose.msra.mxu0 0
        %3520 = vmatprep.subr.bf16.mxu0 0
        %3521 = vmatpush1.bf16.xpose.msra.mxu0 0
        %3522 = vmatprep.subr.bf16.mxu0 0
        %3523 = vmatpush1.bf16.xpose.msra.mxu0 0
        %3524 = vmatprep.subr.bf16.mxu0 0
        %3525 = vmatpush1.bf16.xpose.msra.mxu0 0
        %3526 = vmatprep.subr.bf16.mxu0 0
        %3527 = vmatpush1.bf16.xpose.msra.mxu0 0
        %3528 = vmatprep.subr.bf16.mxu0 0
        %3529 = vmatpush1.bf16.xpose.msra.mxu0 0
        %3530 = vmatprep.subr.bf16.mxu0 0
        %3531 = vmatpush1.bf16.xpose.msra.mxu0 0
        %3532 = vmatprep.subr.bf16.mxu0 0
        %3533 = vmatpush1.bf16.xpose.msra.mxu0 0
        %3534 = vmatprep.subr.bf16.mxu0 0
        %3535 = vmatpush1.bf16.xpose.msra.mxu0 0
        %3536 = vmatprep.subr.bf16.mxu0 0
        %3537 = vmatpush1.bf16.xpose.msra.mxu0 0
        %3538 = vmatprep.subr.bf16.mxu0 0
        %3539 = vmatpush1.bf16.xpose.msra.mxu0 0
        %3540 = vmatprep.subr.bf16.mxu0 0
        %3541 = vmatpush1.bf16.xpose.msra.mxu0 0
        %3542 = vmatprep.subr.bf16.mxu0 0
        %3543 = vmatpush1.bf16.xpose.msra.mxu0 0
        %3544 = vmatprep.mubr.bf16.mxu0 0
        %3545 = vmatmul.mubr.bf16.gmra.mrb[0].mxu0 %v3507
        %v3546 = vpop.f32.mrb[0].mxu0
        %v3547 = vadd.f32 0.0, %v3546
        %v3548 = vpop.f32.mrb[0].mxu0
        %v3549 = vpop.f32.mrb[0].mxu0
        %v3550 = vpop.f32.mrb[0].mxu0
        %3551 = vdwg.mxu0
        %v3552 = vmul.f32 %v3547, 0.25
        %v3553 = vadd.f32 %v3552, %v845
        %v3554 = vsel %vm848, %v3553, -inf
        %3555 = vmax.xlane.f32.xlu0 %v3554
        %v3556 = vpop.xlane.xlu0 %3555
        %v3557 = vsub.f32 %v3553, %v3556
        %v3558 = vmul.f32 %v3557, 1.442695
        %v3559 = vpow.pop %v3558
        %v3560 = vsel %vm848, %v3559, 0.0
        %3561 = vadd.xlane.f32.xlu0 %v3560
        %v3562 = vpop.xlane.xlu0 %3561
        %v3563 = vrcp.pop %v3562
        %v3564 = vmul.f32 %v3559, %v3563
        %v3565 = vpack.c.bf16 %v3564, %v3564
        %3566 = vrot.lane.b32.xlu0 %v2528, 32
        %v3567 = vpop.permute.xlu0 %3566
        %v3569 = vsel %vm848, %v3565, 0
        %v3572 = vsel %vm864, %v3567, 0
        %3574 = vmatprep.subr.bf16.mxu0 0
        %3575 = vmatpush1.bf16.msra.mxu0 %v3572
        %3576 = vmatprep.subr.bf16.mxu0 0
        %3577 = vmatpush1.bf16.msra.mxu0 0
        %3578 = vmatprep.subr.bf16.mxu0 0
        %3579 = vmatpush1.bf16.msra.mxu0 0
        %3580 = vmatprep.subr.bf16.mxu0 0
        %3581 = vmatpush1.bf16.msra.mxu0 0
        %3582 = vmatprep.subr.bf16.mxu0 0
        %3583 = vmatpush1.bf16.msra.mxu0 0
        %3584 = vmatprep.subr.bf16.mxu0 0
        %3585 = vmatpush1.bf16.msra.mxu0 0
        %3586 = vmatprep.subr.bf16.mxu0 0
        %3587 = vmatpush1.bf16.msra.mxu0 0
        %3588 = vmatprep.subr.bf16.mxu0 0
        %3589 = vmatpush1.bf16.msra.mxu0 0
        %3590 = vmatprep.subr.bf16.mxu0 0
        %3591 = vmatpush1.bf16.msra.mxu0 0
        %3592 = vmatprep.subr.bf16.mxu0 0
        %3593 = vmatpush1.bf16.msra.mxu0 0
        %3594 = vmatprep.subr.bf16.mxu0 0
        %3595 = vmatpush1.bf16.msra.mxu0 0
        %3596 = vmatprep.subr.bf16.mxu0 0
        %3597 = vmatpush1.bf16.msra.mxu0 0
        %3598 = vmatprep.subr.bf16.mxu0 0
        %3599 = vmatpush1.bf16.msra.mxu0 0
        %3600 = vmatprep.subr.bf16.mxu0 0
        %3601 = vmatpush1.bf16.msra.mxu0 0
        %3602 = vmatprep.subr.bf16.mxu0 0
        %3603 = vmatpush1.bf16.msra.mxu0 0
        %3604 = vmatprep.subr.bf16.mxu0 0
        %3605 = vmatpush1.bf16.msra.mxu0 0
        %3606 = vmatprep.mubr.bf16.mxu0 0
        %3607 = vmatmul.mubr.bf16.gmra.mrb[0].mxu0 %v3569
        %v3608 = vpop.f32.mrb[0].mxu0
        %v3609 = vadd.f32 0.0, %v3608
        %v3610 = vpop.f32.mrb[0].mxu0
        %v3611 = vpop.f32.mrb[0].mxu0
        %v3612 = vpop.f32.mrb[0].mxu0
        %3613 = vdwg.mxu0
        %v3614 = vpack.c.bf16 %v3609, %v3609
        %v3617 = vunpack.c.l.b16 %v2339
        %v3618 = vunpack.c.l.b16 %v2340
        %v3619 = vpack.c.b16 %v3618, %v3617
        %v3622 = vsel %vm793, %v3614, 0
        %3624 = vmatprep.subr.bf16.mxu0 0
        %3625 = vmatpush1.bf16.msra.mxu0 %v3619
        %3626 = vmatprep.subr.bf16.mxu0 0
        %3627 = vmatpush1.bf16.msra.mxu0 0
        %3628 = vmatprep.subr.bf16.mxu0 0
        %3629 = vmatpush1.bf16.msra.mxu0 0
        %3630 = vmatprep.subr.bf16.mxu0 0
        %3631 = vmatpush1.bf16.msra.mxu0 0
        %3632 = vmatprep.subr.bf16.mxu0 0
        %3633 = vmatpush1.bf16.msra.mxu0 0
        %3634 = vmatprep.subr.bf16.mxu0 0
        %3635 = vmatpush1.bf16.msra.mxu0 0
        %3636 = vmatprep.subr.bf16.mxu0 0
        %3637 = vmatpush1.bf16.msra.mxu0 0
        %3638 = vmatprep.subr.bf16.mxu0 0
        %3639 = vmatpush1.bf16.msra.mxu0 0
        %3640 = vmatprep.subr.bf16.mxu0 0
        %3641 = vmatpush1.bf16.msra.mxu0 0
        %3642 = vmatprep.subr.bf16.mxu0 0
        %3643 = vmatpush1.bf16.msra.mxu0 0
        %3644 = vmatprep.subr.bf16.mxu0 0
        %3645 = vmatpush1.bf16.msra.mxu0 0
        %3646 = vmatprep.subr.bf16.mxu0 0
        %3647 = vmatpush1.bf16.msra.mxu0 0
        %3648 = vmatprep.subr.bf16.mxu0 0
        %3649 = vmatpush1.bf16.msra.mxu0 0
        %3650 = vmatprep.subr.bf16.mxu0 0
        %3651 = vmatpush1.bf16.msra.mxu0 0
        %3652 = vmatprep.subr.bf16.mxu0 0
        %3653 = vmatpush1.bf16.msra.mxu0 0
        %3654 = vmatprep.subr.bf16.mxu0 0
        %3655 = vmatpush1.bf16.msra.mxu0 0
        %3656 = vmatprep.mubr.bf16.mxu0 0
        %3657 = vmatmul.mubr.bf16.gmra.mrb[0].mxu0 %v3622
        %v3658 = vpop.f32.mrb[0].mxu0
        %v3659 = vadd.f32 0.0, %v3658
        %v3660 = vpop.f32.mrb[0].mxu0
        %v3661 = vpop.f32.mrb[0].mxu0
        %v3662 = vpop.f32.mrb[0].mxu0
        %3663 = vdwg.mxu0
        %v3664 = vadd.f32 %v3501, %v3659
        %3665 = vrot.lane.b32.xlu0 %v2526, 16
        %v3666 = vpop.permute.xlu0 %3665
        %3667 = vrot.lane.b32.xlu0 %v2527, 16
        %v3668 = vpop.permute.xlu0 %3667
        %v3670 = vsel %vm793, %v3666, 0
        %v3673 = vsel %vm793, %v3668, 0
        %3675 = vmatprep.subr.bf16.mxu0 0
        %3676 = vmatpush1.bf16.xpose.msra.mxu0 %v3673
        %3677 = vmatprep.subr.bf16.mxu0 0
        %3678 = vmatpush1.bf16.xpose.msra.mxu0 0
        %3679 = vmatprep.subr.bf16.mxu0 0
        %3680 = vmatpush1.bf16.xpose.msra.mxu0 0
        %3681 = vmatprep.subr.bf16.mxu0 0
        %3682 = vmatpush1.bf16.xpose.msra.mxu0 0
        %3683 = vmatprep.subr.bf16.mxu0 0
        %3684 = vmatpush1.bf16.xpose.msra.mxu0 0
        %3685 = vmatprep.subr.bf16.mxu0 0
        %3686 = vmatpush1.bf16.xpose.msra.mxu0 0
        %3687 = vmatprep.subr.bf16.mxu0 0
        %3688 = vmatpush1.bf16.xpose.msra.mxu0 0
        %3689 = vmatprep.subr.bf16.mxu0 0
        %3690 = vmatpush1.bf16.xpose.msra.mxu0 0
        %3691 = vmatprep.subr.bf16.mxu0 0
        %3692 = vmatpush1.bf16.xpose.msra.mxu0 0
        %3693 = vmatprep.subr.bf16.mxu0 0
        %3694 = vmatpush1.bf16.xpose.msra.mxu0 0
        %3695 = vmatprep.subr.bf16.mxu0 0
        %3696 = vmatpush1.bf16.xpose.msra.mxu0 0
        %3697 = vmatprep.subr.bf16.mxu0 0
        %3698 = vmatpush1.bf16.xpose.msra.mxu0 0
        %3699 = vmatprep.subr.bf16.mxu0 0
        %3700 = vmatpush1.bf16.xpose.msra.mxu0 0
        %3701 = vmatprep.subr.bf16.mxu0 0
        %3702 = vmatpush1.bf16.xpose.msra.mxu0 0
        %3703 = vmatprep.subr.bf16.mxu0 0
        %3704 = vmatpush1.bf16.xpose.msra.mxu0 0
        %3705 = vmatprep.subr.bf16.mxu0 0
        %3706 = vmatpush1.bf16.xpose.msra.mxu0 0
        %3707 = vmatprep.mubr.bf16.mxu0 0
        %3708 = vmatmul.mubr.bf16.gmra.mrb[0].mxu0 %v3670
        %v3709 = vpop.f32.mrb[0].mxu0
        %v3710 = vadd.f32 0.0, %v3709
        %v3711 = vpop.f32.mrb[0].mxu0
        %v3712 = vpop.f32.mrb[0].mxu0
        %v3713 = vpop.f32.mrb[0].mxu0
        %3714 = vdwg.mxu0
        %v3715 = vmul.f32 %v3710, 0.25
        %v3716 = vadd.f32 %v3715, %v845
        %v3717 = vsel %vm848, %v3716, -inf
        %3718 = vmax.xlane.f32.xlu0 %v3717
        %v3719 = vpop.xlane.xlu0 %3718
        %v3720 = vsub.f32 %v3716, %v3719
        %v3721 = vmul.f32 %v3720, 1.442695
        %v3722 = vpow.pop %v3721
        %v3723 = vsel %vm848, %v3722, 0.0
        %3724 = vadd.xlane.f32.xlu0 %v3723
        %v3725 = vpop.xlane.xlu0 %3724
        %v3726 = vrcp.pop %v3725
        %v3727 = vmul.f32 %v3722, %v3726
        %v3728 = vpack.c.bf16 %v3727, %v3727
        %3729 = vrot.lane.b32.xlu0 %v2528, 16
        %v3730 = vpop.permute.xlu0 %3729
        %v3732 = vsel %vm848, %v3728, 0
        %v3735 = vsel %vm864, %v3730, 0
        %3737 = vmatprep.subr.bf16.mxu0 0
        %3738 = vmatpush1.bf16.msra.mxu0 %v3735
        %3739 = vmatprep.subr.bf16.mxu0 0
        %3740 = vmatpush1.bf16.msra.mxu0 0
        %3741 = vmatprep.subr.bf16.mxu0 0
        %3742 = vmatpush1.bf16.msra.mxu0 0
        %3743 = vmatprep.subr.bf16.mxu0 0
        %3744 = vmatpush1.bf16.msra.mxu0 0
        %3745 = vmatprep.subr.bf16.mxu0 0
        %3746 = vmatpush1.bf16.msra.mxu0 0
        %3747 = vmatprep.subr.bf16.mxu0 0
        %3748 = vmatpush1.bf16.msra.mxu0 0
        %3749 = vmatprep.subr.bf16.mxu0 0
        %3750 = vmatpush1.bf16.msra.mxu0 0
        %3751 = vmatprep.subr.bf16.mxu0 0
        %3752 = vmatpush1.bf16.msra.mxu0 0
        %3753 = vmatprep.subr.bf16.mxu0 0
        %3754 = vmatpush1.bf16.msra.mxu0 0
        %3755 = vmatprep.subr.bf16.mxu0 0
        %3756 = vmatpush1.bf16.msra.mxu0 0
        %3757 = vmatprep.subr.bf16.mxu0 0
        %3758 = vmatpush1.bf16.msra.mxu0 0
        %3759 = vmatprep.subr.bf16.mxu0 0
        %3760 = vmatpush1.bf16.msra.mxu0 0
        %3761 = vmatprep.subr.bf16.mxu0 0
        %3762 = vmatpush1.bf16.msra.mxu0 0
        %3763 = vmatprep.subr.bf16.mxu0 0
        %3764 = vmatpush1.bf16.msra.mxu0 0
        %3765 = vmatprep.subr.bf16.mxu0 0
        %3766 = vmatpush1.bf16.msra.mxu0 0
        %3767 = vmatprep.subr.bf16.mxu0 0
        %3768 = vmatpush1.bf16.msra.mxu0 0
        %3769 = vmatprep.mubr.bf16.mxu0 0
        %3770 = vmatmul.mubr.bf16.gmra.mrb[0].mxu0 %v3732
        %v3771 = vpop.f32.mrb[0].mxu0
        %v3772 = vadd.f32 0.0, %v3771
        %v3773 = vpop.f32.mrb[0].mxu0
        %v3774 = vpop.f32.mrb[0].mxu0
        %v3775 = vpop.f32.mrb[0].mxu0
        %3776 = vdwg.mxu0
        %v3777 = vpack.c.bf16 %v3772, %v3772
        %v3780 = vunpack.c.l.b16 %v2341
        %v3781 = vunpack.c.l.b16 %v2342
        %v3782 = vpack.c.b16 %v3781, %v3780
        %v3785 = vsel %vm793, %v3777, 0
        %3787 = vmatprep.subr.bf16.mxu0 0
        %3788 = vmatpush1.bf16.msra.mxu0 %v3782
        %3789 = vmatprep.subr.bf16.mxu0 0
        %3790 = vmatpush1.bf16.msra.mxu0 0
        %3791 = vmatprep.subr.bf16.mxu0 0
        %3792 = vmatpush1.bf16.msra.mxu0 0
        %3793 = vmatprep.subr.bf16.mxu0 0
        %3794 = vmatpush1.bf16.msra.mxu0 0
        %3795 = vmatprep.subr.bf16.mxu0 0
        %3796 = vmatpush1.bf16.msra.mxu0 0
        %3797 = vmatprep.subr.bf16.mxu0 0
        %3798 = vmatpush1.bf16.msra.mxu0 0
        %3799 = vmatprep.subr.bf16.mxu0 0
        %3800 = vmatpush1.bf16.msra.mxu0 0
        %3801 = vmatprep.subr.bf16.mxu0 0
        %3802 = vmatpush1.bf16.msra.mxu0 0
        %3803 = vmatprep.subr.bf16.mxu0 0
        %3804 = vmatpush1.bf16.msra.mxu0 0
        %3805 = vmatprep.subr.bf16.mxu0 0
        %3806 = vmatpush1.bf16.msra.mxu0 0
        %3807 = vmatprep.subr.bf16.mxu0 0
        %3808 = vmatpush1.bf16.msra.mxu0 0
        %3809 = vmatprep.subr.bf16.mxu0 0
        %3810 = vmatpush1.bf16.msra.mxu0 0
        %3811 = vmatprep.subr.bf16.mxu0 0
        %3812 = vmatpush1.bf16.msra.mxu0 0
        %3813 = vmatprep.subr.bf16.mxu0 0
        %3814 = vmatpush1.bf16.msra.mxu0 0
        %3815 = vmatprep.subr.bf16.mxu0 0
        %3816 = vmatpush1.bf16.msra.mxu0 0
        %3817 = vmatprep.subr.bf16.mxu0 0
        %3818 = vmatpush1.bf16.msra.mxu0 0
        %3819 = vmatprep.mubr.bf16.mxu0 0
        %3820 = vmatmul.mubr.bf16.gmra.mrb[0].mxu0 %v3785
        %v3821 = vpop.f32.mrb[0].mxu0
        %v3822 = vadd.f32 0.0, %v3821
        %v3823 = vpop.f32.mrb[0].mxu0
        %v3824 = vpop.f32.mrb[0].mxu0
        %v3825 = vpop.f32.mrb[0].mxu0
        %3826 = vdwg.mxu0
        %v3827 = vadd.f32 %v3664, %v3822
        %v3829 = vlaneseq
        %v3830 = vshrl.u32 %v3829, 7
        %v3831 = vsub.s32 0, %v3830
        %v3832 = vrot.slane %v2344, %v3831
        %v3834 = vadd.f32 %v3827, %v3832
        %v3835 = vadd.f32 %v3834, %v2306
        %s3836 = scalar_lea.vmem %s7, 1
        %v3837 = vld [vmem:[%s3836] sm:$0x1]
        %s3838 = scalar_lea.vmem %s8, 1
        %v3839 = vld [vmem:[%s3838] sm:$0x1]
        %v3840 = vsel %vm705, %v3835, 0.0
        %3841 = vadd.xlane.f32.xlu0 %v3840
        %v3842 = vpop.xlane.xlu0 %3841
        %v3843 = vmul.f32 %v3842, %v2114
        %v3844 = vsub.f32 %v3835, %v3843
        %v3845 = vmul.f32 %v3844, %v3844
        %v3846 = vsel %vm705, %v3845, 0.0
        %3847 = vadd.xlane.f32.xlu0 %v3846
        %v3848 = vpop.xlane.xlu0 %3847
        %v3849 = vmul.f32 %v3848, %v2114
        %v3850 = vadd.f32 %v3849, 1e-05
        %v3851 = vrsqrt.pop %v3850
        %v3852 = vmul.f32 %v3844, %v3851
        %v3854 = vlaneseq
        %v3855 = vshrl.u32 %v3854, 7
        %v3856 = vsub.s32 0, %v3855
        %v3857 = vrot.slane %v3837, %v3856
        %v3859 = vmul.f32 %v3852, %v3857
        %v3861 = vlaneseq
        %v3862 = vshrl.u32 %v3861, 7
        %v3863 = vsub.s32 0, %v3862
        %v3864 = vrot.slane %v3839, %v3863
        %v3866 = vadd.f32 %v3859, %v3864
        %v3867 = vmul.f32 %v3866, %v2142
        %v3868 = vpack.c.bf16 %v3867, %v3867
        %v3870 = vlaneseq
        %v3871 = vshrl.u32 %v3870, 7
        %v3872 = vsub.s32 0, %v3871
        %v3873 = vrot.slane %v2355, %v3872
        %v3883 = vunpack.c.l.b16 %v2346
        %v3884 = vunpack.c.l.b16 %v2347
        %v3885 = vunpack.c.l.b16 %v2348
        %v3886 = vunpack.c.l.b16 %v2349
        %v3887 = vunpack.c.l.b16 %v2350
        %v3888 = vunpack.c.l.b16 %v2351
        %v3889 = vunpack.c.l.b16 %v2352
        %v3890 = vunpack.c.l.b16 %v2353
        %v3891 = vpack.c.b16 %v3884, %v3883
        %v3892 = vpack.c.b16 %v3886, %v3885
        %v3893 = vpack.c.b16 %v3888, %v3887
        %v3894 = vpack.c.b16 %v3890, %v3889
        %v3900 = vsel %vm705, %v3868, 0
        %3902 = vmatprep.subr.bf16.mxu0 0
        %3903 = vmatpush1.bf16.msra.mxu0 %v3891
        %3904 = vmatprep.subr.bf16.mxu0 0
        %3905 = vmatpush1.bf16.msra.mxu0 %v3892
        %3906 = vmatprep.subr.bf16.mxu0 0
        %3907 = vmatpush1.bf16.msra.mxu0 %v3893
        %3908 = vmatprep.subr.bf16.mxu0 0
        %3909 = vmatpush1.bf16.msra.mxu0 %v3894
        %3910 = vmatprep.subr.bf16.mxu0 0
        %3911 = vmatpush1.bf16.msra.mxu0 0
        %3912 = vmatprep.subr.bf16.mxu0 0
        %3913 = vmatpush1.bf16.msra.mxu0 0
        %3914 = vmatprep.subr.bf16.mxu0 0
        %3915 = vmatpush1.bf16.msra.mxu0 0
        %3916 = vmatprep.subr.bf16.mxu0 0
        %3917 = vmatpush1.bf16.msra.mxu0 0
        %3918 = vmatprep.subr.bf16.mxu0 0
        %3919 = vmatpush1.bf16.msra.mxu0 0
        %3920 = vmatprep.subr.bf16.mxu0 0
        %3921 = vmatpush1.bf16.msra.mxu0 0
        %3922 = vmatprep.subr.bf16.mxu0 0
        %3923 = vmatpush1.bf16.msra.mxu0 0
        %3924 = vmatprep.subr.bf16.mxu0 0
        %3925 = vmatpush1.bf16.msra.mxu0 0
        %3926 = vmatprep.subr.bf16.mxu0 0
        %3927 = vmatpush1.bf16.msra.mxu0 0
        %3928 = vmatprep.subr.bf16.mxu0 0
        %3929 = vmatpush1.bf16.msra.mxu0 0
        %3930 = vmatprep.subr.bf16.mxu0 0
        %3931 = vmatpush1.bf16.msra.mxu0 0
        %3932 = vmatprep.subr.bf16.mxu0 0
        %3933 = vmatpush1.bf16.msra.mxu0 0
        %3934 = vmatprep.mubr.bf16.mxu0 0
        %3935 = vmatmul.mubr.bf16.gmra.mrb[0].mxu0 %v3900
        %v3936 = vpop.f32.mrb[0].mxu0
        %v3937 = vadd.f32 %v3873, %v3936
        %v3938 = vpop.f32.mrb[0].mxu0
        %v3939 = vpop.f32.mrb[0].mxu0
        %v3940 = vpop.f32.mrb[0].mxu0
        %3941 = vdwg.mxu0
        %v3942 = vmax.f32 %v3937, 0.0
        %v3943 = vpack.c.bf16 %v3942, %v3942
        %v3945 = vlaneseq
        %v3946 = vshrl.u32 %v3945, 7
        %v3947 = vsub.s32 0, %v3946
        %v3948 = vrot.slane %v2360, %v3947
        %v3952 = vunpack.c.l.b16 %v2357
        %v3953 = vunpack.c.l.b16 %v2358
        %v3954 = vpack.c.b16 %v3953, %v3952
        %v3957 = vsel %vm793, %v3943, 0
        %3959 = vmatprep.subr.bf16.mxu0 0
        %3960 = vmatpush1.bf16.msra.mxu0 %v3954
        %3961 = vmatprep.subr.bf16.mxu0 0
        %3962 = vmatpush1.bf16.msra.mxu0 0
        %3963 = vmatprep.subr.bf16.mxu0 0
        %3964 = vmatpush1.bf16.msra.mxu0 0
        %3965 = vmatprep.subr.bf16.mxu0 0
        %3966 = vmatpush1.bf16.msra.mxu0 0
        %3967 = vmatprep.subr.bf16.mxu0 0
        %3968 = vmatpush1.bf16.msra.mxu0 0
        %3969 = vmatprep.subr.bf16.mxu0 0
        %3970 = vmatpush1.bf16.msra.mxu0 0
        %3971 = vmatprep.subr.bf16.mxu0 0
        %3972 = vmatpush1.bf16.msra.mxu0 0
        %3973 = vmatprep.subr.bf16.mxu0 0
        %3974 = vmatpush1.bf16.msra.mxu0 0
        %3975 = vmatprep.subr.bf16.mxu0 0
        %3976 = vmatpush1.bf16.msra.mxu0 0
        %3977 = vmatprep.subr.bf16.mxu0 0
        %3978 = vmatpush1.bf16.msra.mxu0 0
        %3979 = vmatprep.subr.bf16.mxu0 0
        %3980 = vmatpush1.bf16.msra.mxu0 0
        %3981 = vmatprep.subr.bf16.mxu0 0
        %3982 = vmatpush1.bf16.msra.mxu0 0
        %3983 = vmatprep.subr.bf16.mxu0 0
        %3984 = vmatpush1.bf16.msra.mxu0 0
        %3985 = vmatprep.subr.bf16.mxu0 0
        %3986 = vmatpush1.bf16.msra.mxu0 0
        %3987 = vmatprep.subr.bf16.mxu0 0
        %3988 = vmatpush1.bf16.msra.mxu0 0
        %3989 = vmatprep.subr.bf16.mxu0 0
        %3990 = vmatpush1.bf16.msra.mxu0 0
        %3991 = vmatprep.mubr.bf16.mxu0 0
        %3992 = vmatmul.mubr.bf16.gmra.mrb[0].mxu0 %v3957
        %v3993 = vpop.f32.mrb[0].mxu0
        %v3994 = vadd.f32 %v3948, %v3993
        %v3995 = vpop.f32.mrb[0].mxu0
        %v3996 = vpop.f32.mrb[0].mxu0
        %v3997 = vpop.f32.mrb[0].mxu0
        %3998 = vdwg.mxu0
        %v3999 = vadd.f32 %v3994, %v3867
        %s4000 = scalar_lea.vmem %s13, 1
        %v4001 = vld [vmem:[%s4000] sm:$0x1]
        %s4002 = scalar_lea.vmem %s14, 1
        %v4003 = vld [vmem:[%s4002] sm:$0x1]
        %v4004 = vsel %vm705, %v3999, 0.0
        %4005 = vadd.xlane.f32.xlu0 %v4004
        %v4006 = vpop.xlane.xlu0 %4005
        %v4007 = vmul.f32 %v4006, %v2114
        %v4008 = vsub.f32 %v3999, %v4007
        %v4009 = vmul.f32 %v4008, %v4008
        %v4010 = vsel %vm705, %v4009, 0.0
        %4011 = vadd.xlane.f32.xlu0 %v4010
        %v4012 = vpop.xlane.xlu0 %4011
        %v4013 = vmul.f32 %v4012, %v2114
        %v4014 = vadd.f32 %v4013, 1e-05
        %v4015 = vrsqrt.pop %v4014
        %v4016 = vmul.f32 %v4008, %v4015
        %v4018 = vlaneseq
        %v4019 = vshrl.u32 %v4018, 7
        %v4020 = vsub.s32 0, %v4019
        %v4021 = vrot.slane %v4001, %v4020
        %v4023 = vmul.f32 %v4016, %v4021
        %v4025 = vlaneseq
        %v4026 = vshrl.u32 %v4025, 7
        %v4027 = vsub.s32 0, %v4026
        %v4028 = vrot.slane %v4003, %v4027
        %v4030 = vadd.f32 %v4023, %v4028
        %v4031 = vmul.f32 %v4030, %v2142
        %s4032 = scalar_lea.vmem %s3, 192
        %v4033 = vld [vmem:[%s4032] sm:$0xff]
        %v4034 = vld [vmem:[%s4032 + $0x8] sm:$0xf]
        %v4035 = vld [vmem:[%s4032 + $0xc] sm:$0xff]
        %v4036 = vld [vmem:[%s4032 + $0x14] sm:$0xf]
        %v4037 = vld [vmem:[%s4032 + $0x18] sm:$0xff]
        %v4038 = vld [vmem:[%s4032 + $0x20] sm:$0xf]
        %v4039 = vld [vmem:[%s4032 + $0x24] sm:$0xff]
        %v4040 = vld [vmem:[%s4032 + $0x2c] sm:$0xf]
        %v4041 = vld [vmem:[%s4032 + $0x30] sm:$0xff]
        %v4042 = vld [vmem:[%s4032 + $0x38] sm:$0xf]
        %v4043 = vld [vmem:[%s4032 + $0x3c] sm:$0xff]
        %v4044 = vld [vmem:[%s4032 + $0x44] sm:$0xf]
        %v4045 = vld [vmem:[%s4032 + $0x48] sm:$0xff]
        %v4046 = vld [vmem:[%s4032 + $0x50] sm:$0xf]
        %v4047 = vld [vmem:[%s4032 + $0x54] sm:$0xff]
        %v4048 = vld [vmem:[%s4032 + $0x5c] sm:$0xf]
        %s4049 = scalar_lea.vmem %s4, 6
        %v4050 = vld [vmem:[%s4049] sm:$0x7]
        %s4051 = scalar_lea.vmem %s5, 128
        %v4052 = vld [vmem:[%s4051] sm:$0xf]
        %v4053 = vld [vmem:[%s4051 + $0x4] sm:$0xf]
        %v4054 = vld [vmem:[%s4051 + $0x8] sm:$0xf]
        %v4055 = vld [vmem:[%s4051 + $0xc] sm:$0xf]
        %v4056 = vld [vmem:[%s4051 + $0x10] sm:$0xf]
        %v4057 = vld [vmem:[%s4051 + $0x14] sm:$0xf]
        %v4058 = vld [vmem:[%s4051 + $0x18] sm:$0xf]
        %v4059 = vld [vmem:[%s4051 + $0x1c] sm:$0xf]
        %v4060 = vld [vmem:[%s4051 + $0x20] sm:$0xf]
        %v4061 = vld [vmem:[%s4051 + $0x24] sm:$0xf]
        %v4062 = vld [vmem:[%s4051 + $0x28] sm:$0xf]
        %v4063 = vld [vmem:[%s4051 + $0x2c] sm:$0xf]
        %v4064 = vld [vmem:[%s4051 + $0x30] sm:$0xf]
        %v4065 = vld [vmem:[%s4051 + $0x34] sm:$0xf]
        %v4066 = vld [vmem:[%s4051 + $0x38] sm:$0xf]
        %v4067 = vld [vmem:[%s4051 + $0x3c] sm:$0xf]
        %s4068 = scalar_lea.vmem %s6, 2
        %v4069 = vld [vmem:[%s4068] sm:$0x1]
        %s4070 = scalar_lea.vmem %s9, 64
        %v4071 = vld [vmem:[%s4070] sm:$0xf]
        %v4072 = vld [vmem:[%s4070 + $0x4] sm:$0xf]
        %v4073 = vld [vmem:[%s4070 + $0x8] sm:$0xf]
        %v4074 = vld [vmem:[%s4070 + $0xc] sm:$0xf]
        %v4075 = vld [vmem:[%s4070 + $0x10] sm:$0xf]
        %v4076 = vld [vmem:[%s4070 + $0x14] sm:$0xf]
        %v4077 = vld [vmem:[%s4070 + $0x18] sm:$0xf]
        %v4078 = vld [vmem:[%s4070 + $0x1c] sm:$0xf]
        %s4079 = scalar_lea.vmem %s10, 2
        %v4080 = vld [vmem:[%s4079] sm:$0x1]
        %s4081 = scalar_lea.vmem %s11, 16
        %v4082 = vld [vmem:[%s4081] sm:$0xf]
        %v4083 = vld [vmem:[%s4081 + $0x4] sm:$0xf]
        %s4084 = scalar_lea.vmem %s12, 2
        %v4085 = vld [vmem:[%s4084] sm:$0x1]
        %v4086 = vpack.c.bf16 %v4031, %v4031
        %v4088 = vlaneseq
        %v4089 = vshrl.u32 %v4088, 7
        %v4090 = vsub.s32 0, %v4089
        %v4091 = vrot.slane %v4050, %v4090
        %v4092 = vlaneseq
        %v4093 = vshrl.u32 %v4092, 7
        %v4094 = vsub.s32 1, %v4093
        %v4095 = vrot.slane %v4050, %v4094
        %v4096 = vlaneseq
        %v4097 = vshrl.u32 %v4096, 7
        %v4098 = vsub.s32 2, %v4097
        %v4099 = vrot.slane %v4050, %v4098
        %v4119 = vunpack.c.l.b16 %v4033
        %v4120 = vunpack.c.h.b16 %v4033
        %v4121 = vunpack.c.l.b16 %v4034
        %v4122 = vunpack.c.l.b16 %v4035
        %v4123 = vunpack.c.h.b16 %v4035
        %v4124 = vunpack.c.l.b16 %v4036
        %v4125 = vunpack.c.l.b16 %v4037
        %v4126 = vunpack.c.h.b16 %v4037
        %v4127 = vunpack.c.l.b16 %v4038
        %v4128 = vunpack.c.l.b16 %v4039
        %v4129 = vunpack.c.h.b16 %v4039
        %v4130 = vunpack.c.l.b16 %v4040
        %v4131 = vunpack.c.l.b16 %v4041
        %v4132 = vunpack.c.h.b16 %v4041
        %v4133 = vunpack.c.l.b16 %v4042
        %v4134 = vunpack.c.l.b16 %v4043
        %v4135 = vunpack.c.h.b16 %v4043
        %v4136 = vunpack.c.l.b16 %v4044
        %v4137 = vunpack.c.l.b16 %v4045
        %v4138 = vunpack.c.h.b16 %v4045
        %v4139 = vunpack.c.l.b16 %v4046
        %v4140 = vunpack.c.l.b16 %v4047
        %v4141 = vunpack.c.h.b16 %v4047
        %v4142 = vunpack.c.l.b16 %v4048
        %v4143 = vpack.c.b16 %v4122, %v4119
        %v4144 = vpack.c.b16 %v4123, %v4120
        %v4145 = vpack.c.b16 %v4124, %v4121
        %v4146 = vpack.c.b16 %v4128, %v4125
        %v4147 = vpack.c.b16 %v4129, %v4126
        %v4148 = vpack.c.b16 %v4130, %v4127
        %v4149 = vpack.c.b16 %v4134, %v4131
        %v4150 = vpack.c.b16 %v4135, %v4132
        %v4151 = vpack.c.b16 %v4136, %v4133
        %v4152 = vpack.c.b16 %v4140, %v4137
        %v4153 = vpack.c.b16 %v4141, %v4138
        %v4154 = vpack.c.b16 %v4142, %v4139
        %v4168 = vsel %vm705, %v4086, 0
        %4170 = vmatprep.subr.bf16.mxu0 %v4144
        %4171 = vmatpush1.bf16.msra.mxu0 %v4143
        %4172 = vmatprep.subr.bf16.mxu0 %v4147
        %4173 = vmatpush1.bf16.msra.mxu0 %v4146
        %4174 = vmatprep.subr.bf16.mxu0 %v4150
        %4175 = vmatpush1.bf16.msra.mxu0 %v4149
        %4176 = vmatprep.subr.bf16.mxu0 %v4153
        %4177 = vmatpush1.bf16.msra.mxu0 %v4152
        %4178 = vmatprep.subr.bf16.mxu0 0
        %4179 = vmatpush1.bf16.msra.mxu0 0
        %4180 = vmatprep.subr.bf16.mxu0 0
        %4181 = vmatpush1.bf16.msra.mxu0 0
        %4182 = vmatprep.subr.bf16.mxu0 0
        %4183 = vmatpush1.bf16.msra.mxu0 0
        %4184 = vmatprep.subr.bf16.mxu0 0
        %4185 = vmatpush1.bf16.msra.mxu0 0
        %4186 = vmatprep.subr.bf16.mxu0 0
        %4187 = vmatpush1.bf16.msra.mxu0 0
        %4188 = vmatprep.subr.bf16.mxu0 0
        %4189 = vmatpush1.bf16.msra.mxu0 0
        %4190 = vmatprep.subr.bf16.mxu0 0
        %4191 = vmatpush1.bf16.msra.mxu0 0
        %4192 = vmatprep.subr.bf16.mxu0 0
        %4193 = vmatpush1.bf16.msra.mxu0 0
        %4194 = vmatprep.subr.bf16.mxu0 0
        %4195 = vmatpush1.bf16.msra.mxu0 0
        %4196 = vmatprep.subr.bf16.mxu0 0
        %4197 = vmatpush1.bf16.msra.mxu0 0
        %4198 = vmatprep.subr.bf16.mxu0 0
        %4199 = vmatpush1.bf16.msra.mxu0 0
        %4200 = vmatprep.subr.bf16.mxu0 0
        %4201 = vmatpush1.bf16.msra.mxu0 0
        %4202 = vmatprep.mubr.bf16.mxu0 0
        %4203 = vmatmul.mubr.bf16.gmra.mrb[0].mxu0 %v4168
        %v4204 = vpop.f32.mrb[0].mxu0
        %v4205 = vadd.f32 %v4091, %v4204
        %v4206 = vpop.f32.mrb[0].mxu0
        %v4207 = vadd.f32 %v4095, %v4206
        %v4208 = vpop.f32.mrb[0].mxu0
        %v4209 = vpop.f32.mrb[0].mxu0
        %4210 = vdwg.mxu0
        %4211 = vmatprep.subr.bf16.mxu0 0
        %4212 = vmatpush1.bf16.msra.mxu0 %v4145
        %4213 = vmatprep.subr.bf16.mxu0 0
        %4214 = vmatpush1.bf16.msra.mxu0 %v4148
        %4215 = vmatprep.subr.bf16.mxu0 0
        %4216 = vmatpush1.bf16.msra.mxu0 %v4151
        %4217 = vmatprep.subr.bf16.mxu0 0
        %4218 = vmatpush1.bf16.msra.mxu0 %v4154
        %4219 = vmatprep.subr.bf16.mxu0 0
        %4220 = vmatpush1.bf16.msra.mxu0 0
        %4221 = vmatprep.subr.bf16.mxu0 0
        %4222 = vmatpush1.bf16.msra.mxu0 0
        %4223 = vmatprep.subr.bf16.mxu0 0
        %4224 = vmatpush1.bf16.msra.mxu0 0
        %4225 = vmatprep.subr.bf16.mxu0 0
        %4226 = vmatpush1.bf16.msra.mxu0 0
        %4227 = vmatprep.subr.bf16.mxu0 0
        %4228 = vmatpush1.bf16.msra.mxu0 0
        %4229 = vmatprep.subr.bf16.mxu0 0
        %4230 = vmatpush1.bf16.msra.mxu0 0
        %4231 = vmatprep.subr.bf16.mxu0 0
        %4232 = vmatpush1.bf16.msra.mxu0 0
        %4233 = vmatprep.subr.bf16.mxu0 0
        %4234 = vmatpush1.bf16.msra.mxu0 0
        %4235 = vmatprep.subr.bf16.mxu0 0
        %4236 = vmatpush1.bf16.msra.mxu0 0
        %4237 = vmatprep.subr.bf16.mxu0 0
        %4238 = vmatpush1.bf16.msra.mxu0 0
        %4239 = vmatprep.subr.bf16.mxu0 0
        %4240 = vmatpush1.bf16.msra.mxu0 0
        %4241 = vmatprep.subr.bf16.mxu0 0
        %4242 = vmatpush1.bf16.msra.mxu0 0
        %4243 = vmatprep.mubr.bf16.mxu0 0
        %4244 = vmatmul.mubr.bf16.gmra.mrb[0].mxu0 %v4168
        %v4245 = vpop.f32.mrb[0].mxu0
        %v4246 = vadd.f32 %v4099, %v4245
        %v4247 = vpop.f32.mrb[0].mxu0
        %v4248 = vpop.f32.mrb[0].mxu0
        %v4249 = vpop.f32.mrb[0].mxu0
        %4250 = vdwg.mxu0
        %v4251 = vpack.c.bf16 %v4205, %v4205
        %v4252 = vpack.c.bf16 %v4207, %v4207
        %v4253 = vpack.c.bf16 %v4246, %v4246
        %v4255 = vsel %vm793, %v4251, 0
        %v4258 = vsel %vm793, %v4252, 0
        %4260 = vmatprep.subr.bf16.mxu0 0
        %4261 = vmatpush1.bf16.xpose.msra.mxu0 %v4258
        %4262 = vmatprep.subr.bf16.mxu0 0
        %4263 = vmatpush1.bf16.xpose.msra.mxu0 0
        %4264 = vmatprep.subr.bf16.mxu0 0
        %4265 = vmatpush1.bf16.xpose.msra.mxu0 0
        %4266 = vmatprep.subr.bf16.mxu0 0
        %4267 = vmatpush1.bf16.xpose.msra.mxu0 0
        %4268 = vmatprep.subr.bf16.mxu0 0
        %4269 = vmatpush1.bf16.xpose.msra.mxu0 0
        %4270 = vmatprep.subr.bf16.mxu0 0
        %4271 = vmatpush1.bf16.xpose.msra.mxu0 0
        %4272 = vmatprep.subr.bf16.mxu0 0
        %4273 = vmatpush1.bf16.xpose.msra.mxu0 0
        %4274 = vmatprep.subr.bf16.mxu0 0
        %4275 = vmatpush1.bf16.xpose.msra.mxu0 0
        %4276 = vmatprep.subr.bf16.mxu0 0
        %4277 = vmatpush1.bf16.xpose.msra.mxu0 0
        %4278 = vmatprep.subr.bf16.mxu0 0
        %4279 = vmatpush1.bf16.xpose.msra.mxu0 0
        %4280 = vmatprep.subr.bf16.mxu0 0
        %4281 = vmatpush1.bf16.xpose.msra.mxu0 0
        %4282 = vmatprep.subr.bf16.mxu0 0
        %4283 = vmatpush1.bf16.xpose.msra.mxu0 0
        %4284 = vmatprep.subr.bf16.mxu0 0
        %4285 = vmatpush1.bf16.xpose.msra.mxu0 0
        %4286 = vmatprep.subr.bf16.mxu0 0
        %4287 = vmatpush1.bf16.xpose.msra.mxu0 0
        %4288 = vmatprep.subr.bf16.mxu0 0
        %4289 = vmatpush1.bf16.xpose.msra.mxu0 0
        %4290 = vmatprep.subr.bf16.mxu0 0
        %4291 = vmatpush1.bf16.xpose.msra.mxu0 0
        %4292 = vmatprep.mubr.bf16.mxu0 0
        %4293 = vmatmul.mubr.bf16.gmra.mrb[0].mxu0 %v4255
        %v4294 = vpop.f32.mrb[0].mxu0
        %v4295 = vadd.f32 0.0, %v4294
        %v4296 = vpop.f32.mrb[0].mxu0
        %v4297 = vpop.f32.mrb[0].mxu0
        %v4298 = vpop.f32.mrb[0].mxu0
        %4299 = vdwg.mxu0
        %v4300 = vmul.f32 %v4295, 0.25
        %v4301 = vadd.f32 %v4300, %v845
        %v4302 = vsel %vm848, %v4301, -inf
        %4303 = vmax.xlane.f32.xlu0 %v4302
        %v4304 = vpop.xlane.xlu0 %4303
        %v4305 = vsub.f32 %v4301, %v4304
        %v4306 = vmul.f32 %v4305, 1.442695
        %v4307 = vpow.pop %v4306
        %v4308 = vsel %vm848, %v4307, 0.0
        %4309 = vadd.xlane.f32.xlu0 %v4308
        %v4310 = vpop.xlane.xlu0 %4309
        %v4311 = vrcp.pop %v4310
        %v4312 = vmul.f32 %v4307, %v4311
        %v4313 = vpack.c.bf16 %v4312, %v4312
        %v4315 = vsel %vm848, %v4313, 0
        %v4318 = vsel %vm864, %v4253, 0
        %4320 = vmatprep.subr.bf16.mxu0 0
        %4321 = vmatpush1.bf16.msra.mxu0 %v4318
        %4322 = vmatprep.subr.bf16.mxu0 0
        %4323 = vmatpush1.bf16.msra.mxu0 0
        %4324 = vmatprep.subr.bf16.mxu0 0
        %4325 = vmatpush1.bf16.msra.mxu0 0
        %4326 = vmatprep.subr.bf16.mxu0 0
        %4327 = vmatpush1.bf16.msra.mxu0 0
        %4328 = vmatprep.subr.bf16.mxu0 0
        %4329 = vmatpush1.bf16.msra.mxu0 0
        %4330 = vmatprep.subr.bf16.mxu0 0
        %4331 = vmatpush1.bf16.msra.mxu0 0
        %4332 = vmatprep.subr.bf16.mxu0 0
        %4333 = vmatpush1.bf16.msra.mxu0 0
        %4334 = vmatprep.subr.bf16.mxu0 0
        %4335 = vmatpush1.bf16.msra.mxu0 0
        %4336 = vmatprep.subr.bf16.mxu0 0
        %4337 = vmatpush1.bf16.msra.mxu0 0
        %4338 = vmatprep.subr.bf16.mxu0 0
        %4339 = vmatpush1.bf16.msra.mxu0 0
        %4340 = vmatprep.subr.bf16.mxu0 0
        %4341 = vmatpush1.bf16.msra.mxu0 0
        %4342 = vmatprep.subr.bf16.mxu0 0
        %4343 = vmatpush1.bf16.msra.mxu0 0
        %4344 = vmatprep.subr.bf16.mxu0 0
        %4345 = vmatpush1.bf16.msra.mxu0 0
        %4346 = vmatprep.subr.bf16.mxu0 0
        %4347 = vmatpush1.bf16.msra.mxu0 0
        %4348 = vmatprep.subr.bf16.mxu0 0
        %4349 = vmatpush1.bf16.msra.mxu0 0
        %4350 = vmatprep.subr.bf16.mxu0 0
        %4351 = vmatpush1.bf16.msra.mxu0 0
        %4352 = vmatprep.mubr.bf16.mxu0 0
        %4353 = vmatmul.mubr.bf16.gmra.mrb[0].mxu0 %v4315
        %v4354 = vpop.f32.mrb[0].mxu0
        %v4355 = vadd.f32 0.0, %v4354
        %v4356 = vpop.f32.mrb[0].mxu0
        %v4357 = vpop.f32.mrb[0].mxu0
        %v4358 = vpop.f32.mrb[0].mxu0
        %4359 = vdwg.mxu0
        %v4360 = vpack.c.bf16 %v4355, %v4355
        %4362 = vrot.lane.b32.xlu0 %v4251, 112
        %v4363 = vpop.permute.xlu0 %4362
        %4365 = vrot.lane.b32.xlu0 %v4252, 112
        %v4366 = vpop.permute.xlu0 %4365
        %v4368 = vsel %vm793, %v4363, 0
        %v4371 = vsel %vm793, %v4366, 0
        %4373 = vmatprep.subr.bf16.mxu0 0
        %4374 = vmatpush1.bf16.xpose.msra.mxu0 %v4371
        %4375 = vmatprep.subr.bf16.mxu0 0
        %4376 = vmatpush1.bf16.xpose.msra.mxu0 0
        %4377 = vmatprep.subr.bf16.mxu0 0
        %4378 = vmatpush1.bf16.xpose.msra.mxu0 0
        %4379 = vmatprep.subr.bf16.mxu0 0
        %4380 = vmatpush1.bf16.xpose.msra.mxu0 0
        %4381 = vmatprep.subr.bf16.mxu0 0
        %4382 = vmatpush1.bf16.xpose.msra.mxu0 0
        %4383 = vmatprep.subr.bf16.mxu0 0
        %4384 = vmatpush1.bf16.xpose.msra.mxu0 0
        %4385 = vmatprep.subr.bf16.mxu0 0
        %4386 = vmatpush1.bf16.xpose.msra.mxu0 0
        %4387 = vmatprep.subr.bf16.mxu0 0
        %4388 = vmatpush1.bf16.xpose.msra.mxu0 0
        %4389 = vmatprep.subr.bf16.mxu0 0
        %4390 = vmatpush1.bf16.xpose.msra.mxu0 0
        %4391 = vmatprep.subr.bf16.mxu0 0
        %4392 = vmatpush1.bf16.xpose.msra.mxu0 0
        %4393 = vmatprep.subr.bf16.mxu0 0
        %4394 = vmatpush1.bf16.xpose.msra.mxu0 0
        %4395 = vmatprep.subr.bf16.mxu0 0
        %4396 = vmatpush1.bf16.xpose.msra.mxu0 0
        %4397 = vmatprep.subr.bf16.mxu0 0
        %4398 = vmatpush1.bf16.xpose.msra.mxu0 0
        %4399 = vmatprep.subr.bf16.mxu0 0
        %4400 = vmatpush1.bf16.xpose.msra.mxu0 0
        %4401 = vmatprep.subr.bf16.mxu0 0
        %4402 = vmatpush1.bf16.xpose.msra.mxu0 0
        %4403 = vmatprep.subr.bf16.mxu0 0
        %4404 = vmatpush1.bf16.xpose.msra.mxu0 0
        %4405 = vmatprep.mubr.bf16.mxu0 0
        %4406 = vmatmul.mubr.bf16.gmra.mrb[0].mxu0 %v4368
        %v4407 = vpop.f32.mrb[0].mxu0
        %v4408 = vadd.f32 0.0, %v4407
        %v4409 = vpop.f32.mrb[0].mxu0
        %v4410 = vpop.f32.mrb[0].mxu0
        %v4411 = vpop.f32.mrb[0].mxu0
        %4412 = vdwg.mxu0
        %v4413 = vmul.f32 %v4408, 0.25
        %v4414 = vadd.f32 %v4413, %v845
        %v4415 = vsel %vm848, %v4414, -inf
        %4416 = vmax.xlane.f32.xlu0 %v4415
        %v4417 = vpop.xlane.xlu0 %4416
        %v4418 = vsub.f32 %v4414, %v4417
        %v4419 = vmul.f32 %v4418, 1.442695
        %v4420 = vpow.pop %v4419
        %v4421 = vsel %vm848, %v4420, 0.0
        %4422 = vadd.xlane.f32.xlu0 %v4421
        %v4423 = vpop.xlane.xlu0 %4422
        %v4424 = vrcp.pop %v4423
        %v4425 = vmul.f32 %v4420, %v4424
        %v4426 = vpack.c.bf16 %v4425, %v4425
        %4428 = vrot.lane.b32.xlu0 %v4253, 112
        %v4429 = vpop.permute.xlu0 %4428
        %v4431 = vsel %vm848, %v4426, 0
        %v4434 = vsel %vm864, %v4429, 0
        %4436 = vmatprep.subr.bf16.mxu0 0
        %4437 = vmatpush1.bf16.msra.mxu0 %v4434
        %4438 = vmatprep.subr.bf16.mxu0 0
        %4439 = vmatpush1.bf16.msra.mxu0 0
        %4440 = vmatprep.subr.bf16.mxu0 0
        %4441 = vmatpush1.bf16.msra.mxu0 0
        %4442 = vmatprep.subr.bf16.mxu0 0
        %4443 = vmatpush1.bf16.msra.mxu0 0
        %4444 = vmatprep.subr.bf16.mxu0 0
        %4445 = vmatpush1.bf16.msra.mxu0 0
        %4446 = vmatprep.subr.bf16.mxu0 0
        %4447 = vmatpush1.bf16.msra.mxu0 0
        %4448 = vmatprep.subr.bf16.mxu0 0
        %4449 = vmatpush1.bf16.msra.mxu0 0
        %4450 = vmatprep.subr.bf16.mxu0 0
        %4451 = vmatpush1.bf16.msra.mxu0 0
        %4452 = vmatprep.subr.bf16.mxu0 0
        %4453 = vmatpush1.bf16.msra.mxu0 0
        %4454 = vmatprep.subr.bf16.mxu0 0
        %4455 = vmatpush1.bf16.msra.mxu0 0
        %4456 = vmatprep.subr.bf16.mxu0 0
        %4457 = vmatpush1.bf16.msra.mxu0 0
        %4458 = vmatprep.subr.bf16.mxu0 0
        %4459 = vmatpush1.bf16.msra.mxu0 0
        %4460 = vmatprep.subr.bf16.mxu0 0
        %4461 = vmatpush1.bf16.msra.mxu0 0
        %4462 = vmatprep.subr.bf16.mxu0 0
        %4463 = vmatpush1.bf16.msra.mxu0 0
        %4464 = vmatprep.subr.bf16.mxu0 0
        %4465 = vmatpush1.bf16.msra.mxu0 0
        %4466 = vmatprep.subr.bf16.mxu0 0
        %4467 = vmatpush1.bf16.msra.mxu0 0
        %4468 = vmatprep.mubr.bf16.mxu0 0
        %4469 = vmatmul.mubr.bf16.gmra.mrb[0].mxu0 %v4431
        %v4470 = vpop.f32.mrb[0].mxu0
        %v4471 = vadd.f32 0.0, %v4470
        %v4472 = vpop.f32.mrb[0].mxu0
        %v4473 = vpop.f32.mrb[0].mxu0
        %v4474 = vpop.f32.mrb[0].mxu0
        %4475 = vdwg.mxu0
        %v4476 = vpack.c.bf16 %v4471, %v4471
        %v4479 = vunpack.c.l.b16 %v4054
        %v4480 = vunpack.c.l.b16 %v4055
        %v4481 = vpack.c.b16 %v4480, %v4479
        %v4484 = vsel %vm793, %v4476, 0
        %4486 = vmatprep.subr.bf16.mxu0 0
        %4487 = vmatpush1.bf16.msra.mxu0 %v4481
        %4488 = vmatprep.subr.bf16.mxu0 0
        %4489 = vmatpush1.bf16.msra.mxu0 0
        %4490 = vmatprep.subr.bf16.mxu0 0
        %4491 = vmatpush1.bf16.msra.mxu0 0
        %4492 = vmatprep.subr.bf16.mxu0 0
        %4493 = vmatpush1.bf16.msra.mxu0 0
        %4494 = vmatprep.subr.bf16.mxu0 0
        %4495 = vmatpush1.bf16.msra.mxu0 0
        %4496 = vmatprep.subr.bf16.mxu0 0
        %4497 = vmatpush1.bf16.msra.mxu0 0
        %4498 = vmatprep.subr.bf16.mxu0 0
        %4499 = vmatpush1.bf16.msra.mxu0 0
        %4500 = vmatprep.subr.bf16.mxu0 0
        %4501 = vmatpush1.bf16.msra.mxu0 0
        %4502 = vmatprep.subr.bf16.mxu0 0
        %4503 = vmatpush1.bf16.msra.mxu0 0
        %4504 = vmatprep.subr.bf16.mxu0 0
        %4505 = vmatpush1.bf16.msra.mxu0 0
        %4506 = vmatprep.subr.bf16.mxu0 0
        %4507 = vmatpush1.bf16.msra.mxu0 0
        %4508 = vmatprep.subr.bf16.mxu0 0
        %4509 = vmatpush1.bf16.msra.mxu0 0
        %4510 = vmatprep.subr.bf16.mxu0 0
        %4511 = vmatpush1.bf16.msra.mxu0 0
        %4512 = vmatprep.subr.bf16.mxu0 0
        %4513 = vmatpush1.bf16.msra.mxu0 0
        %4514 = vmatprep.subr.bf16.mxu0 0
        %4515 = vmatpush1.bf16.msra.mxu0 0
        %4516 = vmatprep.subr.bf16.mxu0 0
        %4517 = vmatpush1.bf16.msra.mxu0 0
        %4518 = vmatprep.mubr.bf16.mxu0 0
        %4519 = vmatmul.mubr.bf16.gmra.mrb[0].mxu0 %v4484
        %v4520 = vpop.f32.mrb[0].mxu0
        %v4521 = vadd.f32 0.0, %v4520
        %v4522 = vpop.f32.mrb[0].mxu0
        %v4523 = vpop.f32.mrb[0].mxu0
        %v4524 = vpop.f32.mrb[0].mxu0
        %4525 = vdwg.mxu0
        %v4528 = vunpack.c.l.b16 %v4052
        %v4529 = vunpack.c.l.b16 %v4053
        %v4530 = vpack.c.b16 %v4529, %v4528
        %v4533 = vsel %vm793, %v4360, 0
        %4535 = vmatprep.subr.bf16.mxu0 0
        %4536 = vmatpush1.bf16.msra.mxu0 %v4530
        %4537 = vmatprep.subr.bf16.mxu0 0
        %4538 = vmatpush1.bf16.msra.mxu0 0
        %4539 = vmatprep.subr.bf16.mxu0 0
        %4540 = vmatpush1.bf16.msra.mxu0 0
        %4541 = vmatprep.subr.bf16.mxu0 0
        %4542 = vmatpush1.bf16.msra.mxu0 0
        %4543 = vmatprep.subr.bf16.mxu0 0
        %4544 = vmatpush1.bf16.msra.mxu0 0
        %4545 = vmatprep.subr.bf16.mxu0 0
        %4546 = vmatpush1.bf16.msra.mxu0 0
        %4547 = vmatprep.subr.bf16.mxu0 0
        %4548 = vmatpush1.bf16.msra.mxu0 0
        %4549 = vmatprep.subr.bf16.mxu0 0
        %4550 = vmatpush1.bf16.msra.mxu0 0
        %4551 = vmatprep.subr.bf16.mxu0 0
        %4552 = vmatpush1.bf16.msra.mxu0 0
        %4553 = vmatprep.subr.bf16.mxu0 0
        %4554 = vmatpush1.bf16.msra.mxu0 0
        %4555 = vmatprep.subr.bf16.mxu0 0
        %4556 = vmatpush1.bf16.msra.mxu0 0
        %4557 = vmatprep.subr.bf16.mxu0 0
        %4558 = vmatpush1.bf16.msra.mxu0 0
        %4559 = vmatprep.subr.bf16.mxu0 0
        %4560 = vmatpush1.bf16.msra.mxu0 0
        %4561 = vmatprep.subr.bf16.mxu0 0
        %4562 = vmatpush1.bf16.msra.mxu0 0
        %4563 = vmatprep.subr.bf16.mxu0 0
        %4564 = vmatpush1.bf16.msra.mxu0 0
        %4565 = vmatprep.subr.bf16.mxu0 0
        %4566 = vmatpush1.bf16.msra.mxu0 0
        %4567 = vmatprep.mubr.bf16.mxu0 0
        %4568 = vmatmul.mubr.bf16.gmra.mrb[0].mxu0 %v4533
        %v4569 = vpop.f32.mrb[0].mxu0
        %v4570 = vadd.f32 %v4521, %v4569
        %v4571 = vpop.f32.mrb[0].mxu0
        %v4572 = vpop.f32.mrb[0].mxu0
        %v4573 = vpop.f32.mrb[0].mxu0
        %4574 = vdwg.mxu0
        %4575 = vrot.lane.b32.xlu0 %v4251, 96
        %v4576 = vpop.permute.xlu0 %4575
        %4577 = vrot.lane.b32.xlu0 %v4252, 96
        %v4578 = vpop.permute.xlu0 %4577
        %v4580 = vsel %vm793, %v4576, 0
        %v4583 = vsel %vm793, %v4578, 0
        %4585 = vmatprep.subr.bf16.mxu0 0
        %4586 = vmatpush1.bf16.xpose.msra.mxu0 %v4583
        %4587 = vmatprep.subr.bf16.mxu0 0
        %4588 = vmatpush1.bf16.xpose.msra.mxu0 0
        %4589 = vmatprep.subr.bf16.mxu0 0
        %4590 = vmatpush1.bf16.xpose.msra.mxu0 0
        %4591 = vmatprep.subr.bf16.mxu0 0
        %4592 = vmatpush1.bf16.xpose.msra.mxu0 0
        %4593 = vmatprep.subr.bf16.mxu0 0
        %4594 = vmatpush1.bf16.xpose.msra.mxu0 0
        %4595 = vmatprep.subr.bf16.mxu0 0
        %4596 = vmatpush1.bf16.xpose.msra.mxu0 0
        %4597 = vmatprep.subr.bf16.mxu0 0
        %4598 = vmatpush1.bf16.xpose.msra.mxu0 0
        %4599 = vmatprep.subr.bf16.mxu0 0
        %4600 = vmatpush1.bf16.xpose.msra.mxu0 0
        %4601 = vmatprep.subr.bf16.mxu0 0
        %4602 = vmatpush1.bf16.xpose.msra.mxu0 0
        %4603 = vmatprep.subr.bf16.mxu0 0
        %4604 = vmatpush1.bf16.xpose.msra.mxu0 0
        %4605 = vmatprep.subr.bf16.mxu0 0
        %4606 = vmatpush1.bf16.xpose.msra.mxu0 0
        %4607 = vmatprep.subr.bf16.mxu0 0
        %4608 = vmatpush1.bf16.xpose.msra.mxu0 0
        %4609 = vmatprep.subr.bf16.mxu0 0
        %4610 = vmatpush1.bf16.xpose.msra.mxu0 0
        %4611 = vmatprep.subr.bf16.mxu0 0
        %4612 = vmatpush1.bf16.xpose.msra.mxu0 0
        %4613 = vmatprep.subr.bf16.mxu0 0
        %4614 = vmatpush1.bf16.xpose.msra.mxu0 0
        %4615 = vmatprep.subr.bf16.mxu0 0
        %4616 = vmatpush1.bf16.xpose.msra.mxu0 0
        %4617 = vmatprep.mubr.bf16.mxu0 0
        %4618 = vmatmul.mubr.bf16.gmra.mrb[0].mxu0 %v4580
        %v4619 = vpop.f32.mrb[0].mxu0
        %v4620 = vadd.f32 0.0, %v4619
        %v4621 = vpop.f32.mrb[0].mxu0
        %v4622 = vpop.f32.mrb[0].mxu0
        %v4623 = vpop.f32.mrb[0].mxu0
        %4624 = vdwg.mxu0
        %v4625 = vmul.f32 %v4620, 0.25
        %v4626 = vadd.f32 %v4625, %v845
        %v4627 = vsel %vm848, %v4626, -inf
        %4628 = vmax.xlane.f32.xlu0 %v4627
        %v4629 = vpop.xlane.xlu0 %4628
        %v4630 = vsub.f32 %v4626, %v4629
        %v4631 = vmul.f32 %v4630, 1.442695
        %v4632 = vpow.pop %v4631
        %v4633 = vsel %vm848, %v4632, 0.0
        %4634 = vadd.xlane.f32.xlu0 %v4633
        %v4635 = vpop.xlane.xlu0 %4634
        %v4636 = vrcp.pop %v4635
        %v4637 = vmul.f32 %v4632, %v4636
        %v4638 = vpack.c.bf16 %v4637, %v4637
        %4639 = vrot.lane.b32.xlu0 %v4253, 96
        %v4640 = vpop.permute.xlu0 %4639
        %v4642 = vsel %vm848, %v4638, 0
        %v4645 = vsel %vm864, %v4640, 0
        %4647 = vmatprep.subr.bf16.mxu0 0
        %4648 = vmatpush1.bf16.msra.mxu0 %v4645
        %4649 = vmatprep.subr.bf16.mxu0 0
        %4650 = vmatpush1.bf16.msra.mxu0 0
        %4651 = vmatprep.subr.bf16.mxu0 0
        %4652 = vmatpush1.bf16.msra.mxu0 0
        %4653 = vmatprep.subr.bf16.mxu0 0
        %4654 = vmatpush1.bf16.msra.mxu0 0
        %4655 = vmatprep.subr.bf16.mxu0 0
        %4656 = vmatpush1.bf16.msra.mxu0 0
        %4657 = vmatprep.subr.bf16.mxu0 0
        %4658 = vmatpush1.bf16.msra.mxu0 0
        %4659 = vmatprep.subr.bf16.mxu0 0
        %4660 = vmatpush1.bf16.msra.mxu0 0
        %4661 = vmatprep.subr.bf16.mxu0 0
        %4662 = vmatpush1.bf16.msra.mxu0 0
        %4663 = vmatprep.subr.bf16.mxu0 0
        %4664 = vmatpush1.bf16.msra.mxu0 0
        %4665 = vmatprep.subr.bf16.mxu0 0
        %4666 = vmatpush1.bf16.msra.mxu0 0
        %4667 = vmatprep.subr.bf16.mxu0 0
        %4668 = vmatpush1.bf16.msra.mxu0 0
        %4669 = vmatprep.subr.bf16.mxu0 0
        %4670 = vmatpush1.bf16.msra.mxu0 0
        %4671 = vmatprep.subr.bf16.mxu0 0
        %4672 = vmatpush1.bf16.msra.mxu0 0
        %4673 = vmatprep.subr.bf16.mxu0 0
        %4674 = vmatpush1.bf16.msra.mxu0 0
        %4675 = vmatprep.subr.bf16.mxu0 0
        %4676 = vmatpush1.bf16.msra.mxu0 0
        %4677 = vmatprep.subr.bf16.mxu0 0
        %4678 = vmatpush1.bf16.msra.mxu0 0
        %4679 = vmatprep.mubr.bf16.mxu0 0
        %4680 = vmatmul.mubr.bf16.gmra.mrb[0].mxu0 %v4642
        %v4681 = vpop.f32.mrb[0].mxu0
        %v4682 = vadd.f32 0.0, %v4681
        %v4683 = vpop.f32.mrb[0].mxu0
        %v4684 = vpop.f32.mrb[0].mxu0
        %v4685 = vpop.f32.mrb[0].mxu0
        %4686 = vdwg.mxu0
        %v4687 = vpack.c.bf16 %v4682, %v4682
        %v4690 = vunpack.c.l.b16 %v4056
        %v4691 = vunpack.c.l.b16 %v4057
        %v4692 = vpack.c.b16 %v4691, %v4690
        %v4695 = vsel %vm793, %v4687, 0
        %4697 = vmatprep.subr.bf16.mxu0 0
        %4698 = vmatpush1.bf16.msra.mxu0 %v4692
        %4699 = vmatprep.subr.bf16.mxu0 0
        %4700 = vmatpush1.bf16.msra.mxu0 0
        %4701 = vmatprep.subr.bf16.mxu0 0
        %4702 = vmatpush1.bf16.msra.mxu0 0
        %4703 = vmatprep.subr.bf16.mxu0 0
        %4704 = vmatpush1.bf16.msra.mxu0 0
        %4705 = vmatprep.subr.bf16.mxu0 0
        %4706 = vmatpush1.bf16.msra.mxu0 0
        %4707 = vmatprep.subr.bf16.mxu0 0
        %4708 = vmatpush1.bf16.msra.mxu0 0
        %4709 = vmatprep.subr.bf16.mxu0 0
        %4710 = vmatpush1.bf16.msra.mxu0 0
        %4711 = vmatprep.subr.bf16.mxu0 0
        %4712 = vmatpush1.bf16.msra.mxu0 0
        %4713 = vmatprep.subr.bf16.mxu0 0
        %4714 = vmatpush1.bf16.msra.mxu0 0
        %4715 = vmatprep.subr.bf16.mxu0 0
        %4716 = vmatpush1.bf16.msra.mxu0 0
        %4717 = vmatprep.subr.bf16.mxu0 0
        %4718 = vmatpush1.bf16.msra.mxu0 0
        %4719 = vmatprep.subr.bf16.mxu0 0
        %4720 = vmatpush1.bf16.msra.mxu0 0
        %4721 = vmatprep.subr.bf16.mxu0 0
        %4722 = vmatpush1.bf16.msra.mxu0 0
        %4723 = vmatprep.subr.bf16.mxu0 0
        %4724 = vmatpush1.bf16.msra.mxu0 0
        %4725 = vmatprep.subr.bf16.mxu0 0
        %4726 = vmatpush1.bf16.msra.mxu0 0
        %4727 = vmatprep.subr.bf16.mxu0 0
        %4728 = vmatpush1.bf16.msra.mxu0 0
        %4729 = vmatprep.mubr.bf16.mxu0 0
        %4730 = vmatmul.mubr.bf16.gmra.mrb[0].mxu0 %v4695
        %v4731 = vpop.f32.mrb[0].mxu0
        %v4732 = vadd.f32 0.0, %v4731
        %v4733 = vpop.f32.mrb[0].mxu0
        %v4734 = vpop.f32.mrb[0].mxu0
        %v4735 = vpop.f32.mrb[0].mxu0
        %4736 = vdwg.mxu0
        %v4737 = vadd.f32 %v4570, %v4732
        %4738 = vrot.lane.b32.xlu0 %v4251, 80
        %v4739 = vpop.permute.xlu0 %4738
        %4740 = vrot.lane.b32.xlu0 %v4252, 80
        %v4741 = vpop.permute.xlu0 %4740
        %v4743 = vsel %vm793, %v4739, 0
        %v4746 = vsel %vm793, %v4741, 0
        %4748 = vmatprep.subr.bf16.mxu0 0
        %4749 = vmatpush1.bf16.xpose.msra.mxu0 %v4746
        %4750 = vmatprep.subr.bf16.mxu0 0
        %4751 = vmatpush1.bf16.xpose.msra.mxu0 0
        %4752 = vmatprep.subr.bf16.mxu0 0
        %4753 = vmatpush1.bf16.xpose.msra.mxu0 0
        %4754 = vmatprep.subr.bf16.mxu0 0
        %4755 = vmatpush1.bf16.xpose.msra.mxu0 0
        %4756 = vmatprep.subr.bf16.mxu0 0
        %4757 = vmatpush1.bf16.xpose.msra.mxu0 0
        %4758 = vmatprep.subr.bf16.mxu0 0
        %4759 = vmatpush1.bf16.xpose.msra.mxu0 0
        %4760 = vmatprep.subr.bf16.mxu0 0
        %4761 = vmatpush1.bf16.xpose.msra.mxu0 0
        %4762 = vmatprep.subr.bf16.mxu0 0
        %4763 = vmatpush1.bf16.xpose.msra.mxu0 0
        %4764 = vmatprep.subr.bf16.mxu0 0
        %4765 = vmatpush1.bf16.xpose.msra.mxu0 0
        %4766 = vmatprep.subr.bf16.mxu0 0
        %4767 = vmatpush1.bf16.xpose.msra.mxu0 0
        %4768 = vmatprep.subr.bf16.mxu0 0
        %4769 = vmatpush1.bf16.xpose.msra.mxu0 0
        %4770 = vmatprep.subr.bf16.mxu0 0
        %4771 = vmatpush1.bf16.xpose.msra.mxu0 0
        %4772 = vmatprep.subr.bf16.mxu0 0
        %4773 = vmatpush1.bf16.xpose.msra.mxu0 0
        %4774 = vmatprep.subr.bf16.mxu0 0
        %4775 = vmatpush1.bf16.xpose.msra.mxu0 0
        %4776 = vmatprep.subr.bf16.mxu0 0
        %4777 = vmatpush1.bf16.xpose.msra.mxu0 0
        %4778 = vmatprep.subr.bf16.mxu0 0
        %4779 = vmatpush1.bf16.xpose.msra.mxu0 0
        %4780 = vmatprep.mubr.bf16.mxu0 0
        %4781 = vmatmul.mubr.bf16.gmra.mrb[0].mxu0 %v4743
        %v4782 = vpop.f32.mrb[0].mxu0
        %v4783 = vadd.f32 0.0, %v4782
        %v4784 = vpop.f32.mrb[0].mxu0
        %v4785 = vpop.f32.mrb[0].mxu0
        %v4786 = vpop.f32.mrb[0].mxu0
        %4787 = vdwg.mxu0
        %v4788 = vmul.f32 %v4783, 0.25
        %v4789 = vadd.f32 %v4788, %v845
        %v4790 = vsel %vm848, %v4789, -inf
        %4791 = vmax.xlane.f32.xlu0 %v4790
        %v4792 = vpop.xlane.xlu0 %4791
        %v4793 = vsub.f32 %v4789, %v4792
        %v4794 = vmul.f32 %v4793, 1.442695
        %v4795 = vpow.pop %v4794
        %v4796 = vsel %vm848, %v4795, 0.0
        %4797 = vadd.xlane.f32.xlu0 %v4796
        %v4798 = vpop.xlane.xlu0 %4797
        %v4799 = vrcp.pop %v4798
        %v4800 = vmul.f32 %v4795, %v4799
        %v4801 = vpack.c.bf16 %v4800, %v4800
        %4802 = vrot.lane.b32.xlu0 %v4253, 80
        %v4803 = vpop.permute.xlu0 %4802
        %v4805 = vsel %vm848, %v4801, 0
        %v4808 = vsel %vm864, %v4803, 0
        %4810 = vmatprep.subr.bf16.mxu0 0
        %4811 = vmatpush1.bf16.msra.mxu0 %v4808
        %4812 = vmatprep.subr.bf16.mxu0 0
        %4813 = vmatpush1.bf16.msra.mxu0 0
        %4814 = vmatprep.subr.bf16.mxu0 0
        %4815 = vmatpush1.bf16.msra.mxu0 0
        %4816 = vmatprep.subr.bf16.mxu0 0
        %4817 = vmatpush1.bf16.msra.mxu0 0
        %4818 = vmatprep.subr.bf16.mxu0 0
        %4819 = vmatpush1.bf16.msra.mxu0 0
        %4820 = vmatprep.subr.bf16.mxu0 0
        %4821 = vmatpush1.bf16.msra.mxu0 0
        %4822 = vmatprep.subr.bf16.mxu0 0
        %4823 = vmatpush1.bf16.msra.mxu0 0
        %4824 = vmatprep.subr.bf16.mxu0 0
        %4825 = vmatpush1.bf16.msra.mxu0 0
        %4826 = vmatprep.subr.bf16.mxu0 0
        %4827 = vmatpush1.bf16.msra.mxu0 0
        %4828 = vmatprep.subr.bf16.mxu0 0
        %4829 = vmatpush1.bf16.msra.mxu0 0
        %4830 = vmatprep.subr.bf16.mxu0 0
        %4831 = vmatpush1.bf16.msra.mxu0 0
        %4832 = vmatprep.subr.bf16.mxu0 0
        %4833 = vmatpush1.bf16.msra.mxu0 0
        %4834 = vmatprep.subr.bf16.mxu0 0
        %4835 = vmatpush1.bf16.msra.mxu0 0
        %4836 = vmatprep.subr.bf16.mxu0 0
        %4837 = vmatpush1.bf16.msra.mxu0 0
        %4838 = vmatprep.subr.bf16.mxu0 0
        %4839 = vmatpush1.bf16.msra.mxu0 0
        %4840 = vmatprep.subr.bf16.mxu0 0
        %4841 = vmatpush1.bf16.msra.mxu0 0
        %4842 = vmatprep.mubr.bf16.mxu0 0
        %4843 = vmatmul.mubr.bf16.gmra.mrb[0].mxu0 %v4805
        %v4844 = vpop.f32.mrb[0].mxu0
        %v4845 = vadd.f32 0.0, %v4844
        %v4846 = vpop.f32.mrb[0].mxu0
        %v4847 = vpop.f32.mrb[0].mxu0
        %v4848 = vpop.f32.mrb[0].mxu0
        %4849 = vdwg.mxu0
        %v4850 = vpack.c.bf16 %v4845, %v4845
        %v4853 = vunpack.c.l.b16 %v4058
        %v4854 = vunpack.c.l.b16 %v4059
        %v4855 = vpack.c.b16 %v4854, %v4853
        %v4858 = vsel %vm793, %v4850, 0
        %4860 = vmatprep.subr.bf16.mxu0 0
        %4861 = vmatpush1.bf16.msra.mxu0 %v4855
        %4862 = vmatprep.subr.bf16.mxu0 0
        %4863 = vmatpush1.bf16.msra.mxu0 0
        %4864 = vmatprep.subr.bf16.mxu0 0
        %4865 = vmatpush1.bf16.msra.mxu0 0
        %4866 = vmatprep.subr.bf16.mxu0 0
        %4867 = vmatpush1.bf16.msra.mxu0 0
        %4868 = vmatprep.subr.bf16.mxu0 0
        %4869 = vmatpush1.bf16.msra.mxu0 0
        %4870 = vmatprep.subr.bf16.mxu0 0
        %4871 = vmatpush1.bf16.msra.mxu0 0
        %4872 = vmatprep.subr.bf16.mxu0 0
        %4873 = vmatpush1.bf16.msra.mxu0 0
        %4874 = vmatprep.subr.bf16.mxu0 0
        %4875 = vmatpush1.bf16.msra.mxu0 0
        %4876 = vmatprep.subr.bf16.mxu0 0
        %4877 = vmatpush1.bf16.msra.mxu0 0
        %4878 = vmatprep.subr.bf16.mxu0 0
        %4879 = vmatpush1.bf16.msra.mxu0 0
        %4880 = vmatprep.subr.bf16.mxu0 0
        %4881 = vmatpush1.bf16.msra.mxu0 0
        %4882 = vmatprep.subr.bf16.mxu0 0
        %4883 = vmatpush1.bf16.msra.mxu0 0
        %4884 = vmatprep.subr.bf16.mxu0 0
        %4885 = vmatpush1.bf16.msra.mxu0 0
        %4886 = vmatprep.subr.bf16.mxu0 0
        %4887 = vmatpush1.bf16.msra.mxu0 0
        %4888 = vmatprep.subr.bf16.mxu0 0
        %4889 = vmatpush1.bf16.msra.mxu0 0
        %4890 = vmatprep.subr.bf16.mxu0 0
        %4891 = vmatpush1.bf16.msra.mxu0 0
        %4892 = vmatprep.mubr.bf16.mxu0 0
        %4893 = vmatmul.mubr.bf16.gmra.mrb[0].mxu0 %v4858
        %v4894 = vpop.f32.mrb[0].mxu0
        %v4895 = vadd.f32 0.0, %v4894
        %v4896 = vpop.f32.mrb[0].mxu0
        %v4897 = vpop.f32.mrb[0].mxu0
        %v4898 = vpop.f32.mrb[0].mxu0
        %4899 = vdwg.mxu0
        %v4900 = vadd.f32 %v4737, %v4895
        %4901 = vrot.lane.b32.xlu0 %v4251, 64
        %v4902 = vpop.permute.xlu0 %4901
        %4903 = vrot.lane.b32.xlu0 %v4252, 64
        %v4904 = vpop.permute.xlu0 %4903
        %v4906 = vsel %vm793, %v4902, 0
        %v4909 = vsel %vm793, %v4904, 0
        %4911 = vmatprep.subr.bf16.mxu0 0
        %4912 = vmatpush1.bf16.xpose.msra.mxu0 %v4909
        %4913 = vmatprep.subr.bf16.mxu0 0
        %4914 = vmatpush1.bf16.xpose.msra.mxu0 0
        %4915 = vmatprep.subr.bf16.mxu0 0
        %4916 = vmatpush1.bf16.xpose.msra.mxu0 0
        %4917 = vmatprep.subr.bf16.mxu0 0
        %4918 = vmatpush1.bf16.xpose.msra.mxu0 0
        %4919 = vmatprep.subr.bf16.mxu0 0
        %4920 = vmatpush1.bf16.xpose.msra.mxu0 0
        %4921 = vmatprep.subr.bf16.mxu0 0
        %4922 = vmatpush1.bf16.xpose.msra.mxu0 0
        %4923 = vmatprep.subr.bf16.mxu0 0
        %4924 = vmatpush1.bf16.xpose.msra.mxu0 0
        %4925 = vmatprep.subr.bf16.mxu0 0
        %4926 = vmatpush1.bf16.xpose.msra.mxu0 0
        %4927 = vmatprep.subr.bf16.mxu0 0
        %4928 = vmatpush1.bf16.xpose.msra.mxu0 0
        %4929 = vmatprep.subr.bf16.mxu0 0
        %4930 = vmatpush1.bf16.xpose.msra.mxu0 0
        %4931 = vmatprep.subr.bf16.mxu0 0
        %4932 = vmatpush1.bf16.xpose.msra.mxu0 0
        %4933 = vmatprep.subr.bf16.mxu0 0
        %4934 = vmatpush1.bf16.xpose.msra.mxu0 0
        %4935 = vmatprep.subr.bf16.mxu0 0
        %4936 = vmatpush1.bf16.xpose.msra.mxu0 0
        %4937 = vmatprep.subr.bf16.mxu0 0
        %4938 = vmatpush1.bf16.xpose.msra.mxu0 0
        %4939 = vmatprep.subr.bf16.mxu0 0
        %4940 = vmatpush1.bf16.xpose.msra.mxu0 0
        %4941 = vmatprep.subr.bf16.mxu0 0
        %4942 = vmatpush1.bf16.xpose.msra.mxu0 0
        %4943 = vmatprep.mubr.bf16.mxu0 0
        %4944 = vmatmul.mubr.bf16.gmra.mrb[0].mxu0 %v4906
        %v4945 = vpop.f32.mrb[0].mxu0
        %v4946 = vadd.f32 0.0, %v4945
        %v4947 = vpop.f32.mrb[0].mxu0
        %v4948 = vpop.f32.mrb[0].mxu0
        %v4949 = vpop.f32.mrb[0].mxu0
        %4950 = vdwg.mxu0
        %v4951 = vmul.f32 %v4946, 0.25
        %v4952 = vadd.f32 %v4951, %v845
        %v4953 = vsel %vm848, %v4952, -inf
        %4954 = vmax.xlane.f32.xlu0 %v4953
        %v4955 = vpop.xlane.xlu0 %4954
        %v4956 = vsub.f32 %v4952, %v4955
        %v4957 = vmul.f32 %v4956, 1.442695
        %v4958 = vpow.pop %v4957
        %v4959 = vsel %vm848, %v4958, 0.0
        %4960 = vadd.xlane.f32.xlu0 %v4959
        %v4961 = vpop.xlane.xlu0 %4960
        %v4962 = vrcp.pop %v4961
        %v4963 = vmul.f32 %v4958, %v4962
        %v4964 = vpack.c.bf16 %v4963, %v4963
        %4965 = vrot.lane.b32.xlu0 %v4253, 64
        %v4966 = vpop.permute.xlu0 %4965
        %v4968 = vsel %vm848, %v4964, 0
        %v4971 = vsel %vm864, %v4966, 0
        %4973 = vmatprep.subr.bf16.mxu0 0
        %4974 = vmatpush1.bf16.msra.mxu0 %v4971
        %4975 = vmatprep.subr.bf16.mxu0 0
        %4976 = vmatpush1.bf16.msra.mxu0 0
        %4977 = vmatprep.subr.bf16.mxu0 0
        %4978 = vmatpush1.bf16.msra.mxu0 0
        %4979 = vmatprep.subr.bf16.mxu0 0
        %4980 = vmatpush1.bf16.msra.mxu0 0
        %4981 = vmatprep.subr.bf16.mxu0 0
        %4982 = vmatpush1.bf16.msra.mxu0 0
        %4983 = vmatprep.subr.bf16.mxu0 0
        %4984 = vmatpush1.bf16.msra.mxu0 0
        %4985 = vmatprep.subr.bf16.mxu0 0
        %4986 = vmatpush1.bf16.msra.mxu0 0
        %4987 = vmatprep.subr.bf16.mxu0 0
        %4988 = vmatpush1.bf16.msra.mxu0 0
        %4989 = vmatprep.subr.bf16.mxu0 0
        %4990 = vmatpush1.bf16.msra.mxu0 0
        %4991 = vmatprep.subr.bf16.mxu0 0
        %4992 = vmatpush1.bf16.msra.mxu0 0
        %4993 = vmatprep.subr.bf16.mxu0 0
        %4994 = vmatpush1.bf16.msra.mxu0 0
        %4995 = vmatprep.subr.bf16.mxu0 0
        %4996 = vmatpush1.bf16.msra.mxu0 0
        %4997 = vmatprep.subr.bf16.mxu0 0
        %4998 = vmatpush1.bf16.msra.mxu0 0
        %4999 = vmatprep.subr.bf16.mxu0 0
        %5000 = vmatpush1.bf16.msra.mxu0 0
        %5001 = vmatprep.subr.bf16.mxu0 0
        %5002 = vmatpush1.bf16.msra.mxu0 0
        %5003 = vmatprep.subr.bf16.mxu0 0
        %5004 = vmatpush1.bf16.msra.mxu0 0
        %5005 = vmatprep.mubr.bf16.mxu0 0
        %5006 = vmatmul.mubr.bf16.gmra.mrb[0].mxu0 %v4968
        %v5007 = vpop.f32.mrb[0].mxu0
        %v5008 = vadd.f32 0.0, %v5007
        %v5009 = vpop.f32.mrb[0].mxu0
        %v5010 = vpop.f32.mrb[0].mxu0
        %v5011 = vpop.f32.mrb[0].mxu0
        %5012 = vdwg.mxu0
        %v5013 = vpack.c.bf16 %v5008, %v5008
        %v5016 = vunpack.c.l.b16 %v4060
        %v5017 = vunpack.c.l.b16 %v4061
        %v5018 = vpack.c.b16 %v5017, %v5016
        %v5021 = vsel %vm793, %v5013, 0
        %5023 = vmatprep.subr.bf16.mxu0 0
        %5024 = vmatpush1.bf16.msra.mxu0 %v5018
        %5025 = vmatprep.subr.bf16.mxu0 0
        %5026 = vmatpush1.bf16.msra.mxu0 0
        %5027 = vmatprep.subr.bf16.mxu0 0
        %5028 = vmatpush1.bf16.msra.mxu0 0
        %5029 = vmatprep.subr.bf16.mxu0 0
        %5030 = vmatpush1.bf16.msra.mxu0 0
        %5031 = vmatprep.subr.bf16.mxu0 0
        %5032 = vmatpush1.bf16.msra.mxu0 0
        %5033 = vmatprep.subr.bf16.mxu0 0
        %5034 = vmatpush1.bf16.msra.mxu0 0
        %5035 = vmatprep.subr.bf16.mxu0 0
        %5036 = vmatpush1.bf16.msra.mxu0 0
        %5037 = vmatprep.subr.bf16.mxu0 0
        %5038 = vmatpush1.bf16.msra.mxu0 0
        %5039 = vmatprep.subr.bf16.mxu0 0
        %5040 = vmatpush1.bf16.msra.mxu0 0
        %5041 = vmatprep.subr.bf16.mxu0 0
        %5042 = vmatpush1.bf16.msra.mxu0 0
        %5043 = vmatprep.subr.bf16.mxu0 0
        %5044 = vmatpush1.bf16.msra.mxu0 0
        %5045 = vmatprep.subr.bf16.mxu0 0
        %5046 = vmatpush1.bf16.msra.mxu0 0
        %5047 = vmatprep.subr.bf16.mxu0 0
        %5048 = vmatpush1.bf16.msra.mxu0 0
        %5049 = vmatprep.subr.bf16.mxu0 0
        %5050 = vmatpush1.bf16.msra.mxu0 0
        %5051 = vmatprep.subr.bf16.mxu0 0
        %5052 = vmatpush1.bf16.msra.mxu0 0
        %5053 = vmatprep.subr.bf16.mxu0 0
        %5054 = vmatpush1.bf16.msra.mxu0 0
        %5055 = vmatprep.mubr.bf16.mxu0 0
        %5056 = vmatmul.mubr.bf16.gmra.mrb[0].mxu0 %v5021
        %v5057 = vpop.f32.mrb[0].mxu0
        %v5058 = vadd.f32 0.0, %v5057
        %v5059 = vpop.f32.mrb[0].mxu0
        %v5060 = vpop.f32.mrb[0].mxu0
        %v5061 = vpop.f32.mrb[0].mxu0
        %5062 = vdwg.mxu0
        %v5063 = vadd.f32 %v4900, %v5058
        %5064 = vrot.lane.b32.xlu0 %v4251, 48
        %v5065 = vpop.permute.xlu0 %5064
        %5066 = vrot.lane.b32.xlu0 %v4252, 48
        %v5067 = vpop.permute.xlu0 %5066
        %v5069 = vsel %vm793, %v5065, 0
        %v5072 = vsel %vm793, %v5067, 0
        %5074 = vmatprep.subr.bf16.mxu0 0
        %5075 = vmatpush1.bf16.xpose.msra.mxu0 %v5072
        %5076 = vmatprep.subr.bf16.mxu0 0
        %5077 = vmatpush1.bf16.xpose.msra.mxu0 0
        %5078 = vmatprep.subr.bf16.mxu0 0
        %5079 = vmatpush1.bf16.xpose.msra.mxu0 0
        %5080 = vmatprep.subr.bf16.mxu0 0
        %5081 = vmatpush1.bf16.xpose.msra.mxu0 0
        %5082 = vmatprep.subr.bf16.mxu0 0
        %5083 = vmatpush1.bf16.xpose.msra.mxu0 0
        %5084 = vmatprep.subr.bf16.mxu0 0
        %5085 = vmatpush1.bf16.xpose.msra.mxu0 0
        %5086 = vmatprep.subr.bf16.mxu0 0
        %5087 = vmatpush1.bf16.xpose.msra.mxu0 0
        %5088 = vmatprep.subr.bf16.mxu0 0
        %5089 = vmatpush1.bf16.xpose.msra.mxu0 0
        %5090 = vmatprep.subr.bf16.mxu0 0
        %5091 = vmatpush1.bf16.xpose.msra.mxu0 0
        %5092 = vmatprep.subr.bf16.mxu0 0
        %5093 = vmatpush1.bf16.xpose.msra.mxu0 0
        %5094 = vmatprep.subr.bf16.mxu0 0
        %5095 = vmatpush1.bf16.xpose.msra.mxu0 0
        %5096 = vmatprep.subr.bf16.mxu0 0
        %5097 = vmatpush1.bf16.xpose.msra.mxu0 0
        %5098 = vmatprep.subr.bf16.mxu0 0
        %5099 = vmatpush1.bf16.xpose.msra.mxu0 0
        %5100 = vmatprep.subr.bf16.mxu0 0
        %5101 = vmatpush1.bf16.xpose.msra.mxu0 0
        %5102 = vmatprep.subr.bf16.mxu0 0
        %5103 = vmatpush1.bf16.xpose.msra.mxu0 0
        %5104 = vmatprep.subr.bf16.mxu0 0
        %5105 = vmatpush1.bf16.xpose.msra.mxu0 0
        %5106 = vmatprep.mubr.bf16.mxu0 0
        %5107 = vmatmul.mubr.bf16.gmra.mrb[0].mxu0 %v5069
        %v5108 = vpop.f32.mrb[0].mxu0
        %v5109 = vadd.f32 0.0, %v5108
        %v5110 = vpop.f32.mrb[0].mxu0
        %v5111 = vpop.f32.mrb[0].mxu0
        %v5112 = vpop.f32.mrb[0].mxu0
        %5113 = vdwg.mxu0
        %v5114 = vmul.f32 %v5109, 0.25
        %v5115 = vadd.f32 %v5114, %v845
        %v5116 = vsel %vm848, %v5115, -inf
        %5117 = vmax.xlane.f32.xlu0 %v5116
        %v5118 = vpop.xlane.xlu0 %5117
        %v5119 = vsub.f32 %v5115, %v5118
        %v5120 = vmul.f32 %v5119, 1.442695
        %v5121 = vpow.pop %v5120
        %v5122 = vsel %vm848, %v5121, 0.0
        %5123 = vadd.xlane.f32.xlu0 %v5122
        %v5124 = vpop.xlane.xlu0 %5123
        %v5125 = vrcp.pop %v5124
        %v5126 = vmul.f32 %v5121, %v5125
        %v5127 = vpack.c.bf16 %v5126, %v5126
        %5128 = vrot.lane.b32.xlu0 %v4253, 48
        %v5129 = vpop.permute.xlu0 %5128
        %v5131 = vsel %vm848, %v5127, 0
        %v5134 = vsel %vm864, %v5129, 0
        %5136 = vmatprep.subr.bf16.mxu0 0
        %5137 = vmatpush1.bf16.msra.mxu0 %v5134
        %5138 = vmatprep.subr.bf16.mxu0 0
        %5139 = vmatpush1.bf16.msra.mxu0 0
        %5140 = vmatprep.subr.bf16.mxu0 0
        %5141 = vmatpush1.bf16.msra.mxu0 0
        %5142 = vmatprep.subr.bf16.mxu0 0
        %5143 = vmatpush1.bf16.msra.mxu0 0
        %5144 = vmatprep.subr.bf16.mxu0 0
        %5145 = vmatpush1.bf16.msra.mxu0 0
        %5146 = vmatprep.subr.bf16.mxu0 0
        %5147 = vmatpush1.bf16.msra.mxu0 0
        %5148 = vmatprep.subr.bf16.mxu0 0
        %5149 = vmatpush1.bf16.msra.mxu0 0
        %5150 = vmatprep.subr.bf16.mxu0 0
        %5151 = vmatpush1.bf16.msra.mxu0 0
        %5152 = vmatprep.subr.bf16.mxu0 0
        %5153 = vmatpush1.bf16.msra.mxu0 0
        %5154 = vmatprep.subr.bf16.mxu0 0
        %5155 = vmatpush1.bf16.msra.mxu0 0
        %5156 = vmatprep.subr.bf16.mxu0 0
        %5157 = vmatpush1.bf16.msra.mxu0 0
        %5158 = vmatprep.subr.bf16.mxu0 0
        %5159 = vmatpush1.bf16.msra.mxu0 0
        %5160 = vmatprep.subr.bf16.mxu0 0
        %5161 = vmatpush1.bf16.msra.mxu0 0
        %5162 = vmatprep.subr.bf16.mxu0 0
        %5163 = vmatpush1.bf16.msra.mxu0 0
        %5164 = vmatprep.subr.bf16.mxu0 0
        %5165 = vmatpush1.bf16.msra.mxu0 0
        %5166 = vmatprep.subr.bf16.mxu0 0
        %5167 = vmatpush1.bf16.msra.mxu0 0
        %5168 = vmatprep.mubr.bf16.mxu0 0
        %5169 = vmatmul.mubr.bf16.gmra.mrb[0].mxu0 %v5131
        %v5170 = vpop.f32.mrb[0].mxu0
        %v5171 = vadd.f32 0.0, %v5170
        %v5172 = vpop.f32.mrb[0].mxu0
        %v5173 = vpop.f32.mrb[0].mxu0
        %v5174 = vpop.f32.mrb[0].mxu0
        %5175 = vdwg.mxu0
        %v5176 = vpack.c.bf16 %v5171, %v5171
        %v5179 = vunpack.c.l.b16 %v4062
        %v5180 = vunpack.c.l.b16 %v4063
        %v5181 = vpack.c.b16 %v5180, %v5179
        %v5184 = vsel %vm793, %v5176, 0
        %5186 = vmatprep.subr.bf16.mxu0 0
        %5187 = vmatpush1.bf16.msra.mxu0 %v5181
        %5188 = vmatprep.subr.bf16.mxu0 0
        %5189 = vmatpush1.bf16.msra.mxu0 0
        %5190 = vmatprep.subr.bf16.mxu0 0
        %5191 = vmatpush1.bf16.msra.mxu0 0
        %5192 = vmatprep.subr.bf16.mxu0 0
        %5193 = vmatpush1.bf16.msra.mxu0 0
        %5194 = vmatprep.subr.bf16.mxu0 0
        %5195 = vmatpush1.bf16.msra.mxu0 0
        %5196 = vmatprep.subr.bf16.mxu0 0
        %5197 = vmatpush1.bf16.msra.mxu0 0
        %5198 = vmatprep.subr.bf16.mxu0 0
        %5199 = vmatpush1.bf16.msra.mxu0 0
        %5200 = vmatprep.subr.bf16.mxu0 0
        %5201 = vmatpush1.bf16.msra.mxu0 0
        %5202 = vmatprep.subr.bf16.mxu0 0
        %5203 = vmatpush1.bf16.msra.mxu0 0
        %5204 = vmatprep.subr.bf16.mxu0 0
        %5205 = vmatpush1.bf16.msra.mxu0 0
        %5206 = vmatprep.subr.bf16.mxu0 0
        %5207 = vmatpush1.bf16.msra.mxu0 0
        %5208 = vmatprep.subr.bf16.mxu0 0
        %5209 = vmatpush1.bf16.msra.mxu0 0
        %5210 = vmatprep.subr.bf16.mxu0 0
        %5211 = vmatpush1.bf16.msra.mxu0 0
        %5212 = vmatprep.subr.bf16.mxu0 0
        %5213 = vmatpush1.bf16.msra.mxu0 0
        %5214 = vmatprep.subr.bf16.mxu0 0
        %5215 = vmatpush1.bf16.msra.mxu0 0
        %5216 = vmatprep.subr.bf16.mxu0 0
        %5217 = vmatpush1.bf16.msra.mxu0 0
        %5218 = vmatprep.mubr.bf16.mxu0 0
        %5219 = vmatmul.mubr.bf16.gmra.mrb[0].mxu0 %v5184
        %v5220 = vpop.f32.mrb[0].mxu0
        %v5221 = vadd.f32 0.0, %v5220
        %v5222 = vpop.f32.mrb[0].mxu0
        %v5223 = vpop.f32.mrb[0].mxu0
        %v5224 = vpop.f32.mrb[0].mxu0
        %5225 = vdwg.mxu0
        %v5226 = vadd.f32 %v5063, %v5221
        %5227 = vrot.lane.b32.xlu0 %v4251, 32
        %v5228 = vpop.permute.xlu0 %5227
        %5229 = vrot.lane.b32.xlu0 %v4252, 32
        %v5230 = vpop.permute.xlu0 %5229
        %v5232 = vsel %vm793, %v5228, 0
        %v5235 = vsel %vm793, %v5230, 0
        %5237 = vmatprep.subr.bf16.mxu0 0
        %5238 = vmatpush1.bf16.xpose.msra.mxu0 %v5235
        %5239 = vmatprep.subr.bf16.mxu0 0
        %5240 = vmatpush1.bf16.xpose.msra.mxu0 0
        %5241 = vmatprep.subr.bf16.mxu0 0
        %5242 = vmatpush1.bf16.xpose.msra.mxu0 0
        %5243 = vmatprep.subr.bf16.mxu0 0
        %5244 = vmatpush1.bf16.xpose.msra.mxu0 0
        %5245 = vmatprep.subr.bf16.mxu0 0
        %5246 = vmatpush1.bf16.xpose.msra.mxu0 0
        %5247 = vmatprep.subr.bf16.mxu0 0
        %5248 = vmatpush1.bf16.xpose.msra.mxu0 0
        %5249 = vmatprep.subr.bf16.mxu0 0
        %5250 = vmatpush1.bf16.xpose.msra.mxu0 0
        %5251 = vmatprep.subr.bf16.mxu0 0
        %5252 = vmatpush1.bf16.xpose.msra.mxu0 0
        %5253 = vmatprep.subr.bf16.mxu0 0
        %5254 = vmatpush1.bf16.xpose.msra.mxu0 0
        %5255 = vmatprep.subr.bf16.mxu0 0
        %5256 = vmatpush1.bf16.xpose.msra.mxu0 0
        %5257 = vmatprep.subr.bf16.mxu0 0
        %5258 = vmatpush1.bf16.xpose.msra.mxu0 0
        %5259 = vmatprep.subr.bf16.mxu0 0
        %5260 = vmatpush1.bf16.xpose.msra.mxu0 0
        %5261 = vmatprep.subr.bf16.mxu0 0
        %5262 = vmatpush1.bf16.xpose.msra.mxu0 0
        %5263 = vmatprep.subr.bf16.mxu0 0
        %5264 = vmatpush1.bf16.xpose.msra.mxu0 0
        %5265 = vmatprep.subr.bf16.mxu0 0
        %5266 = vmatpush1.bf16.xpose.msra.mxu0 0
        %5267 = vmatprep.subr.bf16.mxu0 0
        %5268 = vmatpush1.bf16.xpose.msra.mxu0 0
        %5269 = vmatprep.mubr.bf16.mxu0 0
        %5270 = vmatmul.mubr.bf16.gmra.mrb[0].mxu0 %v5232
        %v5271 = vpop.f32.mrb[0].mxu0
        %v5272 = vadd.f32 0.0, %v5271
        %v5273 = vpop.f32.mrb[0].mxu0
        %v5274 = vpop.f32.mrb[0].mxu0
        %v5275 = vpop.f32.mrb[0].mxu0
        %5276 = vdwg.mxu0
        %v5277 = vmul.f32 %v5272, 0.25
        %v5278 = vadd.f32 %v5277, %v845
        %v5279 = vsel %vm848, %v5278, -inf
        %5280 = vmax.xlane.f32.xlu0 %v5279
        %v5281 = vpop.xlane.xlu0 %5280
        %v5282 = vsub.f32 %v5278, %v5281
        %v5283 = vmul.f32 %v5282, 1.442695
        %v5284 = vpow.pop %v5283
        %v5285 = vsel %vm848, %v5284, 0.0
        %5286 = vadd.xlane.f32.xlu0 %v5285
        %v5287 = vpop.xlane.xlu0 %5286
        %v5288 = vrcp.pop %v5287
        %v5289 = vmul.f32 %v5284, %v5288
        %v5290 = vpack.c.bf16 %v5289, %v5289
        %5291 = vrot.lane.b32.xlu0 %v4253, 32
        %v5292 = vpop.permute.xlu0 %5291
        %v5294 = vsel %vm848, %v5290, 0
        %v5297 = vsel %vm864, %v5292, 0
        %5299 = vmatprep.subr.bf16.mxu0 0
        %5300 = vmatpush1.bf16.msra.mxu0 %v5297
        %5301 = vmatprep.subr.bf16.mxu0 0
        %5302 = vmatpush1.bf16.msra.mxu0 0
        %5303 = vmatprep.subr.bf16.mxu0 0
        %5304 = vmatpush1.bf16.msra.mxu0 0
        %5305 = vmatprep.subr.bf16.mxu0 0
        %5306 = vmatpush1.bf16.msra.mxu0 0
        %5307 = vmatprep.subr.bf16.mxu0 0
        %5308 = vmatpush1.bf16.msra.mxu0 0
        %5309 = vmatprep.subr.bf16.mxu0 0
        %5310 = vmatpush1.bf16.msra.mxu0 0
        %5311 = vmatprep.subr.bf16.mxu0 0
        %5312 = vmatpush1.bf16.msra.mxu0 0
        %5313 = vmatprep.subr.bf16.mxu0 0
        %5314 = vmatpush1.bf16.msra.mxu0 0
        %5315 = vmatprep.subr.bf16.mxu0 0
        %5316 = vmatpush1.bf16.msra.mxu0 0
        %5317 = vmatprep.subr.bf16.mxu0 0
        %5318 = vmatpush1.bf16.msra.mxu0 0
        %5319 = vmatprep.subr.bf16.mxu0 0
        %5320 = vmatpush1.bf16.msra.mxu0 0
        %5321 = vmatprep.subr.bf16.mxu0 0
        %5322 = vmatpush1.bf16.msra.mxu0 0
        %5323 = vmatprep.subr.bf16.mxu0 0
        %5324 = vmatpush1.bf16.msra.mxu0 0
        %5325 = vmatprep.subr.bf16.mxu0 0
        %5326 = vmatpush1.bf16.msra.mxu0 0
        %5327 = vmatprep.subr.bf16.mxu0 0
        %5328 = vmatpush1.bf16.msra.mxu0 0
        %5329 = vmatprep.subr.bf16.mxu0 0
        %5330 = vmatpush1.bf16.msra.mxu0 0
        %5331 = vmatprep.mubr.bf16.mxu0 0
        %5332 = vmatmul.mubr.bf16.gmra.mrb[0].mxu0 %v5294
        %v5333 = vpop.f32.mrb[0].mxu0
        %v5334 = vadd.f32 0.0, %v5333
        %v5335 = vpop.f32.mrb[0].mxu0
        %v5336 = vpop.f32.mrb[0].mxu0
        %v5337 = vpop.f32.mrb[0].mxu0
        %5338 = vdwg.mxu0
        %v5339 = vpack.c.bf16 %v5334, %v5334
        %v5342 = vunpack.c.l.b16 %v4064
        %v5343 = vunpack.c.l.b16 %v4065
        %v5344 = vpack.c.b16 %v5343, %v5342
        %v5347 = vsel %vm793, %v5339, 0
        %5349 = vmatprep.subr.bf16.mxu0 0
        %5350 = vmatpush1.bf16.msra.mxu0 %v5344
        %5351 = vmatprep.subr.bf16.mxu0 0
        %5352 = vmatpush1.bf16.msra.mxu0 0
        %5353 = vmatprep.subr.bf16.mxu0 0
        %5354 = vmatpush1.bf16.msra.mxu0 0
        %5355 = vmatprep.subr.bf16.mxu0 0
        %5356 = vmatpush1.bf16.msra.mxu0 0
        %5357 = vmatprep.subr.bf16.mxu0 0
        %5358 = vmatpush1.bf16.msra.mxu0 0
        %5359 = vmatprep.subr.bf16.mxu0 0
        %5360 = vmatpush1.bf16.msra.mxu0 0
        %5361 = vmatprep.subr.bf16.mxu0 0
        %5362 = vmatpush1.bf16.msra.mxu0 0
        %5363 = vmatprep.subr.bf16.mxu0 0
        %5364 = vmatpush1.bf16.msra.mxu0 0
        %5365 = vmatprep.subr.bf16.mxu0 0
        %5366 = vmatpush1.bf16.msra.mxu0 0
        %5367 = vmatprep.subr.bf16.mxu0 0
        %5368 = vmatpush1.bf16.msra.mxu0 0
        %5369 = vmatprep.subr.bf16.mxu0 0
        %5370 = vmatpush1.bf16.msra.mxu0 0
        %5371 = vmatprep.subr.bf16.mxu0 0
        %5372 = vmatpush1.bf16.msra.mxu0 0
        %5373 = vmatprep.subr.bf16.mxu0 0
        %5374 = vmatpush1.bf16.msra.mxu0 0
        %5375 = vmatprep.subr.bf16.mxu0 0
        %5376 = vmatpush1.bf16.msra.mxu0 0
        %5377 = vmatprep.subr.bf16.mxu0 0
        %5378 = vmatpush1.bf16.msra.mxu0 0
        %5379 = vmatprep.subr.bf16.mxu0 0
        %5380 = vmatpush1.bf16.msra.mxu0 0
        %5381 = vmatprep.mubr.bf16.mxu0 0
        %5382 = vmatmul.mubr.bf16.gmra.mrb[0].mxu0 %v5347
        %v5383 = vpop.f32.mrb[0].mxu0
        %v5384 = vadd.f32 0.0, %v5383
        %v5385 = vpop.f32.mrb[0].mxu0
        %v5386 = vpop.f32.mrb[0].mxu0
        %v5387 = vpop.f32.mrb[0].mxu0
        %5388 = vdwg.mxu0
        %v5389 = vadd.f32 %v5226, %v5384
        %5390 = vrot.lane.b32.xlu0 %v4251, 16
        %v5391 = vpop.permute.xlu0 %5390
        %5392 = vrot.lane.b32.xlu0 %v4252, 16
        %v5393 = vpop.permute.xlu0 %5392
        %v5395 = vsel %vm793, %v5391, 0
        %v5398 = vsel %vm793, %v5393, 0
        %5400 = vmatprep.subr.bf16.mxu0 0
        %5401 = vmatpush1.bf16.xpose.msra.mxu0 %v5398
        %5402 = vmatprep.subr.bf16.mxu0 0
        %5403 = vmatpush1.bf16.xpose.msra.mxu0 0
        %5404 = vmatprep.subr.bf16.mxu0 0
        %5405 = vmatpush1.bf16.xpose.msra.mxu0 0
        %5406 = vmatprep.subr.bf16.mxu0 0
        %5407 = vmatpush1.bf16.xpose.msra.mxu0 0
        %5408 = vmatprep.subr.bf16.mxu0 0
        %5409 = vmatpush1.bf16.xpose.msra.mxu0 0
        %5410 = vmatprep.subr.bf16.mxu0 0
        %5411 = vmatpush1.bf16.xpose.msra.mxu0 0
        %5412 = vmatprep.subr.bf16.mxu0 0
        %5413 = vmatpush1.bf16.xpose.msra.mxu0 0
        %5414 = vmatprep.subr.bf16.mxu0 0
        %5415 = vmatpush1.bf16.xpose.msra.mxu0 0
        %5416 = vmatprep.subr.bf16.mxu0 0
        %5417 = vmatpush1.bf16.xpose.msra.mxu0 0
        %5418 = vmatprep.subr.bf16.mxu0 0
        %5419 = vmatpush1.bf16.xpose.msra.mxu0 0
        %5420 = vmatprep.subr.bf16.mxu0 0
        %5421 = vmatpush1.bf16.xpose.msra.mxu0 0
        %5422 = vmatprep.subr.bf16.mxu0 0
        %5423 = vmatpush1.bf16.xpose.msra.mxu0 0
        %5424 = vmatprep.subr.bf16.mxu0 0
        %5425 = vmatpush1.bf16.xpose.msra.mxu0 0
        %5426 = vmatprep.subr.bf16.mxu0 0
        %5427 = vmatpush1.bf16.xpose.msra.mxu0 0
        %5428 = vmatprep.subr.bf16.mxu0 0
        %5429 = vmatpush1.bf16.xpose.msra.mxu0 0
        %5430 = vmatprep.subr.bf16.mxu0 0
        %5431 = vmatpush1.bf16.xpose.msra.mxu0 0
        %5432 = vmatprep.mubr.bf16.mxu0 0
        %5433 = vmatmul.mubr.bf16.gmra.mrb[0].mxu0 %v5395
        %v5434 = vpop.f32.mrb[0].mxu0
        %v5435 = vadd.f32 0.0, %v5434
        %v5436 = vpop.f32.mrb[0].mxu0
        %v5437 = vpop.f32.mrb[0].mxu0
        %v5438 = vpop.f32.mrb[0].mxu0
        %5439 = vdwg.mxu0
        %v5440 = vmul.f32 %v5435, 0.25
        %v5441 = vadd.f32 %v5440, %v845
        %v5442 = vsel %vm848, %v5441, -inf
        %5443 = vmax.xlane.f32.xlu0 %v5442
        %v5444 = vpop.xlane.xlu0 %5443
        %v5445 = vsub.f32 %v5441, %v5444
        %v5446 = vmul.f32 %v5445, 1.442695
        %v5447 = vpow.pop %v5446
        %v5448 = vsel %vm848, %v5447, 0.0
        %5449 = vadd.xlane.f32.xlu0 %v5448
        %v5450 = vpop.xlane.xlu0 %5449
        %v5451 = vrcp.pop %v5450
        %v5452 = vmul.f32 %v5447, %v5451
        %v5453 = vpack.c.bf16 %v5452, %v5452
        %5454 = vrot.lane.b32.xlu0 %v4253, 16
        %v5455 = vpop.permute.xlu0 %5454
        %v5457 = vsel %vm848, %v5453, 0
        %v5460 = vsel %vm864, %v5455, 0
        %5462 = vmatprep.subr.bf16.mxu0 0
        %5463 = vmatpush1.bf16.msra.mxu0 %v5460
        %5464 = vmatprep.subr.bf16.mxu0 0
        %5465 = vmatpush1.bf16.msra.mxu0 0
        %5466 = vmatprep.subr.bf16.mxu0 0
        %5467 = vmatpush1.bf16.msra.mxu0 0
        %5468 = vmatprep.subr.bf16.mxu0 0
        %5469 = vmatpush1.bf16.msra.mxu0 0
        %5470 = vmatprep.subr.bf16.mxu0 0
        %5471 = vmatpush1.bf16.msra.mxu0 0
        %5472 = vmatprep.subr.bf16.mxu0 0
        %5473 = vmatpush1.bf16.msra.mxu0 0
        %5474 = vmatprep.subr.bf16.mxu0 0
        %5475 = vmatpush1.bf16.msra.mxu0 0
        %5476 = vmatprep.subr.bf16.mxu0 0
        %5477 = vmatpush1.bf16.msra.mxu0 0
        %5478 = vmatprep.subr.bf16.mxu0 0
        %5479 = vmatpush1.bf16.msra.mxu0 0
        %5480 = vmatprep.subr.bf16.mxu0 0
        %5481 = vmatpush1.bf16.msra.mxu0 0
        %5482 = vmatprep.subr.bf16.mxu0 0
        %5483 = vmatpush1.bf16.msra.mxu0 0
        %5484 = vmatprep.subr.bf16.mxu0 0
        %5485 = vmatpush1.bf16.msra.mxu0 0
        %5486 = vmatprep.subr.bf16.mxu0 0
        %5487 = vmatpush1.bf16.msra.mxu0 0
        %5488 = vmatprep.subr.bf16.mxu0 0
        %5489 = vmatpush1.bf16.msra.mxu0 0
        %5490 = vmatprep.subr.bf16.mxu0 0
        %5491 = vmatpush1.bf16.msra.mxu0 0
        %5492 = vmatprep.subr.bf16.mxu0 0
        %5493 = vmatpush1.bf16.msra.mxu0 0
        %5494 = vmatprep.mubr.bf16.mxu0 0
        %5495 = vmatmul.mubr.bf16.gmra.mrb[0].mxu0 %v5457
        %v5496 = vpop.f32.mrb[0].mxu0
        %v5497 = vadd.f32 0.0, %v5496
        %v5498 = vpop.f32.mrb[0].mxu0
        %v5499 = vpop.f32.mrb[0].mxu0
        %v5500 = vpop.f32.mrb[0].mxu0
        %5501 = vdwg.mxu0
        %v5502 = vpack.c.bf16 %v5497, %v5497
        %v5505 = vunpack.c.l.b16 %v4066
        %v5506 = vunpack.c.l.b16 %v4067
        %v5507 = vpack.c.b16 %v5506, %v5505
        %v5510 = vsel %vm793, %v5502, 0
        %5512 = vmatprep.subr.bf16.mxu0 0
        %5513 = vmatpush1.bf16.msra.mxu0 %v5507
        %5514 = vmatprep.subr.bf16.mxu0 0
        %5515 = vmatpush1.bf16.msra.mxu0 0
        %5516 = vmatprep.subr.bf16.mxu0 0
        %5517 = vmatpush1.bf16.msra.mxu0 0
        %5518 = vmatprep.subr.bf16.mxu0 0
        %5519 = vmatpush1.bf16.msra.mxu0 0
        %5520 = vmatprep.subr.bf16.mxu0 0
        %5521 = vmatpush1.bf16.msra.mxu0 0
        %5522 = vmatprep.subr.bf16.mxu0 0
        %5523 = vmatpush1.bf16.msra.mxu0 0
        %5524 = vmatprep.subr.bf16.mxu0 0
        %5525 = vmatpush1.bf16.msra.mxu0 0
        %5526 = vmatprep.subr.bf16.mxu0 0
        %5527 = vmatpush1.bf16.msra.mxu0 0
        %5528 = vmatprep.subr.bf16.mxu0 0
        %5529 = vmatpush1.bf16.msra.mxu0 0
        %5530 = vmatprep.subr.bf16.mxu0 0
        %5531 = vmatpush1.bf16.msra.mxu0 0
        %5532 = vmatprep.subr.bf16.mxu0 0
        %5533 = vmatpush1.bf16.msra.mxu0 0
        %5534 = vmatprep.subr.bf16.mxu0 0
        %5535 = vmatpush1.bf16.msra.mxu0 0
        %5536 = vmatprep.subr.bf16.mxu0 0
        %5537 = vmatpush1.bf16.msra.mxu0 0
        %5538 = vmatprep.subr.bf16.mxu0 0
        %5539 = vmatpush1.bf16.msra.mxu0 0
        %5540 = vmatprep.subr.bf16.mxu0 0
        %5541 = vmatpush1.bf16.msra.mxu0 0
        %5542 = vmatprep.subr.bf16.mxu0 0
        %5543 = vmatpush1.bf16.msra.mxu0 0
        %5544 = vmatprep.mubr.bf16.mxu0 0
        %5545 = vmatmul.mubr.bf16.gmra.mrb[0].mxu0 %v5510
        %v5546 = vpop.f32.mrb[0].mxu0
        %v5547 = vadd.f32 0.0, %v5546
        %v5548 = vpop.f32.mrb[0].mxu0
        %v5549 = vpop.f32.mrb[0].mxu0
        %v5550 = vpop.f32.mrb[0].mxu0
        %5551 = vdwg.mxu0
        %v5552 = vadd.f32 %v5389, %v5547
        %v5554 = vlaneseq
        %v5555 = vshrl.u32 %v5554, 7
        %v5556 = vsub.s32 0, %v5555
        %v5557 = vrot.slane %v4069, %v5556
        %v5559 = vadd.f32 %v5552, %v5557
        %v5560 = vadd.f32 %v5559, %v4031
        %s5561 = scalar_lea.vmem %s7, 2
        %v5562 = vld [vmem:[%s5561] sm:$0x1]
        %s5563 = scalar_lea.vmem %s8, 2
        %v5564 = vld [vmem:[%s5563] sm:$0x1]
        %v5565 = vsel %vm705, %v5560, 0.0
        %5566 = vadd.xlane.f32.xlu0 %v5565
        %v5567 = vpop.xlane.xlu0 %5566
        %v5568 = vmul.f32 %v5567, %v2114
        %v5569 = vsub.f32 %v5560, %v5568
        %v5570 = vmul.f32 %v5569, %v5569
        %v5571 = vsel %vm705, %v5570, 0.0
        %5572 = vadd.xlane.f32.xlu0 %v5571
        %v5573 = vpop.xlane.xlu0 %5572
        %v5574 = vmul.f32 %v5573, %v2114
        %v5575 = vadd.f32 %v5574, 1e-05
        %v5576 = vrsqrt.pop %v5575
        %v5577 = vmul.f32 %v5569, %v5576
        %v5579 = vlaneseq
        %v5580 = vshrl.u32 %v5579, 7
        %v5581 = vsub.s32 0, %v5580
        %v5582 = vrot.slane %v5562, %v5581
        %v5584 = vmul.f32 %v5577, %v5582
        %v5586 = vlaneseq
        %v5587 = vshrl.u32 %v5586, 7
        %v5588 = vsub.s32 0, %v5587
        %v5589 = vrot.slane %v5564, %v5588
        %v5591 = vadd.f32 %v5584, %v5589
        %v5592 = vmul.f32 %v5591, %v2142
        %v5593 = vpack.c.bf16 %v5592, %v5592
        %v5595 = vlaneseq
        %v5596 = vshrl.u32 %v5595, 7
        %v5597 = vsub.s32 0, %v5596
        %v5598 = vrot.slane %v4080, %v5597
        %v5608 = vunpack.c.l.b16 %v4071
        %v5609 = vunpack.c.l.b16 %v4072
        %v5610 = vunpack.c.l.b16 %v4073
        %v5611 = vunpack.c.l.b16 %v4074
        %v5612 = vunpack.c.l.b16 %v4075
        %v5613 = vunpack.c.l.b16 %v4076
        %v5614 = vunpack.c.l.b16 %v4077
        %v5615 = vunpack.c.l.b16 %v4078
        %v5616 = vpack.c.b16 %v5609, %v5608
        %v5617 = vpack.c.b16 %v5611, %v5610
        %v5618 = vpack.c.b16 %v5613, %v5612
        %v5619 = vpack.c.b16 %v5615, %v5614
        %v5625 = vsel %vm705, %v5593, 0
        %5627 = vmatprep.subr.bf16.mxu0 0
        %5628 = vmatpush1.bf16.msra.mxu0 %v5616
        %5629 = vmatprep.subr.bf16.mxu0 0
        %5630 = vmatpush1.bf16.msra.mxu0 %v5617
        %5631 = vmatprep.subr.bf16.mxu0 0
        %5632 = vmatpush1.bf16.msra.mxu0 %v5618
        %5633 = vmatprep.subr.bf16.mxu0 0
        %5634 = vmatpush1.bf16.msra.mxu0 %v5619
        %5635 = vmatprep.subr.bf16.mxu0 0
        %5636 = vmatpush1.bf16.msra.mxu0 0
        %5637 = vmatprep.subr.bf16.mxu0 0
        %5638 = vmatpush1.bf16.msra.mxu0 0
        %5639 = vmatprep.subr.bf16.mxu0 0
        %5640 = vmatpush1.bf16.msra.mxu0 0
        %5641 = vmatprep.subr.bf16.mxu0 0
        %5642 = vmatpush1.bf16.msra.mxu0 0
        %5643 = vmatprep.subr.bf16.mxu0 0
        %5644 = vmatpush1.bf16.msra.mxu0 0
        %5645 = vmatprep.subr.bf16.mxu0 0
        %5646 = vmatpush1.bf16.msra.mxu0 0
        %5647 = vmatprep.subr.bf16.mxu0 0
        %5648 = vmatpush1.bf16.msra.mxu0 0
        %5649 = vmatprep.subr.bf16.mxu0 0
        %5650 = vmatpush1.bf16.msra.mxu0 0
        %5651 = vmatprep.subr.bf16.mxu0 0
        %5652 = vmatpush1.bf16.msra.mxu0 0
        %5653 = vmatprep.subr.bf16.mxu0 0
        %5654 = vmatpush1.bf16.msra.mxu0 0
        %5655 = vmatprep.subr.bf16.mxu0 0
        %5656 = vmatpush1.bf16.msra.mxu0 0
        %5657 = vmatprep.subr.bf16.mxu0 0
        %5658 = vmatpush1.bf16.msra.mxu0 0
        %5659 = vmatprep.mubr.bf16.mxu0 0
        %5660 = vmatmul.mubr.bf16.gmra.mrb[0].mxu0 %v5625
        %v5661 = vpop.f32.mrb[0].mxu0
        %v5662 = vadd.f32 %v5598, %v5661
        %v5663 = vpop.f32.mrb[0].mxu0
        %v5664 = vpop.f32.mrb[0].mxu0
        %v5665 = vpop.f32.mrb[0].mxu0
        %5666 = vdwg.mxu0
        %v5667 = vmax.f32 %v5662, 0.0
        %v5668 = vpack.c.bf16 %v5667, %v5667
        %v5670 = vlaneseq
        %v5671 = vshrl.u32 %v5670, 7
        %v5672 = vsub.s32 0, %v5671
        %v5673 = vrot.slane %v4085, %v5672
        %v5677 = vunpack.c.l.b16 %v4082
        %v5678 = vunpack.c.l.b16 %v4083
        %v5679 = vpack.c.b16 %v5678, %v5677
        %v5682 = vsel %vm793, %v5668, 0
        %5684 = vmatprep.subr.bf16.mxu0 0
        %5685 = vmatpush1.bf16.msra.mxu0 %v5679
        %5686 = vmatprep.subr.bf16.mxu0 0
        %5687 = vmatpush1.bf16.msra.mxu0 0
        %5688 = vmatprep.subr.bf16.mxu0 0
        %5689 = vmatpush1.bf16.msra.mxu0 0
        %5690 = vmatprep.subr.bf16.mxu0 0
        %5691 = vmatpush1.bf16.msra.mxu0 0
        %5692 = vmatprep.subr.bf16.mxu0 0
        %5693 = vmatpush1.bf16.msra.mxu0 0
        %5694 = vmatprep.subr.bf16.mxu0 0
        %5695 = vmatpush1.bf16.msra.mxu0 0
        %5696 = vmatprep.subr.bf16.mxu0 0
        %5697 = vmatpush1.bf16.msra.mxu0 0
        %5698 = vmatprep.subr.bf16.mxu0 0
        %5699 = vmatpush1.bf16.msra.mxu0 0
        %5700 = vmatprep.subr.bf16.mxu0 0
        %5701 = vmatpush1.bf16.msra.mxu0 0
        %5702 = vmatprep.subr.bf16.mxu0 0
        %5703 = vmatpush1.bf16.msra.mxu0 0
        %5704 = vmatprep.subr.bf16.mxu0 0
        %5705 = vmatpush1.bf16.msra.mxu0 0
        %5706 = vmatprep.subr.bf16.mxu0 0
        %5707 = vmatpush1.bf16.msra.mxu0 0
        %5708 = vmatprep.subr.bf16.mxu0 0
        %5709 = vmatpush1.bf16.msra.mxu0 0
        %5710 = vmatprep.subr.bf16.mxu0 0
        %5711 = vmatpush1.bf16.msra.mxu0 0
        %5712 = vmatprep.subr.bf16.mxu0 0
        %5713 = vmatpush1.bf16.msra.mxu0 0
        %5714 = vmatprep.subr.bf16.mxu0 0
        %5715 = vmatpush1.bf16.msra.mxu0 0
        %5716 = vmatprep.mubr.bf16.mxu0 0
        %5717 = vmatmul.mubr.bf16.gmra.mrb[0].mxu0 %v5682
        %v5718 = vpop.f32.mrb[0].mxu0
        %v5719 = vadd.f32 %v5673, %v5718
        %v5720 = vpop.f32.mrb[0].mxu0
        %v5721 = vpop.f32.mrb[0].mxu0
        %v5722 = vpop.f32.mrb[0].mxu0
        %5723 = vdwg.mxu0
        %v5724 = vadd.f32 %v5719, %v5592
        %s5725 = scalar_lea.vmem %s13, 2
        %v5726 = vld [vmem:[%s5725] sm:$0x1]
        %s5727 = scalar_lea.vmem %s14, 2
        %v5728 = vld [vmem:[%s5727] sm:$0x1]
        %v5729 = vsel %vm705, %v5724, 0.0
        %5730 = vadd.xlane.f32.xlu0 %v5729
        %v5731 = vpop.xlane.xlu0 %5730
        %v5732 = vmul.f32 %v5731, %v2114
        %v5733 = vsub.f32 %v5724, %v5732
        %v5734 = vmul.f32 %v5733, %v5733
        %v5735 = vsel %vm705, %v5734, 0.0
        %5736 = vadd.xlane.f32.xlu0 %v5735
        %v5737 = vpop.xlane.xlu0 %5736
        %v5738 = vmul.f32 %v5737, %v2114
        %v5739 = vadd.f32 %v5738, 1e-05
        %v5740 = vrsqrt.pop %v5739
        %v5741 = vmul.f32 %v5733, %v5740
        %v5743 = vlaneseq
        %v5744 = vshrl.u32 %v5743, 7
        %v5745 = vsub.s32 0, %v5744
        %v5746 = vrot.slane %v5726, %v5745
        %v5748 = vmul.f32 %v5741, %v5746
        %v5750 = vlaneseq
        %v5751 = vshrl.u32 %v5750, 7
        %v5752 = vsub.s32 0, %v5751
        %v5753 = vrot.slane %v5728, %v5752
        %v5755 = vadd.f32 %v5748, %v5753
        %v5756 = vmul.f32 %v5755, %v2142
        %s5757 = scalar_lea.vmem %s3, 288
        %v5758 = vld [vmem:[%s5757] sm:$0xff]
        %v5759 = vld [vmem:[%s5757 + $0x8] sm:$0xf]
        %v5760 = vld [vmem:[%s5757 + $0xc] sm:$0xff]
        %v5761 = vld [vmem:[%s5757 + $0x14] sm:$0xf]
        %v5762 = vld [vmem:[%s5757 + $0x18] sm:$0xff]
        %v5763 = vld [vmem:[%s5757 + $0x20] sm:$0xf]
        %v5764 = vld [vmem:[%s5757 + $0x24] sm:$0xff]
        %v5765 = vld [vmem:[%s5757 + $0x2c] sm:$0xf]
        %v5766 = vld [vmem:[%s5757 + $0x30] sm:$0xff]
        %v5767 = vld [vmem:[%s5757 + $0x38] sm:$0xf]
        %v5768 = vld [vmem:[%s5757 + $0x3c] sm:$0xff]
        %v5769 = vld [vmem:[%s5757 + $0x44] sm:$0xf]
        %v5770 = vld [vmem:[%s5757 + $0x48] sm:$0xff]
        %v5771 = vld [vmem:[%s5757 + $0x50] sm:$0xf]
        %v5772 = vld [vmem:[%s5757 + $0x54] sm:$0xff]
        %v5773 = vld [vmem:[%s5757 + $0x5c] sm:$0xf]
        %s5774 = scalar_lea.vmem %s4, 9
        %v5775 = vld [vmem:[%s5774] sm:$0x7]
        %s5776 = scalar_lea.vmem %s5, 192
        %v5777 = vld [vmem:[%s5776] sm:$0xf]
        %v5778 = vld [vmem:[%s5776 + $0x4] sm:$0xf]
        %v5779 = vld [vmem:[%s5776 + $0x8] sm:$0xf]
        %v5780 = vld [vmem:[%s5776 + $0xc] sm:$0xf]
        %v5781 = vld [vmem:[%s5776 + $0x10] sm:$0xf]
        %v5782 = vld [vmem:[%s5776 + $0x14] sm:$0xf]
        %v5783 = vld [vmem:[%s5776 + $0x18] sm:$0xf]
        %v5784 = vld [vmem:[%s5776 + $0x1c] sm:$0xf]
        %v5785 = vld [vmem:[%s5776 + $0x20] sm:$0xf]
        %v5786 = vld [vmem:[%s5776 + $0x24] sm:$0xf]
        %v5787 = vld [vmem:[%s5776 + $0x28] sm:$0xf]
        %v5788 = vld [vmem:[%s5776 + $0x2c] sm:$0xf]
        %v5789 = vld [vmem:[%s5776 + $0x30] sm:$0xf]
        %v5790 = vld [vmem:[%s5776 + $0x34] sm:$0xf]
        %v5791 = vld [vmem:[%s5776 + $0x38] sm:$0xf]
        %v5792 = vld [vmem:[%s5776 + $0x3c] sm:$0xf]
        %s5793 = scalar_lea.vmem %s6, 3
        %v5794 = vld [vmem:[%s5793] sm:$0x1]
        %s5795 = scalar_lea.vmem %s9, 96
        %v5796 = vld [vmem:[%s5795] sm:$0xf]
        %v5797 = vld [vmem:[%s5795 + $0x4] sm:$0xf]
        %v5798 = vld [vmem:[%s5795 + $0x8] sm:$0xf]
        %v5799 = vld [vmem:[%s5795 + $0xc] sm:$0xf]
        %v5800 = vld [vmem:[%s5795 + $0x10] sm:$0xf]
        %v5801 = vld [vmem:[%s5795 + $0x14] sm:$0xf]
        %v5802 = vld [vmem:[%s5795 + $0x18] sm:$0xf]
        %v5803 = vld [vmem:[%s5795 + $0x1c] sm:$0xf]
        %s5804 = scalar_lea.vmem %s10, 3
        %v5805 = vld [vmem:[%s5804] sm:$0x1]
        %s5806 = scalar_lea.vmem %s11, 24
        %v5807 = vld [vmem:[%s5806] sm:$0xf]
        %v5808 = vld [vmem:[%s5806 + $0x4] sm:$0xf]
        %s5809 = scalar_lea.vmem %s12, 3
        %v5810 = vld [vmem:[%s5809] sm:$0x1]
        %v5811 = vpack.c.bf16 %v5756, %v5756
        %v5813 = vlaneseq
        %v5814 = vshrl.u32 %v5813, 7
        %v5815 = vsub.s32 0, %v5814
        %v5816 = vrot.slane %v5775, %v5815
        %v5817 = vlaneseq
        %v5818 = vshrl.u32 %v5817, 7
        %v5819 = vsub.s32 1, %v5818
        %v5820 = vrot.slane %v5775, %v5819
        %v5821 = vlaneseq
        %v5822 = vshrl.u32 %v5821, 7
        %v5823 = vsub.s32 2, %v5822
        %v5824 = vrot.slane %v5775, %v5823
        %v5844 = vunpack.c.l.b16 %v5758
        %v5845 = vunpack.c.h.b16 %v5758
        %v5846 = vunpack.c.l.b16 %v5759
        %v5847 = vunpack.c.l.b16 %v5760
        %v5848 = vunpack.c.h.b16 %v5760
        %v5849 = vunpack.c.l.b16 %v5761
        %v5850 = vunpack.c.l.b16 %v5762
        %v5851 = vunpack.c.h.b16 %v5762
        %v5852 = vunpack.c.l.b16 %v5763
        %v5853 = vunpack.c.l.b16 %v5764
        %v5854 = vunpack.c.h.b16 %v5764
        %v5855 = vunpack.c.l.b16 %v5765
        %v5856 = vunpack.c.l.b16 %v5766
        %v5857 = vunpack.c.h.b16 %v5766
        %v5858 = vunpack.c.l.b16 %v5767
        %v5859 = vunpack.c.l.b16 %v5768
        %v5860 = vunpack.c.h.b16 %v5768
        %v5861 = vunpack.c.l.b16 %v5769
        %v5862 = vunpack.c.l.b16 %v5770
        %v5863 = vunpack.c.h.b16 %v5770
        %v5864 = vunpack.c.l.b16 %v5771
        %v5865 = vunpack.c.l.b16 %v5772
        %v5866 = vunpack.c.h.b16 %v5772
        %v5867 = vunpack.c.l.b16 %v5773
        %v5868 = vpack.c.b16 %v5847, %v5844
        %v5869 = vpack.c.b16 %v5848, %v5845
        %v5870 = vpack.c.b16 %v5849, %v5846
        %v5871 = vpack.c.b16 %v5853, %v5850
        %v5872 = vpack.c.b16 %v5854, %v5851
        %v5873 = vpack.c.b16 %v5855, %v5852
        %v5874 = vpack.c.b16 %v5859, %v5856
        %v5875 = vpack.c.b16 %v5860, %v5857
        %v5876 = vpack.c.b16 %v5861, %v5858
        %v5877 = vpack.c.b16 %v5865, %v5862
        %v5878 = vpack.c.b16 %v5866, %v5863
        %v5879 = vpack.c.b16 %v5867, %v5864
        %v5893 = vsel %vm705, %v5811, 0
        %5895 = vmatprep.subr.bf16.mxu0 %v5869
        %5896 = vmatpush1.bf16.msra.mxu0 %v5868
        %5897 = vmatprep.subr.bf16.mxu0 %v5872
        %5898 = vmatpush1.bf16.msra.mxu0 %v5871
        %5899 = vmatprep.subr.bf16.mxu0 %v5875
        %5900 = vmatpush1.bf16.msra.mxu0 %v5874
        %5901 = vmatprep.subr.bf16.mxu0 %v5878
        %5902 = vmatpush1.bf16.msra.mxu0 %v5877
        %5903 = vmatprep.subr.bf16.mxu0 0
        %5904 = vmatpush1.bf16.msra.mxu0 0
        %5905 = vmatprep.subr.bf16.mxu0 0
        %5906 = vmatpush1.bf16.msra.mxu0 0
        %5907 = vmatprep.subr.bf16.mxu0 0
        %5908 = vmatpush1.bf16.msra.mxu0 0
        %5909 = vmatprep.subr.bf16.mxu0 0
        %5910 = vmatpush1.bf16.msra.mxu0 0
        %5911 = vmatprep.subr.bf16.mxu0 0
        %5912 = vmatpush1.bf16.msra.mxu0 0
        %5913 = vmatprep.subr.bf16.mxu0 0
        %5914 = vmatpush1.bf16.msra.mxu0 0
        %5915 = vmatprep.subr.bf16.mxu0 0
        %5916 = vmatpush1.bf16.msra.mxu0 0
        %5917 = vmatprep.subr.bf16.mxu0 0
        %5918 = vmatpush1.bf16.msra.mxu0 0
        %5919 = vmatprep.subr.bf16.mxu0 0
        %5920 = vmatpush1.bf16.msra.mxu0 0
        %5921 = vmatprep.subr.bf16.mxu0 0
        %5922 = vmatpush1.bf16.msra.mxu0 0
        %5923 = vmatprep.subr.bf16.mxu0 0
        %5924 = vmatpush1.bf16.msra.mxu0 0
        %5925 = vmatprep.subr.bf16.mxu0 0
        %5926 = vmatpush1.bf16.msra.mxu0 0
        %5927 = vmatprep.mubr.bf16.mxu0 0
        %5928 = vmatmul.mubr.bf16.gmra.mrb[0].mxu0 %v5893
        %v5929 = vpop.f32.mrb[0].mxu0
        %v5930 = vadd.f32 %v5816, %v5929
        %v5931 = vpop.f32.mrb[0].mxu0
        %v5932 = vadd.f32 %v5820, %v5931
        %v5933 = vpop.f32.mrb[0].mxu0
        %v5934 = vpop.f32.mrb[0].mxu0
        %5935 = vdwg.mxu0
        %5936 = vmatprep.subr.bf16.mxu0 0
        %5937 = vmatpush1.bf16.msra.mxu0 %v5870
        %5938 = vmatprep.subr.bf16.mxu0 0
        %5939 = vmatpush1.bf16.msra.mxu0 %v5873
        %5940 = vmatprep.subr.bf16.mxu0 0
        %5941 = vmatpush1.bf16.msra.mxu0 %v5876
        %5942 = vmatprep.subr.bf16.mxu0 0
        %5943 = vmatpush1.bf16.msra.mxu0 %v5879
        %5944 = vmatprep.subr.bf16.mxu0 0
        %5945 = vmatpush1.bf16.msra.mxu0 0
        %5946 = vmatprep.subr.bf16.mxu0 0
        %5947 = vmatpush1.bf16.msra.mxu0 0
        %5948 = vmatprep.subr.bf16.mxu0 0
        %5949 = vmatpush1.bf16.msra.mxu0 0
        %5950 = vmatprep.subr.bf16.mxu0 0
        %5951 = vmatpush1.bf16.msra.mxu0 0
        %5952 = vmatprep.subr.bf16.mxu0 0
        %5953 = vmatpush1.bf16.msra.mxu0 0
        %5954 = vmatprep.subr.bf16.mxu0 0
        %5955 = vmatpush1.bf16.msra.mxu0 0
        %5956 = vmatprep.subr.bf16.mxu0 0
        %5957 = vmatpush1.bf16.msra.mxu0 0
        %5958 = vmatprep.subr.bf16.mxu0 0
        %5959 = vmatpush1.bf16.msra.mxu0 0
        %5960 = vmatprep.subr.bf16.mxu0 0
        %5961 = vmatpush1.bf16.msra.mxu0 0
        %5962 = vmatprep.subr.bf16.mxu0 0
        %5963 = vmatpush1.bf16.msra.mxu0 0
        %5964 = vmatprep.subr.bf16.mxu0 0
        %5965 = vmatpush1.bf16.msra.mxu0 0
        %5966 = vmatprep.subr.bf16.mxu0 0
        %5967 = vmatpush1.bf16.msra.mxu0 0
        %5968 = vmatprep.mubr.bf16.mxu0 0
        %5969 = vmatmul.mubr.bf16.gmra.mrb[0].mxu0 %v5893
        %v5970 = vpop.f32.mrb[0].mxu0
        %v5971 = vadd.f32 %v5824, %v5970
        %v5972 = vpop.f32.mrb[0].mxu0
        %v5973 = vpop.f32.mrb[0].mxu0
        %v5974 = vpop.f32.mrb[0].mxu0
        %5975 = vdwg.mxu0
        %v5976 = vpack.c.bf16 %v5930, %v5930
        %v5977 = vpack.c.bf16 %v5932, %v5932
        %v5978 = vpack.c.bf16 %v5971, %v5971
        %v5980 = vsel %vm793, %v5976, 0
        %v5983 = vsel %vm793, %v5977, 0
        %5985 = vmatprep.subr.bf16.mxu0 0
        %5986 = vmatpush1.bf16.xpose.msra.mxu0 %v5983
        %5987 = vmatprep.subr.bf16.mxu0 0
        %5988 = vmatpush1.bf16.xpose.msra.mxu0 0
        %5989 = vmatprep.subr.bf16.mxu0 0
        %5990 = vmatpush1.bf16.xpose.msra.mxu0 0
        %5991 = vmatprep.subr.bf16.mxu0 0
        %5992 = vmatpush1.bf16.xpose.msra.mxu0 0
        %5993 = vmatprep.subr.bf16.mxu0 0
        %5994 = vmatpush1.bf16.xpose.msra.mxu0 0
        %5995 = vmatprep.subr.bf16.mxu0 0
        %5996 = vmatpush1.bf16.xpose.msra.mxu0 0
        %5997 = vmatprep.subr.bf16.mxu0 0
        %5998 = vmatpush1.bf16.xpose.msra.mxu0 0
        %5999 = vmatprep.subr.bf16.mxu0 0
        %6000 = vmatpush1.bf16.xpose.msra.mxu0 0
        %6001 = vmatprep.subr.bf16.mxu0 0
        %6002 = vmatpush1.bf16.xpose.msra.mxu0 0
        %6003 = vmatprep.subr.bf16.mxu0 0
        %6004 = vmatpush1.bf16.xpose.msra.mxu0 0
        %6005 = vmatprep.subr.bf16.mxu0 0
        %6006 = vmatpush1.bf16.xpose.msra.mxu0 0
        %6007 = vmatprep.subr.bf16.mxu0 0
        %6008 = vmatpush1.bf16.xpose.msra.mxu0 0
        %6009 = vmatprep.subr.bf16.mxu0 0
        %6010 = vmatpush1.bf16.xpose.msra.mxu0 0
        %6011 = vmatprep.subr.bf16.mxu0 0
        %6012 = vmatpush1.bf16.xpose.msra.mxu0 0
        %6013 = vmatprep.subr.bf16.mxu0 0
        %6014 = vmatpush1.bf16.xpose.msra.mxu0 0
        %6015 = vmatprep.subr.bf16.mxu0 0
        %6016 = vmatpush1.bf16.xpose.msra.mxu0 0
        %6017 = vmatprep.mubr.bf16.mxu0 0
        %6018 = vmatmul.mubr.bf16.gmra.mrb[0].mxu0 %v5980
        %v6019 = vpop.f32.mrb[0].mxu0
        %v6020 = vadd.f32 0.0, %v6019
        %v6021 = vpop.f32.mrb[0].mxu0
        %v6022 = vpop.f32.mrb[0].mxu0
        %v6023 = vpop.f32.mrb[0].mxu0
        %6024 = vdwg.mxu0
        %v6025 = vmul.f32 %v6020, 0.25
        %v6026 = vadd.f32 %v6025, %v845
        %v6027 = vsel %vm848, %v6026, -inf
        %6028 = vmax.xlane.f32.xlu0 %v6027
        %v6029 = vpop.xlane.xlu0 %6028
        %v6030 = vsub.f32 %v6026, %v6029
        %v6031 = vmul.f32 %v6030, 1.442695
        %v6032 = vpow.pop %v6031
        %v6033 = vsel %vm848, %v6032, 0.0
        %6034 = vadd.xlane.f32.xlu0 %v6033
        %v6035 = vpop.xlane.xlu0 %6034
        %v6036 = vrcp.pop %v6035
        %v6037 = vmul.f32 %v6032, %v6036
        %v6038 = vpack.c.bf16 %v6037, %v6037
        %v6040 = vsel %vm848, %v6038, 0
        %v6043 = vsel %vm864, %v5978, 0
        %6045 = vmatprep.subr.bf16.mxu0 0
        %6046 = vmatpush1.bf16.msra.mxu0 %v6043
        %6047 = vmatprep.subr.bf16.mxu0 0
        %6048 = vmatpush1.bf16.msra.mxu0 0
        %6049 = vmatprep.subr.bf16.mxu0 0
        %6050 = vmatpush1.bf16.msra.mxu0 0
        %6051 = vmatprep.subr.bf16.mxu0 0
        %6052 = vmatpush1.bf16.msra.mxu0 0
        %6053 = vmatprep.subr.bf16.mxu0 0
        %6054 = vmatpush1.bf16.msra.mxu0 0
        %6055 = vmatprep.subr.bf16.mxu0 0
        %6056 = vmatpush1.bf16.msra.mxu0 0
        %6057 = vmatprep.subr.bf16.mxu0 0
        %6058 = vmatpush1.bf16.msra.mxu0 0
        %6059 = vmatprep.subr.bf16.mxu0 0
        %6060 = vmatpush1.bf16.msra.mxu0 0
        %6061 = vmatprep.subr.bf16.mxu0 0
        %6062 = vmatpush1.bf16.msra.mxu0 0
        %6063 = vmatprep.subr.bf16.mxu0 0
        %6064 = vmatpush1.bf16.msra.mxu0 0
        %6065 = vmatprep.subr.bf16.mxu0 0
        %6066 = vmatpush1.bf16.msra.mxu0 0
        %6067 = vmatprep.subr.bf16.mxu0 0
        %6068 = vmatpush1.bf16.msra.mxu0 0
        %6069 = vmatprep.subr.bf16.mxu0 0
        %6070 = vmatpush1.bf16.msra.mxu0 0
        %6071 = vmatprep.subr.bf16.mxu0 0
        %6072 = vmatpush1.bf16.msra.mxu0 0
        %6073 = vmatprep.subr.bf16.mxu0 0
        %6074 = vmatpush1.bf16.msra.mxu0 0
        %6075 = vmatprep.subr.bf16.mxu0 0
        %6076 = vmatpush1.bf16.msra.mxu0 0
        %6077 = vmatprep.mubr.bf16.mxu0 0
        %6078 = vmatmul.mubr.bf16.gmra.mrb[0].mxu0 %v6040
        %v6079 = vpop.f32.mrb[0].mxu0
        %v6080 = vadd.f32 0.0, %v6079
        %v6081 = vpop.f32.mrb[0].mxu0
        %v6082 = vpop.f32.mrb[0].mxu0
        %v6083 = vpop.f32.mrb[0].mxu0
        %6084 = vdwg.mxu0
        %v6085 = vpack.c.bf16 %v6080, %v6080
        %6087 = vrot.lane.b32.xlu0 %v5976, 112
        %v6088 = vpop.permute.xlu0 %6087
        %6090 = vrot.lane.b32.xlu0 %v5977, 112
        %v6091 = vpop.permute.xlu0 %6090
        %v6093 = vsel %vm793, %v6088, 0
        %v6096 = vsel %vm793, %v6091, 0
        %6098 = vmatprep.subr.bf16.mxu0 0
        %6099 = vmatpush1.bf16.xpose.msra.mxu0 %v6096
        %6100 = vmatprep.subr.bf16.mxu0 0
        %6101 = vmatpush1.bf16.xpose.msra.mxu0 0
        %6102 = vmatprep.subr.bf16.mxu0 0
        %6103 = vmatpush1.bf16.xpose.msra.mxu0 0
        %6104 = vmatprep.subr.bf16.mxu0 0
        %6105 = vmatpush1.bf16.xpose.msra.mxu0 0
        %6106 = vmatprep.subr.bf16.mxu0 0
        %6107 = vmatpush1.bf16.xpose.msra.mxu0 0
        %6108 = vmatprep.subr.bf16.mxu0 0
        %6109 = vmatpush1.bf16.xpose.msra.mxu0 0
        %6110 = vmatprep.subr.bf16.mxu0 0
        %6111 = vmatpush1.bf16.xpose.msra.mxu0 0
        %6112 = vmatprep.subr.bf16.mxu0 0
        %6113 = vmatpush1.bf16.xpose.msra.mxu0 0
        %6114 = vmatprep.subr.bf16.mxu0 0
        %6115 = vmatpush1.bf16.xpose.msra.mxu0 0
        %6116 = vmatprep.subr.bf16.mxu0 0
        %6117 = vmatpush1.bf16.xpose.msra.mxu0 0
        %6118 = vmatprep.subr.bf16.mxu0 0
        %6119 = vmatpush1.bf16.xpose.msra.mxu0 0
        %6120 = vmatprep.subr.bf16.mxu0 0
        %6121 = vmatpush1.bf16.xpose.msra.mxu0 0
        %6122 = vmatprep.subr.bf16.mxu0 0
        %6123 = vmatpush1.bf16.xpose.msra.mxu0 0
        %6124 = vmatprep.subr.bf16.mxu0 0
        %6125 = vmatpush1.bf16.xpose.msra.mxu0 0
        %6126 = vmatprep.subr.bf16.mxu0 0
        %6127 = vmatpush1.bf16.xpose.msra.mxu0 0
        %6128 = vmatprep.subr.bf16.mxu0 0
        %6129 = vmatpush1.bf16.xpose.msra.mxu0 0
        %6130 = vmatprep.mubr.bf16.mxu0 0
        %6131 = vmatmul.mubr.bf16.gmra.mrb[0].mxu0 %v6093
        %v6132 = vpop.f32.mrb[0].mxu0
        %v6133 = vadd.f32 0.0, %v6132
        %v6134 = vpop.f32.mrb[0].mxu0
        %v6135 = vpop.f32.mrb[0].mxu0
        %v6136 = vpop.f32.mrb[0].mxu0
        %6137 = vdwg.mxu0
        %v6138 = vmul.f32 %v6133, 0.25
        %v6139 = vadd.f32 %v6138, %v845
        %v6140 = vsel %vm848, %v6139, -inf
        %6141 = vmax.xlane.f32.xlu0 %v6140
        %v6142 = vpop.xlane.xlu0 %6141
        %v6143 = vsub.f32 %v6139, %v6142
        %v6144 = vmul.f32 %v6143, 1.442695
        %v6145 = vpow.pop %v6144
        %v6146 = vsel %vm848, %v6145, 0.0
        %6147 = vadd.xlane.f32.xlu0 %v6146
        %v6148 = vpop.xlane.xlu0 %6147
        %v6149 = vrcp.pop %v6148
        %v6150 = vmul.f32 %v6145, %v6149
        %v6151 = vpack.c.bf16 %v6150, %v6150
        %6153 = vrot.lane.b32.xlu0 %v5978, 112
        %v6154 = vpop.permute.xlu0 %6153
        %v6156 = vsel %vm848, %v6151, 0
        %v6159 = vsel %vm864, %v6154, 0
        %6161 = vmatprep.subr.bf16.mxu0 0
        %6162 = vmatpush1.bf16.msra.mxu0 %v6159
        %6163 = vmatprep.subr.bf16.mxu0 0
        %6164 = vmatpush1.bf16.msra.mxu0 0
        %6165 = vmatprep.subr.bf16.mxu0 0
        %6166 = vmatpush1.bf16.msra.mxu0 0
        %6167 = vmatprep.subr.bf16.mxu0 0
        %6168 = vmatpush1.bf16.msra.mxu0 0
        %6169 = vmatprep.subr.bf16.mxu0 0
        %6170 = vmatpush1.bf16.msra.mxu0 0
        %6171 = vmatprep.subr.bf16.mxu0 0
        %6172 = vmatpush1.bf16.msra.mxu0 0
        %6173 = vmatprep.subr.bf16.mxu0 0
        %6174 = vmatpush1.bf16.msra.mxu0 0
        %6175 = vmatprep.subr.bf16.mxu0 0
        %6176 = vmatpush1.bf16.msra.mxu0 0
        %6177 = vmatprep.subr.bf16.mxu0 0
        %6178 = vmatpush1.bf16.msra.mxu0 0
        %6179 = vmatprep.subr.bf16.mxu0 0
        %6180 = vmatpush1.bf16.msra.mxu0 0
        %6181 = vmatprep.subr.bf16.mxu0 0
        %6182 = vmatpush1.bf16.msra.mxu0 0
        %6183 = vmatprep.subr.bf16.mxu0 0
        %6184 = vmatpush1.bf16.msra.mxu0 0
        %6185 = vmatprep.subr.bf16.mxu0 0
        %6186 = vmatpush1.bf16.msra.mxu0 0
        %6187 = vmatprep.subr.bf16.mxu0 0
        %6188 = vmatpush1.bf16.msra.mxu0 0
        %6189 = vmatprep.subr.bf16.mxu0 0
        %6190 = vmatpush1.bf16.msra.mxu0 0
        %6191 = vmatprep.subr.bf16.mxu0 0
        %6192 = vmatpush1.bf16.msra.mxu0 0
        %6193 = vmatprep.mubr.bf16.mxu0 0
        %6194 = vmatmul.mubr.bf16.gmra.mrb[0].mxu0 %v6156
        %v6195 = vpop.f32.mrb[0].mxu0
        %v6196 = vadd.f32 0.0, %v6195
        %v6197 = vpop.f32.mrb[0].mxu0
        %v6198 = vpop.f32.mrb[0].mxu0
        %v6199 = vpop.f32.mrb[0].mxu0
        %6200 = vdwg.mxu0
        %v6201 = vpack.c.bf16 %v6196, %v6196
        %v6204 = vunpack.c.l.b16 %v5779
        %v6205 = vunpack.c.l.b16 %v5780
        %v6206 = vpack.c.b16 %v6205, %v6204
        %v6209 = vsel %vm793, %v6201, 0
        %6211 = vmatprep.subr.bf16.mxu0 0
        %6212 = vmatpush1.bf16.msra.mxu0 %v6206
        %6213 = vmatprep.subr.bf16.mxu0 0
        %6214 = vmatpush1.bf16.msra.mxu0 0
        %6215 = vmatprep.subr.bf16.mxu0 0
        %6216 = vmatpush1.bf16.msra.mxu0 0
        %6217 = vmatprep.subr.bf16.mxu0 0
        %6218 = vmatpush1.bf16.msra.mxu0 0
        %6219 = vmatprep.subr.bf16.mxu0 0
        %6220 = vmatpush1.bf16.msra.mxu0 0
        %6221 = vmatprep.subr.bf16.mxu0 0
        %6222 = vmatpush1.bf16.msra.mxu0 0
        %6223 = vmatprep.subr.bf16.mxu0 0
        %6224 = vmatpush1.bf16.msra.mxu0 0
        %6225 = vmatprep.subr.bf16.mxu0 0
        %6226 = vmatpush1.bf16.msra.mxu0 0
        %6227 = vmatprep.subr.bf16.mxu0 0
        %6228 = vmatpush1.bf16.msra.mxu0 0
        %6229 = vmatprep.subr.bf16.mxu0 0
        %6230 = vmatpush1.bf16.msra.mxu0 0
        %6231 = vmatprep.subr.bf16.mxu0 0
        %6232 = vmatpush1.bf16.msra.mxu0 0
        %6233 = vmatprep.subr.bf16.mxu0 0
        %6234 = vmatpush1.bf16.msra.mxu0 0
        %6235 = vmatprep.subr.bf16.mxu0 0
        %6236 = vmatpush1.bf16.msra.mxu0 0
        %6237 = vmatprep.subr.bf16.mxu0 0
        %6238 = vmatpush1.bf16.msra.mxu0 0
        %6239 = vmatprep.subr.bf16.mxu0 0
        %6240 = vmatpush1.bf16.msra.mxu0 0
        %6241 = vmatprep.subr.bf16.mxu0 0
        %6242 = vmatpush1.bf16.msra.mxu0 0
        %6243 = vmatprep.mubr.bf16.mxu0 0
        %6244 = vmatmul.mubr.bf16.gmra.mrb[0].mxu0 %v6209
        %v6245 = vpop.f32.mrb[0].mxu0
        %v6246 = vadd.f32 0.0, %v6245
        %v6247 = vpop.f32.mrb[0].mxu0
        %v6248 = vpop.f32.mrb[0].mxu0
        %v6249 = vpop.f32.mrb[0].mxu0
        %6250 = vdwg.mxu0
        %v6253 = vunpack.c.l.b16 %v5777
        %v6254 = vunpack.c.l.b16 %v5778
        %v6255 = vpack.c.b16 %v6254, %v6253
        %v6258 = vsel %vm793, %v6085, 0
        %6260 = vmatprep.subr.bf16.mxu0 0
        %6261 = vmatpush1.bf16.msra.mxu0 %v6255
        %6262 = vmatprep.subr.bf16.mxu0 0
        %6263 = vmatpush1.bf16.msra.mxu0 0
        %6264 = vmatprep.subr.bf16.mxu0 0
        %6265 = vmatpush1.bf16.msra.mxu0 0
        %6266 = vmatprep.subr.bf16.mxu0 0
        %6267 = vmatpush1.bf16.msra.mxu0 0
        %6268 = vmatprep.subr.bf16.mxu0 0
        %6269 = vmatpush1.bf16.msra.mxu0 0
        %6270 = vmatprep.subr.bf16.mxu0 0
        %6271 = vmatpush1.bf16.msra.mxu0 0
        %6272 = vmatprep.subr.bf16.mxu0 0
        %6273 = vmatpush1.bf16.msra.mxu0 0
        %6274 = vmatprep.subr.bf16.mxu0 0
        %6275 = vmatpush1.bf16.msra.mxu0 0
        %6276 = vmatprep.subr.bf16.mxu0 0
        %6277 = vmatpush1.bf16.msra.mxu0 0
        %6278 = vmatprep.subr.bf16.mxu0 0
        %6279 = vmatpush1.bf16.msra.mxu0 0
        %6280 = vmatprep.subr.bf16.mxu0 0
        %6281 = vmatpush1.bf16.msra.mxu0 0
        %6282 = vmatprep.subr.bf16.mxu0 0
        %6283 = vmatpush1.bf16.msra.mxu0 0
        %6284 = vmatprep.subr.bf16.mxu0 0
        %6285 = vmatpush1.bf16.msra.mxu0 0
        %6286 = vmatprep.subr.bf16.mxu0 0
        %6287 = vmatpush1.bf16.msra.mxu0 0
        %6288 = vmatprep.subr.bf16.mxu0 0
        %6289 = vmatpush1.bf16.msra.mxu0 0
        %6290 = vmatprep.subr.bf16.mxu0 0
        %6291 = vmatpush1.bf16.msra.mxu0 0
        %6292 = vmatprep.mubr.bf16.mxu0 0
        %6293 = vmatmul.mubr.bf16.gmra.mrb[0].mxu0 %v6258
        %v6294 = vpop.f32.mrb[0].mxu0
        %v6295 = vadd.f32 %v6246, %v6294
        %v6296 = vpop.f32.mrb[0].mxu0
        %v6297 = vpop.f32.mrb[0].mxu0
        %v6298 = vpop.f32.mrb[0].mxu0
        %6299 = vdwg.mxu0
        %6300 = vrot.lane.b32.xlu0 %v5976, 96
        %v6301 = vpop.permute.xlu0 %6300
        %6302 = vrot.lane.b32.xlu0 %v5977, 96
        %v6303 = vpop.permute.xlu0 %6302
        %v6305 = vsel %vm793, %v6301, 0
        %v6308 = vsel %vm793, %v6303, 0
        %6310 = vmatprep.subr.bf16.mxu0 0
        %6311 = vmatpush1.bf16.xpose.msra.mxu0 %v6308
        %6312 = vmatprep.subr.bf16.mxu0 0
        %6313 = vmatpush1.bf16.xpose.msra.mxu0 0
        %6314 = vmatprep.subr.bf16.mxu0 0
        %6315 = vmatpush1.bf16.xpose.msra.mxu0 0
        %6316 = vmatprep.subr.bf16.mxu0 0
        %6317 = vmatpush1.bf16.xpose.msra.mxu0 0
        %6318 = vmatprep.subr.bf16.mxu0 0
        %6319 = vmatpush1.bf16.xpose.msra.mxu0 0
        %6320 = vmatprep.subr.bf16.mxu0 0
        %6321 = vmatpush1.bf16.xpose.msra.mxu0 0
        %6322 = vmatprep.subr.bf16.mxu0 0
        %6323 = vmatpush1.bf16.xpose.msra.mxu0 0
        %6324 = vmatprep.subr.bf16.mxu0 0
        %6325 = vmatpush1.bf16.xpose.msra.mxu0 0
        %6326 = vmatprep.subr.bf16.mxu0 0
        %6327 = vmatpush1.bf16.xpose.msra.mxu0 0
        %6328 = vmatprep.subr.bf16.mxu0 0
        %6329 = vmatpush1.bf16.xpose.msra.mxu0 0
        %6330 = vmatprep.subr.bf16.mxu0 0
        %6331 = vmatpush1.bf16.xpose.msra.mxu0 0
        %6332 = vmatprep.subr.bf16.mxu0 0
        %6333 = vmatpush1.bf16.xpose.msra.mxu0 0
        %6334 = vmatprep.subr.bf16.mxu0 0
        %6335 = vmatpush1.bf16.xpose.msra.mxu0 0
        %6336 = vmatprep.subr.bf16.mxu0 0
        %6337 = vmatpush1.bf16.xpose.msra.mxu0 0
        %6338 = vmatprep.subr.bf16.mxu0 0
        %6339 = vmatpush1.bf16.xpose.msra.mxu0 0
        %6340 = vmatprep.subr.bf16.mxu0 0
        %6341 = vmatpush1.bf16.xpose.msra.mxu0 0
        %6342 = vmatprep.mubr.bf16.mxu0 0
        %6343 = vmatmul.mubr.bf16.gmra.mrb[0].mxu0 %v6305
        %v6344 = vpop.f32.mrb[0].mxu0
        %v6345 = vadd.f32 0.0, %v6344
        %v6346 = vpop.f32.mrb[0].mxu0
        %v6347 = vpop.f32.mrb[0].mxu0
        %v6348 = vpop.f32.mrb[0].mxu0
        %6349 = vdwg.mxu0
        %v6350 = vmul.f32 %v6345, 0.25
        %v6351 = vadd.f32 %v6350, %v845
        %v6352 = vsel %vm848, %v6351, -inf
        %6353 = vmax.xlane.f32.xlu0 %v6352
        %v6354 = vpop.xlane.xlu0 %6353
        %v6355 = vsub.f32 %v6351, %v6354
        %v6356 = vmul.f32 %v6355, 1.442695
        %v6357 = vpow.pop %v6356
        %v6358 = vsel %vm848, %v6357, 0.0
        %6359 = vadd.xlane.f32.xlu0 %v6358
        %v6360 = vpop.xlane.xlu0 %6359
        %v6361 = vrcp.pop %v6360
        %v6362 = vmul.f32 %v6357, %v6361
        %v6363 = vpack.c.bf16 %v6362, %v6362
        %6364 = vrot.lane.b32.xlu0 %v5978, 96
        %v6365 = vpop.permute.xlu0 %6364
        %v6367 = vsel %vm848, %v6363, 0
        %v6370 = vsel %vm864, %v6365, 0
        %6372 = vmatprep.subr.bf16.mxu0 0
        %6373 = vmatpush1.bf16.msra.mxu0 %v6370
        %6374 = vmatprep.subr.bf16.mxu0 0
        %6375 = vmatpush1.bf16.msra.mxu0 0
        %6376 = vmatprep.subr.bf16.mxu0 0
        %6377 = vmatpush1.bf16.msra.mxu0 0
        %6378 = vmatprep.subr.bf16.mxu0 0
        %6379 = vmatpush1.bf16.msra.mxu0 0
        %6380 = vmatprep.subr.bf16.mxu0 0
        %6381 = vmatpush1.bf16.msra.mxu0 0
        %6382 = vmatprep.subr.bf16.mxu0 0
        %6383 = vmatpush1.bf16.msra.mxu0 0
        %6384 = vmatprep.subr.bf16.mxu0 0
        %6385 = vmatpush1.bf16.msra.mxu0 0
        %6386 = vmatprep.subr.bf16.mxu0 0
        %6387 = vmatpush1.bf16.msra.mxu0 0
        %6388 = vmatprep.subr.bf16.mxu0 0
        %6389 = vmatpush1.bf16.msra.mxu0 0
        %6390 = vmatprep.subr.bf16.mxu0 0
        %6391 = vmatpush1.bf16.msra.mxu0 0
        %6392 = vmatprep.subr.bf16.mxu0 0
        %6393 = vmatpush1.bf16.msra.mxu0 0
        %6394 = vmatprep.subr.bf16.mxu0 0
        %6395 = vmatpush1.bf16.msra.mxu0 0
        %6396 = vmatprep.subr.bf16.mxu0 0
        %6397 = vmatpush1.bf16.msra.mxu0 0
        %6398 = vmatprep.subr.bf16.mxu0 0
        %6399 = vmatpush1.bf16.msra.mxu0 0
        %6400 = vmatprep.subr.bf16.mxu0 0
        %6401 = vmatpush1.bf16.msra.mxu0 0
        %6402 = vmatprep.subr.bf16.mxu0 0
        %6403 = vmatpush1.bf16.msra.mxu0 0
        %6404 = vmatprep.mubr.bf16.mxu0 0
        %6405 = vmatmul.mubr.bf16.gmra.mrb[0].mxu0 %v6367
        %v6406 = vpop.f32.mrb[0].mxu0
        %v6407 = vadd.f32 0.0, %v6406
        %v6408 = vpop.f32.mrb[0].mxu0
        %v6409 = vpop.f32.mrb[0].mxu0
        %v6410 = vpop.f32.mrb[0].mxu0
        %6411 = vdwg.mxu0
        %v6412 = vpack.c.bf16 %v6407, %v6407
        %v6415 = vunpack.c.l.b16 %v5781
        %v6416 = vunpack.c.l.b16 %v5782
        %v6417 = vpack.c.b16 %v6416, %v6415
        %v6420 = vsel %vm793, %v6412, 0
        %6422 = vmatprep.subr.bf16.mxu0 0
        %6423 = vmatpush1.bf16.msra.mxu0 %v6417
        %6424 = vmatprep.subr.bf16.mxu0 0
        %6425 = vmatpush1.bf16.msra.mxu0 0
        %6426 = vmatprep.subr.bf16.mxu0 0
        %6427 = vmatpush1.bf16.msra.mxu0 0
        %6428 = vmatprep.subr.bf16.mxu0 0
        %6429 = vmatpush1.bf16.msra.mxu0 0
        %6430 = vmatprep.subr.bf16.mxu0 0
        %6431 = vmatpush1.bf16.msra.mxu0 0
        %6432 = vmatprep.subr.bf16.mxu0 0
        %6433 = vmatpush1.bf16.msra.mxu0 0
        %6434 = vmatprep.subr.bf16.mxu0 0
        %6435 = vmatpush1.bf16.msra.mxu0 0
        %6436 = vmatprep.subr.bf16.mxu0 0
        %6437 = vmatpush1.bf16.msra.mxu0 0
        %6438 = vmatprep.subr.bf16.mxu0 0
        %6439 = vmatpush1.bf16.msra.mxu0 0
        %6440 = vmatprep.subr.bf16.mxu0 0
        %6441 = vmatpush1.bf16.msra.mxu0 0
        %6442 = vmatprep.subr.bf16.mxu0 0
        %6443 = vmatpush1.bf16.msra.mxu0 0
        %6444 = vmatprep.subr.bf16.mxu0 0
        %6445 = vmatpush1.bf16.msra.mxu0 0
        %6446 = vmatprep.subr.bf16.mxu0 0
        %6447 = vmatpush1.bf16.msra.mxu0 0
        %6448 = vmatprep.subr.bf16.mxu0 0
        %6449 = vmatpush1.bf16.msra.mxu0 0
        %6450 = vmatprep.subr.bf16.mxu0 0
        %6451 = vmatpush1.bf16.msra.mxu0 0
        %6452 = vmatprep.subr.bf16.mxu0 0
        %6453 = vmatpush1.bf16.msra.mxu0 0
        %6454 = vmatprep.mubr.bf16.mxu0 0
        %6455 = vmatmul.mubr.bf16.gmra.mrb[0].mxu0 %v6420
        %v6456 = vpop.f32.mrb[0].mxu0
        %v6457 = vadd.f32 0.0, %v6456
        %v6458 = vpop.f32.mrb[0].mxu0
        %v6459 = vpop.f32.mrb[0].mxu0
        %v6460 = vpop.f32.mrb[0].mxu0
        %6461 = vdwg.mxu0
        %v6462 = vadd.f32 %v6295, %v6457
        %6463 = vrot.lane.b32.xlu0 %v5976, 80
        %v6464 = vpop.permute.xlu0 %6463
        %6465 = vrot.lane.b32.xlu0 %v5977, 80
        %v6466 = vpop.permute.xlu0 %6465
        %v6468 = vsel %vm793, %v6464, 0
        %v6471 = vsel %vm793, %v6466, 0
        %6473 = vmatprep.subr.bf16.mxu0 0
        %6474 = vmatpush1.bf16.xpose.msra.mxu0 %v6471
        %6475 = vmatprep.subr.bf16.mxu0 0
        %6476 = vmatpush1.bf16.xpose.msra.mxu0 0
        %6477 = vmatprep.subr.bf16.mxu0 0
        %6478 = vmatpush1.bf16.xpose.msra.mxu0 0
        %6479 = vmatprep.subr.bf16.mxu0 0
        %6480 = vmatpush1.bf16.xpose.msra.mxu0 0
        %6481 = vmatprep.subr.bf16.mxu0 0
        %6482 = vmatpush1.bf16.xpose.msra.mxu0 0
        %6483 = vmatprep.subr.bf16.mxu0 0
        %6484 = vmatpush1.bf16.xpose.msra.mxu0 0
        %6485 = vmatprep.subr.bf16.mxu0 0
        %6486 = vmatpush1.bf16.xpose.msra.mxu0 0
        %6487 = vmatprep.subr.bf16.mxu0 0
        %6488 = vmatpush1.bf16.xpose.msra.mxu0 0
        %6489 = vmatprep.subr.bf16.mxu0 0
        %6490 = vmatpush1.bf16.xpose.msra.mxu0 0
        %6491 = vmatprep.subr.bf16.mxu0 0
        %6492 = vmatpush1.bf16.xpose.msra.mxu0 0
        %6493 = vmatprep.subr.bf16.mxu0 0
        %6494 = vmatpush1.bf16.xpose.msra.mxu0 0
        %6495 = vmatprep.subr.bf16.mxu0 0
        %6496 = vmatpush1.bf16.xpose.msra.mxu0 0
        %6497 = vmatprep.subr.bf16.mxu0 0
        %6498 = vmatpush1.bf16.xpose.msra.mxu0 0
        %6499 = vmatprep.subr.bf16.mxu0 0
        %6500 = vmatpush1.bf16.xpose.msra.mxu0 0
        %6501 = vmatprep.subr.bf16.mxu0 0
        %6502 = vmatpush1.bf16.xpose.msra.mxu0 0
        %6503 = vmatprep.subr.bf16.mxu0 0
        %6504 = vmatpush1.bf16.xpose.msra.mxu0 0
        %6505 = vmatprep.mubr.bf16.mxu0 0
        %6506 = vmatmul.mubr.bf16.gmra.mrb[0].mxu0 %v6468
        %v6507 = vpop.f32.mrb[0].mxu0
        %v6508 = vadd.f32 0.0, %v6507
        %v6509 = vpop.f32.mrb[0].mxu0
        %v6510 = vpop.f32.mrb[0].mxu0
        %v6511 = vpop.f32.mrb[0].mxu0
        %6512 = vdwg.mxu0
        %v6513 = vmul.f32 %v6508, 0.25
        %v6514 = vadd.f32 %v6513, %v845
        %v6515 = vsel %vm848, %v6514, -inf
        %6516 = vmax.xlane.f32.xlu0 %v6515
        %v6517 = vpop.xlane.xlu0 %6516
        %v6518 = vsub.f32 %v6514, %v6517
        %v6519 = vmul.f32 %v6518, 1.442695
        %v6520 = vpow.pop %v6519
        %v6521 = vsel %vm848, %v6520, 0.0
        %6522 = vadd.xlane.f32.xlu0 %v6521
        %v6523 = vpop.xlane.xlu0 %6522
        %v6524 = vrcp.pop %v6523
        %v6525 = vmul.f32 %v6520, %v6524
        %v6526 = vpack.c.bf16 %v6525, %v6525
        %6527 = vrot.lane.b32.xlu0 %v5978, 80
        %v6528 = vpop.permute.xlu0 %6527
        %v6530 = vsel %vm848, %v6526, 0
        %v6533 = vsel %vm864, %v6528, 0
        %6535 = vmatprep.subr.bf16.mxu0 0
        %6536 = vmatpush1.bf16.msra.mxu0 %v6533
        %6537 = vmatprep.subr.bf16.mxu0 0
        %6538 = vmatpush1.bf16.msra.mxu0 0
        %6539 = vmatprep.subr.bf16.mxu0 0
        %6540 = vmatpush1.bf16.msra.mxu0 0
        %6541 = vmatprep.subr.bf16.mxu0 0
        %6542 = vmatpush1.bf16.msra.mxu0 0
        %6543 = vmatprep.subr.bf16.mxu0 0
        %6544 = vmatpush1.bf16.msra.mxu0 0
        %6545 = vmatprep.subr.bf16.mxu0 0
        %6546 = vmatpush1.bf16.msra.mxu0 0
        %6547 = vmatprep.subr.bf16.mxu0 0
        %6548 = vmatpush1.bf16.msra.mxu0 0
        %6549 = vmatprep.subr.bf16.mxu0 0
        %6550 = vmatpush1.bf16.msra.mxu0 0
        %6551 = vmatprep.subr.bf16.mxu0 0
        %6552 = vmatpush1.bf16.msra.mxu0 0
        %6553 = vmatprep.subr.bf16.mxu0 0
        %6554 = vmatpush1.bf16.msra.mxu0 0
        %6555 = vmatprep.subr.bf16.mxu0 0
        %6556 = vmatpush1.bf16.msra.mxu0 0
        %6557 = vmatprep.subr.bf16.mxu0 0
        %6558 = vmatpush1.bf16.msra.mxu0 0
        %6559 = vmatprep.subr.bf16.mxu0 0
        %6560 = vmatpush1.bf16.msra.mxu0 0
        %6561 = vmatprep.subr.bf16.mxu0 0
        %6562 = vmatpush1.bf16.msra.mxu0 0
        %6563 = vmatprep.subr.bf16.mxu0 0
        %6564 = vmatpush1.bf16.msra.mxu0 0
        %6565 = vmatprep.subr.bf16.mxu0 0
        %6566 = vmatpush1.bf16.msra.mxu0 0
        %6567 = vmatprep.mubr.bf16.mxu0 0
        %6568 = vmatmul.mubr.bf16.gmra.mrb[0].mxu0 %v6530
        %v6569 = vpop.f32.mrb[0].mxu0
        %v6570 = vadd.f32 0.0, %v6569
        %v6571 = vpop.f32.mrb[0].mxu0
        %v6572 = vpop.f32.mrb[0].mxu0
        %v6573 = vpop.f32.mrb[0].mxu0
        %6574 = vdwg.mxu0
        %v6575 = vpack.c.bf16 %v6570, %v6570
        %v6578 = vunpack.c.l.b16 %v5783
        %v6579 = vunpack.c.l.b16 %v5784
        %v6580 = vpack.c.b16 %v6579, %v6578
        %v6583 = vsel %vm793, %v6575, 0
        %6585 = vmatprep.subr.bf16.mxu0 0
        %6586 = vmatpush1.bf16.msra.mxu0 %v6580
        %6587 = vmatprep.subr.bf16.mxu0 0
        %6588 = vmatpush1.bf16.msra.mxu0 0
        %6589 = vmatprep.subr.bf16.mxu0 0
        %6590 = vmatpush1.bf16.msra.mxu0 0
        %6591 = vmatprep.subr.bf16.mxu0 0
        %6592 = vmatpush1.bf16.msra.mxu0 0
        %6593 = vmatprep.subr.bf16.mxu0 0
        %6594 = vmatpush1.bf16.msra.mxu0 0
        %6595 = vmatprep.subr.bf16.mxu0 0
        %6596 = vmatpush1.bf16.msra.mxu0 0
        %6597 = vmatprep.subr.bf16.mxu0 0
        %6598 = vmatpush1.bf16.msra.mxu0 0
        %6599 = vmatprep.subr.bf16.mxu0 0
        %6600 = vmatpush1.bf16.msra.mxu0 0
        %6601 = vmatprep.subr.bf16.mxu0 0
        %6602 = vmatpush1.bf16.msra.mxu0 0
        %6603 = vmatprep.subr.bf16.mxu0 0
        %6604 = vmatpush1.bf16.msra.mxu0 0
        %6605 = vmatprep.subr.bf16.mxu0 0
        %6606 = vmatpush1.bf16.msra.mxu0 0
        %6607 = vmatprep.subr.bf16.mxu0 0
        %6608 = vmatpush1.bf16.msra.mxu0 0
        %6609 = vmatprep.subr.bf16.mxu0 0
        %6610 = vmatpush1.bf16.msra.mxu0 0
        %6611 = vmatprep.subr.bf16.mxu0 0
        %6612 = vmatpush1.bf16.msra.mxu0 0
        %6613 = vmatprep.subr.bf16.mxu0 0
        %6614 = vmatpush1.bf16.msra.mxu0 0
        %6615 = vmatprep.subr.bf16.mxu0 0
        %6616 = vmatpush1.bf16.msra.mxu0 0
        %6617 = vmatprep.mubr.bf16.mxu0 0
        %6618 = vmatmul.mubr.bf16.gmra.mrb[0].mxu0 %v6583
        %v6619 = vpop.f32.mrb[0].mxu0
        %v6620 = vadd.f32 0.0, %v6619
        %v6621 = vpop.f32.mrb[0].mxu0
        %v6622 = vpop.f32.mrb[0].mxu0
        %v6623 = vpop.f32.mrb[0].mxu0
        %6624 = vdwg.mxu0
        %v6625 = vadd.f32 %v6462, %v6620
        %6626 = vrot.lane.b32.xlu0 %v5976, 64
        %v6627 = vpop.permute.xlu0 %6626
        %6628 = vrot.lane.b32.xlu0 %v5977, 64
        %v6629 = vpop.permute.xlu0 %6628
        %v6631 = vsel %vm793, %v6627, 0
        %v6634 = vsel %vm793, %v6629, 0
        %6636 = vmatprep.subr.bf16.mxu0 0
        %6637 = vmatpush1.bf16.xpose.msra.mxu0 %v6634
        %6638 = vmatprep.subr.bf16.mxu0 0
        %6639 = vmatpush1.bf16.xpose.msra.mxu0 0
        %6640 = vmatprep.subr.bf16.mxu0 0
        %6641 = vmatpush1.bf16.xpose.msra.mxu0 0
        %6642 = vmatprep.subr.bf16.mxu0 0
        %6643 = vmatpush1.bf16.xpose.msra.mxu0 0
        %6644 = vmatprep.subr.bf16.mxu0 0
        %6645 = vmatpush1.bf16.xpose.msra.mxu0 0
        %6646 = vmatprep.subr.bf16.mxu0 0
        %6647 = vmatpush1.bf16.xpose.msra.mxu0 0
        %6648 = vmatprep.subr.bf16.mxu0 0
        %6649 = vmatpush1.bf16.xpose.msra.mxu0 0
        %6650 = vmatprep.subr.bf16.mxu0 0
        %6651 = vmatpush1.bf16.xpose.msra.mxu0 0
        %6652 = vmatprep.subr.bf16.mxu0 0
        %6653 = vmatpush1.bf16.xpose.msra.mxu0 0
        %6654 = vmatprep.subr.bf16.mxu0 0
        %6655 = vmatpush1.bf16.xpose.msra.mxu0 0
        %6656 = vmatprep.subr.bf16.mxu0 0
        %6657 = vmatpush1.bf16.xpose.msra.mxu0 0
        %6658 = vmatprep.subr.bf16.mxu0 0
        %6659 = vmatpush1.bf16.xpose.msra.mxu0 0
        %6660 = vmatprep.subr.bf16.mxu0 0
        %6661 = vmatpush1.bf16.xpose.msra.mxu0 0
        %6662 = vmatprep.subr.bf16.mxu0 0
        %6663 = vmatpush1.bf16.xpose.msra.mxu0 0
        %6664 = vmatprep.subr.bf16.mxu0 0
        %6665 = vmatpush1.bf16.xpose.msra.mxu0 0
        %6666 = vmatprep.subr.bf16.mxu0 0
        %6667 = vmatpush1.bf16.xpose.msra.mxu0 0
        %6668 = vmatprep.mubr.bf16.mxu0 0
        %6669 = vmatmul.mubr.bf16.gmra.mrb[0].mxu0 %v6631
        %v6670 = vpop.f32.mrb[0].mxu0
        %v6671 = vadd.f32 0.0, %v6670
        %v6672 = vpop.f32.mrb[0].mxu0
        %v6673 = vpop.f32.mrb[0].mxu0
        %v6674 = vpop.f32.mrb[0].mxu0
        %6675 = vdwg.mxu0
        %v6676 = vmul.f32 %v6671, 0.25
        %v6677 = vadd.f32 %v6676, %v845
        %v6678 = vsel %vm848, %v6677, -inf
        %6679 = vmax.xlane.f32.xlu0 %v6678
        %v6680 = vpop.xlane.xlu0 %6679
        %v6681 = vsub.f32 %v6677, %v6680
        %v6682 = vmul.f32 %v6681, 1.442695
        %v6683 = vpow.pop %v6682
        %v6684 = vsel %vm848, %v6683, 0.0
        %6685 = vadd.xlane.f32.xlu0 %v6684
        %v6686 = vpop.xlane.xlu0 %6685
        %v6687 = vrcp.pop %v6686
        %v6688 = vmul.f32 %v6683, %v6687
        %v6689 = vpack.c.bf16 %v6688, %v6688
        %6690 = vrot.lane.b32.xlu0 %v5978, 64
        %v6691 = vpop.permute.xlu0 %6690
        %v6693 = vsel %vm848, %v6689, 0
        %v6696 = vsel %vm864, %v6691, 0
        %6698 = vmatprep.subr.bf16.mxu0 0
        %6699 = vmatpush1.bf16.msra.mxu0 %v6696
        %6700 = vmatprep.subr.bf16.mxu0 0
        %6701 = vmatpush1.bf16.msra.mxu0 0
        %6702 = vmatprep.subr.bf16.mxu0 0
        %6703 = vmatpush1.bf16.msra.mxu0 0
        %6704 = vmatprep.subr.bf16.mxu0 0
        %6705 = vmatpush1.bf16.msra.mxu0 0
        %6706 = vmatprep.subr.bf16.mxu0 0
        %6707 = vmatpush1.bf16.msra.mxu0 0
        %6708 = vmatprep.subr.bf16.mxu0 0
        %6709 = vmatpush1.bf16.msra.mxu0 0
        %6710 = vmatprep.subr.bf16.mxu0 0
        %6711 = vmatpush1.bf16.msra.mxu0 0
        %6712 = vmatprep.subr.bf16.mxu0 0
        %6713 = vmatpush1.bf16.msra.mxu0 0
        %6714 = vmatprep.subr.bf16.mxu0 0
        %6715 = vmatpush1.bf16.msra.mxu0 0
        %6716 = vmatprep.subr.bf16.mxu0 0
        %6717 = vmatpush1.bf16.msra.mxu0 0
        %6718 = vmatprep.subr.bf16.mxu0 0
        %6719 = vmatpush1.bf16.msra.mxu0 0
        %6720 = vmatprep.subr.bf16.mxu0 0
        %6721 = vmatpush1.bf16.msra.mxu0 0
        %6722 = vmatprep.subr.bf16.mxu0 0
        %6723 = vmatpush1.bf16.msra.mxu0 0
        %6724 = vmatprep.subr.bf16.mxu0 0
        %6725 = vmatpush1.bf16.msra.mxu0 0
        %6726 = vmatprep.subr.bf16.mxu0 0
        %6727 = vmatpush1.bf16.msra.mxu0 0
        %6728 = vmatprep.subr.bf16.mxu0 0
        %6729 = vmatpush1.bf16.msra.mxu0 0
        %6730 = vmatprep.mubr.bf16.mxu0 0
        %6731 = vmatmul.mubr.bf16.gmra.mrb[0].mxu0 %v6693
        %v6732 = vpop.f32.mrb[0].mxu0
        %v6733 = vadd.f32 0.0, %v6732
        %v6734 = vpop.f32.mrb[0].mxu0
        %v6735 = vpop.f32.mrb[0].mxu0
        %v6736 = vpop.f32.mrb[0].mxu0
        %6737 = vdwg.mxu0
        %v6738 = vpack.c.bf16 %v6733, %v6733
        %v6741 = vunpack.c.l.b16 %v5785
        %v6742 = vunpack.c.l.b16 %v5786
        %v6743 = vpack.c.b16 %v6742, %v6741
        %v6746 = vsel %vm793, %v6738, 0
        %6748 = vmatprep.subr.bf16.mxu0 0
        %6749 = vmatpush1.bf16.msra.mxu0 %v6743
        %6750 = vmatprep.subr.bf16.mxu0 0
        %6751 = vmatpush1.bf16.msra.mxu0 0
        %6752 = vmatprep.subr.bf16.mxu0 0
        %6753 = vmatpush1.bf16.msra.mxu0 0
        %6754 = vmatprep.subr.bf16.mxu0 0
        %6755 = vmatpush1.bf16.msra.mxu0 0
        %6756 = vmatprep.subr.bf16.mxu0 0
        %6757 = vmatpush1.bf16.msra.mxu0 0
        %6758 = vmatprep.subr.bf16.mxu0 0
        %6759 = vmatpush1.bf16.msra.mxu0 0
        %6760 = vmatprep.subr.bf16.mxu0 0
        %6761 = vmatpush1.bf16.msra.mxu0 0
        %6762 = vmatprep.subr.bf16.mxu0 0
        %6763 = vmatpush1.bf16.msra.mxu0 0
        %6764 = vmatprep.subr.bf16.mxu0 0
        %6765 = vmatpush1.bf16.msra.mxu0 0
        %6766 = vmatprep.subr.bf16.mxu0 0
        %6767 = vmatpush1.bf16.msra.mxu0 0
        %6768 = vmatprep.subr.bf16.mxu0 0
        %6769 = vmatpush1.bf16.msra.mxu0 0
        %6770 = vmatprep.subr.bf16.mxu0 0
        %6771 = vmatpush1.bf16.msra.mxu0 0
        %6772 = vmatprep.subr.bf16.mxu0 0
        %6773 = vmatpush1.bf16.msra.mxu0 0
        %6774 = vmatprep.subr.bf16.mxu0 0
        %6775 = vmatpush1.bf16.msra.mxu0 0
        %6776 = vmatprep.subr.bf16.mxu0 0
        %6777 = vmatpush1.bf16.msra.mxu0 0
        %6778 = vmatprep.subr.bf16.mxu0 0
        %6779 = vmatpush1.bf16.msra.mxu0 0
        %6780 = vmatprep.mubr.bf16.mxu0 0
        %6781 = vmatmul.mubr.bf16.gmra.mrb[0].mxu0 %v6746
        %v6782 = vpop.f32.mrb[0].mxu0
        %v6783 = vadd.f32 0.0, %v6782
        %v6784 = vpop.f32.mrb[0].mxu0
        %v6785 = vpop.f32.mrb[0].mxu0
        %v6786 = vpop.f32.mrb[0].mxu0
        %6787 = vdwg.mxu0
        %v6788 = vadd.f32 %v6625, %v6783
        %6789 = vrot.lane.b32.xlu0 %v5976, 48
        %v6790 = vpop.permute.xlu0 %6789
        %6791 = vrot.lane.b32.xlu0 %v5977, 48
        %v6792 = vpop.permute.xlu0 %6791
        %v6794 = vsel %vm793, %v6790, 0
        %v6797 = vsel %vm793, %v6792, 0
        %6799 = vmatprep.subr.bf16.mxu0 0
        %6800 = vmatpush1.bf16.xpose.msra.mxu0 %v6797
        %6801 = vmatprep.subr.bf16.mxu0 0
        %6802 = vmatpush1.bf16.xpose.msra.mxu0 0
        %6803 = vmatprep.subr.bf16.mxu0 0
        %6804 = vmatpush1.bf16.xpose.msra.mxu0 0
        %6805 = vmatprep.subr.bf16.mxu0 0
        %6806 = vmatpush1.bf16.xpose.msra.mxu0 0
        %6807 = vmatprep.subr.bf16.mxu0 0
        %6808 = vmatpush1.bf16.xpose.msra.mxu0 0
        %6809 = vmatprep.subr.bf16.mxu0 0
        %6810 = vmatpush1.bf16.xpose.msra.mxu0 0
        %6811 = vmatprep.subr.bf16.mxu0 0
        %6812 = vmatpush1.bf16.xpose.msra.mxu0 0
        %6813 = vmatprep.subr.bf16.mxu0 0
        %6814 = vmatpush1.bf16.xpose.msra.mxu0 0
        %6815 = vmatprep.subr.bf16.mxu0 0
        %6816 = vmatpush1.bf16.xpose.msra.mxu0 0
        %6817 = vmatprep.subr.bf16.mxu0 0
        %6818 = vmatpush1.bf16.xpose.msra.mxu0 0
        %6819 = vmatprep.subr.bf16.mxu0 0
        %6820 = vmatpush1.bf16.xpose.msra.mxu0 0
        %6821 = vmatprep.subr.bf16.mxu0 0
        %6822 = vmatpush1.bf16.xpose.msra.mxu0 0
        %6823 = vmatprep.subr.bf16.mxu0 0
        %6824 = vmatpush1.bf16.xpose.msra.mxu0 0
        %6825 = vmatprep.subr.bf16.mxu0 0
        %6826 = vmatpush1.bf16.xpose.msra.mxu0 0
        %6827 = vmatprep.subr.bf16.mxu0 0
        %6828 = vmatpush1.bf16.xpose.msra.mxu0 0
        %6829 = vmatprep.subr.bf16.mxu0 0
        %6830 = vmatpush1.bf16.xpose.msra.mxu0 0
        %6831 = vmatprep.mubr.bf16.mxu0 0
        %6832 = vmatmul.mubr.bf16.gmra.mrb[0].mxu0 %v6794
        %v6833 = vpop.f32.mrb[0].mxu0
        %v6834 = vadd.f32 0.0, %v6833
        %v6835 = vpop.f32.mrb[0].mxu0
        %v6836 = vpop.f32.mrb[0].mxu0
        %v6837 = vpop.f32.mrb[0].mxu0
        %6838 = vdwg.mxu0
        %v6839 = vmul.f32 %v6834, 0.25
        %v6840 = vadd.f32 %v6839, %v845
        %v6841 = vsel %vm848, %v6840, -inf
        %6842 = vmax.xlane.f32.xlu0 %v6841
        %v6843 = vpop.xlane.xlu0 %6842
        %v6844 = vsub.f32 %v6840, %v6843
        %v6845 = vmul.f32 %v6844, 1.442695
        %v6846 = vpow.pop %v6845
        %v6847 = vsel %vm848, %v6846, 0.0
        %6848 = vadd.xlane.f32.xlu0 %v6847
        %v6849 = vpop.xlane.xlu0 %6848
        %v6850 = vrcp.pop %v6849
        %v6851 = vmul.f32 %v6846, %v6850
        %v6852 = vpack.c.bf16 %v6851, %v6851
        %6853 = vrot.lane.b32.xlu0 %v5978, 48
        %v6854 = vpop.permute.xlu0 %6853
        %v6856 = vsel %vm848, %v6852, 0
        %v6859 = vsel %vm864, %v6854, 0
        %6861 = vmatprep.subr.bf16.mxu0 0
        %6862 = vmatpush1.bf16.msra.mxu0 %v6859
        %6863 = vmatprep.subr.bf16.mxu0 0
        %6864 = vmatpush1.bf16.msra.mxu0 0
        %6865 = vmatprep.subr.bf16.mxu0 0
        %6866 = vmatpush1.bf16.msra.mxu0 0
        %6867 = vmatprep.subr.bf16.mxu0 0
        %6868 = vmatpush1.bf16.msra.mxu0 0
        %6869 = vmatprep.subr.bf16.mxu0 0
        %6870 = vmatpush1.bf16.msra.mxu0 0
        %6871 = vmatprep.subr.bf16.mxu0 0
        %6872 = vmatpush1.bf16.msra.mxu0 0
        %6873 = vmatprep.subr.bf16.mxu0 0
        %6874 = vmatpush1.bf16.msra.mxu0 0
        %6875 = vmatprep.subr.bf16.mxu0 0
        %6876 = vmatpush1.bf16.msra.mxu0 0
        %6877 = vmatprep.subr.bf16.mxu0 0
        %6878 = vmatpush1.bf16.msra.mxu0 0
        %6879 = vmatprep.subr.bf16.mxu0 0
        %6880 = vmatpush1.bf16.msra.mxu0 0
        %6881 = vmatprep.subr.bf16.mxu0 0
        %6882 = vmatpush1.bf16.msra.mxu0 0
        %6883 = vmatprep.subr.bf16.mxu0 0
        %6884 = vmatpush1.bf16.msra.mxu0 0
        %6885 = vmatprep.subr.bf16.mxu0 0
        %6886 = vmatpush1.bf16.msra.mxu0 0
        %6887 = vmatprep.subr.bf16.mxu0 0
        %6888 = vmatpush1.bf16.msra.mxu0 0
        %6889 = vmatprep.subr.bf16.mxu0 0
        %6890 = vmatpush1.bf16.msra.mxu0 0
        %6891 = vmatprep.subr.bf16.mxu0 0
        %6892 = vmatpush1.bf16.msra.mxu0 0
        %6893 = vmatprep.mubr.bf16.mxu0 0
        %6894 = vmatmul.mubr.bf16.gmra.mrb[0].mxu0 %v6856
        %v6895 = vpop.f32.mrb[0].mxu0
        %v6896 = vadd.f32 0.0, %v6895
        %v6897 = vpop.f32.mrb[0].mxu0
        %v6898 = vpop.f32.mrb[0].mxu0
        %v6899 = vpop.f32.mrb[0].mxu0
        %6900 = vdwg.mxu0
        %v6901 = vpack.c.bf16 %v6896, %v6896
        %v6904 = vunpack.c.l.b16 %v5787
        %v6905 = vunpack.c.l.b16 %v5788
        %v6906 = vpack.c.b16 %v6905, %v6904
        %v6909 = vsel %vm793, %v6901, 0
        %6911 = vmatprep.subr.bf16.mxu0 0
        %6912 = vmatpush1.bf16.msra.mxu0 %v6906
        %6913 = vmatprep.subr.bf16.mxu0 0
        %6914 = vmatpush1.bf16.msra.mxu0 0
        %6915 = vmatprep.subr.bf16.mxu0 0
        %6916 = vmatpush1.bf16.msra.mxu0 0
        %6917 = vmatprep.subr.bf16.mxu0 0
        %6918 = vmatpush1.bf16.msra.mxu0 0
        %6919 = vmatprep.subr.bf16.mxu0 0
        %6920 = vmatpush1.bf16.msra.mxu0 0
        %6921 = vmatprep.subr.bf16.mxu0 0
        %6922 = vmatpush1.bf16.msra.mxu0 0
        %6923 = vmatprep.subr.bf16.mxu0 0
        %6924 = vmatpush1.bf16.msra.mxu0 0
        %6925 = vmatprep.subr.bf16.mxu0 0
        %6926 = vmatpush1.bf16.msra.mxu0 0
        %6927 = vmatprep.subr.bf16.mxu0 0
        %6928 = vmatpush1.bf16.msra.mxu0 0
        %6929 = vmatprep.subr.bf16.mxu0 0
        %6930 = vmatpush1.bf16.msra.mxu0 0
        %6931 = vmatprep.subr.bf16.mxu0 0
        %6932 = vmatpush1.bf16.msra.mxu0 0
        %6933 = vmatprep.subr.bf16.mxu0 0
        %6934 = vmatpush1.bf16.msra.mxu0 0
        %6935 = vmatprep.subr.bf16.mxu0 0
        %6936 = vmatpush1.bf16.msra.mxu0 0
        %6937 = vmatprep.subr.bf16.mxu0 0
        %6938 = vmatpush1.bf16.msra.mxu0 0
        %6939 = vmatprep.subr.bf16.mxu0 0
        %6940 = vmatpush1.bf16.msra.mxu0 0
        %6941 = vmatprep.subr.bf16.mxu0 0
        %6942 = vmatpush1.bf16.msra.mxu0 0
        %6943 = vmatprep.mubr.bf16.mxu0 0
        %6944 = vmatmul.mubr.bf16.gmra.mrb[0].mxu0 %v6909
        %v6945 = vpop.f32.mrb[0].mxu0
        %v6946 = vadd.f32 0.0, %v6945
        %v6947 = vpop.f32.mrb[0].mxu0
        %v6948 = vpop.f32.mrb[0].mxu0
        %v6949 = vpop.f32.mrb[0].mxu0
        %6950 = vdwg.mxu0
        %v6951 = vadd.f32 %v6788, %v6946
        %6952 = vrot.lane.b32.xlu0 %v5976, 32
        %v6953 = vpop.permute.xlu0 %6952
        %6954 = vrot.lane.b32.xlu0 %v5977, 32
        %v6955 = vpop.permute.xlu0 %6954
        %v6957 = vsel %vm793, %v6953, 0
        %v6960 = vsel %vm793, %v6955, 0
        %6962 = vmatprep.subr.bf16.mxu0 0
        %6963 = vmatpush1.bf16.xpose.msra.mxu0 %v6960
        %6964 = vmatprep.subr.bf16.mxu0 0
        %6965 = vmatpush1.bf16.xpose.msra.mxu0 0
        %6966 = vmatprep.subr.bf16.mxu0 0
        %6967 = vmatpush1.bf16.xpose.msra.mxu0 0
        %6968 = vmatprep.subr.bf16.mxu0 0
        %6969 = vmatpush1.bf16.xpose.msra.mxu0 0
        %6970 = vmatprep.subr.bf16.mxu0 0
        %6971 = vmatpush1.bf16.xpose.msra.mxu0 0
        %6972 = vmatprep.subr.bf16.mxu0 0
        %6973 = vmatpush1.bf16.xpose.msra.mxu0 0
        %6974 = vmatprep.subr.bf16.mxu0 0
        %6975 = vmatpush1.bf16.xpose.msra.mxu0 0
        %6976 = vmatprep.subr.bf16.mxu0 0
        %6977 = vmatpush1.bf16.xpose.msra.mxu0 0
        %6978 = vmatprep.subr.bf16.mxu0 0
        %6979 = vmatpush1.bf16.xpose.msra.mxu0 0
        %6980 = vmatprep.subr.bf16.mxu0 0
        %6981 = vmatpush1.bf16.xpose.msra.mxu0 0
        %6982 = vmatprep.subr.bf16.mxu0 0
        %6983 = vmatpush1.bf16.xpose.msra.mxu0 0
        %6984 = vmatprep.subr.bf16.mxu0 0
        %6985 = vmatpush1.bf16.xpose.msra.mxu0 0
        %6986 = vmatprep.subr.bf16.mxu0 0
        %6987 = vmatpush1.bf16.xpose.msra.mxu0 0
        %6988 = vmatprep.subr.bf16.mxu0 0
        %6989 = vmatpush1.bf16.xpose.msra.mxu0 0
        %6990 = vmatprep.subr.bf16.mxu0 0
        %6991 = vmatpush1.bf16.xpose.msra.mxu0 0
        %6992 = vmatprep.subr.bf16.mxu0 0
        %6993 = vmatpush1.bf16.xpose.msra.mxu0 0
        %6994 = vmatprep.mubr.bf16.mxu0 0
        %6995 = vmatmul.mubr.bf16.gmra.mrb[0].mxu0 %v6957
        %v6996 = vpop.f32.mrb[0].mxu0
        %v6997 = vadd.f32 0.0, %v6996
        %v6998 = vpop.f32.mrb[0].mxu0
        %v6999 = vpop.f32.mrb[0].mxu0
        %v7000 = vpop.f32.mrb[0].mxu0
        %7001 = vdwg.mxu0
        %v7002 = vmul.f32 %v6997, 0.25
        %v7003 = vadd.f32 %v7002, %v845
        %v7004 = vsel %vm848, %v7003, -inf
        %7005 = vmax.xlane.f32.xlu0 %v7004
        %v7006 = vpop.xlane.xlu0 %7005
        %v7007 = vsub.f32 %v7003, %v7006
        %v7008 = vmul.f32 %v7007, 1.442695
        %v7009 = vpow.pop %v7008
        %v7010 = vsel %vm848, %v7009, 0.0
        %7011 = vadd.xlane.f32.xlu0 %v7010
        %v7012 = vpop.xlane.xlu0 %7011
        %v7013 = vrcp.pop %v7012
        %v7014 = vmul.f32 %v7009, %v7013
        %v7015 = vpack.c.bf16 %v7014, %v7014
        %7016 = vrot.lane.b32.xlu0 %v5978, 32
        %v7017 = vpop.permute.xlu0 %7016
        %v7019 = vsel %vm848, %v7015, 0
        %v7022 = vsel %vm864, %v7017, 0
        %7024 = vmatprep.subr.bf16.mxu0 0
        %7025 = vmatpush1.bf16.msra.mxu0 %v7022
        %7026 = vmatprep.subr.bf16.mxu0 0
        %7027 = vmatpush1.bf16.msra.mxu0 0
        %7028 = vmatprep.subr.bf16.mxu0 0
        %7029 = vmatpush1.bf16.msra.mxu0 0
        %7030 = vmatprep.subr.bf16.mxu0 0
        %7031 = vmatpush1.bf16.msra.mxu0 0
        %7032 = vmatprep.subr.bf16.mxu0 0
        %7033 = vmatpush1.bf16.msra.mxu0 0
        %7034 = vmatprep.subr.bf16.mxu0 0
        %7035 = vmatpush1.bf16.msra.mxu0 0
        %7036 = vmatprep.subr.bf16.mxu0 0
        %7037 = vmatpush1.bf16.msra.mxu0 0
        %7038 = vmatprep.subr.bf16.mxu0 0
        %7039 = vmatpush1.bf16.msra.mxu0 0
        %7040 = vmatprep.subr.bf16.mxu0 0
        %7041 = vmatpush1.bf16.msra.mxu0 0
        %7042 = vmatprep.subr.bf16.mxu0 0
        %7043 = vmatpush1.bf16.msra.mxu0 0
        %7044 = vmatprep.subr.bf16.mxu0 0
        %7045 = vmatpush1.bf16.msra.mxu0 0
        %7046 = vmatprep.subr.bf16.mxu0 0
        %7047 = vmatpush1.bf16.msra.mxu0 0
        %7048 = vmatprep.subr.bf16.mxu0 0
        %7049 = vmatpush1.bf16.msra.mxu0 0
        %7050 = vmatprep.subr.bf16.mxu0 0
        %7051 = vmatpush1.bf16.msra.mxu0 0
        %7052 = vmatprep.subr.bf16.mxu0 0
        %7053 = vmatpush1.bf16.msra.mxu0 0
        %7054 = vmatprep.subr.bf16.mxu0 0
        %7055 = vmatpush1.bf16.msra.mxu0 0
        %7056 = vmatprep.mubr.bf16.mxu0 0
        %7057 = vmatmul.mubr.bf16.gmra.mrb[0].mxu0 %v7019
        %v7058 = vpop.f32.mrb[0].mxu0
        %v7059 = vadd.f32 0.0, %v7058
        %v7060 = vpop.f32.mrb[0].mxu0
        %v7061 = vpop.f32.mrb[0].mxu0
        %v7062 = vpop.f32.mrb[0].mxu0
        %7063 = vdwg.mxu0
        %v7064 = vpack.c.bf16 %v7059, %v7059
        %v7067 = vunpack.c.l.b16 %v5789
        %v7068 = vunpack.c.l.b16 %v5790
        %v7069 = vpack.c.b16 %v7068, %v7067
        %v7072 = vsel %vm793, %v7064, 0
        %7074 = vmatprep.subr.bf16.mxu0 0
        %7075 = vmatpush1.bf16.msra.mxu0 %v7069
        %7076 = vmatprep.subr.bf16.mxu0 0
        %7077 = vmatpush1.bf16.msra.mxu0 0
        %7078 = vmatprep.subr.bf16.mxu0 0
        %7079 = vmatpush1.bf16.msra.mxu0 0
        %7080 = vmatprep.subr.bf16.mxu0 0
        %7081 = vmatpush1.bf16.msra.mxu0 0
        %7082 = vmatprep.subr.bf16.mxu0 0
        %7083 = vmatpush1.bf16.msra.mxu0 0
        %7084 = vmatprep.subr.bf16.mxu0 0
        %7085 = vmatpush1.bf16.msra.mxu0 0
        %7086 = vmatprep.subr.bf16.mxu0 0
        %7087 = vmatpush1.bf16.msra.mxu0 0
        %7088 = vmatprep.subr.bf16.mxu0 0
        %7089 = vmatpush1.bf16.msra.mxu0 0
        %7090 = vmatprep.subr.bf16.mxu0 0
        %7091 = vmatpush1.bf16.msra.mxu0 0
        %7092 = vmatprep.subr.bf16.mxu0 0
        %7093 = vmatpush1.bf16.msra.mxu0 0
        %7094 = vmatprep.subr.bf16.mxu0 0
        %7095 = vmatpush1.bf16.msra.mxu0 0
        %7096 = vmatprep.subr.bf16.mxu0 0
        %7097 = vmatpush1.bf16.msra.mxu0 0
        %7098 = vmatprep.subr.bf16.mxu0 0
        %7099 = vmatpush1.bf16.msra.mxu0 0
        %7100 = vmatprep.subr.bf16.mxu0 0
        %7101 = vmatpush1.bf16.msra.mxu0 0
        %7102 = vmatprep.subr.bf16.mxu0 0
        %7103 = vmatpush1.bf16.msra.mxu0 0
        %7104 = vmatprep.subr.bf16.mxu0 0
        %7105 = vmatpush1.bf16.msra.mxu0 0
        %7106 = vmatprep.mubr.bf16.mxu0 0
        %7107 = vmatmul.mubr.bf16.gmra.mrb[0].mxu0 %v7072
        %v7108 = vpop.f32.mrb[0].mxu0
        %v7109 = vadd.f32 0.0, %v7108
        %v7110 = vpop.f32.mrb[0].mxu0
        %v7111 = vpop.f32.mrb[0].mxu0
        %v7112 = vpop.f32.mrb[0].mxu0
        %7113 = vdwg.mxu0
        %v7114 = vadd.f32 %v6951, %v7109
        %7115 = vrot.lane.b32.xlu0 %v5976, 16
        %v7116 = vpop.permute.xlu0 %7115
        %7117 = vrot.lane.b32.xlu0 %v5977, 16
        %v7118 = vpop.permute.xlu0 %7117
        %v7120 = vsel %vm793, %v7116, 0
        %v7123 = vsel %vm793, %v7118, 0
        %7125 = vmatprep.subr.bf16.mxu0 0
        %7126 = vmatpush1.bf16.xpose.msra.mxu0 %v7123
        %7127 = vmatprep.subr.bf16.mxu0 0
        %7128 = vmatpush1.bf16.xpose.msra.mxu0 0
        %7129 = vmatprep.subr.bf16.mxu0 0
        %7130 = vmatpush1.bf16.xpose.msra.mxu0 0
        %7131 = vmatprep.subr.bf16.mxu0 0
        %7132 = vmatpush1.bf16.xpose.msra.mxu0 0
        %7133 = vmatprep.subr.bf16.mxu0 0
        %7134 = vmatpush1.bf16.xpose.msra.mxu0 0
        %7135 = vmatprep.subr.bf16.mxu0 0
        %7136 = vmatpush1.bf16.xpose.msra.mxu0 0
        %7137 = vmatprep.subr.bf16.mxu0 0
        %7138 = vmatpush1.bf16.xpose.msra.mxu0 0
        %7139 = vmatprep.subr.bf16.mxu0 0
        %7140 = vmatpush1.bf16.xpose.msra.mxu0 0
        %7141 = vmatprep.subr.bf16.mxu0 0
        %7142 = vmatpush1.bf16.xpose.msra.mxu0 0
        %7143 = vmatprep.subr.bf16.mxu0 0
        %7144 = vmatpush1.bf16.xpose.msra.mxu0 0
        %7145 = vmatprep.subr.bf16.mxu0 0
        %7146 = vmatpush1.bf16.xpose.msra.mxu0 0
        %7147 = vmatprep.subr.bf16.mxu0 0
        %7148 = vmatpush1.bf16.xpose.msra.mxu0 0
        %7149 = vmatprep.subr.bf16.mxu0 0
        %7150 = vmatpush1.bf16.xpose.msra.mxu0 0
        %7151 = vmatprep.subr.bf16.mxu0 0
        %7152 = vmatpush1.bf16.xpose.msra.mxu0 0
        %7153 = vmatprep.subr.bf16.mxu0 0
        %7154 = vmatpush1.bf16.xpose.msra.mxu0 0
        %7155 = vmatprep.subr.bf16.mxu0 0
        %7156 = vmatpush1.bf16.xpose.msra.mxu0 0
        %7157 = vmatprep.mubr.bf16.mxu0 0
        %7158 = vmatmul.mubr.bf16.gmra.mrb[0].mxu0 %v7120
        %v7159 = vpop.f32.mrb[0].mxu0
        %v7160 = vadd.f32 0.0, %v7159
        %v7161 = vpop.f32.mrb[0].mxu0
        %v7162 = vpop.f32.mrb[0].mxu0
        %v7163 = vpop.f32.mrb[0].mxu0
        %7164 = vdwg.mxu0
        %v7165 = vmul.f32 %v7160, 0.25
        %v7166 = vadd.f32 %v7165, %v845
        %v7167 = vsel %vm848, %v7166, -inf
        %7168 = vmax.xlane.f32.xlu0 %v7167
        %v7169 = vpop.xlane.xlu0 %7168
        %v7170 = vsub.f32 %v7166, %v7169
        %v7171 = vmul.f32 %v7170, 1.442695
        %v7172 = vpow.pop %v7171
        %v7173 = vsel %vm848, %v7172, 0.0
        %7174 = vadd.xlane.f32.xlu0 %v7173
        %v7175 = vpop.xlane.xlu0 %7174
        %v7176 = vrcp.pop %v7175
        %v7177 = vmul.f32 %v7172, %v7176
        %v7178 = vpack.c.bf16 %v7177, %v7177
        %7179 = vrot.lane.b32.xlu0 %v5978, 16
        %v7180 = vpop.permute.xlu0 %7179
        %v7182 = vsel %vm848, %v7178, 0
        %v7185 = vsel %vm864, %v7180, 0
        %7187 = vmatprep.subr.bf16.mxu0 0
        %7188 = vmatpush1.bf16.msra.mxu0 %v7185
        %7189 = vmatprep.subr.bf16.mxu0 0
        %7190 = vmatpush1.bf16.msra.mxu0 0
        %7191 = vmatprep.subr.bf16.mxu0 0
        %7192 = vmatpush1.bf16.msra.mxu0 0
        %7193 = vmatprep.subr.bf16.mxu0 0
        %7194 = vmatpush1.bf16.msra.mxu0 0
        %7195 = vmatprep.subr.bf16.mxu0 0
        %7196 = vmatpush1.bf16.msra.mxu0 0
        %7197 = vmatprep.subr.bf16.mxu0 0
        %7198 = vmatpush1.bf16.msra.mxu0 0
        %7199 = vmatprep.subr.bf16.mxu0 0
        %7200 = vmatpush1.bf16.msra.mxu0 0
        %7201 = vmatprep.subr.bf16.mxu0 0
        %7202 = vmatpush1.bf16.msra.mxu0 0
        %7203 = vmatprep.subr.bf16.mxu0 0
        %7204 = vmatpush1.bf16.msra.mxu0 0
        %7205 = vmatprep.subr.bf16.mxu0 0
        %7206 = vmatpush1.bf16.msra.mxu0 0
        %7207 = vmatprep.subr.bf16.mxu0 0
        %7208 = vmatpush1.bf16.msra.mxu0 0
        %7209 = vmatprep.subr.bf16.mxu0 0
        %7210 = vmatpush1.bf16.msra.mxu0 0
        %7211 = vmatprep.subr.bf16.mxu0 0
        %7212 = vmatpush1.bf16.msra.mxu0 0
        %7213 = vmatprep.subr.bf16.mxu0 0
        %7214 = vmatpush1.bf16.msra.mxu0 0
        %7215 = vmatprep.subr.bf16.mxu0 0
        %7216 = vmatpush1.bf16.msra.mxu0 0
        %7217 = vmatprep.subr.bf16.mxu0 0
        %7218 = vmatpush1.bf16.msra.mxu0 0
        %7219 = vmatprep.mubr.bf16.mxu0 0
        %7220 = vmatmul.mubr.bf16.gmra.mrb[0].mxu0 %v7182
        %v7221 = vpop.f32.mrb[0].mxu0
        %v7222 = vadd.f32 0.0, %v7221
        %v7223 = vpop.f32.mrb[0].mxu0
        %v7224 = vpop.f32.mrb[0].mxu0
        %v7225 = vpop.f32.mrb[0].mxu0
        %7226 = vdwg.mxu0
        %v7227 = vpack.c.bf16 %v7222, %v7222
        %v7230 = vunpack.c.l.b16 %v5791
        %v7231 = vunpack.c.l.b16 %v5792
        %v7232 = vpack.c.b16 %v7231, %v7230
        %v7235 = vsel %vm793, %v7227, 0
        %7237 = vmatprep.subr.bf16.mxu0 0
        %7238 = vmatpush1.bf16.msra.mxu0 %v7232
        %7239 = vmatprep.subr.bf16.mxu0 0
        %7240 = vmatpush1.bf16.msra.mxu0 0
        %7241 = vmatprep.subr.bf16.mxu0 0
        %7242 = vmatpush1.bf16.msra.mxu0 0
        %7243 = vmatprep.subr.bf16.mxu0 0
        %7244 = vmatpush1.bf16.msra.mxu0 0
        %7245 = vmatprep.subr.bf16.mxu0 0
        %7246 = vmatpush1.bf16.msra.mxu0 0
        %7247 = vmatprep.subr.bf16.mxu0 0
        %7248 = vmatpush1.bf16.msra.mxu0 0
        %7249 = vmatprep.subr.bf16.mxu0 0
        %7250 = vmatpush1.bf16.msra.mxu0 0
        %7251 = vmatprep.subr.bf16.mxu0 0
        %7252 = vmatpush1.bf16.msra.mxu0 0
        %7253 = vmatprep.subr.bf16.mxu0 0
        %7254 = vmatpush1.bf16.msra.mxu0 0
        %7255 = vmatprep.subr.bf16.mxu0 0
        %7256 = vmatpush1.bf16.msra.mxu0 0
        %7257 = vmatprep.subr.bf16.mxu0 0
        %7258 = vmatpush1.bf16.msra.mxu0 0
        %7259 = vmatprep.subr.bf16.mxu0 0
        %7260 = vmatpush1.bf16.msra.mxu0 0
        %7261 = vmatprep.subr.bf16.mxu0 0
        %7262 = vmatpush1.bf16.msra.mxu0 0
        %7263 = vmatprep.subr.bf16.mxu0 0
        %7264 = vmatpush1.bf16.msra.mxu0 0
        %7265 = vmatprep.subr.bf16.mxu0 0
        %7266 = vmatpush1.bf16.msra.mxu0 0
        %7267 = vmatprep.subr.bf16.mxu0 0
        %7268 = vmatpush1.bf16.msra.mxu0 0
        %7269 = vmatprep.mubr.bf16.mxu0 0
        %7270 = vmatmul.mubr.bf16.gmra.mrb[0].mxu0 %v7235
        %v7271 = vpop.f32.mrb[0].mxu0
        %v7272 = vadd.f32 0.0, %v7271
        %v7273 = vpop.f32.mrb[0].mxu0
        %v7274 = vpop.f32.mrb[0].mxu0
        %v7275 = vpop.f32.mrb[0].mxu0
        %7276 = vdwg.mxu0
        %v7277 = vadd.f32 %v7114, %v7272
        %v7279 = vlaneseq
        %v7280 = vshrl.u32 %v7279, 7
        %v7281 = vsub.s32 0, %v7280
        %v7282 = vrot.slane %v5794, %v7281
        %v7284 = vadd.f32 %v7277, %v7282
        %v7285 = vadd.f32 %v7284, %v5756
        %s7286 = scalar_lea.vmem %s7, 3
        %v7287 = vld [vmem:[%s7286] sm:$0x1]
        %s7288 = scalar_lea.vmem %s8, 3
        %v7289 = vld [vmem:[%s7288] sm:$0x1]
        %v7290 = vsel %vm705, %v7285, 0.0
        %7291 = vadd.xlane.f32.xlu0 %v7290
        %v7292 = vpop.xlane.xlu0 %7291
        %v7293 = vmul.f32 %v7292, %v2114
        %v7294 = vsub.f32 %v7285, %v7293
        %v7295 = vmul.f32 %v7294, %v7294
        %v7296 = vsel %vm705, %v7295, 0.0
        %7297 = vadd.xlane.f32.xlu0 %v7296
        %v7298 = vpop.xlane.xlu0 %7297
        %v7299 = vmul.f32 %v7298, %v2114
        %v7300 = vadd.f32 %v7299, 1e-05
        %v7301 = vrsqrt.pop %v7300
        %v7302 = vmul.f32 %v7294, %v7301
        %v7304 = vlaneseq
        %v7305 = vshrl.u32 %v7304, 7
        %v7306 = vsub.s32 0, %v7305
        %v7307 = vrot.slane %v7287, %v7306
        %v7309 = vmul.f32 %v7302, %v7307
        %v7311 = vlaneseq
        %v7312 = vshrl.u32 %v7311, 7
        %v7313 = vsub.s32 0, %v7312
        %v7314 = vrot.slane %v7289, %v7313
        %v7316 = vadd.f32 %v7309, %v7314
        %v7317 = vmul.f32 %v7316, %v2142
        %v7318 = vpack.c.bf16 %v7317, %v7317
        %v7320 = vlaneseq
        %v7321 = vshrl.u32 %v7320, 7
        %v7322 = vsub.s32 0, %v7321
        %v7323 = vrot.slane %v5805, %v7322
        %v7333 = vunpack.c.l.b16 %v5796
        %v7334 = vunpack.c.l.b16 %v5797
        %v7335 = vunpack.c.l.b16 %v5798
        %v7336 = vunpack.c.l.b16 %v5799
        %v7337 = vunpack.c.l.b16 %v5800
        %v7338 = vunpack.c.l.b16 %v5801
        %v7339 = vunpack.c.l.b16 %v5802
        %v7340 = vunpack.c.l.b16 %v5803
        %v7341 = vpack.c.b16 %v7334, %v7333
        %v7342 = vpack.c.b16 %v7336, %v7335
        %v7343 = vpack.c.b16 %v7338, %v7337
        %v7344 = vpack.c.b16 %v7340, %v7339
        %v7350 = vsel %vm705, %v7318, 0
        %7352 = vmatprep.subr.bf16.mxu0 0
        %7353 = vmatpush1.bf16.msra.mxu0 %v7341
        %7354 = vmatprep.subr.bf16.mxu0 0
        %7355 = vmatpush1.bf16.msra.mxu0 %v7342
        %7356 = vmatprep.subr.bf16.mxu0 0
        %7357 = vmatpush1.bf16.msra.mxu0 %v7343
        %7358 = vmatprep.subr.bf16.mxu0 0
        %7359 = vmatpush1.bf16.msra.mxu0 %v7344
        %7360 = vmatprep.subr.bf16.mxu0 0
        %7361 = vmatpush1.bf16.msra.mxu0 0
        %7362 = vmatprep.subr.bf16.mxu0 0
        %7363 = vmatpush1.bf16.msra.mxu0 0
        %7364 = vmatprep.subr.bf16.mxu0 0
        %7365 = vmatpush1.bf16.msra.mxu0 0
        %7366 = vmatprep.subr.bf16.mxu0 0
        %7367 = vmatpush1.bf16.msra.mxu0 0
        %7368 = vmatprep.subr.bf16.mxu0 0
        %7369 = vmatpush1.bf16.msra.mxu0 0
        %7370 = vmatprep.subr.bf16.mxu0 0
        %7371 = vmatpush1.bf16.msra.mxu0 0
        %7372 = vmatprep.subr.bf16.mxu0 0
        %7373 = vmatpush1.bf16.msra.mxu0 0
        %7374 = vmatprep.subr.bf16.mxu0 0
        %7375 = vmatpush1.bf16.msra.mxu0 0
        %7376 = vmatprep.subr.bf16.mxu0 0
        %7377 = vmatpush1.bf16.msra.mxu0 0
        %7378 = vmatprep.subr.bf16.mxu0 0
        %7379 = vmatpush1.bf16.msra.mxu0 0
        %7380 = vmatprep.subr.bf16.mxu0 0
        %7381 = vmatpush1.bf16.msra.mxu0 0
        %7382 = vmatprep.subr.bf16.mxu0 0
        %7383 = vmatpush1.bf16.msra.mxu0 0
        %7384 = vmatprep.mubr.bf16.mxu0 0
        %7385 = vmatmul.mubr.bf16.gmra.mrb[0].mxu0 %v7350
        %v7386 = vpop.f32.mrb[0].mxu0
        %v7387 = vadd.f32 %v7323, %v7386
        %v7388 = vpop.f32.mrb[0].mxu0
        %v7389 = vpop.f32.mrb[0].mxu0
        %v7390 = vpop.f32.mrb[0].mxu0
        %7391 = vdwg.mxu0
        %v7392 = vmax.f32 %v7387, 0.0
        %v7393 = vpack.c.bf16 %v7392, %v7392
        %v7395 = vlaneseq
        %v7396 = vshrl.u32 %v7395, 7
        %v7397 = vsub.s32 0, %v7396
        %v7398 = vrot.slane %v5810, %v7397
        %v7402 = vunpack.c.l.b16 %v5807
        %v7403 = vunpack.c.l.b16 %v5808
        %v7404 = vpack.c.b16 %v7403, %v7402
        %v7407 = vsel %vm793, %v7393, 0
        %7409 = vmatprep.subr.bf16.mxu0 0
        %7410 = vmatpush1.bf16.msra.mxu0 %v7404
        %7411 = vmatprep.subr.bf16.mxu0 0
        %7412 = vmatpush1.bf16.msra.mxu0 0
        %7413 = vmatprep.subr.bf16.mxu0 0
        %7414 = vmatpush1.bf16.msra.mxu0 0
        %7415 = vmatprep.subr.bf16.mxu0 0
        %7416 = vmatpush1.bf16.msra.mxu0 0
        %7417 = vmatprep.subr.bf16.mxu0 0
        %7418 = vmatpush1.bf16.msra.mxu0 0
        %7419 = vmatprep.subr.bf16.mxu0 0
        %7420 = vmatpush1.bf16.msra.mxu0 0
        %7421 = vmatprep.subr.bf16.mxu0 0
        %7422 = vmatpush1.bf16.msra.mxu0 0
        %7423 = vmatprep.subr.bf16.mxu0 0
        %7424 = vmatpush1.bf16.msra.mxu0 0
        %7425 = vmatprep.subr.bf16.mxu0 0
        %7426 = vmatpush1.bf16.msra.mxu0 0
        %7427 = vmatprep.subr.bf16.mxu0 0
        %7428 = vmatpush1.bf16.msra.mxu0 0
        %7429 = vmatprep.subr.bf16.mxu0 0
        %7430 = vmatpush1.bf16.msra.mxu0 0
        %7431 = vmatprep.subr.bf16.mxu0 0
        %7432 = vmatpush1.bf16.msra.mxu0 0
        %7433 = vmatprep.subr.bf16.mxu0 0
        %7434 = vmatpush1.bf16.msra.mxu0 0
        %7435 = vmatprep.subr.bf16.mxu0 0
        %7436 = vmatpush1.bf16.msra.mxu0 0
        %7437 = vmatprep.subr.bf16.mxu0 0
        %7438 = vmatpush1.bf16.msra.mxu0 0
        %7439 = vmatprep.subr.bf16.mxu0 0
        %7440 = vmatpush1.bf16.msra.mxu0 0
        %7441 = vmatprep.mubr.bf16.mxu0 0
        %7442 = vmatmul.mubr.bf16.gmra.mrb[0].mxu0 %v7407
        %v7443 = vpop.f32.mrb[0].mxu0
        %v7444 = vadd.f32 %v7398, %v7443
        %v7445 = vpop.f32.mrb[0].mxu0
        %v7446 = vpop.f32.mrb[0].mxu0
        %v7447 = vpop.f32.mrb[0].mxu0
        %7448 = vdwg.mxu0
        %v7449 = vadd.f32 %v7444, %v7317
        %s7450 = scalar_lea.vmem %s13, 3
        %v7451 = vld [vmem:[%s7450] sm:$0x1]
        %s7452 = scalar_lea.vmem %s14, 3
        %v7453 = vld [vmem:[%s7452] sm:$0x1]
        %v7454 = vsel %vm705, %v7449, 0.0
        %7455 = vadd.xlane.f32.xlu0 %v7454
        %v7456 = vpop.xlane.xlu0 %7455
        %v7457 = vmul.f32 %v7456, %v2114
        %v7458 = vsub.f32 %v7449, %v7457
        %v7459 = vmul.f32 %v7458, %v7458
        %v7460 = vsel %vm705, %v7459, 0.0
        %7461 = vadd.xlane.f32.xlu0 %v7460
        %v7462 = vpop.xlane.xlu0 %7461
        %v7463 = vmul.f32 %v7462, %v2114
        %v7464 = vadd.f32 %v7463, 1e-05
        %v7465 = vrsqrt.pop %v7464
        %v7466 = vmul.f32 %v7458, %v7465
        %v7468 = vlaneseq
        %v7469 = vshrl.u32 %v7468, 7
        %v7470 = vsub.s32 0, %v7469
        %v7471 = vrot.slane %v7451, %v7470
        %v7473 = vmul.f32 %v7466, %v7471
        %v7475 = vlaneseq
        %v7476 = vshrl.u32 %v7475, 7
        %v7477 = vsub.s32 0, %v7476
        %v7478 = vrot.slane %v7453, %v7477
        %v7480 = vadd.f32 %v7473, %v7478
        %v7481 = vmul.f32 %v7480, %v2142
        %v7482 = vpack.c.bf16 %v7481, %v7481
        %v7483 = vld [vmem:[%s15] sm:$0xf]
        %v7484 = vld [vmem:[%s15 + $0x4] sm:$0xf]
        %v7485 = vld [vmem:[%s15 + $0x8] sm:$0xf]
        %v7486 = vld [vmem:[%s15 + $0xc] sm:$0xf]
        %v7487 = vld [vmem:[%s15 + $0x10] sm:$0xf]
        %v7488 = vld [vmem:[%s15 + $0x14] sm:$0xf]
        %v7489 = vld [vmem:[%s15 + $0x18] sm:$0xf]
        %v7490 = vld [vmem:[%s15 + $0x1c] sm:$0xf]
        %v7491 = vld [vmem:[%s16] sm:$0x1]
        %v7493 = vlaneseq
        %v7494 = vshrl.u32 %v7493, 7
        %v7495 = vsub.s32 0, %v7494
        %v7496 = vrot.slane %v7491, %v7495
        %v7506 = vunpack.c.l.b16 %v7483
        %v7507 = vunpack.c.l.b16 %v7484
        %v7508 = vunpack.c.l.b16 %v7485
        %v7509 = vunpack.c.l.b16 %v7486
        %v7510 = vunpack.c.l.b16 %v7487
        %v7511 = vunpack.c.l.b16 %v7488
        %v7512 = vunpack.c.l.b16 %v7489
        %v7513 = vunpack.c.l.b16 %v7490
        %v7514 = vpack.c.b16 %v7507, %v7506
        %v7515 = vpack.c.b16 %v7509, %v7508
        %v7516 = vpack.c.b16 %v7511, %v7510
        %v7517 = vpack.c.b16 %v7513, %v7512
        %v7523 = vsel %vm705, %v7482, 0
        %7525 = vmatprep.subr.bf16.mxu0 0
        %7526 = vmatpush1.bf16.msra.mxu0 %v7514
        %7527 = vmatprep.subr.bf16.mxu0 0
        %7528 = vmatpush1.bf16.msra.mxu0 %v7515
        %7529 = vmatprep.subr.bf16.mxu0 0
        %7530 = vmatpush1.bf16.msra.mxu0 %v7516
        %7531 = vmatprep.subr.bf16.mxu0 0
        %7532 = vmatpush1.bf16.msra.mxu0 %v7517
        %7533 = vmatprep.subr.bf16.mxu0 0
        %7534 = vmatpush1.bf16.msra.mxu0 0
        %7535 = vmatprep.subr.bf16.mxu0 0
        %7536 = vmatpush1.bf16.msra.mxu0 0
        %7537 = vmatprep.subr.bf16.mxu0 0
        %7538 = vmatpush1.bf16.msra.mxu0 0
        %7539 = vmatprep.subr.bf16.mxu0 0
        %7540 = vmatpush1.bf16.msra.mxu0 0
        %7541 = vmatprep.subr.bf16.mxu0 0
        %7542 = vmatpush1.bf16.msra.mxu0 0
        %7543 = vmatprep.subr.bf16.mxu0 0
        %7544 = vmatpush1.bf16.msra.mxu0 0
        %7545 = vmatprep.subr.bf16.mxu0 0
        %7546 = vmatpush1.bf16.msra.mxu0 0
        %7547 = vmatprep.subr.bf16.mxu0 0
        %7548 = vmatpush1.bf16.msra.mxu0 0
        %7549 = vmatprep.subr.bf16.mxu0 0
        %7550 = vmatpush1.bf16.msra.mxu0 0
        %7551 = vmatprep.subr.bf16.mxu0 0
        %7552 = vmatpush1.bf16.msra.mxu0 0
        %7553 = vmatprep.subr.bf16.mxu0 0
        %7554 = vmatpush1.bf16.msra.mxu0 0
        %7555 = vmatprep.subr.bf16.mxu0 0
        %7556 = vmatpush1.bf16.msra.mxu0 0
        %7557 = vmatprep.mubr.bf16.mxu0 0
        %7558 = vmatmul.mubr.bf16.gmra.mrb[0].mxu0 %v7523
        %v7559 = vpop.f32.mrb[0].mxu0
        %v7560 = vadd.f32 %v7496, %v7559
        %v7561 = vpop.f32.mrb[0].mxu0
        %v7562 = vpop.f32.mrb[0].mxu0
        %v7563 = vpop.f32.mrb[0].mxu0
        %7564 = vdwg.mxu0
        %vm7565 = vcmask 97280
        %v7566 = vsel %vm7565, %v7560, -inf
        %v7567 = vrot.slane %v7566, 4
        %v7568 = vmax.f32 %v7566, %v7567
        %v7569 = vrot.slane %v7568, 2
        %v7570 = vmax.f32 %v7568, %v7569
        %v7571 = vrot.slane %v7570, 1
        %v7572 = vmax.f32 %v7570, %v7571
        %vm7573 = vcmask 90112
        %7574 = vst.msk [vmem:[%s562] sm:$0x1] %vm7573, %v7572
        %s7575 = sand.u32 %s411, 1
        %s7576 = scalar_lea.sflag [#allocation3], %s7575
        %s7577 = sand.u32 %s411, 1
        %s7578 = scalar_lea.vmem [#allocation2], %s7577
        // Predicated region
        $region89: #{transformer_pallas.1} parent=87 // pred_check
          %p7579 = pneg %p421
        $region90: #{transformer_pallas.1} parent=87 // pred_check_branch
          %7581 = sbr.rel (%p7579) target = $region92
        $region91: #{transformer_pallas.1} parent=87 // pred_region
          %s7583 = ssub.s32 16, 16
          %7584 = vsyncadd %s7576, %s7583
          %s7585 = smul.addr %s31, 16
          %s7586 = scalar_lea.hbm %s17, %s7585
          %s7588 = sshll.u32 %s7578, 4
          %s7589 = int_to_ptr.vmem [resolvable:$true] %s7588
          %7591 = dma.vmem_to_hbm [thread:$0]  %s7589, 16, %s7586, %s7576
        $region92: #{transformer_pallas.1} parent=87 // pred_fallthru
          _
      $region88: #{transformer_pallas.1} parent=5 // pred_fallthru
        _
      %p7592 = scmp.le.s32.totalorder 2, %s26
      // Predicated region
      $region93: #{transformer_pallas.1} parent=5 // pred_check
        %p7593 = pneg %p7592
      $region94: #{transformer_pallas.1} parent=5 // pred_check_branch
        %7595 = sbr.rel (%p7593) target = $region96
      $region95: #{transformer_pallas.1} parent=5 // pred_region
        %s7596 = ssub.s32 %s26, 2
        // Predicated region
        $region97: #{transformer_pallas.1} parent=95 // pred_check
          %p7597 = pneg %p427
        $region98: #{transformer_pallas.1} parent=95 // pred_check_branch
          %7599 = sbr.rel (%p7597) target = $region100
        $region99: #{transformer_pallas.1} parent=95 // pred_region
          %s7600 = sand.u32 %s412, 1
          %s7601 = scalar_lea.sflag [#allocation3], %s7600
          %s7602 = sand.u32 %s412, 1
          %s7603 = scalar_lea.vmem [#allocation2], %s7602
          %7604 = dma.done %s7601, 16
        $region100: #{transformer_pallas.1} parent=95 // pred_fallthru
          _
      $region96: #{transformer_pallas.1} parent=5 // pred_fallthru
        _
    $region6: #{transformer_pallas.1} parent=1 // loop_footer
      %s30 = sadd.s32 1, %s26
    $region7: #{transformer_pallas.1} parent=1 // loop_footer_branch
      %25 = sbr.rel target = $region3
    $region8: #{transformer_pallas.1} parent=1 // loop_exit
      _
    %7605 = vsyncpa [#allocation3], 1
    %s7606 = scalar_lea.sflag [#allocation3], 1
    %7607 = vsyncpa %s7606, 1

</llo_original>
